<compile_context>
chip_gen: v6e
topology: v6e:2x2x1
jax: 0.10.0
libtpu: 0.0.40
codegen_flags: <defaults>
</compile_context>

<pallas_src>
import jax
import jax.numpy as jnp
from jax import lax
from jax.experimental import pallas as pl
from jax.experimental.pallas import tpu as pltpu

C_OUT = 5                      # conv output channels
KS = 5                         # conv kernel size
H = W = 28                     # MNIST spatial size (required by dense1: 5*14*14)
HP = WP = 14                   # pooled spatial size
ROW = 32                       # padded row pitch (lanes per image row, 28 + 2+2 gutter)
XLANES = ROW * ROW             # 1024: padded image lanes (32x32 slab)
PA = ROW * (H - 1) + W         # 892:  conv-output slab width, conv pixel (h,w) at p = 32h + w
KE = 2 * ROW * (HP - 1) + 2 * (WP - 1) + 1   # 859: pooled slab width, pooled (i,j) at q = 64i + 2j
NPAD = 128                     # dense lane padding


def fused_mnist_kernel(taps_ref, shift_ref, xp_ref, w1e_ref, b1_ref, w2_ref, b2_ref, o_ref):
    """conv+BN -> maxpool -> ReLU -> dense1 -> ReLU -> dense2 -> softmax for one batch tile."""
    bt = xp_ref.shape[0]
    h1 = jnp.zeros((bt, NPAD), jnp.float32)

    for c in range(C_OUT):
        # --- conv (BN scale folded into taps): 25 full-lane VPU multiply-accumulates ---
        acc = jnp.zeros((bt, PA), jnp.float32)
        for di in range(KS):
            for dj in range(KS):
                tap = taps_ref[c * KS * KS + di * KS + dj]          # SMEM scalar
                acc = acc + tap * xp_ref[:, pl.ds(ROW * di + dj, PA)]

        # --- 2x2 stride-2 maxpool on the VPU: pooled (i,j) lives at q = 64i + 2j ---
        pe = jnp.maximum(
            jnp.maximum(acc[:, 0:KE], acc[:, 1:KE + 1]),
            jnp.maximum(acc[:, ROW:ROW + KE], acc[:, ROW + 1:ROW + 1 + KE]),
        )
        # BN shift (constant per channel, commutes with max) + ReLU, on the narrower slab
        pe = jnp.maximum(pe + shift_ref[c], 0.0)

        # --- dense1 contribution: flatten/gather folded into expanded weights (MXU) ---
        h1 = h1 + jnp.dot(pe, w1e_ref[c], preferred_element_type=jnp.float32)

    h1 = jnp.maximum(h1 + b1_ref[...], 0.0)                          # dense1 bias + ReLU
    logits = jnp.dot(h1, w2_ref[...], preferred_element_type=jnp.float32) + b2_ref[...]

    # mask the padded logit lanes (cols >= 10) before softmax
    col = lax.broadcasted_iota(jnp.int32, logits.shape, 1)
    logits = jnp.where(col < 10, logits, -1e30)
    m = jnp.max(logits, axis=-1, keepdims=True)
    e = jnp.exp(logits - m)                                          # padded lanes -> exactly 0
    s = jnp.sum(e, axis=-1, keepdims=True)
    o_ref[...] = e * (1.0 / s)                                       # exact divide (lane-dense store)


def _round_up(n, m):
    return ((n + m - 1) // m) * m


def mnist_forward(x, w_conv, scale, shift, w1, b1, w2, b2, *, batch_tile=256):
    """x: (B, 1, 28, 28).  scale/shift: folded eval-mode BN affine per channel."""
    B = x.shape[0]
    assert x.shape[1:] == (1, H, W)

    # batch tile: up to `batch_tile` images per grid step.
    bt = min(batch_tile, _round_up(B, 8))
    b_pad = _round_up(B, bt)

    # Padded image slabs: 28x28 -> 32x32 (conv pad=2 baked in), flattened to 1024 lanes.
    xp = jnp.pad(x.reshape(B, H, W).astype(jnp.float32),
                 ((0, b_pad - B), (2, 2), (2, 2))).reshape(b_pad, XLANES)

    # Conv taps with the (eval-mode) BN scale folded in; layout [c*25 + di*5 + dj].
    taps = (w_conv[:, 0] * scale[:, None, None]).reshape(-1).astype(jnp.float32)

    # Expanded dense1 weights: flatten index c*196 + 14*i + j maps to slab position
    # q = 64*i + 2*j of channel c; all other rows are zero.  N padded 120 -> 128.
    k = jnp.arange(HP * WP)
    q = 64 * (k // WP) + 2 * (k % WP)                                # (196,)
    w1_r = w1.T.reshape(C_OUT, HP * WP, 120).astype(jnp.float32)     # [c, k, n]
    w1e = jnp.zeros((C_OUT, KE, NPAD), jnp.float32).at[:, q, :120].set(w1_r)

    b1p = jnp.zeros((1, NPAD), jnp.float32).at[0, :120].set(b1)
    w2p = jnp.zeros((NPAD, NPAD), jnp.float32).at[:120, :10].set(w2.T)
    b2p = jnp.zeros((1, NPAD), jnp.float32).at[0, :10].set(b2)

    out = pl.pallas_call(
        fused_mnist_kernel,
        out_shape=jax.ShapeDtypeStruct((b_pad, NPAD), jnp.float32),
        grid=(b_pad // bt,),
        in_specs=[
            pl.BlockSpec(memory_space=pltpu.MemorySpace.SMEM),        # conv taps (125,)
            pl.BlockSpec(memory_space=pltpu.MemorySpace.SMEM),        # BN shift (5,)
            pl.BlockSpec((bt, XLANES), lambda b: (b, 0)),             # padded image slab
            pl.BlockSpec((C_OUT, KE, NPAD), lambda b: (0, 0, 0)),     # expanded dense1 W (resident)
            pl.BlockSpec((1, NPAD), lambda b: (0, 0)),                # b1 (padded)
            pl.BlockSpec((NPAD, NPAD), lambda b: (0, 0)),             # W2^T (padded)
            pl.BlockSpec((1, NPAD), lambda b: (0, 0)),                # b2 (padded)
        ],
        out_specs=pl.BlockSpec((bt, NPAD), lambda b: (b, 0)),         # lane-dense output slab
        compiler_params=pltpu.CompilerParams(dimension_semantics=("parallel",)),
    )(taps, shift.astype(jnp.float32), xp, w1e, b1p, w2p, b2p)

    return out[:B, :10]


def reference(x, w_conv, scale, shift, w1, b1, w2, b2):
    B = x.shape[0]
    conv = lax.conv_general_dilated(
        x, w_conv, window_strides=(1, 1), padding=((2, 2), (2, 2)),
        dimension_numbers=("NCHW", "OIHW", "NCHW"), precision=lax.Precision.HIGHEST)
    bn = conv * scale[None, :, None, None] + shift[None, :, None, None]
    pooled = bn.reshape(B, C_OUT, HP, 2, WP, 2).max(axis=(3, 5))
    flat = jnp.maximum(pooled, 0.0).reshape(B, -1)
    h = jnp.maximum(jnp.dot(flat, w1.T, precision=lax.Precision.HIGHEST) + b1, 0.0)
    logits = jnp.dot(h, w2.T, precision=lax.Precision.HIGHEST) + b2
    return jax.nn.softmax(logits, axis=1)


if __name__ == "__main__":
    key = jax.random.PRNGKey(0)
    ks = jax.random.split(key, 9)

    # Deterministic synthetic parameters (shapes from mnist_model.__init__).
    w_conv = jax.random.normal(ks[0], (C_OUT, 1, KS, KS), jnp.float32) * 0.1
    gamma = 1.0 + 0.1 * jax.random.normal(ks[1], (C_OUT,), jnp.float32)
    beta = 0.1 * jax.random.normal(ks[2], (C_OUT,), jnp.float32)
    running_mean = 0.1 * jax.random.normal(ks[3], (C_OUT,), jnp.float32)
    running_var = 1.0 + 0.5 * jax.random.uniform(ks[4], (C_OUT,), jnp.float32)
    eps = 1e-3
    scale = gamma / jnp.sqrt(running_var + eps)       # folded BN (eval mode)
    shift = beta - running_mean * scale

    w1 = jax.random.normal(ks[5], (120, C_OUT * HP * WP), jnp.float32) * 0.02
    b1 = 0.01 * jax.random.normal(ks[6], (120,), jnp.float32)
    w2 = jax.random.normal(ks[7], (10, 120), jnp.float32) * 0.05
    b2 = 0.01 * jax.random.normal(ks[8], (10,), jnp.float32)

    # Example input: batch=2, NCHW, 1x28x28 (28 is required by dense1 = 5*14*14).
    x = jax.random.normal(jax.random.PRNGKey(0), (2, 1, H, W), jnp.float32)

    out = jax.jit(mnist_forward)(x, w_conv, scale, shift, w1, b1, w2, b2)
    out = jax.block_until_ready(out)

    ref = reference(x, w_conv, scale, shift, w1, b1, w2, b2)
    assert out.shape == (2, 10)
    # exact softmax divide -> rows sum to 1 up to f32 rounding
    assert jnp.allclose(jnp.sum(out, axis=1), 1.0, atol=1e-3)
    # tolerances account for default-precision MXU matmuls vs HIGHEST-precision reference
    assert jnp.allclose(out, ref, atol=2e-3, rtol=2e-3)

    print("KERNEL_OK")
</pallas_src>

<mosaic_0001>
module attributes {stable_mosaic.version = 11 : i64} {
  func.func @fused_mnist_kernel(%arg0: i32, %arg1: memref<125xf32, #tpu.memory_space<smem>>, %arg2: memref<5xf32, #tpu.memory_space<smem>>, %arg3: memref<8x1024xf32, #tpu.memory_space<vmem>>, %arg4: memref<5x859x128xf32, #tpu.memory_space<vmem>>, %arg5: memref<1x128xf32, #tpu.memory_space<vmem>>, %arg6: memref<128x128xf32, #tpu.memory_space<vmem>>, %arg7: memref<1x128xf32, #tpu.memory_space<vmem>>, %arg8: memref<8x128xf32, #tpu.memory_space<vmem>>) attributes {dimension_semantics = [#tpu.dimension_semantics<parallel>], iteration_bounds = array<i64: 1>, scalar_prefetch = 0 : i64, scratch_operands = 0 : i64, tpu.core_type = #tpu.core_type<tc>, window_params = [{transform_indices = @transform_0, window_bounds = array<i64: 125>}, {transform_indices = @transform_1, window_bounds = array<i64: 5>}, {transform_indices = @transform_2, window_bounds = array<i64: 8, 1024>}, {pipeline_mode = #tpu.pipeline_mode<synchronous>, transform_indices = @transform_3, window_bounds = array<i64: 5, 859, 128>}, {pipeline_mode = #tpu.pipeline_mode<synchronous>, transform_indices = @transform_4, window_bounds = array<i64: 1, 128>}, {pipeline_mode = #tpu.pipeline_mode<synchronous>, transform_indices = @transform_5, window_bounds = array<i64: 128, 128>}, {pipeline_mode = #tpu.pipeline_mode<synchronous>, transform_indices = @transform_6, window_bounds = array<i64: 1, 128>}, {transform_indices = @transform_7, window_bounds = array<i64: 8, 128>}]} {
    %cst = arith.constant 0.000000e+00 : f32
    %0 = vector.broadcast %cst : f32 to vector<8x128xf32>
    %cst_0 = arith.constant 0.000000e+00 : f32
    %1 = vector.broadcast %cst_0 : f32 to vector<8x892xf32>
    %c0 = arith.constant 0 : index
    %2 = memref.load %arg1[%c0] : memref<125xf32, #tpu.memory_space<smem>>
    %c0_1 = arith.constant 0 : index
    %c0_2 = arith.constant 0 : index
    %3 = vector.load %arg3[%c0_1, %c0_2] : memref<8x1024xf32, #tpu.memory_space<vmem>>, vector<8x892xf32>
    %4 = vector.broadcast %2 : f32 to vector<8x892xf32>
    %5 = arith.mulf %4, %3 : vector<8x892xf32>
    %6 = arith.addf %1, %5 : vector<8x892xf32>
    %c1 = arith.constant 1 : index
    %7 = memref.load %arg1[%c1] : memref<125xf32, #tpu.memory_space<smem>>
    %c0_3 = arith.constant 0 : index
    %c1_4 = arith.constant 1 : index
    %8 = vector.load %arg3[%c0_3, %c1_4] : memref<8x1024xf32, #tpu.memory_space<vmem>>, vector<8x892xf32>
    %9 = vector.broadcast %7 : f32 to vector<8x892xf32>
    %10 = arith.mulf %9, %8 : vector<8x892xf32>
    %11 = arith.addf %6, %10 : vector<8x892xf32>
    %c2 = arith.constant 2 : index
    %12 = memref.load %arg1[%c2] : memref<125xf32, #tpu.memory_space<smem>>
    %c0_5 = arith.constant 0 : index
    %c2_6 = arith.constant 2 : index
    %13 = vector.load %arg3[%c0_5, %c2_6] : memref<8x1024xf32, #tpu.memory_space<vmem>>, vector<8x892xf32>
    %14 = vector.broadcast %12 : f32 to vector<8x892xf32>
    %15 = arith.mulf %14, %13 : vector<8x892xf32>
    %16 = arith.addf %11, %15 : vector<8x892xf32>
    %c3 = arith.constant 3 : index
    %17 = memref.load %arg1[%c3] : memref<125xf32, #tpu.memory_space<smem>>
    %c0_7 = arith.constant 0 : index
    %c3_8 = arith.constant 3 : index
    %18 = vector.load %arg3[%c0_7, %c3_8] : memref<8x1024xf32, #tpu.memory_space<vmem>>, vector<8x892xf32>
    %19 = vector.broadcast %17 : f32 to vector<8x892xf32>
    %20 = arith.mulf %19, %18 : vector<8x892xf32>
    %21 = arith.addf %16, %20 : vector<8x892xf32>
    %c4 = arith.constant 4 : index
    %22 = memref.load %arg1[%c4] : memref<125xf32, #tpu.memory_space<smem>>
    %c0_9 = arith.constant 0 : index
    %c4_10 = arith.constant 4 : index
    %23 = vector.load %arg3[%c0_9, %c4_10] : memref<8x1024xf32, #tpu.memory_space<vmem>>, vector<8x892xf32>
    %24 = vector.broadcast %22 : f32 to vector<8x892xf32>
    %25 = arith.mulf %24, %23 : vector<8x892xf32>
    %26 = arith.addf %21, %25 : vector<8x892xf32>
    %c5 = arith.constant 5 : index
    %27 = memref.load %arg1[%c5] : memref<125xf32, #tpu.memory_space<smem>>
    %c0_11 = arith.constant 0 : index
    %c32 = arith.constant 32 : index
    %28 = vector.load %arg3[%c0_11, %c32] : memref<8x1024xf32, #tpu.memory_space<vmem>>, vector<8x892xf32>
    %29 = vector.broadcast %27 : f32 to vector<8x892xf32>
    %30 = arith.mulf %29, %28 : vector<8x892xf32>
    %31 = arith.addf %26, %30 : vector<8x892xf32>
    %c6 = arith.constant 6 : index
    %32 = memref.load %arg1[%c6] : memref<125xf32, #tpu.memory_space<smem>>
    %c0_12 = arith.constant 0 : index
    %c33 = arith.constant 33 : index
    %33 = vector.load %arg3[%c0_12, %c33] : memref<8x1024xf32, #tpu.memory_space<vmem>>, vector<8x892xf32>
    %34 = vector.broadcast %32 : f32 to vector<8x892xf32>
    %35 = arith.mulf %34, %33 : vector<8x892xf32>
    %36 = arith.addf %31, %35 : vector<8x892xf32>
    %c7 = arith.constant 7 : index
    %37 = memref.load %arg1[%c7] : memref<125xf32, #tpu.memory_space<smem>>
    %c0_13 = arith.constant 0 : index
    %c34 = arith.constant 34 : index
    %38 = vector.load %arg3[%c0_13, %c34] : memref<8x1024xf32, #tpu.memory_space<vmem>>, vector<8x892xf32>
    %39 = vector.broadcast %37 : f32 to vector<8x892xf32>
    %40 = arith.mulf %39, %38 : vector<8x892xf32>
    %41 = arith.addf %36, %40 : vector<8x892xf32>
    %c8 = arith.constant 8 : index
    %42 = memref.load %arg1[%c8] : memref<125xf32, #tpu.memory_space<smem>>
    %c0_14 = arith.constant 0 : index
    %c35 = arith.constant 35 : index
    %43 = vector.load %arg3[%c0_14, %c35] : memref<8x1024xf32, #tpu.memory_space<vmem>>, vector<8x892xf32>
    %44 = vector.broadcast %42 : f32 to vector<8x892xf32>
    %45 = arith.mulf %44, %43 : vector<8x892xf32>
    %46 = arith.addf %41, %45 : vector<8x892xf32>
    %c9 = arith.constant 9 : index
    %47 = memref.load %arg1[%c9] : memref<125xf32, #tpu.memory_space<smem>>
    %c0_15 = arith.constant 0 : index
    %c36 = arith.constant 36 : index
    %48 = vector.load %arg3[%c0_15, %c36] : memref<8x1024xf32, #tpu.memory_space<vmem>>, vector<8x892xf32>
    %49 = vector.broadcast %47 : f32 to vector<8x892xf32>
    %50 = arith.mulf %49, %48 : vector<8x892xf32>
    %51 = arith.addf %46, %50 : vector<8x892xf32>
    %c10 = arith.constant 10 : index
    %52 = memref.load %arg1[%c10] : memref<125xf32, #tpu.memory_space<smem>>
    %c0_16 = arith.constant 0 : index
    %c64 = arith.constant 64 : index
    %53 = vector.load %arg3[%c0_16, %c64] : memref<8x1024xf32, #tpu.memory_space<vmem>>, vector<8x892xf32>
    %54 = vector.broadcast %52 : f32 to vector<8x892xf32>
    %55 = arith.mulf %54, %53 : vector<8x892xf32>
    %56 = arith.addf %51, %55 : vector<8x892xf32>
    %c11 = arith.constant 11 : index
    %57 = memref.load %arg1[%c11] : memref<125xf32, #tpu.memory_space<smem>>
    %c0_17 = arith.constant 0 : index
    %c65 = arith.constant 65 : index
    %58 = vector.load %arg3[%c0_17, %c65] : memref<8x1024xf32, #tpu.memory_space<vmem>>, vector<8x892xf32>
    %59 = vector.broadcast %57 : f32 to vector<8x892xf32>
    %60 = arith.mulf %59, %58 : vector<8x892xf32>
    %61 = arith.addf %56, %60 : vector<8x892xf32>
    %c12 = arith.constant 12 : index
    %62 = memref.load %arg1[%c12] : memref<125xf32, #tpu.memory_space<smem>>
    %c0_18 = arith.constant 0 : index
    %c66 = arith.constant 66 : index
    %63 = vector.load %arg3[%c0_18, %c66] : memref<8x1024xf32, #tpu.memory_space<vmem>>, vector<8x892xf32>
    %64 = vector.broadcast %62 : f32 to vector<8x892xf32>
    %65 = arith.mulf %64, %63 : vector<8x892xf32>
    %66 = arith.addf %61, %65 : vector<8x892xf32>
    %c13 = arith.constant 13 : index
    %67 = memref.load %arg1[%c13] : memref<125xf32, #tpu.memory_space<smem>>
    %c0_19 = arith.constant 0 : index
    %c67 = arith.constant 67 : index
    %68 = vector.load %arg3[%c0_19, %c67] : memref<8x1024xf32, #tpu.memory_space<vmem>>, vector<8x892xf32>
    %69 = vector.broadcast %67 : f32 to vector<8x892xf32>
    %70 = arith.mulf %69, %68 : vector<8x892xf32>
    %71 = arith.addf %66, %70 : vector<8x892xf32>
    %c14 = arith.constant 14 : index
    %72 = memref.load %arg1[%c14] : memref<125xf32, #tpu.memory_space<smem>>
    %c0_20 = arith.constant 0 : index
    %c68 = arith.constant 68 : index
    %73 = vector.load %arg3[%c0_20, %c68] : memref<8x1024xf32, #tpu.memory_space<vmem>>, vector<8x892xf32>
    %74 = vector.broadcast %72 : f32 to vector<8x892xf32>
    %75 = arith.mulf %74, %73 : vector<8x892xf32>
    %76 = arith.addf %71, %75 : vector<8x892xf32>
    %c15 = arith.constant 15 : index
    %77 = memref.load %arg1[%c15] : memref<125xf32, #tpu.memory_space<smem>>
    %c0_21 = arith.constant 0 : index
    %c96 = arith.constant 96 : index
    %78 = vector.load %arg3[%c0_21, %c96] : memref<8x1024xf32, #tpu.memory_space<vmem>>, vector<8x892xf32>
    %79 = vector.broadcast %77 : f32 to vector<8x892xf32>
    %80 = arith.mulf %79, %78 : vector<8x892xf32>
    %81 = arith.addf %76, %80 : vector<8x892xf32>
    %c16 = arith.constant 16 : index
    %82 = memref.load %arg1[%c16] : memref<125xf32, #tpu.memory_space<smem>>
    %c0_22 = arith.constant 0 : index
    %c97 = arith.constant 97 : index
    %83 = vector.load %arg3[%c0_22, %c97] : memref<8x1024xf32, #tpu.memory_space<vmem>>, vector<8x892xf32>
    %84 = vector.broadcast %82 : f32 to vector<8x892xf32>
    %85 = arith.mulf %84, %83 : vector<8x892xf32>
    %86 = arith.addf %81, %85 : vector<8x892xf32>
    %c17 = arith.constant 17 : index
    %87 = memref.load %arg1[%c17] : memref<125xf32, #tpu.memory_space<smem>>
    %c0_23 = arith.constant 0 : index
    %c98 = arith.constant 98 : index
    %88 = vector.load %arg3[%c0_23, %c98] : memref<8x1024xf32, #tpu.memory_space<vmem>>, vector<8x892xf32>
    %89 = vector.broadcast %87 : f32 to vector<8x892xf32>
    %90 = arith.mulf %89, %88 : vector<8x892xf32>
    %91 = arith.addf %86, %90 : vector<8x892xf32>
    %c18 = arith.constant 18 : index
    %92 = memref.load %arg1[%c18] : memref<125xf32, #tpu.memory_space<smem>>
    %c0_24 = arith.constant 0 : index
    %c99 = arith.constant 99 : index
    %93 = vector.load %arg3[%c0_24, %c99] : memref<8x1024xf32, #tpu.memory_space<vmem>>, vector<8x892xf32>
    %94 = vector.broadcast %92 : f32 to vector<8x892xf32>
    %95 = arith.mulf %94, %93 : vector<8x892xf32>
    %96 = arith.addf %91, %95 : vector<8x892xf32>
    %c19 = arith.constant 19 : index
    %97 = memref.load %arg1[%c19] : memref<125xf32, #tpu.memory_space<smem>>
    %c0_25 = arith.constant 0 : index
    %c100 = arith.constant 100 : index
    %98 = vector.load %arg3[%c0_25, %c100] : memref<8x1024xf32, #tpu.memory_space<vmem>>, vector<8x892xf32>
    %99 = vector.broadcast %97 : f32 to vector<8x892xf32>
    %100 = arith.mulf %99, %98 : vector<8x892xf32>
    %101 = arith.addf %96, %100 : vector<8x892xf32>
    %c20 = arith.constant 20 : index
    %102 = memref.load %arg1[%c20] : memref<125xf32, #tpu.memory_space<smem>>
    %c0_26 = arith.constant 0 : index
    %c128 = arith.constant 128 : index
    %103 = vector.load %arg3[%c0_26, %c128] : memref<8x1024xf32, #tpu.memory_space<vmem>>, vector<8x892xf32>
    %104 = vector.broadcast %102 : f32 to vector<8x892xf32>
    %105 = arith.mulf %104, %103 : vector<8x892xf32>
    %106 = arith.addf %101, %105 : vector<8x892xf32>
    %c21 = arith.constant 21 : index
    %107 = memref.load %arg1[%c21] : memref<125xf32, #tpu.memory_space<smem>>
    %c0_27 = arith.constant 0 : index
    %c129 = arith.constant 129 : index
    %108 = vector.load %arg3[%c0_27, %c129] : memref<8x1024xf32, #tpu.memory_space<vmem>>, vector<8x892xf32>
    %109 = vector.broadcast %107 : f32 to vector<8x892xf32>
    %110 = arith.mulf %109, %108 : vector<8x892xf32>
    %111 = arith.addf %106, %110 : vector<8x892xf32>
    %c22 = arith.constant 22 : index
    %112 = memref.load %arg1[%c22] : memref<125xf32, #tpu.memory_space<smem>>
    %c0_28 = arith.constant 0 : index
    %c130 = arith.constant 130 : index
    %113 = vector.load %arg3[%c0_28, %c130] : memref<8x1024xf32, #tpu.memory_space<vmem>>, vector<8x892xf32>
    %114 = vector.broadcast %112 : f32 to vector<8x892xf32>
    %115 = arith.mulf %114, %113 : vector<8x892xf32>
    %116 = arith.addf %111, %115 : vector<8x892xf32>
    %c23 = arith.constant 23 : index
    %117 = memref.load %arg1[%c23] : memref<125xf32, #tpu.memory_space<smem>>
    %c0_29 = arith.constant 0 : index
    %c131 = arith.constant 131 : index
    %118 = vector.load %arg3[%c0_29, %c131] : memref<8x1024xf32, #tpu.memory_space<vmem>>, vector<8x892xf32>
    %119 = vector.broadcast %117 : f32 to vector<8x892xf32>
    %120 = arith.mulf %119, %118 : vector<8x892xf32>
    %121 = arith.addf %116, %120 : vector<8x892xf32>
    %c24 = arith.constant 24 : index
    %122 = memref.load %arg1[%c24] : memref<125xf32, #tpu.memory_space<smem>>
    %c0_30 = arith.constant 0 : index
    %c132 = arith.constant 132 : index
    %123 = vector.load %arg3[%c0_30, %c132] : memref<8x1024xf32, #tpu.memory_space<vmem>>, vector<8x892xf32>
    %124 = vector.broadcast %122 : f32 to vector<8x892xf32>
    %125 = arith.mulf %124, %123 : vector<8x892xf32>
    %126 = arith.addf %121, %125 : vector<8x892xf32>
    %127 = vector.extract_strided_slice %126 {offsets = [0, 0], sizes = [8, 859], strides = [1, 1]} : vector<8x892xf32> to vector<8x859xf32>
    %128 = vector.extract_strided_slice %126 {offsets = [0, 1], sizes = [8, 859], strides = [1, 1]} : vector<8x892xf32> to vector<8x859xf32>
    %129 = arith.maximumf %127, %128 : vector<8x859xf32>
    %130 = vector.extract_strided_slice %126 {offsets = [0, 32], sizes = [8, 859], strides = [1, 1]} : vector<8x892xf32> to vector<8x859xf32>
    %131 = vector.extract_strided_slice %126 {offsets = [0, 33], sizes = [8, 859], strides = [1, 1]} : vector<8x892xf32> to vector<8x859xf32>
    %132 = arith.maximumf %130, %131 : vector<8x859xf32>
    %133 = arith.maximumf %129, %132 : vector<8x859xf32>
    %c0_31 = arith.constant 0 : index
    %134 = memref.load %arg2[%c0_31] : memref<5xf32, #tpu.memory_space<smem>>
    %135 = vector.broadcast %134 : f32 to vector<8x859xf32>
    %136 = arith.addf %133, %135 : vector<8x859xf32>
    %cst_32 = arith.constant 0.000000e+00 : f32
    %137 = vector.broadcast %cst_32 : f32 to vector<8x859xf32>
    %138 = arith.maximumf %136, %137 : vector<8x859xf32>
    %c0_33 = arith.constant 0 : index
    %c0_34 = arith.constant 0 : index
    %c0_35 = arith.constant 0 : index
    %139 = vector.load %arg4[%c0_33, %c0_34, %c0_35] : memref<5x859x128xf32, #tpu.memory_space<vmem>>, vector<1x859x128xf32>
    %140 = vector.shape_cast %139 : vector<1x859x128xf32> to vector<859x128xf32>
    %cst_36 = arith.constant dense<0.000000e+00> : vector<8x128xf32>
    %141 = tpu.matmul %138, %140, %cst_36 {dimension_numbers = #tpu.dot_dimension_numbers<[1], [0], [0], [1], [0, 0, 1, 1], [], []>} : vector<8x859xf32>, vector<859x128xf32>, vector<8x128xf32> -> vector<8x128xf32>
    %142 = arith.addf %0, %141 : vector<8x128xf32>
    %cst_37 = arith.constant 0.000000e+00 : f32
    %143 = vector.broadcast %cst_37 : f32 to vector<8x892xf32>
    %c25 = arith.constant 25 : index
    %144 = memref.load %arg1[%c25] : memref<125xf32, #tpu.memory_space<smem>>
    %c0_38 = arith.constant 0 : index
    %c0_39 = arith.constant 0 : index
    %145 = vector.load %arg3[%c0_38, %c0_39] : memref<8x1024xf32, #tpu.memory_space<vmem>>, vector<8x892xf32>
    %146 = vector.broadcast %144 : f32 to vector<8x892xf32>
    %147 = arith.mulf %146, %145 : vector<8x892xf32>
    %148 = arith.addf %143, %147 : vector<8x892xf32>
    %c26 = arith.constant 26 : index
    %149 = memref.load %arg1[%c26] : memref<125xf32, #tpu.memory_space<smem>>
    %c0_40 = arith.constant 0 : index
    %c1_41 = arith.constant 1 : index
    %150 = vector.load %arg3[%c0_40, %c1_41] : memref<8x1024xf32, #tpu.memory_space<vmem>>, vector<8x892xf32>
    %151 = vector.broadcast %149 : f32 to vector<8x892xf32>
    %152 = arith.mulf %151, %150 : vector<8x892xf32>
    %153 = arith.addf %148, %152 : vector<8x892xf32>
    %c27 = arith.constant 27 : index
    %154 = memref.load %arg1[%c27] : memref<125xf32, #tpu.memory_space<smem>>
    %c0_42 = arith.constant 0 : index
    %c2_43 = arith.constant 2 : index
    %155 = vector.load %arg3[%c0_42, %c2_43] : memref<8x1024xf32, #tpu.memory_space<vmem>>, vector<8x892xf32>
    %156 = vector.broadcast %154 : f32 to vector<8x892xf32>
    %157 = arith.mulf %156, %155 : vector<8x892xf32>
    %158 = arith.addf %153, %157 : vector<8x892xf32>
    %c28 = arith.constant 28 : index
    %159 = memref.load %arg1[%c28] : memref<125xf32, #tpu.memory_space<smem>>
    %c0_44 = arith.constant 0 : index
    %c3_45 = arith.constant 3 : index
    %160 = vector.load %arg3[%c0_44, %c3_45] : memref<8x1024xf32, #tpu.memory_space<vmem>>, vector<8x892xf32>
    %161 = vector.broadcast %159 : f32 to vector<8x892xf32>
    %162 = arith.mulf %161, %160 : vector<8x892xf32>
    %163 = arith.addf %158, %162 : vector<8x892xf32>
    %c29 = arith.constant 29 : index
    %164 = memref.load %arg1[%c29] : memref<125xf32, #tpu.memory_space<smem>>
    %c0_46 = arith.constant 0 : index
    %c4_47 = arith.constant 4 : index
    %165 = vector.load %arg3[%c0_46, %c4_47] : memref<8x1024xf32, #tpu.memory_space<vmem>>, vector<8x892xf32>
    %166 = vector.broadcast %164 : f32 to vector<8x892xf32>
    %167 = arith.mulf %166, %165 : vector<8x892xf32>
    %168 = arith.addf %163, %167 : vector<8x892xf32>
    %c30 = arith.constant 30 : index
    %169 = memref.load %arg1[%c30] : memref<125xf32, #tpu.memory_space<smem>>
    %c0_48 = arith.constant 0 : index
    %c32_49 = arith.constant 32 : index
    %170 = vector.load %arg3[%c0_48, %c32_49] : memref<8x1024xf32, #tpu.memory_space<vmem>>, vector<8x892xf32>
    %171 = vector.broadcast %169 : f32 to vector<8x892xf32>
    %172 = arith.mulf %171, %170 : vector<8x892xf32>
    %173 = arith.addf %168, %172 : vector<8x892xf32>
    %c31 = arith.constant 31 : index
    %174 = memref.load %arg1[%c31] : memref<125xf32, #tpu.memory_space<smem>>
    %c0_50 = arith.constant 0 : index
    %c33_51 = arith.constant 33 : index
    %175 = vector.load %arg3[%c0_50, %c33_51] : memref<8x1024xf32, #tpu.memory_space<vmem>>, vector<8x892xf32>
    %176 = vector.broadcast %174 : f32 to vector<8x892xf32>
    %177 = arith.mulf %176, %175 : vector<8x892xf32>
    %178 = arith.addf %173, %177 : vector<8x892xf32>
    %c32_52 = arith.constant 32 : index
    %179 = memref.load %arg1[%c32_52] : memref<125xf32, #tpu.memory_space<smem>>
    %c0_53 = arith.constant 0 : index
    %c34_54 = arith.constant 34 : index
    %180 = vector.load %arg3[%c0_53, %c34_54] : memref<8x1024xf32, #tpu.memory_space<vmem>>, vector<8x892xf32>
    %181 = vector.broadcast %179 : f32 to vector<8x892xf32>
    %182 = arith.mulf %181, %180 : vector<8x892xf32>
    %183 = arith.addf %178, %182 : vector<8x892xf32>
    %c33_55 = arith.constant 33 : index
    %184 = memref.load %arg1[%c33_55] : memref<125xf32, #tpu.memory_space<smem>>
    %c0_56 = arith.constant 0 : index
    %c35_57 = arith.constant 35 : index
    %185 = vector.load %arg3[%c0_56, %c35_57] : memref<8x1024xf32, #tpu.memory_space<vmem>>, vector<8x892xf32>
    %186 = vector.broadcast %184 : f32 to vector<8x892xf32>
    %187 = arith.mulf %186, %185 : vector<8x892xf32>
    %188 = arith.addf %183, %187 : vector<8x892xf32>
    %c34_58 = arith.constant 34 : index
    %189 = memref.load %arg1[%c34_58] : memref<125xf32, #tpu.memory_space<smem>>
    %c0_59 = arith.constant 0 : index
    %c36_60 = arith.constant 36 : index
    %190 = vector.load %arg3[%c0_59, %c36_60] : memref<8x1024xf32, #tpu.memory_space<vmem>>, vector<8x892xf32>
    %191 = vector.broadcast %189 : f32 to vector<8x892xf32>
    %192 = arith.mulf %191, %190 : vector<8x892xf32>
    %193 = arith.addf %188, %192 : vector<8x892xf32>
    %c35_61 = arith.constant 35 : index
    %194 = memref.load %arg1[%c35_61] : memref<125xf32, #tpu.memory_space<smem>>
    %c0_62 = arith.constant 0 : index
    %c64_63 = arith.constant 64 : index
    %195 = vector.load %arg3[%c0_62, %c64_63] : memref<8x1024xf32, #tpu.memory_space<vmem>>, vector<8x892xf32>
    %196 = vector.broadcast %194 : f32 to vector<8x892xf32>
    %197 = arith.mulf %196, %195 : vector<8x892xf32>
    %198 = arith.addf %193, %197 : vector<8x892xf32>
    %c36_64 = arith.constant 36 : index
    %199 = memref.load %arg1[%c36_64] : memref<125xf32, #tpu.memory_space<smem>>
    %c0_65 = arith.constant 0 : index
    %c65_66 = arith.constant 65 : index
    %200 = vector.load %arg3[%c0_65, %c65_66] : memref<8x1024xf32, #tpu.memory_space<vmem>>, vector<8x892xf32>
    %201 = vector.broadcast %199 : f32 to vector<8x892xf32>
    %202 = arith.mulf %201, %200 : vector<8x892xf32>
    %203 = arith.addf %198, %202 : vector<8x892xf32>
    %c37 = arith.constant 37 : index
    %204 = memref.load %arg1[%c37] : memref<125xf32, #tpu.memory_space<smem>>
    %c0_67 = arith.constant 0 : index
    %c66_68 = arith.constant 66 : index
    %205 = vector.load %arg3[%c0_67, %c66_68] : memref<8x1024xf32, #tpu.memory_space<vmem>>, vector<8x892xf32>
    %206 = vector.broadcast %204 : f32 to vector<8x892xf32>
    %207 = arith.mulf %206, %205 : vector<8x892xf32>
    %208 = arith.addf %203, %207 : vector<8x892xf32>
    %c38 = arith.constant 38 : index
    %209 = memref.load %arg1[%c38] : memref<125xf32, #tpu.memory_space<smem>>
    %c0_69 = arith.constant 0 : index
    %c67_70 = arith.constant 67 : index
    %210 = vector.load %arg3[%c0_69, %c67_70] : memref<8x1024xf32, #tpu.memory_space<vmem>>, vector<8x892xf32>
    %211 = vector.broadcast %209 : f32 to vector<8x892xf32>
    %212 = arith.mulf %211, %210 : vector<8x892xf32>
    %213 = arith.addf %208, %212 : vector<8x892xf32>
    %c39 = arith.constant 39 : index
    %214 = memref.load %arg1[%c39] : memref<125xf32, #tpu.memory_space<smem>>
    %c0_71 = arith.constant 0 : index
    %c68_72 = arith.constant 68 : index
    %215 = vector.load %arg3[%c0_71, %c68_72] : memref<8x1024xf32, #tpu.memory_space<vmem>>, vector<8x892xf32>
    %216 = vector.broadcast %214 : f32 to vector<8x892xf32>
    %217 = arith.mulf %216, %215 : vector<8x892xf32>
    %218 = arith.addf %213, %217 : vector<8x892xf32>
    %c40 = arith.constant 40 : index
    %219 = memref.load %arg1[%c40] : memref<125xf32, #tpu.memory_space<smem>>
    %c0_73 = arith.constant 0 : index
    %c96_74 = arith.constant 96 : index
    %220 = vector.load %arg3[%c0_73, %c96_74] : memref<8x1024xf32, #tpu.memory_space<vmem>>, vector<8x892xf32>
    %221 = vector.broadcast %219 : f32 to vector<8x892xf32>
    %222 = arith.mulf %221, %220 : vector<8x892xf32>
    %223 = arith.addf %218, %222 : vector<8x892xf32>
    %c41 = arith.constant 41 : index
    %224 = memref.load %arg1[%c41] : memref<125xf32, #tpu.memory_space<smem>>
    %c0_75 = arith.constant 0 : index
    %c97_76 = arith.constant 97 : index
    %225 = vector.load %arg3[%c0_75, %c97_76] : memref<8x1024xf32, #tpu.memory_space<vmem>>, vector<8x892xf32>
    %226 = vector.broadcast %224 : f32 to vector<8x892xf32>
    %227 = arith.mulf %226, %225 : vector<8x892xf32>
    %228 = arith.addf %223, %227 : vector<8x892xf32>
    %c42 = arith.constant 42 : index
    %229 = memref.load %arg1[%c42] : memref<125xf32, #tpu.memory_space<smem>>
    %c0_77 = arith.constant 0 : index
    %c98_78 = arith.constant 98 : index
    %230 = vector.load %arg3[%c0_77, %c98_78] : memref<8x1024xf32, #tpu.memory_space<vmem>>, vector<8x892xf32>
    %231 = vector.broadcast %229 : f32 to vector<8x892xf32>
    %232 = arith.mulf %231, %230 : vector<8x892xf32>
    %233 = arith.addf %228, %232 : vector<8x892xf32>
    %c43 = arith.constant 43 : index
    %234 = memref.load %arg1[%c43] : memref<125xf32, #tpu.memory_space<smem>>
    %c0_79 = arith.constant 0 : index
    %c99_80 = arith.constant 99 : index
    %235 = vector.load %arg3[%c0_79, %c99_80] : memref<8x1024xf32, #tpu.memory_space<vmem>>, vector<8x892xf32>
    %236 = vector.broadcast %234 : f32 to vector<8x892xf32>
    %237 = arith.mulf %236, %235 : vector<8x892xf32>
    %238 = arith.addf %233, %237 : vector<8x892xf32>
    %c44 = arith.constant 44 : index
    %239 = memref.load %arg1[%c44] : memref<125xf32, #tpu.memory_space<smem>>
    %c0_81 = arith.constant 0 : index
    %c100_82 = arith.constant 100 : index
    %240 = vector.load %arg3[%c0_81, %c100_82] : memref<8x1024xf32, #tpu.memory_space<vmem>>, vector<8x892xf32>
    %241 = vector.broadcast %239 : f32 to vector<8x892xf32>
    %242 = arith.mulf %241, %240 : vector<8x892xf32>
    %243 = arith.addf %238, %242 : vector<8x892xf32>
    %c45 = arith.constant 45 : index
    %244 = memref.load %arg1[%c45] : memref<125xf32, #tpu.memory_space<smem>>
    %c0_83 = arith.constant 0 : index
    %c128_84 = arith.constant 128 : index
    %245 = vector.load %arg3[%c0_83, %c128_84] : memref<8x1024xf32, #tpu.memory_space<vmem>>, vector<8x892xf32>
    %246 = vector.broadcast %244 : f32 to vector<8x892xf32>
    %247 = arith.mulf %246, %245 : vector<8x892xf32>
    %248 = arith.addf %243, %247 : vector<8x892xf32>
    %c46 = arith.constant 46 : index
    %249 = memref.load %arg1[%c46] : memref<125xf32, #tpu.memory_space<smem>>
    %c0_85 = arith.constant 0 : index
    %c129_86 = arith.constant 129 : index
    %250 = vector.load %arg3[%c0_85, %c129_86] : memref<8x1024xf32, #tpu.memory_space<vmem>>, vector<8x892xf32>
    %251 = vector.broadcast %249 : f32 to vector<8x892xf32>
    %252 = arith.mulf %251, %250 : vector<8x892xf32>
    %253 = arith.addf %248, %252 : vector<8x892xf32>
    %c47 = arith.constant 47 : index
    %254 = memref.load %arg1[%c47] : memref<125xf32, #tpu.memory_space<smem>>
    %c0_87 = arith.constant 0 : index
    %c130_88 = arith.constant 130 : index
    %255 = vector.load %arg3[%c0_87, %c130_88] : memref<8x1024xf32, #tpu.memory_space<vmem>>, vector<8x892xf32>
    %256 = vector.broadcast %254 : f32 to vector<8x892xf32>
    %257 = arith.mulf %256, %255 : vector<8x892xf32>
    %258 = arith.addf %253, %257 : vector<8x892xf32>
    %c48 = arith.constant 48 : index
    %259 = memref.load %arg1[%c48] : memref<125xf32, #tpu.memory_space<smem>>
    %c0_89 = arith.constant 0 : index
    %c131_90 = arith.constant 131 : index
    %260 = vector.load %arg3[%c0_89, %c131_90] : memref<8x1024xf32, #tpu.memory_space<vmem>>, vector<8x892xf32>
    %261 = vector.broadcast %259 : f32 to vector<8x892xf32>
    %262 = arith.mulf %261, %260 : vector<8x892xf32>
    %263 = arith.addf %258, %262 : vector<8x892xf32>
    %c49 = arith.constant 49 : index
    %264 = memref.load %arg1[%c49] : memref<125xf32, #tpu.memory_space<smem>>
    %c0_91 = arith.constant 0 : index
    %c132_92 = arith.constant 132 : index
    %265 = vector.load %arg3[%c0_91, %c132_92] : memref<8x1024xf32, #tpu.memory_space<vmem>>, vector<8x892xf32>
    %266 = vector.broadcast %264 : f32 to vector<8x892xf32>
    %267 = arith.mulf %266, %265 : vector<8x892xf32>
    %268 = arith.addf %263, %267 : vector<8x892xf32>
    %269 = vector.extract_strided_slice %268 {offsets = [0, 0], sizes = [8, 859], strides = [1, 1]} : vector<8x892xf32> to vector<8x859xf32>
    %270 = vector.extract_strided_slice %268 {offsets = [0, 1], sizes = [8, 859], strides = [1, 1]} : vector<8x892xf32> to vector<8x859xf32>
    %271 = arith.maximumf %269, %270 : vector<8x859xf32>
    %272 = vector.extract_strided_slice %268 {offsets = [0, 32], sizes = [8, 859], strides = [1, 1]} : vector<8x892xf32> to vector<8x859xf32>
    %273 = vector.extract_strided_slice %268 {offsets = [0, 33], sizes = [8, 859], strides = [1, 1]} : vector<8x892xf32> to vector<8x859xf32>
    %274 = arith.maximumf %272, %273 : vector<8x859xf32>
    %275 = arith.maximumf %271, %274 : vector<8x859xf32>
    %c1_93 = arith.constant 1 : index
    %276 = memref.load %arg2[%c1_93] : memref<5xf32, #tpu.memory_space<smem>>
    %277 = vector.broadcast %276 : f32 to vector<8x859xf32>
    %278 = arith.addf %275, %277 : vector<8x859xf32>
    %cst_94 = arith.constant 0.000000e+00 : f32
    %279 = vector.broadcast %cst_94 : f32 to vector<8x859xf32>
    %280 = arith.maximumf %278, %279 : vector<8x859xf32>
    %c1_95 = arith.constant 1 : index
    %c0_96 = arith.constant 0 : index
    %c0_97 = arith.constant 0 : index
    %281 = vector.load %arg4[%c1_95, %c0_96, %c0_97] : memref<5x859x128xf32, #tpu.memory_space<vmem>>, vector<1x859x128xf32>
    %282 = vector.shape_cast %281 : vector<1x859x128xf32> to vector<859x128xf32>
    %cst_98 = arith.constant dense<0.000000e+00> : vector<8x128xf32>
    %283 = tpu.matmul %280, %282, %cst_98 {dimension_numbers = #tpu.dot_dimension_numbers<[1], [0], [0], [1], [0, 0, 1, 1], [], []>} : vector<8x859xf32>, vector<859x128xf32>, vector<8x128xf32> -> vector<8x128xf32>
    %284 = arith.addf %142, %283 : vector<8x128xf32>
    %cst_99 = arith.constant 0.000000e+00 : f32
    %285 = vector.broadcast %cst_99 : f32 to vector<8x892xf32>
    %c50 = arith.constant 50 : index
    %286 = memref.load %arg1[%c50] : memref<125xf32, #tpu.memory_space<smem>>
    %c0_100 = arith.constant 0 : index
    %c0_101 = arith.constant 0 : index
    %287 = vector.load %arg3[%c0_100, %c0_101] : memref<8x1024xf32, #tpu.memory_space<vmem>>, vector<8x892xf32>
    %288 = vector.broadcast %286 : f32 to vector<8x892xf32>
    %289 = arith.mulf %288, %287 : vector<8x892xf32>
    %290 = arith.addf %285, %289 : vector<8x892xf32>
    %c51 = arith.constant 51 : index
    %291 = memref.load %arg1[%c51] : memref<125xf32, #tpu.memory_space<smem>>
    %c0_102 = arith.constant 0 : index
    %c1_103 = arith.constant 1 : index
    %292 = vector.load %arg3[%c0_102, %c1_103] : memref<8x1024xf32, #tpu.memory_space<vmem>>, vector<8x892xf32>
    %293 = vector.broadcast %291 : f32 to vector<8x892xf32>
    %294 = arith.mulf %293, %292 : vector<8x892xf32>
    %295 = arith.addf %290, %294 : vector<8x892xf32>
    %c52 = arith.constant 52 : index
    %296 = memref.load %arg1[%c52] : memref<125xf32, #tpu.memory_space<smem>>
    %c0_104 = arith.constant 0 : index
    %c2_105 = arith.constant 2 : index
    %297 = vector.load %arg3[%c0_104, %c2_105] : memref<8x1024xf32, #tpu.memory_space<vmem>>, vector<8x892xf32>
    %298 = vector.broadcast %296 : f32 to vector<8x892xf32>
    %299 = arith.mulf %298, %297 : vector<8x892xf32>
    %300 = arith.addf %295, %299 : vector<8x892xf32>
    %c53 = arith.constant 53 : index
    %301 = memref.load %arg1[%c53] : memref<125xf32, #tpu.memory_space<smem>>
    %c0_106 = arith.constant 0 : index
    %c3_107 = arith.constant 3 : index
    %302 = vector.load %arg3[%c0_106, %c3_107] : memref<8x1024xf32, #tpu.memory_space<vmem>>, vector<8x892xf32>
    %303 = vector.broadcast %301 : f32 to vector<8x892xf32>
    %304 = arith.mulf %303, %302 : vector<8x892xf32>
    %305 = arith.addf %300, %304 : vector<8x892xf32>
    %c54 = arith.constant 54 : index
    %306 = memref.load %arg1[%c54] : memref<125xf32, #tpu.memory_space<smem>>
    %c0_108 = arith.constant 0 : index
    %c4_109 = arith.constant 4 : index
    %307 = vector.load %arg3[%c0_108, %c4_109] : memref<8x1024xf32, #tpu.memory_space<vmem>>, vector<8x892xf32>
    %308 = vector.broadcast %306 : f32 to vector<8x892xf32>
    %309 = arith.mulf %308, %307 : vector<8x892xf32>
    %310 = arith.addf %305, %309 : vector<8x892xf32>
    %c55 = arith.constant 55 : index
    %311 = memref.load %arg1[%c55] : memref<125xf32, #tpu.memory_space<smem>>
    %c0_110 = arith.constant 0 : index
    %c32_111 = arith.constant 32 : index
    %312 = vector.load %arg3[%c0_110, %c32_111] : memref<8x1024xf32, #tpu.memory_space<vmem>>, vector<8x892xf32>
    %313 = vector.broadcast %311 : f32 to vector<8x892xf32>
    %314 = arith.mulf %313, %312 : vector<8x892xf32>
    %315 = arith.addf %310, %314 : vector<8x892xf32>
    %c56 = arith.constant 56 : index
    %316 = memref.load %arg1[%c56] : memref<125xf32, #tpu.memory_space<smem>>
    %c0_112 = arith.constant 0 : index
    %c33_113 = arith.constant 33 : index
    %317 = vector.load %arg3[%c0_112, %c33_113] : memref<8x1024xf32, #tpu.memory_space<vmem>>, vector<8x892xf32>
    %318 = vector.broadcast %316 : f32 to vector<8x892xf32>
    %319 = arith.mulf %318, %317 : vector<8x892xf32>
    %320 = arith.addf %315, %319 : vector<8x892xf32>
    %c57 = arith.constant 57 : index
    %321 = memref.load %arg1[%c57] : memref<125xf32, #tpu.memory_space<smem>>
    %c0_114 = arith.constant 0 : index
    %c34_115 = arith.constant 34 : index
    %322 = vector.load %arg3[%c0_114, %c34_115] : memref<8x1024xf32, #tpu.memory_space<vmem>>, vector<8x892xf32>
    %323 = vector.broadcast %321 : f32 to vector<8x892xf32>
    %324 = arith.mulf %323, %322 : vector<8x892xf32>
    %325 = arith.addf %320, %324 : vector<8x892xf32>
    %c58 = arith.constant 58 : index
    %326 = memref.load %arg1[%c58] : memref<125xf32, #tpu.memory_space<smem>>
    %c0_116 = arith.constant 0 : index
    %c35_117 = arith.constant 35 : index
    %327 = vector.load %arg3[%c0_116, %c35_117] : memref<8x1024xf32, #tpu.memory_space<vmem>>, vector<8x892xf32>
    %328 = vector.broadcast %326 : f32 to vector<8x892xf32>
    %329 = arith.mulf %328, %327 : vector<8x892xf32>
    %330 = arith.addf %325, %329 : vector<8x892xf32>
    %c59 = arith.constant 59 : index
    %331 = memref.load %arg1[%c59] : memref<125xf32, #tpu.memory_space<smem>>
    %c0_118 = arith.constant 0 : index
    %c36_119 = arith.constant 36 : index
    %332 = vector.load %arg3[%c0_118, %c36_119] : memref<8x1024xf32, #tpu.memory_space<vmem>>, vector<8x892xf32>
    %333 = vector.broadcast %331 : f32 to vector<8x892xf32>
    %334 = arith.mulf %333, %332 : vector<8x892xf32>
    %335 = arith.addf %330, %334 : vector<8x892xf32>
    %c60 = arith.constant 60 : index
    %336 = memref.load %arg1[%c60] : memref<125xf32, #tpu.memory_space<smem>>
    %c0_120 = arith.constant 0 : index
    %c64_121 = arith.constant 64 : index
    %337 = vector.load %arg3[%c0_120, %c64_121] : memref<8x1024xf32, #tpu.memory_space<vmem>>, vector<8x892xf32>
    %338 = vector.broadcast %336 : f32 to vector<8x892xf32>
    %339 = arith.mulf %338, %337 : vector<8x892xf32>
    %340 = arith.addf %335, %339 : vector<8x892xf32>
    %c61 = arith.constant 61 : index
    %341 = memref.load %arg1[%c61] : memref<125xf32, #tpu.memory_space<smem>>
    %c0_122 = arith.constant 0 : index
    %c65_123 = arith.constant 65 : index
    %342 = vector.load %arg3[%c0_122, %c65_123] : memref<8x1024xf32, #tpu.memory_space<vmem>>, vector<8x892xf32>
    %343 = vector.broadcast %341 : f32 to vector<8x892xf32>
    %344 = arith.mulf %343, %342 : vector<8x892xf32>
    %345 = arith.addf %340, %344 : vector<8x892xf32>
    %c62 = arith.constant 62 : index
    %346 = memref.load %arg1[%c62] : memref<125xf32, #tpu.memory_space<smem>>
    %c0_124 = arith.constant 0 : index
    %c66_125 = arith.constant 66 : index
    %347 = vector.load %arg3[%c0_124, %c66_125] : memref<8x1024xf32, #tpu.memory_space<vmem>>, vector<8x892xf32>
    %348 = vector.broadcast %346 : f32 to vector<8x892xf32>
    %349 = arith.mulf %348, %347 : vector<8x892xf32>
    %350 = arith.addf %345, %349 : vector<8x892xf32>
    %c63 = arith.constant 63 : index
    %351 = memref.load %arg1[%c63] : memref<125xf32, #tpu.memory_space<smem>>
    %c0_126 = arith.constant 0 : index
    %c67_127 = arith.constant 67 : index
    %352 = vector.load %arg3[%c0_126, %c67_127] : memref<8x1024xf32, #tpu.memory_space<vmem>>, vector<8x892xf32>
    %353 = vector.broadcast %351 : f32 to vector<8x892xf32>
    %354 = arith.mulf %353, %352 : vector<8x892xf32>
    %355 = arith.addf %350, %354 : vector<8x892xf32>
    %c64_128 = arith.constant 64 : index
    %356 = memref.load %arg1[%c64_128] : memref<125xf32, #tpu.memory_space<smem>>
    %c0_129 = arith.constant 0 : index
    %c68_130 = arith.constant 68 : index
    %357 = vector.load %arg3[%c0_129, %c68_130] : memref<8x1024xf32, #tpu.memory_space<vmem>>, vector<8x892xf32>
    %358 = vector.broadcast %356 : f32 to vector<8x892xf32>
    %359 = arith.mulf %358, %357 : vector<8x892xf32>
    %360 = arith.addf %355, %359 : vector<8x892xf32>
    %c65_131 = arith.constant 65 : index
    %361 = memref.load %arg1[%c65_131] : memref<125xf32, #tpu.memory_space<smem>>
    %c0_132 = arith.constant 0 : index
    %c96_133 = arith.constant 96 : index
    %362 = vector.load %arg3[%c0_132, %c96_133] : memref<8x1024xf32, #tpu.memory_space<vmem>>, vector<8x892xf32>
    %363 = vector.broadcast %361 : f32 to vector<8x892xf32>
    %364 = arith.mulf %363, %362 : vector<8x892xf32>
    %365 = arith.addf %360, %364 : vector<8x892xf32>
    %c66_134 = arith.constant 66 : index
    %366 = memref.load %arg1[%c66_134] : memref<125xf32, #tpu.memory_space<smem>>
    %c0_135 = arith.constant 0 : index
    %c97_136 = arith.constant 97 : index
    %367 = vector.load %arg3[%c0_135, %c97_136] : memref<8x1024xf32, #tpu.memory_space<vmem>>, vector<8x892xf32>
    %368 = vector.broadcast %366 : f32 to vector<8x892xf32>
    %369 = arith.mulf %368, %367 : vector<8x892xf32>
    %370 = arith.addf %365, %369 : vector<8x892xf32>
    %c67_137 = arith.constant 67 : index
    %371 = memref.load %arg1[%c67_137] : memref<125xf32, #tpu.memory_space<smem>>
    %c0_138 = arith.constant 0 : index
    %c98_139 = arith.constant 98 : index
    %372 = vector.load %arg3[%c0_138, %c98_139] : memref<8x1024xf32, #tpu.memory_space<vmem>>, vector<8x892xf32>
    %373 = vector.broadcast %371 : f32 to vector<8x892xf32>
    %374 = arith.mulf %373, %372 : vector<8x892xf32>
    %375 = arith.addf %370, %374 : vector<8x892xf32>
    %c68_140 = arith.constant 68 : index
    %376 = memref.load %arg1[%c68_140] : memref<125xf32, #tpu.memory_space<smem>>
    %c0_141 = arith.constant 0 : index
    %c99_142 = arith.constant 99 : index
    %377 = vector.load %arg3[%c0_141, %c99_142] : memref<8x1024xf32, #tpu.memory_space<vmem>>, vector<8x892xf32>
    %378 = vector.broadcast %376 : f32 to vector<8x892xf32>
    %379 = arith.mulf %378, %377 : vector<8x892xf32>
    %380 = arith.addf %375, %379 : vector<8x892xf32>
    %c69 = arith.constant 69 : index
    %381 = memref.load %arg1[%c69] : memref<125xf32, #tpu.memory_space<smem>>
    %c0_143 = arith.constant 0 : index
    %c100_144 = arith.constant 100 : index
    %382 = vector.load %arg3[%c0_143, %c100_144] : memref<8x1024xf32, #tpu.memory_space<vmem>>, vector<8x892xf32>
    %383 = vector.broadcast %381 : f32 to vector<8x892xf32>
    %384 = arith.mulf %383, %382 : vector<8x892xf32>
    %385 = arith.addf %380, %384 : vector<8x892xf32>
    %c70 = arith.constant 70 : index
    %386 = memref.load %arg1[%c70] : memref<125xf32, #tpu.memory_space<smem>>
    %c0_145 = arith.constant 0 : index
    %c128_146 = arith.constant 128 : index
    %387 = vector.load %arg3[%c0_145, %c128_146] : memref<8x1024xf32, #tpu.memory_space<vmem>>, vector<8x892xf32>
    %388 = vector.broadcast %386 : f32 to vector<8x892xf32>
    %389 = arith.mulf %388, %387 : vector<8x892xf32>
    %390 = arith.addf %385, %389 : vector<8x892xf32>
    %c71 = arith.constant 71 : index
    %391 = memref.load %arg1[%c71] : memref<125xf32, #tpu.memory_space<smem>>
    %c0_147 = arith.constant 0 : index
    %c129_148 = arith.constant 129 : index
    %392 = vector.load %arg3[%c0_147, %c129_148] : memref<8x1024xf32, #tpu.memory_space<vmem>>, vector<8x892xf32>
    %393 = vector.broadcast %391 : f32 to vector<8x892xf32>
    %394 = arith.mulf %393, %392 : vector<8x892xf32>
    %395 = arith.addf %390, %394 : vector<8x892xf32>
    %c72 = arith.constant 72 : index
    %396 = memref.load %arg1[%c72] : memref<125xf32, #tpu.memory_space<smem>>
    %c0_149 = arith.constant 0 : index
    %c130_150 = arith.constant 130 : index
    %397 = vector.load %arg3[%c0_149, %c130_150] : memref<8x1024xf32, #tpu.memory_space<vmem>>, vector<8x892xf32>
    %398 = vector.broadcast %396 : f32 to vector<8x892xf32>
    %399 = arith.mulf %398, %397 : vector<8x892xf32>
    %400 = arith.addf %395, %399 : vector<8x892xf32>
    %c73 = arith.constant 73 : index
    %401 = memref.load %arg1[%c73] : memref<125xf32, #tpu.memory_space<smem>>
    %c0_151 = arith.constant 0 : index
    %c131_152 = arith.constant 131 : index
    %402 = vector.load %arg3[%c0_151, %c131_152] : memref<8x1024xf32, #tpu.memory_space<vmem>>, vector<8x892xf32>
    %403 = vector.broadcast %401 : f32 to vector<8x892xf32>
    %404 = arith.mulf %403, %402 : vector<8x892xf32>
    %405 = arith.addf %400, %404 : vector<8x892xf32>
    %c74 = arith.constant 74 : index
    %406 = memref.load %arg1[%c74] : memref<125xf32, #tpu.memory_space<smem>>
    %c0_153 = arith.constant 0 : index
    %c132_154 = arith.constant 132 : index
    %407 = vector.load %arg3[%c0_153, %c132_154] : memref<8x1024xf32, #tpu.memory_space<vmem>>, vector<8x892xf32>
    %408 = vector.broadcast %406 : f32 to vector<8x892xf32>
    %409 = arith.mulf %408, %407 : vector<8x892xf32>
    %410 = arith.addf %405, %409 : vector<8x892xf32>
    %411 = vector.extract_strided_slice %410 {offsets = [0, 0], sizes = [8, 859], strides = [1, 1]} : vector<8x892xf32> to vector<8x859xf32>
    %412 = vector.extract_strided_slice %410 {offsets = [0, 1], sizes = [8, 859], strides = [1, 1]} : vector<8x892xf32> to vector<8x859xf32>
    %413 = arith.maximumf %411, %412 : vector<8x859xf32>
    %414 = vector.extract_strided_slice %410 {offsets = [0, 32], sizes = [8, 859], strides = [1, 1]} : vector<8x892xf32> to vector<8x859xf32>
    %415 = vector.extract_strided_slice %410 {offsets = [0, 33], sizes = [8, 859], strides = [1, 1]} : vector<8x892xf32> to vector<8x859xf32>
    %416 = arith.maximumf %414, %415 : vector<8x859xf32>
    %417 = arith.maximumf %413, %416 : vector<8x859xf32>
    %c2_155 = arith.constant 2 : index
    %418 = memref.load %arg2[%c2_155] : memref<5xf32, #tpu.memory_space<smem>>
    %419 = vector.broadcast %418 : f32 to vector<8x859xf32>
    %420 = arith.addf %417, %419 : vector<8x859xf32>
    %cst_156 = arith.constant 0.000000e+00 : f32
    %421 = vector.broadcast %cst_156 : f32 to vector<8x859xf32>
    %422 = arith.maximumf %420, %421 : vector<8x859xf32>
    %c2_157 = arith.constant 2 : index
    %c0_158 = arith.constant 0 : index
    %c0_159 = arith.constant 0 : index
    %423 = vector.load %arg4[%c2_157, %c0_158, %c0_159] : memref<5x859x128xf32, #tpu.memory_space<vmem>>, vector<1x859x128xf32>
    %424 = vector.shape_cast %423 : vector<1x859x128xf32> to vector<859x128xf32>
    %cst_160 = arith.constant dense<0.000000e+00> : vector<8x128xf32>
    %425 = tpu.matmul %422, %424, %cst_160 {dimension_numbers = #tpu.dot_dimension_numbers<[1], [0], [0], [1], [0, 0, 1, 1], [], []>} : vector<8x859xf32>, vector<859x128xf32>, vector<8x128xf32> -> vector<8x128xf32>
    %426 = arith.addf %284, %425 : vector<8x128xf32>
    %cst_161 = arith.constant 0.000000e+00 : f32
    %427 = vector.broadcast %cst_161 : f32 to vector<8x892xf32>
    %c75 = arith.constant 75 : index
    %428 = memref.load %arg1[%c75] : memref<125xf32, #tpu.memory_space<smem>>
    %c0_162 = arith.constant 0 : index
    %c0_163 = arith.constant 0 : index
    %429 = vector.load %arg3[%c0_162, %c0_163] : memref<8x1024xf32, #tpu.memory_space<vmem>>, vector<8x892xf32>
    %430 = vector.broadcast %428 : f32 to vector<8x892xf32>
    %431 = arith.mulf %430, %429 : vector<8x892xf32>
    %432 = arith.addf %427, %431 : vector<8x892xf32>
    %c76 = arith.constant 76 : index
    %433 = memref.load %arg1[%c76] : memref<125xf32, #tpu.memory_space<smem>>
    %c0_164 = arith.constant 0 : index
    %c1_165 = arith.constant 1 : index
    %434 = vector.load %arg3[%c0_164, %c1_165] : memref<8x1024xf32, #tpu.memory_space<vmem>>, vector<8x892xf32>
    %435 = vector.broadcast %433 : f32 to vector<8x892xf32>
    %436 = arith.mulf %435, %434 : vector<8x892xf32>
    %437 = arith.addf %432, %436 : vector<8x892xf32>
    %c77 = arith.constant 77 : index
    %438 = memref.load %arg1[%c77] : memref<125xf32, #tpu.memory_space<smem>>
    %c0_166 = arith.constant 0 : index
    %c2_167 = arith.constant 2 : index
    %439 = vector.load %arg3[%c0_166, %c2_167] : memref<8x1024xf32, #tpu.memory_space<vmem>>, vector<8x892xf32>
    %440 = vector.broadcast %438 : f32 to vector<8x892xf32>
    %441 = arith.mulf %440, %439 : vector<8x892xf32>
    %442 = arith.addf %437, %441 : vector<8x892xf32>
    %c78 = arith.constant 78 : index
    %443 = memref.load %arg1[%c78] : memref<125xf32, #tpu.memory_space<smem>>
    %c0_168 = arith.constant 0 : index
    %c3_169 = arith.constant 3 : index
    %444 = vector.load %arg3[%c0_168, %c3_169] : memref<8x1024xf32, #tpu.memory_space<vmem>>, vector<8x892xf32>
    %445 = vector.broadcast %443 : f32 to vector<8x892xf32>
    %446 = arith.mulf %445, %444 : vector<8x892xf32>
    %447 = arith.addf %442, %446 : vector<8x892xf32>
    %c79 = arith.constant 79 : index
    %448 = memref.load %arg1[%c79] : memref<125xf32, #tpu.memory_space<smem>>
    %c0_170 = arith.constant 0 : index
    %c4_171 = arith.constant 4 : index
    %449 = vector.load %arg3[%c0_170, %c4_171] : memref<8x1024xf32, #tpu.memory_space<vmem>>, vector<8x892xf32>
    %450 = vector.broadcast %448 : f32 to vector<8x892xf32>
    %451 = arith.mulf %450, %449 : vector<8x892xf32>
    %452 = arith.addf %447, %451 : vector<8x892xf32>
    %c80 = arith.constant 80 : index
    %453 = memref.load %arg1[%c80] : memref<125xf32, #tpu.memory_space<smem>>
    %c0_172 = arith.constant 0 : index
    %c32_173 = arith.constant 32 : index
    %454 = vector.load %arg3[%c0_172, %c32_173] : memref<8x1024xf32, #tpu.memory_space<vmem>>, vector<8x892xf32>
    %455 = vector.broadcast %453 : f32 to vector<8x892xf32>
    %456 = arith.mulf %455, %454 : vector<8x892xf32>
    %457 = arith.addf %452, %456 : vector<8x892xf32>
    %c81 = arith.constant 81 : index
    %458 = memref.load %arg1[%c81] : memref<125xf32, #tpu.memory_space<smem>>
    %c0_174 = arith.constant 0 : index
    %c33_175 = arith.constant 33 : index
    %459 = vector.load %arg3[%c0_174, %c33_175] : memref<8x1024xf32, #tpu.memory_space<vmem>>, vector<8x892xf32>
    %460 = vector.broadcast %458 : f32 to vector<8x892xf32>
    %461 = arith.mulf %460, %459 : vector<8x892xf32>
    %462 = arith.addf %457, %461 : vector<8x892xf32>
    %c82 = arith.constant 82 : index
    %463 = memref.load %arg1[%c82] : memref<125xf32, #tpu.memory_space<smem>>
    %c0_176 = arith.constant 0 : index
    %c34_177 = arith.constant 34 : index
    %464 = vector.load %arg3[%c0_176, %c34_177] : memref<8x1024xf32, #tpu.memory_space<vmem>>, vector<8x892xf32>
    %465 = vector.broadcast %463 : f32 to vector<8x892xf32>
    %466 = arith.mulf %465, %464 : vector<8x892xf32>
    %467 = arith.addf %462, %466 : vector<8x892xf32>
    %c83 = arith.constant 83 : index
    %468 = memref.load %arg1[%c83] : memref<125xf32, #tpu.memory_space<smem>>
    %c0_178 = arith.constant 0 : index
    %c35_179 = arith.constant 35 : index
    %469 = vector.load %arg3[%c0_178, %c35_179] : memref<8x1024xf32, #tpu.memory_space<vmem>>, vector<8x892xf32>
    %470 = vector.broadcast %468 : f32 to vector<8x892xf32>
    %471 = arith.mulf %470, %469 : vector<8x892xf32>
    %472 = arith.addf %467, %471 : vector<8x892xf32>
    %c84 = arith.constant 84 : index
    %473 = memref.load %arg1[%c84] : memref<125xf32, #tpu.memory_space<smem>>
    %c0_180 = arith.constant 0 : index
    %c36_181 = arith.constant 36 : index
    %474 = vector.load %arg3[%c0_180, %c36_181] : memref<8x1024xf32, #tpu.memory_space<vmem>>, vector<8x892xf32>
    %475 = vector.broadcast %473 : f32 to vector<8x892xf32>
    %476 = arith.mulf %475, %474 : vector<8x892xf32>
    %477 = arith.addf %472, %476 : vector<8x892xf32>
    %c85 = arith.constant 85 : index
    %478 = memref.load %arg1[%c85] : memref<125xf32, #tpu.memory_space<smem>>
    %c0_182 = arith.constant 0 : index
    %c64_183 = arith.constant 64 : index
    %479 = vector.load %arg3[%c0_182, %c64_183] : memref<8x1024xf32, #tpu.memory_space<vmem>>, vector<8x892xf32>
    %480 = vector.broadcast %478 : f32 to vector<8x892xf32>
    %481 = arith.mulf %480, %479 : vector<8x892xf32>
    %482 = arith.addf %477, %481 : vector<8x892xf32>
    %c86 = arith.constant 86 : index
    %483 = memref.load %arg1[%c86] : memref<125xf32, #tpu.memory_space<smem>>
    %c0_184 = arith.constant 0 : index
    %c65_185 = arith.constant 65 : index
    %484 = vector.load %arg3[%c0_184, %c65_185] : memref<8x1024xf32, #tpu.memory_space<vmem>>, vector<8x892xf32>
    %485 = vector.broadcast %483 : f32 to vector<8x892xf32>
    %486 = arith.mulf %485, %484 : vector<8x892xf32>
    %487 = arith.addf %482, %486 : vector<8x892xf32>
    %c87 = arith.constant 87 : index
    %488 = memref.load %arg1[%c87] : memref<125xf32, #tpu.memory_space<smem>>
    %c0_186 = arith.constant 0 : index
    %c66_187 = arith.constant 66 : index
    %489 = vector.load %arg3[%c0_186, %c66_187] : memref<8x1024xf32, #tpu.memory_space<vmem>>, vector<8x892xf32>
    %490 = vector.broadcast %488 : f32 to vector<8x892xf32>
    %491 = arith.mulf %490, %489 : vector<8x892xf32>
    %492 = arith.addf %487, %491 : vector<8x892xf32>
    %c88 = arith.constant 88 : index
    %493 = memref.load %arg1[%c88] : memref<125xf32, #tpu.memory_space<smem>>
    %c0_188 = arith.constant 0 : index
    %c67_189 = arith.constant 67 : index
    %494 = vector.load %arg3[%c0_188, %c67_189] : memref<8x1024xf32, #tpu.memory_space<vmem>>, vector<8x892xf32>
    %495 = vector.broadcast %493 : f32 to vector<8x892xf32>
    %496 = arith.mulf %495, %494 : vector<8x892xf32>
    %497 = arith.addf %492, %496 : vector<8x892xf32>
    %c89 = arith.constant 89 : index
    %498 = memref.load %arg1[%c89] : memref<125xf32, #tpu.memory_space<smem>>
    %c0_190 = arith.constant 0 : index
    %c68_191 = arith.constant 68 : index
    %499 = vector.load %arg3[%c0_190, %c68_191] : memref<8x1024xf32, #tpu.memory_space<vmem>>, vector<8x892xf32>
    %500 = vector.broadcast %498 : f32 to vector<8x892xf32>
    %501 = arith.mulf %500, %499 : vector<8x892xf32>
    %502 = arith.addf %497, %501 : vector<8x892xf32>
    %c90 = arith.constant 90 : index
    %503 = memref.load %arg1[%c90] : memref<125xf32, #tpu.memory_space<smem>>
    %c0_192 = arith.constant 0 : index
    %c96_193 = arith.constant 96 : index
    %504 = vector.load %arg3[%c0_192, %c96_193] : memref<8x1024xf32, #tpu.memory_space<vmem>>, vector<8x892xf32>
    %505 = vector.broadcast %503 : f32 to vector<8x892xf32>
    %506 = arith.mulf %505, %504 : vector<8x892xf32>
    %507 = arith.addf %502, %506 : vector<8x892xf32>
    %c91 = arith.constant 91 : index
    %508 = memref.load %arg1[%c91] : memref<125xf32, #tpu.memory_space<smem>>
    %c0_194 = arith.constant 0 : index
    %c97_195 = arith.constant 97 : index
    %509 = vector.load %arg3[%c0_194, %c97_195] : memref<8x1024xf32, #tpu.memory_space<vmem>>, vector<8x892xf32>
    %510 = vector.broadcast %508 : f32 to vector<8x892xf32>
    %511 = arith.mulf %510, %509 : vector<8x892xf32>
    %512 = arith.addf %507, %511 : vector<8x892xf32>
    %c92 = arith.constant 92 : index
    %513 = memref.load %arg1[%c92] : memref<125xf32, #tpu.memory_space<smem>>
    %c0_196 = arith.constant 0 : index
    %c98_197 = arith.constant 98 : index
    %514 = vector.load %arg3[%c0_196, %c98_197] : memref<8x1024xf32, #tpu.memory_space<vmem>>, vector<8x892xf32>
    %515 = vector.broadcast %513 : f32 to vector<8x892xf32>
    %516 = arith.mulf %515, %514 : vector<8x892xf32>
    %517 = arith.addf %512, %516 : vector<8x892xf32>
    %c93 = arith.constant 93 : index
    %518 = memref.load %arg1[%c93] : memref<125xf32, #tpu.memory_space<smem>>
    %c0_198 = arith.constant 0 : index
    %c99_199 = arith.constant 99 : index
    %519 = vector.load %arg3[%c0_198, %c99_199] : memref<8x1024xf32, #tpu.memory_space<vmem>>, vector<8x892xf32>
    %520 = vector.broadcast %518 : f32 to vector<8x892xf32>
    %521 = arith.mulf %520, %519 : vector<8x892xf32>
    %522 = arith.addf %517, %521 : vector<8x892xf32>
    %c94 = arith.constant 94 : index
    %523 = memref.load %arg1[%c94] : memref<125xf32, #tpu.memory_space<smem>>
    %c0_200 = arith.constant 0 : index
    %c100_201 = arith.constant 100 : index
    %524 = vector.load %arg3[%c0_200, %c100_201] : memref<8x1024xf32, #tpu.memory_space<vmem>>, vector<8x892xf32>
    %525 = vector.broadcast %523 : f32 to vector<8x892xf32>
    %526 = arith.mulf %525, %524 : vector<8x892xf32>
    %527 = arith.addf %522, %526 : vector<8x892xf32>
    %c95 = arith.constant 95 : index
    %528 = memref.load %arg1[%c95] : memref<125xf32, #tpu.memory_space<smem>>
    %c0_202 = arith.constant 0 : index
    %c128_203 = arith.constant 128 : index
    %529 = vector.load %arg3[%c0_202, %c128_203] : memref<8x1024xf32, #tpu.memory_space<vmem>>, vector<8x892xf32>
    %530 = vector.broadcast %528 : f32 to vector<8x892xf32>
    %531 = arith.mulf %530, %529 : vector<8x892xf32>
    %532 = arith.addf %527, %531 : vector<8x892xf32>
    %c96_204 = arith.constant 96 : index
    %533 = memref.load %arg1[%c96_204] : memref<125xf32, #tpu.memory_space<smem>>
    %c0_205 = arith.constant 0 : index
    %c129_206 = arith.constant 129 : index
    %534 = vector.load %arg3[%c0_205, %c129_206] : memref<8x1024xf32, #tpu.memory_space<vmem>>, vector<8x892xf32>
    %535 = vector.broadcast %533 : f32 to vector<8x892xf32>
    %536 = arith.mulf %535, %534 : vector<8x892xf32>
    %537 = arith.addf %532, %536 : vector<8x892xf32>
    %c97_207 = arith.constant 97 : index
    %538 = memref.load %arg1[%c97_207] : memref<125xf32, #tpu.memory_space<smem>>
    %c0_208 = arith.constant 0 : index
    %c130_209 = arith.constant 130 : index
    %539 = vector.load %arg3[%c0_208, %c130_209] : memref<8x1024xf32, #tpu.memory_space<vmem>>, vector<8x892xf32>
    %540 = vector.broadcast %538 : f32 to vector<8x892xf32>
    %541 = arith.mulf %540, %539 : vector<8x892xf32>
    %542 = arith.addf %537, %541 : vector<8x892xf32>
    %c98_210 = arith.constant 98 : index
    %543 = memref.load %arg1[%c98_210] : memref<125xf32, #tpu.memory_space<smem>>
    %c0_211 = arith.constant 0 : index
    %c131_212 = arith.constant 131 : index
    %544 = vector.load %arg3[%c0_211, %c131_212] : memref<8x1024xf32, #tpu.memory_space<vmem>>, vector<8x892xf32>
    %545 = vector.broadcast %543 : f32 to vector<8x892xf32>
    %546 = arith.mulf %545, %544 : vector<8x892xf32>
    %547 = arith.addf %542, %546 : vector<8x892xf32>
    %c99_213 = arith.constant 99 : index
    %548 = memref.load %arg1[%c99_213] : memref<125xf32, #tpu.memory_space<smem>>
    %c0_214 = arith.constant 0 : index
    %c132_215 = arith.constant 132 : index
    %549 = vector.load %arg3[%c0_214, %c132_215] : memref<8x1024xf32, #tpu.memory_space<vmem>>, vector<8x892xf32>
    %550 = vector.broadcast %548 : f32 to vector<8x892xf32>
    %551 = arith.mulf %550, %549 : vector<8x892xf32>
    %552 = arith.addf %547, %551 : vector<8x892xf32>
    %553 = vector.extract_strided_slice %552 {offsets = [0, 0], sizes = [8, 859], strides = [1, 1]} : vector<8x892xf32> to vector<8x859xf32>
    %554 = vector.extract_strided_slice %552 {offsets = [0, 1], sizes = [8, 859], strides = [1, 1]} : vector<8x892xf32> to vector<8x859xf32>
    %555 = arith.maximumf %553, %554 : vector<8x859xf32>
    %556 = vector.extract_strided_slice %552 {offsets = [0, 32], sizes = [8, 859], strides = [1, 1]} : vector<8x892xf32> to vector<8x859xf32>
    %557 = vector.extract_strided_slice %552 {offsets = [0, 33], sizes = [8, 859], strides = [1, 1]} : vector<8x892xf32> to vector<8x859xf32>
    %558 = arith.maximumf %556, %557 : vector<8x859xf32>
    %559 = arith.maximumf %555, %558 : vector<8x859xf32>
    %c3_216 = arith.constant 3 : index
    %560 = memref.load %arg2[%c3_216] : memref<5xf32, #tpu.memory_space<smem>>
    %561 = vector.broadcast %560 : f32 to vector<8x859xf32>
    %562 = arith.addf %559, %561 : vector<8x859xf32>
    %cst_217 = arith.constant 0.000000e+00 : f32
    %563 = vector.broadcast %cst_217 : f32 to vector<8x859xf32>
    %564 = arith.maximumf %562, %563 : vector<8x859xf32>
    %c3_218 = arith.constant 3 : index
    %c0_219 = arith.constant 0 : index
    %c0_220 = arith.constant 0 : index
    %565 = vector.load %arg4[%c3_218, %c0_219, %c0_220] : memref<5x859x128xf32, #tpu.memory_space<vmem>>, vector<1x859x128xf32>
    %566 = vector.shape_cast %565 : vector<1x859x128xf32> to vector<859x128xf32>
    %cst_221 = arith.constant dense<0.000000e+00> : vector<8x128xf32>
    %567 = tpu.matmul %564, %566, %cst_221 {dimension_numbers = #tpu.dot_dimension_numbers<[1], [0], [0], [1], [0, 0, 1, 1], [], []>} : vector<8x859xf32>, vector<859x128xf32>, vector<8x128xf32> -> vector<8x128xf32>
    %568 = arith.addf %426, %567 : vector<8x128xf32>
    %cst_222 = arith.constant 0.000000e+00 : f32
    %569 = vector.broadcast %cst_222 : f32 to vector<8x892xf32>
    %c100_223 = arith.constant 100 : index
    %570 = memref.load %arg1[%c100_223] : memref<125xf32, #tpu.memory_space<smem>>
    %c0_224 = arith.constant 0 : index
    %c0_225 = arith.constant 0 : index
    %571 = vector.load %arg3[%c0_224, %c0_225] : memref<8x1024xf32, #tpu.memory_space<vmem>>, vector<8x892xf32>
    %572 = vector.broadcast %570 : f32 to vector<8x892xf32>
    %573 = arith.mulf %572, %571 : vector<8x892xf32>
    %574 = arith.addf %569, %573 : vector<8x892xf32>
    %c101 = arith.constant 101 : index
    %575 = memref.load %arg1[%c101] : memref<125xf32, #tpu.memory_space<smem>>
    %c0_226 = arith.constant 0 : index
    %c1_227 = arith.constant 1 : index
    %576 = vector.load %arg3[%c0_226, %c1_227] : memref<8x1024xf32, #tpu.memory_space<vmem>>, vector<8x892xf32>
    %577 = vector.broadcast %575 : f32 to vector<8x892xf32>
    %578 = arith.mulf %577, %576 : vector<8x892xf32>
    %579 = arith.addf %574, %578 : vector<8x892xf32>
    %c102 = arith.constant 102 : index
    %580 = memref.load %arg1[%c102] : memref<125xf32, #tpu.memory_space<smem>>
    %c0_228 = arith.constant 0 : index
    %c2_229 = arith.constant 2 : index
    %581 = vector.load %arg3[%c0_228, %c2_229] : memref<8x1024xf32, #tpu.memory_space<vmem>>, vector<8x892xf32>
    %582 = vector.broadcast %580 : f32 to vector<8x892xf32>
    %583 = arith.mulf %582, %581 : vector<8x892xf32>
    %584 = arith.addf %579, %583 : vector<8x892xf32>
    %c103 = arith.constant 103 : index
    %585 = memref.load %arg1[%c103] : memref<125xf32, #tpu.memory_space<smem>>
    %c0_230 = arith.constant 0 : index
    %c3_231 = arith.constant 3 : index
    %586 = vector.load %arg3[%c0_230, %c3_231] : memref<8x1024xf32, #tpu.memory_space<vmem>>, vector<8x892xf32>
    %587 = vector.broadcast %585 : f32 to vector<8x892xf32>
    %588 = arith.mulf %587, %586 : vector<8x892xf32>
    %589 = arith.addf %584, %588 : vector<8x892xf32>
    %c104 = arith.constant 104 : index
    %590 = memref.load %arg1[%c104] : memref<125xf32, #tpu.memory_space<smem>>
    %c0_232 = arith.constant 0 : index
    %c4_233 = arith.constant 4 : index
    %591 = vector.load %arg3[%c0_232, %c4_233] : memref<8x1024xf32, #tpu.memory_space<vmem>>, vector<8x892xf32>
    %592 = vector.broadcast %590 : f32 to vector<8x892xf32>
    %593 = arith.mulf %592, %591 : vector<8x892xf32>
    %594 = arith.addf %589, %593 : vector<8x892xf32>
    %c105 = arith.constant 105 : index
    %595 = memref.load %arg1[%c105] : memref<125xf32, #tpu.memory_space<smem>>
    %c0_234 = arith.constant 0 : index
    %c32_235 = arith.constant 32 : index
    %596 = vector.load %arg3[%c0_234, %c32_235] : memref<8x1024xf32, #tpu.memory_space<vmem>>, vector<8x892xf32>
    %597 = vector.broadcast %595 : f32 to vector<8x892xf32>
    %598 = arith.mulf %597, %596 : vector<8x892xf32>
    %599 = arith.addf %594, %598 : vector<8x892xf32>
    %c106 = arith.constant 106 : index
    %600 = memref.load %arg1[%c106] : memref<125xf32, #tpu.memory_space<smem>>
    %c0_236 = arith.constant 0 : index
    %c33_237 = arith.constant 33 : index
    %601 = vector.load %arg3[%c0_236, %c33_237] : memref<8x1024xf32, #tpu.memory_space<vmem>>, vector<8x892xf32>
    %602 = vector.broadcast %600 : f32 to vector<8x892xf32>
    %603 = arith.mulf %602, %601 : vector<8x892xf32>
    %604 = arith.addf %599, %603 : vector<8x892xf32>
    %c107 = arith.constant 107 : index
    %605 = memref.load %arg1[%c107] : memref<125xf32, #tpu.memory_space<smem>>
    %c0_238 = arith.constant 0 : index
    %c34_239 = arith.constant 34 : index
    %606 = vector.load %arg3[%c0_238, %c34_239] : memref<8x1024xf32, #tpu.memory_space<vmem>>, vector<8x892xf32>
    %607 = vector.broadcast %605 : f32 to vector<8x892xf32>
    %608 = arith.mulf %607, %606 : vector<8x892xf32>
    %609 = arith.addf %604, %608 : vector<8x892xf32>
    %c108 = arith.constant 108 : index
    %610 = memref.load %arg1[%c108] : memref<125xf32, #tpu.memory_space<smem>>
    %c0_240 = arith.constant 0 : index
    %c35_241 = arith.constant 35 : index
    %611 = vector.load %arg3[%c0_240, %c35_241] : memref<8x1024xf32, #tpu.memory_space<vmem>>, vector<8x892xf32>
    %612 = vector.broadcast %610 : f32 to vector<8x892xf32>
    %613 = arith.mulf %612, %611 : vector<8x892xf32>
    %614 = arith.addf %609, %613 : vector<8x892xf32>
    %c109 = arith.constant 109 : index
    %615 = memref.load %arg1[%c109] : memref<125xf32, #tpu.memory_space<smem>>
    %c0_242 = arith.constant 0 : index
    %c36_243 = arith.constant 36 : index
    %616 = vector.load %arg3[%c0_242, %c36_243] : memref<8x1024xf32, #tpu.memory_space<vmem>>, vector<8x892xf32>
    %617 = vector.broadcast %615 : f32 to vector<8x892xf32>
    %618 = arith.mulf %617, %616 : vector<8x892xf32>
    %619 = arith.addf %614, %618 : vector<8x892xf32>
    %c110 = arith.constant 110 : index
    %620 = memref.load %arg1[%c110] : memref<125xf32, #tpu.memory_space<smem>>
    %c0_244 = arith.constant 0 : index
    %c64_245 = arith.constant 64 : index
    %621 = vector.load %arg3[%c0_244, %c64_245] : memref<8x1024xf32, #tpu.memory_space<vmem>>, vector<8x892xf32>
    %622 = vector.broadcast %620 : f32 to vector<8x892xf32>
    %623 = arith.mulf %622, %621 : vector<8x892xf32>
    %624 = arith.addf %619, %623 : vector<8x892xf32>
    %c111 = arith.constant 111 : index
    %625 = memref.load %arg1[%c111] : memref<125xf32, #tpu.memory_space<smem>>
    %c0_246 = arith.constant 0 : index
    %c65_247 = arith.constant 65 : index
    %626 = vector.load %arg3[%c0_246, %c65_247] : memref<8x1024xf32, #tpu.memory_space<vmem>>, vector<8x892xf32>
    %627 = vector.broadcast %625 : f32 to vector<8x892xf32>
    %628 = arith.mulf %627, %626 : vector<8x892xf32>
    %629 = arith.addf %624, %628 : vector<8x892xf32>
    %c112 = arith.constant 112 : index
    %630 = memref.load %arg1[%c112] : memref<125xf32, #tpu.memory_space<smem>>
    %c0_248 = arith.constant 0 : index
    %c66_249 = arith.constant 66 : index
    %631 = vector.load %arg3[%c0_248, %c66_249] : memref<8x1024xf32, #tpu.memory_space<vmem>>, vector<8x892xf32>
    %632 = vector.broadcast %630 : f32 to vector<8x892xf32>
    %633 = arith.mulf %632, %631 : vector<8x892xf32>
    %634 = arith.addf %629, %633 : vector<8x892xf32>
    %c113 = arith.constant 113 : index
    %635 = memref.load %arg1[%c113] : memref<125xf32, #tpu.memory_space<smem>>
    %c0_250 = arith.constant 0 : index
    %c67_251 = arith.constant 67 : index
    %636 = vector.load %arg3[%c0_250, %c67_251] : memref<8x1024xf32, #tpu.memory_space<vmem>>, vector<8x892xf32>
    %637 = vector.broadcast %635 : f32 to vector<8x892xf32>
    %638 = arith.mulf %637, %636 : vector<8x892xf32>
    %639 = arith.addf %634, %638 : vector<8x892xf32>
    %c114 = arith.constant 114 : index
    %640 = memref.load %arg1[%c114] : memref<125xf32, #tpu.memory_space<smem>>
    %c0_252 = arith.constant 0 : index
    %c68_253 = arith.constant 68 : index
    %641 = vector.load %arg3[%c0_252, %c68_253] : memref<8x1024xf32, #tpu.memory_space<vmem>>, vector<8x892xf32>
    %642 = vector.broadcast %640 : f32 to vector<8x892xf32>
    %643 = arith.mulf %642, %641 : vector<8x892xf32>
    %644 = arith.addf %639, %643 : vector<8x892xf32>
    %c115 = arith.constant 115 : index
    %645 = memref.load %arg1[%c115] : memref<125xf32, #tpu.memory_space<smem>>
    %c0_254 = arith.constant 0 : index
    %c96_255 = arith.constant 96 : index
    %646 = vector.load %arg3[%c0_254, %c96_255] : memref<8x1024xf32, #tpu.memory_space<vmem>>, vector<8x892xf32>
    %647 = vector.broadcast %645 : f32 to vector<8x892xf32>
    %648 = arith.mulf %647, %646 : vector<8x892xf32>
    %649 = arith.addf %644, %648 : vector<8x892xf32>
    %c116 = arith.constant 116 : index
    %650 = memref.load %arg1[%c116] : memref<125xf32, #tpu.memory_space<smem>>
    %c0_256 = arith.constant 0 : index
    %c97_257 = arith.constant 97 : index
    %651 = vector.load %arg3[%c0_256, %c97_257] : memref<8x1024xf32, #tpu.memory_space<vmem>>, vector<8x892xf32>
    %652 = vector.broadcast %650 : f32 to vector<8x892xf32>
    %653 = arith.mulf %652, %651 : vector<8x892xf32>
    %654 = arith.addf %649, %653 : vector<8x892xf32>
    %c117 = arith.constant 117 : index
    %655 = memref.load %arg1[%c117] : memref<125xf32, #tpu.memory_space<smem>>
    %c0_258 = arith.constant 0 : index
    %c98_259 = arith.constant 98 : index
    %656 = vector.load %arg3[%c0_258, %c98_259] : memref<8x1024xf32, #tpu.memory_space<vmem>>, vector<8x892xf32>
    %657 = vector.broadcast %655 : f32 to vector<8x892xf32>
    %658 = arith.mulf %657, %656 : vector<8x892xf32>
    %659 = arith.addf %654, %658 : vector<8x892xf32>
    %c118 = arith.constant 118 : index
    %660 = memref.load %arg1[%c118] : memref<125xf32, #tpu.memory_space<smem>>
    %c0_260 = arith.constant 0 : index
    %c99_261 = arith.constant 99 : index
    %661 = vector.load %arg3[%c0_260, %c99_261] : memref<8x1024xf32, #tpu.memory_space<vmem>>, vector<8x892xf32>
    %662 = vector.broadcast %660 : f32 to vector<8x892xf32>
    %663 = arith.mulf %662, %661 : vector<8x892xf32>
    %664 = arith.addf %659, %663 : vector<8x892xf32>
    %c119 = arith.constant 119 : index
    %665 = memref.load %arg1[%c119] : memref<125xf32, #tpu.memory_space<smem>>
    %c0_262 = arith.constant 0 : index
    %c100_263 = arith.constant 100 : index
    %666 = vector.load %arg3[%c0_262, %c100_263] : memref<8x1024xf32, #tpu.memory_space<vmem>>, vector<8x892xf32>
    %667 = vector.broadcast %665 : f32 to vector<8x892xf32>
    %668 = arith.mulf %667, %666 : vector<8x892xf32>
    %669 = arith.addf %664, %668 : vector<8x892xf32>
    %c120 = arith.constant 120 : index
    %670 = memref.load %arg1[%c120] : memref<125xf32, #tpu.memory_space<smem>>
    %c0_264 = arith.constant 0 : index
    %c128_265 = arith.constant 128 : index
    %671 = vector.load %arg3[%c0_264, %c128_265] : memref<8x1024xf32, #tpu.memory_space<vmem>>, vector<8x892xf32>
    %672 = vector.broadcast %670 : f32 to vector<8x892xf32>
    %673 = arith.mulf %672, %671 : vector<8x892xf32>
    %674 = arith.addf %669, %673 : vector<8x892xf32>
    %c121 = arith.constant 121 : index
    %675 = memref.load %arg1[%c121] : memref<125xf32, #tpu.memory_space<smem>>
    %c0_266 = arith.constant 0 : index
    %c129_267 = arith.constant 129 : index
    %676 = vector.load %arg3[%c0_266, %c129_267] : memref<8x1024xf32, #tpu.memory_space<vmem>>, vector<8x892xf32>
    %677 = vector.broadcast %675 : f32 to vector<8x892xf32>
    %678 = arith.mulf %677, %676 : vector<8x892xf32>
    %679 = arith.addf %674, %678 : vector<8x892xf32>
    %c122 = arith.constant 122 : index
    %680 = memref.load %arg1[%c122] : memref<125xf32, #tpu.memory_space<smem>>
    %c0_268 = arith.constant 0 : index
    %c130_269 = arith.constant 130 : index
    %681 = vector.load %arg3[%c0_268, %c130_269] : memref<8x1024xf32, #tpu.memory_space<vmem>>, vector<8x892xf32>
    %682 = vector.broadcast %680 : f32 to vector<8x892xf32>
    %683 = arith.mulf %682, %681 : vector<8x892xf32>
    %684 = arith.addf %679, %683 : vector<8x892xf32>
    %c123 = arith.constant 123 : index
    %685 = memref.load %arg1[%c123] : memref<125xf32, #tpu.memory_space<smem>>
    %c0_270 = arith.constant 0 : index
    %c131_271 = arith.constant 131 : index
    %686 = vector.load %arg3[%c0_270, %c131_271] : memref<8x1024xf32, #tpu.memory_space<vmem>>, vector<8x892xf32>
    %687 = vector.broadcast %685 : f32 to vector<8x892xf32>
    %688 = arith.mulf %687, %686 : vector<8x892xf32>
    %689 = arith.addf %684, %688 : vector<8x892xf32>
    %c124 = arith.constant 124 : index
    %690 = memref.load %arg1[%c124] : memref<125xf32, #tpu.memory_space<smem>>
    %c0_272 = arith.constant 0 : index
    %c132_273 = arith.constant 132 : index
    %691 = vector.load %arg3[%c0_272, %c132_273] : memref<8x1024xf32, #tpu.memory_space<vmem>>, vector<8x892xf32>
    %692 = vector.broadcast %690 : f32 to vector<8x892xf32>
    %693 = arith.mulf %692, %691 : vector<8x892xf32>
    %694 = arith.addf %689, %693 : vector<8x892xf32>
    %695 = vector.extract_strided_slice %694 {offsets = [0, 0], sizes = [8, 859], strides = [1, 1]} : vector<8x892xf32> to vector<8x859xf32>
    %696 = vector.extract_strided_slice %694 {offsets = [0, 1], sizes = [8, 859], strides = [1, 1]} : vector<8x892xf32> to vector<8x859xf32>
    %697 = arith.maximumf %695, %696 : vector<8x859xf32>
    %698 = vector.extract_strided_slice %694 {offsets = [0, 32], sizes = [8, 859], strides = [1, 1]} : vector<8x892xf32> to vector<8x859xf32>
    %699 = vector.extract_strided_slice %694 {offsets = [0, 33], sizes = [8, 859], strides = [1, 1]} : vector<8x892xf32> to vector<8x859xf32>
    %700 = arith.maximumf %698, %699 : vector<8x859xf32>
    %701 = arith.maximumf %697, %700 : vector<8x859xf32>
    %c4_274 = arith.constant 4 : index
    %702 = memref.load %arg2[%c4_274] : memref<5xf32, #tpu.memory_space<smem>>
    %703 = vector.broadcast %702 : f32 to vector<8x859xf32>
    %704 = arith.addf %701, %703 : vector<8x859xf32>
    %cst_275 = arith.constant 0.000000e+00 : f32
    %705 = vector.broadcast %cst_275 : f32 to vector<8x859xf32>
    %706 = arith.maximumf %704, %705 : vector<8x859xf32>
    %c4_276 = arith.constant 4 : index
    %c0_277 = arith.constant 0 : index
    %c0_278 = arith.constant 0 : index
    %707 = vector.load %arg4[%c4_276, %c0_277, %c0_278] : memref<5x859x128xf32, #tpu.memory_space<vmem>>, vector<1x859x128xf32>
    %708 = vector.shape_cast %707 : vector<1x859x128xf32> to vector<859x128xf32>
    %cst_279 = arith.constant dense<0.000000e+00> : vector<8x128xf32>
    %709 = tpu.matmul %706, %708, %cst_279 {dimension_numbers = #tpu.dot_dimension_numbers<[1], [0], [0], [1], [0, 0, 1, 1], [], []>} : vector<8x859xf32>, vector<859x128xf32>, vector<8x128xf32> -> vector<8x128xf32>
    %710 = arith.addf %568, %709 : vector<8x128xf32>
    %c0_280 = arith.constant 0 : index
    %c0_281 = arith.constant 0 : index
    %711 = vector.load %arg5[%c0_280, %c0_281] : memref<1x128xf32, #tpu.memory_space<vmem>>, vector<1x128xf32>
    %712 = vector.broadcast %711 : vector<1x128xf32> to vector<8x128xf32>
    %713 = arith.addf %710, %712 : vector<8x128xf32>
    %cst_282 = arith.constant 0.000000e+00 : f32
    %714 = vector.broadcast %cst_282 : f32 to vector<8x128xf32>
    %715 = arith.maximumf %713, %714 : vector<8x128xf32>
    %c0_283 = arith.constant 0 : index
    %c0_284 = arith.constant 0 : index
    %716 = vector.load %arg6[%c0_283, %c0_284] : memref<128x128xf32, #tpu.memory_space<vmem>>, vector<128x128xf32>
    %cst_285 = arith.constant dense<0.000000e+00> : vector<8x128xf32>
    %717 = tpu.matmul %715, %716, %cst_285 {dimension_numbers = #tpu.dot_dimension_numbers<[1], [0], [0], [1], [0, 0, 1, 1], [], []>} : vector<8x128xf32>, vector<128x128xf32>, vector<8x128xf32> -> vector<8x128xf32>
    %c0_286 = arith.constant 0 : index
    %c0_287 = arith.constant 0 : index
    %718 = vector.load %arg7[%c0_286, %c0_287] : memref<1x128xf32, #tpu.memory_space<vmem>>, vector<1x128xf32>
    %719 = vector.broadcast %718 : vector<1x128xf32> to vector<8x128xf32>
    %720 = arith.addf %717, %719 : vector<8x128xf32>
    %721 = tpu.iota {dimensions = array<i32: 1>} : vector<8x128xi32>
    %c10_i32 = arith.constant 10 : i32
    %722 = vector.broadcast %c10_i32 : i32 to vector<8x128xi32>
    %723 = arith.cmpi slt, %721, %722 : vector<8x128xi32>
    %cst_288 = arith.constant -1.000000e+30 : f32
    %724 = vector.broadcast %cst_288 : f32 to vector<8x128xf32>
    %725 = arith.select %723, %720, %724 : vector<8x128xi1>, vector<8x128xf32>
    %cst_289 = arith.constant dense<0xFF800000> : vector<8xf32>
    %726 = vector.multi_reduction <maximumf>, %725, %cst_289 [1] : vector<8x128xf32> to vector<8xf32>
    %727 = vector.shape_cast %726 : vector<8xf32> to vector<8x1xf32>
    %728 = vector.broadcast %727 : vector<8x1xf32> to vector<8x128xf32>
    %729 = arith.subf %725, %728 : vector<8x128xf32>
    %730 = math.exp %729 : vector<8x128xf32>
    %cst_290 = arith.constant dense<0.000000e+00> : vector<8xf32>
    %731 = vector.multi_reduction <add>, %730, %cst_290 [1] : vector<8x128xf32> to vector<8xf32>
    %732 = vector.shape_cast %731 : vector<8xf32> to vector<8x1xf32>
    %cst_291 = arith.constant 1.000000e+00 : f32
    %733 = vector.broadcast %cst_291 : f32 to vector<8x1xf32>
    %734 = arith.divf %733, %732 : vector<8x1xf32>
    %735 = vector.broadcast %734 : vector<8x1xf32> to vector<8x128xf32>
    %736 = arith.mulf %730, %735 : vector<8x128xf32>
    %c0_292 = arith.constant 0 : index
    %c0_293 = arith.constant 0 : index
    %737 = vector.load %arg8[%c0_292, %c0_293] : memref<8x128xf32, #tpu.memory_space<vmem>>, vector<8x128xf32>
    tpu.vector_store %arg8[%c0_292, %c0_293], %736 {strides = array<i32>} : memref<8x128xf32, #tpu.memory_space<vmem>>, vector<8x128xf32>,
    return
  }
  func.func @transform_0(%arg0: i32) -> i32 {
    %c0_i32 = arith.constant 0 : i32
    %c0_i32_0 = arith.constant 0 : i32
    return %c0_i32 : i32
  }
  func.func @transform_1(%arg0: i32) -> i32 {
    %c0_i32 = arith.constant 0 : i32
    %c0_i32_0 = arith.constant 0 : i32
    return %c0_i32 : i32
  }
  func.func @transform_2(%arg0: i32) -> (i32, i32) {
    %c0_i32 = arith.constant 0 : i32
    %c0_i32_0 = arith.constant 0 : i32
    return %arg0, %c0_i32 : i32, i32
  }
  func.func @transform_3(%arg0: i32) -> (i32, i32, i32) {
    %c0_i32 = arith.constant 0 : i32
    %c0_i32_0 = arith.constant 0 : i32
    %c0_i32_1 = arith.constant 0 : i32
    %c0_i32_2 = arith.constant 0 : i32
    return %c0_i32, %c0_i32_0, %c0_i32_1 : i32, i32, i32
  }
  func.func @transform_4(%arg0: i32) -> (i32, i32) {
    %c0_i32 = arith.constant 0 : i32
    %c0_i32_0 = arith.constant 0 : i32
    %c0_i32_1 = arith.constant 0 : i32
    return %c0_i32, %c0_i32_0 : i32, i32
  }
  func.func @transform_5(%arg0: i32) -> (i32, i32) {
    %c0_i32 = arith.constant 0 : i32
    %c0_i32_0 = arith.constant 0 : i32
    %c0_i32_1 = arith.constant 0 : i32
    return %c0_i32, %c0_i32_0 : i32, i32
  }
  func.func @transform_6(%arg0: i32) -> (i32, i32) {
    %c0_i32 = arith.constant 0 : i32
    %c0_i32_0 = arith.constant 0 : i32
    %c0_i32_1 = arith.constant 0 : i32
    return %c0_i32, %c0_i32_0 : i32, i32
  }
  func.func @transform_7(%arg0: i32) -> (i32, i32) {
    %c0_i32 = arith.constant 0 : i32
    %c0_i32_0 = arith.constant 0 : i32
    return %arg0, %c0_i32 : i32, i32
  }
}

</mosaic_0001>

<llo_original>
// kernel: mul.0
$region0: #{mul.0}
  #allocation0 [shape = 's32[1]{0}', space=sflag, size = 0x4, scoped, tag = 'scoped memory for mul.0']
  %s0 = inlined_call_operand.vmem [shape: f32[125], index: 0, kind: input, shape index: {}]
  %s1 = inlined_call_operand.vmem [shape: f32[125], index: 1, kind: input, shape index: {}]
  %s2 = inlined_call_operand.vmem [shape: f32[125], index: 2, kind: output, shape index: {}]
  %v3 = vld [vmem:[%s0] sm:$0x1]
  %v4 = vld [vmem:[%s1] sm:$0x1]
  %5 = xla_tuple %v3, %v4
  %6 = xla_tuple %5
  %v7 = vmul.f32 %v3, %v4
  %8 = xla_tuple %v7
  %9 = vst [vmem:[%s2] sm:$0x1] %v7

// kernel: mnist_forward.1
$region0: #{mnist_forward.1}
  #allocation0 [shape = 'u32[]', space=smem, size = 0x4, offset = 0x4, fixed_abs, tag = 'smem constant byte address 0x4 - core index']
  #allocation1 [shape = 'u32[144,128]{1,0:T(1,128)}', space=vmem, size = 0x12000, scoped, tag = 'internal scratch']
  %s0 = inlined_call_operand.vmem [shape: f32[125], index: 0, kind: input, shape index: {}]
  %s1 = inlined_call_operand.vmem [shape: f32[5], index: 1, kind: input, shape index: {}]
  %s2 = inlined_call_operand.vmem [shape: f32[8,1024], index: 2, kind: input, shape index: {}]
  %s3 = inlined_call_operand.vmem [shape: f32[5,859,128], index: 3, kind: input, shape index: {}]
  %s4 = inlined_call_operand.vmem [shape: f32[1,128], index: 4, kind: input, shape index: {}]
  %s5 = inlined_call_operand.vmem [shape: f32[128,128], index: 5, kind: input, shape index: {}]
  %s6 = inlined_call_operand.vmem [shape: f32[1,128], index: 6, kind: input, shape index: {}]
  %s7 = inlined_call_operand.vmem [shape: f32[8,128], index: 7, kind: output, shape index: {}]
  %s8 = sld [smem:[#allocation0]]
  $region46: #{mnist_forward.1} parent=0
    _
  %s10 = ssub.s32 1, %s8
  %s11 = scalar_select 0, %s10, %s8
  $region1: #{mnist_forward.1} parent=0
    #allocation2 [shape = 'u8[512]{0}', space=smem, size = 0x200, scoped, tag = 'input window, operand 0, single buffered']
    #allocation3 [shape = 's32[1]{0}', space=sflag, size = 0x4, scoped, tag = 'scoped memory for mnist_forward.1']
    #allocation4 [shape = 'u8[512]{0}', space=smem, size = 0x200, scoped, tag = 'input window, operand 1, single buffered']
    #allocation5 [shape = 's32[1]{0}', space=sflag, size = 0x4, scoped, tag = 'scoped memory for mnist_forward.1']
    %12 = vsyncpa [#allocation3], 0
    %13 = vsyncpa [#allocation5], 0
    // Predicated region
    $region2: #{mnist_forward.1} parent=1 // pred_check
      _
    $region3: #{mnist_forward.1} parent=1 // pred_check_branch
      %15 = sbr.rel (0) target = $region5
    $region4: #{mnist_forward.1} parent=1 // pred_region
      %s17 = ssub.s32 16, 16
      %18 = vsyncadd [#allocation3], %s17
      %s20 = sshll.u32 %s0, 4
      %s21 = int_to_ptr.vmem [resolvable:$true] %s20
      %23 = dma.vmem_to_smem %s21, 16, [#allocation2], [#allocation3]
    $region5: #{mnist_forward.1} parent=1 // pred_fallthru
      _
    // Predicated region
    $region6: #{mnist_forward.1} parent=1 // pred_check
      _
    $region7: #{mnist_forward.1} parent=1 // pred_check_branch
      %25 = sbr.rel (0) target = $region9
    $region8: #{mnist_forward.1} parent=1 // pred_region
      %s27 = ssub.s32 16, 16
      %28 = vsyncadd [#allocation5], %s27
      %s30 = sshll.u32 %s1, 4
      %s31 = int_to_ptr.vmem [resolvable:$true] %s30
      %33 = dma.vmem_to_smem %s31, 16, [#allocation4], [#allocation5]
    $region9: #{mnist_forward.1} parent=1 // pred_fallthru
      _
    // Predicated region
    $region10: #{mnist_forward.1} parent=1 // pred_check
      _
    $region11: #{mnist_forward.1} parent=1 // pred_check_branch
      %35 = sbr.rel (0) target = $region13
    $region12: #{mnist_forward.1} parent=1 // pred_region
      _
    $region13: #{mnist_forward.1} parent=1 // pred_fallthru
      _
    // Predicated region
    $region14: #{mnist_forward.1} parent=1 // pred_check
      _
    $region15: #{mnist_forward.1} parent=1 // pred_check_branch
      %37 = sbr.rel (0) target = $region17
    $region16: #{mnist_forward.1} parent=1 // pred_region
      _
    $region17: #{mnist_forward.1} parent=1 // pred_fallthru
      _
    // Predicated region
    $region18: #{mnist_forward.1} parent=1 // pred_check
      _
    $region19: #{mnist_forward.1} parent=1 // pred_check_branch
      %39 = sbr.rel (0) target = $region21
    $region20: #{mnist_forward.1} parent=1 // pred_region
      _
    $region21: #{mnist_forward.1} parent=1 // pred_fallthru
      _
    // Predicated region
    $region22: #{mnist_forward.1} parent=1 // pred_check
      _
    $region23: #{mnist_forward.1} parent=1 // pred_check_branch
      %41 = sbr.rel (0) target = $region25
    $region24: #{mnist_forward.1} parent=1 // pred_region
      _
    $region25: #{mnist_forward.1} parent=1 // pred_fallthru
      _
    // Predicated region
    $region26: #{mnist_forward.1} parent=1 // pred_check
      _
    $region27: #{mnist_forward.1} parent=1 // pred_check_branch
      %43 = sbr.rel (0) target = $region29
    $region28: #{mnist_forward.1} parent=1 // pred_region
      _
    $region29: #{mnist_forward.1} parent=1 // pred_fallthru
      _
    // Predicated region
    $region30: #{mnist_forward.1} parent=1 // pred_check
      _
    $region31: #{mnist_forward.1} parent=1 // pred_check_branch
      %45 = sbr.rel (0) target = $region33
    $region32: #{mnist_forward.1} parent=1 // pred_region
      %46 = dma.done [#allocation3], 16
    $region33: #{mnist_forward.1} parent=1 // pred_fallthru
      _
    // Predicated region
    $region34: #{mnist_forward.1} parent=1 // pred_check
      _
    $region35: #{mnist_forward.1} parent=1 // pred_check_branch
      %48 = sbr.rel (0) target = $region37
    $region36: #{mnist_forward.1} parent=1 // pred_region
      %49 = dma.done [#allocation5], 16
    $region37: #{mnist_forward.1} parent=1 // pred_fallthru
      _
    %50 = sfence
    %s51 = sld [smem:[#allocation2]]
    %v52 = vld [vmem:[%s2] sm:$0xff]
    %v53 = vld [vmem:[%s2 + $0x8] sm:$0xff]
    %v54 = vld [vmem:[%s2 + $0x10] sm:$0xff]
    %v55 = vld [vmem:[%s2 + $0x18] sm:$0xff]
    %v56 = vld [vmem:[%s2 + $0x20] sm:$0xff]
    %v57 = vld [vmem:[%s2 + $0x28] sm:$0xff]
    %v58 = vld [vmem:[%s2 + $0x30] sm:$0xff]
    %v59 = vstv %s51
    %v60 = vmul.f32 %v59, %v52
    %v61 = vmul.f32 %v59, %v53
    %v62 = vmul.f32 %v59, %v54
    %v63 = vmul.f32 %v59, %v55
    %v64 = vmul.f32 %v59, %v56
    %v65 = vmul.f32 %v59, %v57
    %v66 = vmul.f32 %v59, %v58
    %v67 = vadd.f32 %v60, 0.0
    %v68 = vadd.f32 %v61, 0.0
    %v69 = vadd.f32 %v62, 0.0
    %v70 = vadd.f32 %v63, 0.0
    %v71 = vadd.f32 %v64, 0.0
    %v72 = vadd.f32 %v65, 0.0
    %v73 = vadd.f32 %v66, 0.0
    %s74 = sld [smem:[#allocation2 + $0x1]]
    %v75 = vstv %s74
    %v76 = vmul.f32 %v75, %v52
    %v77 = vmul.f32 %v75, %v53
    %v78 = vmul.f32 %v75, %v54
    %v79 = vmul.f32 %v75, %v55
    %v80 = vmul.f32 %v75, %v56
    %v81 = vmul.f32 %v75, %v57
    %v82 = vmul.f32 %v75, %v58
    %90 = vrot.lane.b32.xlu0 %v76, 127
    %v91 = vpop.permute.xlu0 %90
    %92 = vrot.lane.b32.xlu0 %v77, 127
    %v93 = vpop.permute.xlu0 %92
    %94 = vrot.lane.b32.xlu0 %v78, 127
    %v95 = vpop.permute.xlu0 %94
    %96 = vrot.lane.b32.xlu0 %v79, 127
    %v97 = vpop.permute.xlu0 %96
    %98 = vrot.lane.b32.xlu0 %v80, 127
    %v99 = vpop.permute.xlu0 %98
    %100 = vrot.lane.b32.xlu0 %v81, 127
    %v101 = vpop.permute.xlu0 %100
    %102 = vrot.lane.b32.xlu0 %v82, 127
    %v103 = vpop.permute.xlu0 %102
    %vm104 = vcmask 1039360
    %v105 = vsel %vm104, %v91, %v93
    %v106 = vsel %vm104, %v93, %v95
    %v107 = vsel %vm104, %v95, %v97
    %v108 = vsel %vm104, %v97, %v99
    %v109 = vsel %vm104, %v99, %v101
    %v110 = vsel %vm104, %v101, %v103
    %v118 = vadd.f32 %v67, %v105
    %v119 = vadd.f32 %v68, %v106
    %v120 = vadd.f32 %v69, %v107
    %v121 = vadd.f32 %v70, %v108
    %v122 = vadd.f32 %v71, %v109
    %v123 = vadd.f32 %v72, %v110
    %v124 = vadd.f32 %v73, %v103
    %s125 = sld [smem:[#allocation2 + $0x2]]
    %v126 = vstv %s125
    %v127 = vmul.f32 %v126, %v52
    %v128 = vmul.f32 %v126, %v53
    %v129 = vmul.f32 %v126, %v54
    %v130 = vmul.f32 %v126, %v55
    %v131 = vmul.f32 %v126, %v56
    %v132 = vmul.f32 %v126, %v57
    %v133 = vmul.f32 %v126, %v58
    %141 = vrot.lane.b32.xlu0 %v127, 126
    %v142 = vpop.permute.xlu0 %141
    %143 = vrot.lane.b32.xlu0 %v128, 126
    %v144 = vpop.permute.xlu0 %143
    %145 = vrot.lane.b32.xlu0 %v129, 126
    %v146 = vpop.permute.xlu0 %145
    %147 = vrot.lane.b32.xlu0 %v130, 126
    %v148 = vpop.permute.xlu0 %147
    %149 = vrot.lane.b32.xlu0 %v131, 126
    %v150 = vpop.permute.xlu0 %149
    %151 = vrot.lane.b32.xlu0 %v132, 126
    %v152 = vpop.permute.xlu0 %151
    %153 = vrot.lane.b32.xlu0 %v133, 126
    %v154 = vpop.permute.xlu0 %153
    %vm155 = vcmask 1031168
    %v156 = vsel %vm155, %v142, %v144
    %v157 = vsel %vm155, %v144, %v146
    %v158 = vsel %vm155, %v146, %v148
    %v159 = vsel %vm155, %v148, %v150
    %v160 = vsel %vm155, %v150, %v152
    %v161 = vsel %vm155, %v152, %v154
    %v169 = vadd.f32 %v118, %v156
    %v170 = vadd.f32 %v119, %v157
    %v171 = vadd.f32 %v120, %v158
    %v172 = vadd.f32 %v121, %v159
    %v173 = vadd.f32 %v122, %v160
    %v174 = vadd.f32 %v123, %v161
    %v175 = vadd.f32 %v124, %v154
    %s176 = sld [smem:[#allocation2 + $0x3]]
    %v177 = vstv %s176
    %v178 = vmul.f32 %v177, %v52
    %v179 = vmul.f32 %v177, %v53
    %v180 = vmul.f32 %v177, %v54
    %v181 = vmul.f32 %v177, %v55
    %v182 = vmul.f32 %v177, %v56
    %v183 = vmul.f32 %v177, %v57
    %v184 = vmul.f32 %v177, %v58
    %192 = vrot.lane.b32.xlu0 %v178, 125
    %v193 = vpop.permute.xlu0 %192
    %194 = vrot.lane.b32.xlu0 %v179, 125
    %v195 = vpop.permute.xlu0 %194
    %196 = vrot.lane.b32.xlu0 %v180, 125
    %v197 = vpop.permute.xlu0 %196
    %198 = vrot.lane.b32.xlu0 %v181, 125
    %v199 = vpop.permute.xlu0 %198
    %200 = vrot.lane.b32.xlu0 %v182, 125
    %v201 = vpop.permute.xlu0 %200
    %202 = vrot.lane.b32.xlu0 %v183, 125
    %v203 = vpop.permute.xlu0 %202
    %204 = vrot.lane.b32.xlu0 %v184, 125
    %v205 = vpop.permute.xlu0 %204
    %vm206 = vcmask 1022976
    %v207 = vsel %vm206, %v193, %v195
    %v208 = vsel %vm206, %v195, %v197
    %v209 = vsel %vm206, %v197, %v199
    %v210 = vsel %vm206, %v199, %v201
    %v211 = vsel %vm206, %v201, %v203
    %v212 = vsel %vm206, %v203, %v205
    %v220 = vadd.f32 %v169, %v207
    %v221 = vadd.f32 %v170, %v208
    %v222 = vadd.f32 %v171, %v209
    %v223 = vadd.f32 %v172, %v210
    %v224 = vadd.f32 %v173, %v211
    %v225 = vadd.f32 %v174, %v212
    %v226 = vadd.f32 %v175, %v205
    %s227 = sld [smem:[#allocation2 + $0x4]]
    %v228 = vstv %s227
    %v229 = vmul.f32 %v228, %v52
    %v230 = vmul.f32 %v228, %v53
    %v231 = vmul.f32 %v228, %v54
    %v232 = vmul.f32 %v228, %v55
    %v233 = vmul.f32 %v228, %v56
    %v234 = vmul.f32 %v228, %v57
    %v235 = vmul.f32 %v228, %v58
    %243 = vrot.lane.b32.xlu0 %v229, 124
    %v244 = vpop.permute.xlu0 %243
    %245 = vrot.lane.b32.xlu0 %v230, 124
    %v246 = vpop.permute.xlu0 %245
    %247 = vrot.lane.b32.xlu0 %v231, 124
    %v248 = vpop.permute.xlu0 %247
    %249 = vrot.lane.b32.xlu0 %v232, 124
    %v250 = vpop.permute.xlu0 %249
    %251 = vrot.lane.b32.xlu0 %v233, 124
    %v252 = vpop.permute.xlu0 %251
    %253 = vrot.lane.b32.xlu0 %v234, 124
    %v254 = vpop.permute.xlu0 %253
    %255 = vrot.lane.b32.xlu0 %v235, 124
    %v256 = vpop.permute.xlu0 %255
    %vm257 = vcmask 1014784
    %v258 = vsel %vm257, %v244, %v246
    %v259 = vsel %vm257, %v246, %v248
    %v260 = vsel %vm257, %v248, %v250
    %v261 = vsel %vm257, %v250, %v252
    %v262 = vsel %vm257, %v252, %v254
    %v263 = vsel %vm257, %v254, %v256
    %v271 = vadd.f32 %v220, %v258
    %v272 = vadd.f32 %v221, %v259
    %v273 = vadd.f32 %v222, %v260
    %v274 = vadd.f32 %v223, %v261
    %v275 = vadd.f32 %v224, %v262
    %v276 = vadd.f32 %v225, %v263
    %v277 = vadd.f32 %v226, %v256
    %s278 = sld [smem:[#allocation2 + $0x5]]
    %v279 = vld [vmem:[%s2] sm:$0xff]
    %v280 = vld [vmem:[%s2 + $0x8] sm:$0xff]
    %v281 = vld [vmem:[%s2 + $0x10] sm:$0xff]
    %v282 = vld [vmem:[%s2 + $0x18] sm:$0xff]
    %v283 = vld [vmem:[%s2 + $0x20] sm:$0xff]
    %v284 = vld [vmem:[%s2 + $0x28] sm:$0xff]
    %v285 = vld [vmem:[%s2 + $0x30] sm:$0xff]
    %v286 = vld [vmem:[%s2 + $0x38] sm:$0xff]
    %v287 = vstv %s278
    %v288 = vmul.f32 %v287, %v279
    %v289 = vmul.f32 %v287, %v280
    %v290 = vmul.f32 %v287, %v281
    %v291 = vmul.f32 %v287, %v282
    %v292 = vmul.f32 %v287, %v283
    %v293 = vmul.f32 %v287, %v284
    %v294 = vmul.f32 %v287, %v285
    %v295 = vmul.f32 %v287, %v286
    %304 = vrot.lane.b32.xlu0 %v288, 96
    %v305 = vpop.permute.xlu0 %304
    %306 = vrot.lane.b32.xlu0 %v289, 96
    %v307 = vpop.permute.xlu0 %306
    %308 = vrot.lane.b32.xlu0 %v290, 96
    %v309 = vpop.permute.xlu0 %308
    %310 = vrot.lane.b32.xlu0 %v291, 96
    %v311 = vpop.permute.xlu0 %310
    %312 = vrot.lane.b32.xlu0 %v292, 96
    %v313 = vpop.permute.xlu0 %312
    %314 = vrot.lane.b32.xlu0 %v293, 96
    %v315 = vpop.permute.xlu0 %314
    %316 = vrot.lane.b32.xlu0 %v294, 96
    %v317 = vpop.permute.xlu0 %316
    %318 = vrot.lane.b32.xlu0 %v295, 96
    %v319 = vpop.permute.xlu0 %318
    %vm320 = vcmask 785408
    %v321 = vsel %vm320, %v305, %v307
    %v322 = vsel %vm320, %v307, %v309
    %v323 = vsel %vm320, %v309, %v311
    %v324 = vsel %vm320, %v311, %v313
    %v325 = vsel %vm320, %v313, %v315
    %v326 = vsel %vm320, %v315, %v317
    %v327 = vsel %vm320, %v317, %v319
    %v335 = vadd.f32 %v271, %v321
    %v336 = vadd.f32 %v272, %v322
    %v337 = vadd.f32 %v273, %v323
    %v338 = vadd.f32 %v274, %v324
    %v339 = vadd.f32 %v275, %v325
    %v340 = vadd.f32 %v276, %v326
    %v341 = vadd.f32 %v277, %v327
    %s342 = sld [smem:[#allocation2 + $0x6]]
    %v343 = vstv %s342
    %v344 = vmul.f32 %v343, %v279
    %v345 = vmul.f32 %v343, %v280
    %v346 = vmul.f32 %v343, %v281
    %v347 = vmul.f32 %v343, %v282
    %v348 = vmul.f32 %v343, %v283
    %v349 = vmul.f32 %v343, %v284
    %v350 = vmul.f32 %v343, %v285
    %v351 = vmul.f32 %v343, %v286
    %360 = vrot.lane.b32.xlu0 %v344, 95
    %v361 = vpop.permute.xlu0 %360
    %362 = vrot.lane.b32.xlu0 %v345, 95
    %v363 = vpop.permute.xlu0 %362
    %364 = vrot.lane.b32.xlu0 %v346, 95
    %v365 = vpop.permute.xlu0 %364
    %366 = vrot.lane.b32.xlu0 %v347, 95
    %v367 = vpop.permute.xlu0 %366
    %368 = vrot.lane.b32.xlu0 %v348, 95
    %v369 = vpop.permute.xlu0 %368
    %370 = vrot.lane.b32.xlu0 %v349, 95
    %v371 = vpop.permute.xlu0 %370
    %372 = vrot.lane.b32.xlu0 %v350, 95
    %v373 = vpop.permute.xlu0 %372
    %374 = vrot.lane.b32.xlu0 %v351, 95
    %v375 = vpop.permute.xlu0 %374
    %vm376 = vcmask 777216
    %v377 = vsel %vm376, %v361, %v363
    %v378 = vsel %vm376, %v363, %v365
    %v379 = vsel %vm376, %v365, %v367
    %v380 = vsel %vm376, %v367, %v369
    %v381 = vsel %vm376, %v369, %v371
    %v382 = vsel %vm376, %v371, %v373
    %v383 = vsel %vm376, %v373, %v375
    %v391 = vadd.f32 %v335, %v377
    %v392 = vadd.f32 %v336, %v378
    %v393 = vadd.f32 %v337, %v379
    %v394 = vadd.f32 %v338, %v380
    %v395 = vadd.f32 %v339, %v381
    %v396 = vadd.f32 %v340, %v382
    %v397 = vadd.f32 %v341, %v383
    %s398 = sld [smem:[#allocation2 + $0x7]]
    %v399 = vstv %s398
    %v400 = vmul.f32 %v399, %v279
    %v401 = vmul.f32 %v399, %v280
    %v402 = vmul.f32 %v399, %v281
    %v403 = vmul.f32 %v399, %v282
    %v404 = vmul.f32 %v399, %v283
    %v405 = vmul.f32 %v399, %v284
    %v406 = vmul.f32 %v399, %v285
    %v407 = vmul.f32 %v399, %v286
    %416 = vrot.lane.b32.xlu0 %v400, 94
    %v417 = vpop.permute.xlu0 %416
    %418 = vrot.lane.b32.xlu0 %v401, 94
    %v419 = vpop.permute.xlu0 %418
    %420 = vrot.lane.b32.xlu0 %v402, 94
    %v421 = vpop.permute.xlu0 %420
    %422 = vrot.lane.b32.xlu0 %v403, 94
    %v423 = vpop.permute.xlu0 %422
    %424 = vrot.lane.b32.xlu0 %v404, 94
    %v425 = vpop.permute.xlu0 %424
    %426 = vrot.lane.b32.xlu0 %v405, 94
    %v427 = vpop.permute.xlu0 %426
    %428 = vrot.lane.b32.xlu0 %v406, 94
    %v429 = vpop.permute.xlu0 %428
    %430 = vrot.lane.b32.xlu0 %v407, 94
    %v431 = vpop.permute.xlu0 %430
    %vm432 = vcmask 769024
    %v433 = vsel %vm432, %v417, %v419
    %v434 = vsel %vm432, %v419, %v421
    %v435 = vsel %vm432, %v421, %v423
    %v436 = vsel %vm432, %v423, %v425
    %v437 = vsel %vm432, %v425, %v427
    %v438 = vsel %vm432, %v427, %v429
    %v439 = vsel %vm432, %v429, %v431
    %v447 = vadd.f32 %v391, %v433
    %v448 = vadd.f32 %v392, %v434
    %v449 = vadd.f32 %v393, %v435
    %v450 = vadd.f32 %v394, %v436
    %v451 = vadd.f32 %v395, %v437
    %v452 = vadd.f32 %v396, %v438
    %v453 = vadd.f32 %v397, %v439
    %s454 = sld [smem:[#allocation2 + $0x8]]
    %v455 = vstv %s454
    %v456 = vmul.f32 %v455, %v279
    %v457 = vmul.f32 %v455, %v280
    %v458 = vmul.f32 %v455, %v281
    %v459 = vmul.f32 %v455, %v282
    %v460 = vmul.f32 %v455, %v283
    %v461 = vmul.f32 %v455, %v284
    %v462 = vmul.f32 %v455, %v285
    %v463 = vmul.f32 %v455, %v286
    %472 = vrot.lane.b32.xlu0 %v456, 93
    %v473 = vpop.permute.xlu0 %472
    %474 = vrot.lane.b32.xlu0 %v457, 93
    %v475 = vpop.permute.xlu0 %474
    %476 = vrot.lane.b32.xlu0 %v458, 93
    %v477 = vpop.permute.xlu0 %476
    %478 = vrot.lane.b32.xlu0 %v459, 93
    %v479 = vpop.permute.xlu0 %478
    %480 = vrot.lane.b32.xlu0 %v460, 93
    %v481 = vpop.permute.xlu0 %480
    %482 = vrot.lane.b32.xlu0 %v461, 93
    %v483 = vpop.permute.xlu0 %482
    %484 = vrot.lane.b32.xlu0 %v462, 93
    %v485 = vpop.permute.xlu0 %484
    %486 = vrot.lane.b32.xlu0 %v463, 93
    %v487 = vpop.permute.xlu0 %486
    %vm488 = vcmask 760832
    %v489 = vsel %vm488, %v473, %v475
    %v490 = vsel %vm488, %v475, %v477
    %v491 = vsel %vm488, %v477, %v479
    %v492 = vsel %vm488, %v479, %v481
    %v493 = vsel %vm488, %v481, %v483
    %v494 = vsel %vm488, %v483, %v485
    %v495 = vsel %vm488, %v485, %v487
    %v503 = vadd.f32 %v447, %v489
    %v504 = vadd.f32 %v448, %v490
    %v505 = vadd.f32 %v449, %v491
    %v506 = vadd.f32 %v450, %v492
    %v507 = vadd.f32 %v451, %v493
    %v508 = vadd.f32 %v452, %v494
    %v509 = vadd.f32 %v453, %v495
    %s510 = sld [smem:[#allocation2 + $0x9]]
    %v511 = vstv %s510
    %v512 = vmul.f32 %v511, %v279
    %v513 = vmul.f32 %v511, %v280
    %v514 = vmul.f32 %v511, %v281
    %v515 = vmul.f32 %v511, %v282
    %v516 = vmul.f32 %v511, %v283
    %v517 = vmul.f32 %v511, %v284
    %v518 = vmul.f32 %v511, %v285
    %v519 = vmul.f32 %v511, %v286
    %528 = vrot.lane.b32.xlu0 %v512, 92
    %v529 = vpop.permute.xlu0 %528
    %530 = vrot.lane.b32.xlu0 %v513, 92
    %v531 = vpop.permute.xlu0 %530
    %532 = vrot.lane.b32.xlu0 %v514, 92
    %v533 = vpop.permute.xlu0 %532
    %534 = vrot.lane.b32.xlu0 %v515, 92
    %v535 = vpop.permute.xlu0 %534
    %536 = vrot.lane.b32.xlu0 %v516, 92
    %v537 = vpop.permute.xlu0 %536
    %538 = vrot.lane.b32.xlu0 %v517, 92
    %v539 = vpop.permute.xlu0 %538
    %540 = vrot.lane.b32.xlu0 %v518, 92
    %v541 = vpop.permute.xlu0 %540
    %542 = vrot.lane.b32.xlu0 %v519, 92
    %v543 = vpop.permute.xlu0 %542
    %vm544 = vcmask 752640
    %v545 = vsel %vm544, %v529, %v531
    %v546 = vsel %vm544, %v531, %v533
    %v547 = vsel %vm544, %v533, %v535
    %v548 = vsel %vm544, %v535, %v537
    %v549 = vsel %vm544, %v537, %v539
    %v550 = vsel %vm544, %v539, %v541
    %v551 = vsel %vm544, %v541, %v543
    %v559 = vadd.f32 %v503, %v545
    %v560 = vadd.f32 %v504, %v546
    %v561 = vadd.f32 %v505, %v547
    %v562 = vadd.f32 %v506, %v548
    %v563 = vadd.f32 %v507, %v549
    %v564 = vadd.f32 %v508, %v550
    %v565 = vadd.f32 %v509, %v551
    %s566 = sld [smem:[#allocation2 + $0xa]]
    %v567 = vstv %s566
    %v568 = vmul.f32 %v567, %v279
    %v569 = vmul.f32 %v567, %v280
    %v570 = vmul.f32 %v567, %v281
    %v571 = vmul.f32 %v567, %v282
    %v572 = vmul.f32 %v567, %v283
    %v573 = vmul.f32 %v567, %v284
    %v574 = vmul.f32 %v567, %v285
    %v575 = vmul.f32 %v567, %v286
    %584 = vrot.lane.b32.xlu0 %v568, 64
    %v585 = vpop.permute.xlu0 %584
    %586 = vrot.lane.b32.xlu0 %v569, 64
    %v587 = vpop.permute.xlu0 %586
    %588 = vrot.lane.b32.xlu0 %v570, 64
    %v589 = vpop.permute.xlu0 %588
    %590 = vrot.lane.b32.xlu0 %v571, 64
    %v591 = vpop.permute.xlu0 %590
    %592 = vrot.lane.b32.xlu0 %v572, 64
    %v593 = vpop.permute.xlu0 %592
    %594 = vrot.lane.b32.xlu0 %v573, 64
    %v595 = vpop.permute.xlu0 %594
    %596 = vrot.lane.b32.xlu0 %v574, 64
    %v597 = vpop.permute.xlu0 %596
    %598 = vrot.lane.b32.xlu0 %v575, 64
    %v599 = vpop.permute.xlu0 %598
    %vm600 = vcmask 523264
    %v601 = vsel %vm600, %v585, %v587
    %v602 = vsel %vm600, %v587, %v589
    %v603 = vsel %vm600, %v589, %v591
    %v604 = vsel %vm600, %v591, %v593
    %v605 = vsel %vm600, %v593, %v595
    %v606 = vsel %vm600, %v595, %v597
    %v607 = vsel %vm600, %v597, %v599
    %v615 = vadd.f32 %v559, %v601
    %v616 = vadd.f32 %v560, %v602
    %v617 = vadd.f32 %v561, %v603
    %v618 = vadd.f32 %v562, %v604
    %v619 = vadd.f32 %v563, %v605
    %v620 = vadd.f32 %v564, %v606
    %v621 = vadd.f32 %v565, %v607
    %s622 = sld [smem:[#allocation2 + $0xb]]
    %v623 = vstv %s622
    %v624 = vmul.f32 %v623, %v279
    %v625 = vmul.f32 %v623, %v280
    %v626 = vmul.f32 %v623, %v281
    %v627 = vmul.f32 %v623, %v282
    %v628 = vmul.f32 %v623, %v283
    %v629 = vmul.f32 %v623, %v284
    %v630 = vmul.f32 %v623, %v285
    %v631 = vmul.f32 %v623, %v286
    %640 = vrot.lane.b32.xlu0 %v624, 63
    %v641 = vpop.permute.xlu0 %640
    %642 = vrot.lane.b32.xlu0 %v625, 63
    %v643 = vpop.permute.xlu0 %642
    %644 = vrot.lane.b32.xlu0 %v626, 63
    %v645 = vpop.permute.xlu0 %644
    %646 = vrot.lane.b32.xlu0 %v627, 63
    %v647 = vpop.permute.xlu0 %646
    %648 = vrot.lane.b32.xlu0 %v628, 63
    %v649 = vpop.permute.xlu0 %648
    %650 = vrot.lane.b32.xlu0 %v629, 63
    %v651 = vpop.permute.xlu0 %650
    %652 = vrot.lane.b32.xlu0 %v630, 63
    %v653 = vpop.permute.xlu0 %652
    %654 = vrot.lane.b32.xlu0 %v631, 63
    %v655 = vpop.permute.xlu0 %654
    %vm656 = vcmask 515072
    %v657 = vsel %vm656, %v641, %v643
    %v658 = vsel %vm656, %v643, %v645
    %v659 = vsel %vm656, %v645, %v647
    %v660 = vsel %vm656, %v647, %v649
    %v661 = vsel %vm656, %v649, %v651
    %v662 = vsel %vm656, %v651, %v653
    %v663 = vsel %vm656, %v653, %v655
    %v671 = vadd.f32 %v615, %v657
    %v672 = vadd.f32 %v616, %v658
    %v673 = vadd.f32 %v617, %v659
    %v674 = vadd.f32 %v618, %v660
    %v675 = vadd.f32 %v619, %v661
    %v676 = vadd.f32 %v620, %v662
    %v677 = vadd.f32 %v621, %v663
    %s678 = sld [smem:[#allocation2 + $0xc]]
    %v679 = vstv %s678
    %v680 = vmul.f32 %v679, %v279
    %v681 = vmul.f32 %v679, %v280
    %v682 = vmul.f32 %v679, %v281
    %v683 = vmul.f32 %v679, %v282
    %v684 = vmul.f32 %v679, %v283
    %v685 = vmul.f32 %v679, %v284
    %v686 = vmul.f32 %v679, %v285
    %v687 = vmul.f32 %v679, %v286
    %696 = vrot.lane.b32.xlu0 %v680, 62
    %v697 = vpop.permute.xlu0 %696
    %698 = vrot.lane.b32.xlu0 %v681, 62
    %v699 = vpop.permute.xlu0 %698
    %700 = vrot.lane.b32.xlu0 %v682, 62
    %v701 = vpop.permute.xlu0 %700
    %702 = vrot.lane.b32.xlu0 %v683, 62
    %v703 = vpop.permute.xlu0 %702
    %704 = vrot.lane.b32.xlu0 %v684, 62
    %v705 = vpop.permute.xlu0 %704
    %706 = vrot.lane.b32.xlu0 %v685, 62
    %v707 = vpop.permute.xlu0 %706
    %708 = vrot.lane.b32.xlu0 %v686, 62
    %v709 = vpop.permute.xlu0 %708
    %710 = vrot.lane.b32.xlu0 %v687, 62
    %v711 = vpop.permute.xlu0 %710
    %vm712 = vcmask 506880
    %v713 = vsel %vm712, %v697, %v699
    %v714 = vsel %vm712, %v699, %v701
    %v715 = vsel %vm712, %v701, %v703
    %v716 = vsel %vm712, %v703, %v705
    %v717 = vsel %vm712, %v705, %v707
    %v718 = vsel %vm712, %v707, %v709
    %v719 = vsel %vm712, %v709, %v711
    %v727 = vadd.f32 %v671, %v713
    %v728 = vadd.f32 %v672, %v714
    %v729 = vadd.f32 %v673, %v715
    %v730 = vadd.f32 %v674, %v716
    %v731 = vadd.f32 %v675, %v717
    %v732 = vadd.f32 %v676, %v718
    %v733 = vadd.f32 %v677, %v719
    %s734 = sld [smem:[#allocation2 + $0xd]]
    %v735 = vstv %s734
    %v736 = vmul.f32 %v735, %v279
    %v737 = vmul.f32 %v735, %v280
    %v738 = vmul.f32 %v735, %v281
    %v739 = vmul.f32 %v735, %v282
    %v740 = vmul.f32 %v735, %v283
    %v741 = vmul.f32 %v735, %v284
    %v742 = vmul.f32 %v735, %v285
    %v743 = vmul.f32 %v735, %v286
    %752 = vrot.lane.b32.xlu0 %v736, 61
    %v753 = vpop.permute.xlu0 %752
    %754 = vrot.lane.b32.xlu0 %v737, 61
    %v755 = vpop.permute.xlu0 %754
    %756 = vrot.lane.b32.xlu0 %v738, 61
    %v757 = vpop.permute.xlu0 %756
    %758 = vrot.lane.b32.xlu0 %v739, 61
    %v759 = vpop.permute.xlu0 %758
    %760 = vrot.lane.b32.xlu0 %v740, 61
    %v761 = vpop.permute.xlu0 %760
    %762 = vrot.lane.b32.xlu0 %v741, 61
    %v763 = vpop.permute.xlu0 %762
    %764 = vrot.lane.b32.xlu0 %v742, 61
    %v765 = vpop.permute.xlu0 %764
    %766 = vrot.lane.b32.xlu0 %v743, 61
    %v767 = vpop.permute.xlu0 %766
    %vm768 = vcmask 498688
    %v769 = vsel %vm768, %v753, %v755
    %v770 = vsel %vm768, %v755, %v757
    %v771 = vsel %vm768, %v757, %v759
    %v772 = vsel %vm768, %v759, %v761
    %v773 = vsel %vm768, %v761, %v763
    %v774 = vsel %vm768, %v763, %v765
    %v775 = vsel %vm768, %v765, %v767
    %v783 = vadd.f32 %v727, %v769
    %v784 = vadd.f32 %v728, %v770
    %v785 = vadd.f32 %v729, %v771
    %v786 = vadd.f32 %v730, %v772
    %v787 = vadd.f32 %v731, %v773
    %v788 = vadd.f32 %v732, %v774
    %v789 = vadd.f32 %v733, %v775
    %s790 = sld [smem:[#allocation2 + $0xe]]
    %v791 = vstv %s790
    %v792 = vmul.f32 %v791, %v279
    %v793 = vmul.f32 %v791, %v280
    %v794 = vmul.f32 %v791, %v281
    %v795 = vmul.f32 %v791, %v282
    %v796 = vmul.f32 %v791, %v283
    %v797 = vmul.f32 %v791, %v284
    %v798 = vmul.f32 %v791, %v285
    %v799 = vmul.f32 %v791, %v286
    %808 = vrot.lane.b32.xlu0 %v792, 60
    %v809 = vpop.permute.xlu0 %808
    %810 = vrot.lane.b32.xlu0 %v793, 60
    %v811 = vpop.permute.xlu0 %810
    %812 = vrot.lane.b32.xlu0 %v794, 60
    %v813 = vpop.permute.xlu0 %812
    %814 = vrot.lane.b32.xlu0 %v795, 60
    %v815 = vpop.permute.xlu0 %814
    %816 = vrot.lane.b32.xlu0 %v796, 60
    %v817 = vpop.permute.xlu0 %816
    %818 = vrot.lane.b32.xlu0 %v797, 60
    %v819 = vpop.permute.xlu0 %818
    %820 = vrot.lane.b32.xlu0 %v798, 60
    %v821 = vpop.permute.xlu0 %820
    %822 = vrot.lane.b32.xlu0 %v799, 60
    %v823 = vpop.permute.xlu0 %822
    %vm824 = vcmask 490496
    %v825 = vsel %vm824, %v809, %v811
    %v826 = vsel %vm824, %v811, %v813
    %v827 = vsel %vm824, %v813, %v815
    %v828 = vsel %vm824, %v815, %v817
    %v829 = vsel %vm824, %v817, %v819
    %v830 = vsel %vm824, %v819, %v821
    %v831 = vsel %vm824, %v821, %v823
    %v839 = vadd.f32 %v783, %v825
    %v840 = vadd.f32 %v784, %v826
    %v841 = vadd.f32 %v785, %v827
    %v842 = vadd.f32 %v786, %v828
    %v843 = vadd.f32 %v787, %v829
    %v844 = vadd.f32 %v788, %v830
    %v845 = vadd.f32 %v789, %v831
    %s846 = sld [smem:[#allocation2 + $0xf]]
    %v847 = vstv %s846
    %v848 = vmul.f32 %v847, %v279
    %v849 = vmul.f32 %v847, %v280
    %v850 = vmul.f32 %v847, %v281
    %v851 = vmul.f32 %v847, %v282
    %v852 = vmul.f32 %v847, %v283
    %v853 = vmul.f32 %v847, %v284
    %v854 = vmul.f32 %v847, %v285
    %v855 = vmul.f32 %v847, %v286
    %864 = vrot.lane.b32.xlu0 %v848, 32
    %v865 = vpop.permute.xlu0 %864
    %866 = vrot.lane.b32.xlu0 %v849, 32
    %v867 = vpop.permute.xlu0 %866
    %868 = vrot.lane.b32.xlu0 %v850, 32
    %v869 = vpop.permute.xlu0 %868
    %870 = vrot.lane.b32.xlu0 %v851, 32
    %v871 = vpop.permute.xlu0 %870
    %872 = vrot.lane.b32.xlu0 %v852, 32
    %v873 = vpop.permute.xlu0 %872
    %874 = vrot.lane.b32.xlu0 %v853, 32
    %v875 = vpop.permute.xlu0 %874
    %876 = vrot.lane.b32.xlu0 %v854, 32
    %v877 = vpop.permute.xlu0 %876
    %878 = vrot.lane.b32.xlu0 %v855, 32
    %v879 = vpop.permute.xlu0 %878
    %vm880 = vcmask 261120
    %v881 = vsel %vm880, %v865, %v867
    %v882 = vsel %vm880, %v867, %v869
    %v883 = vsel %vm880, %v869, %v871
    %v884 = vsel %vm880, %v871, %v873
    %v885 = vsel %vm880, %v873, %v875
    %v886 = vsel %vm880, %v875, %v877
    %v887 = vsel %vm880, %v877, %v879
    %v895 = vadd.f32 %v839, %v881
    %v896 = vadd.f32 %v840, %v882
    %v897 = vadd.f32 %v841, %v883
    %v898 = vadd.f32 %v842, %v884
    %v899 = vadd.f32 %v843, %v885
    %v900 = vadd.f32 %v844, %v886
    %v901 = vadd.f32 %v845, %v887
    %s902 = sld [smem:[#allocation2 + $0x10]]
    %v903 = vstv %s902
    %v904 = vmul.f32 %v903, %v279
    %v905 = vmul.f32 %v903, %v280
    %v906 = vmul.f32 %v903, %v281
    %v907 = vmul.f32 %v903, %v282
    %v908 = vmul.f32 %v903, %v283
    %v909 = vmul.f32 %v903, %v284
    %v910 = vmul.f32 %v903, %v285
    %v911 = vmul.f32 %v903, %v286
    %920 = vrot.lane.b32.xlu0 %v904, 31
    %v921 = vpop.permute.xlu0 %920
    %922 = vrot.lane.b32.xlu0 %v905, 31
    %v923 = vpop.permute.xlu0 %922
    %924 = vrot.lane.b32.xlu0 %v906, 31
    %v925 = vpop.permute.xlu0 %924
    %926 = vrot.lane.b32.xlu0 %v907, 31
    %v927 = vpop.permute.xlu0 %926
    %928 = vrot.lane.b32.xlu0 %v908, 31
    %v929 = vpop.permute.xlu0 %928
    %930 = vrot.lane.b32.xlu0 %v909, 31
    %v931 = vpop.permute.xlu0 %930
    %932 = vrot.lane.b32.xlu0 %v910, 31
    %v933 = vpop.permute.xlu0 %932
    %934 = vrot.lane.b32.xlu0 %v911, 31
    %v935 = vpop.permute.xlu0 %934
    %vm936 = vcmask 252928
    %v937 = vsel %vm936, %v921, %v923
    %v938 = vsel %vm936, %v923, %v925
    %v939 = vsel %vm936, %v925, %v927
    %v940 = vsel %vm936, %v927, %v929
    %v941 = vsel %vm936, %v929, %v931
    %v942 = vsel %vm936, %v931, %v933
    %v943 = vsel %vm936, %v933, %v935
    %v951 = vadd.f32 %v895, %v937
    %v952 = vadd.f32 %v896, %v938
    %v953 = vadd.f32 %v897, %v939
    %v954 = vadd.f32 %v898, %v940
    %v955 = vadd.f32 %v899, %v941
    %v956 = vadd.f32 %v900, %v942
    %v957 = vadd.f32 %v901, %v943
    %s958 = sld [smem:[#allocation2 + $0x11]]
    %v959 = vstv %s958
    %v960 = vmul.f32 %v959, %v279
    %v961 = vmul.f32 %v959, %v280
    %v962 = vmul.f32 %v959, %v281
    %v963 = vmul.f32 %v959, %v282
    %v964 = vmul.f32 %v959, %v283
    %v965 = vmul.f32 %v959, %v284
    %v966 = vmul.f32 %v959, %v285
    %v967 = vmul.f32 %v959, %v286
    %976 = vrot.lane.b32.xlu0 %v960, 30
    %v977 = vpop.permute.xlu0 %976
    %978 = vrot.lane.b32.xlu0 %v961, 30
    %v979 = vpop.permute.xlu0 %978
    %980 = vrot.lane.b32.xlu0 %v962, 30
    %v981 = vpop.permute.xlu0 %980
    %982 = vrot.lane.b32.xlu0 %v963, 30
    %v983 = vpop.permute.xlu0 %982
    %984 = vrot.lane.b32.xlu0 %v964, 30
    %v985 = vpop.permute.xlu0 %984
    %986 = vrot.lane.b32.xlu0 %v965, 30
    %v987 = vpop.permute.xlu0 %986
    %988 = vrot.lane.b32.xlu0 %v966, 30
    %v989 = vpop.permute.xlu0 %988
    %990 = vrot.lane.b32.xlu0 %v967, 30
    %v991 = vpop.permute.xlu0 %990
    %vm992 = vcmask 244736
    %v993 = vsel %vm992, %v977, %v979
    %v994 = vsel %vm992, %v979, %v981
    %v995 = vsel %vm992, %v981, %v983
    %v996 = vsel %vm992, %v983, %v985
    %v997 = vsel %vm992, %v985, %v987
    %v998 = vsel %vm992, %v987, %v989
    %v999 = vsel %vm992, %v989, %v991
    %v1007 = vadd.f32 %v951, %v993
    %v1008 = vadd.f32 %v952, %v994
    %v1009 = vadd.f32 %v953, %v995
    %v1010 = vadd.f32 %v954, %v996
    %v1011 = vadd.f32 %v955, %v997
    %v1012 = vadd.f32 %v956, %v998
    %v1013 = vadd.f32 %v957, %v999
    %s1014 = sld [smem:[#allocation2 + $0x12]]
    %v1015 = vstv %s1014
    %v1016 = vmul.f32 %v1015, %v279
    %v1017 = vmul.f32 %v1015, %v280
    %v1018 = vmul.f32 %v1015, %v281
    %v1019 = vmul.f32 %v1015, %v282
    %v1020 = vmul.f32 %v1015, %v283
    %v1021 = vmul.f32 %v1015, %v284
    %v1022 = vmul.f32 %v1015, %v285
    %v1023 = vmul.f32 %v1015, %v286
    %1032 = vrot.lane.b32.xlu0 %v1016, 29
    %v1033 = vpop.permute.xlu0 %1032
    %1034 = vrot.lane.b32.xlu0 %v1017, 29
    %v1035 = vpop.permute.xlu0 %1034
    %1036 = vrot.lane.b32.xlu0 %v1018, 29
    %v1037 = vpop.permute.xlu0 %1036
    %1038 = vrot.lane.b32.xlu0 %v1019, 29
    %v1039 = vpop.permute.xlu0 %1038
    %1040 = vrot.lane.b32.xlu0 %v1020, 29
    %v1041 = vpop.permute.xlu0 %1040
    %1042 = vrot.lane.b32.xlu0 %v1021, 29
    %v1043 = vpop.permute.xlu0 %1042
    %1044 = vrot.lane.b32.xlu0 %v1022, 29
    %v1045 = vpop.permute.xlu0 %1044
    %1046 = vrot.lane.b32.xlu0 %v1023, 29
    %v1047 = vpop.permute.xlu0 %1046
    %vm1048 = vcmask 236544
    %v1049 = vsel %vm1048, %v1033, %v1035
    %v1050 = vsel %vm1048, %v1035, %v1037
    %v1051 = vsel %vm1048, %v1037, %v1039
    %v1052 = vsel %vm1048, %v1039, %v1041
    %v1053 = vsel %vm1048, %v1041, %v1043
    %v1054 = vsel %vm1048, %v1043, %v1045
    %v1055 = vsel %vm1048, %v1045, %v1047
    %v1063 = vadd.f32 %v1007, %v1049
    %v1064 = vadd.f32 %v1008, %v1050
    %v1065 = vadd.f32 %v1009, %v1051
    %v1066 = vadd.f32 %v1010, %v1052
    %v1067 = vadd.f32 %v1011, %v1053
    %v1068 = vadd.f32 %v1012, %v1054
    %v1069 = vadd.f32 %v1013, %v1055
    %s1070 = sld [smem:[#allocation2 + $0x13]]
    %v1071 = vstv %s1070
    %v1072 = vmul.f32 %v1071, %v279
    %v1073 = vmul.f32 %v1071, %v280
    %v1074 = vmul.f32 %v1071, %v281
    %v1075 = vmul.f32 %v1071, %v282
    %v1076 = vmul.f32 %v1071, %v283
    %v1077 = vmul.f32 %v1071, %v284
    %v1078 = vmul.f32 %v1071, %v285
    %v1079 = vmul.f32 %v1071, %v286
    %1088 = vrot.lane.b32.xlu0 %v1072, 28
    %v1089 = vpop.permute.xlu0 %1088
    %1090 = vrot.lane.b32.xlu0 %v1073, 28
    %v1091 = vpop.permute.xlu0 %1090
    %1092 = vrot.lane.b32.xlu0 %v1074, 28
    %v1093 = vpop.permute.xlu0 %1092
    %1094 = vrot.lane.b32.xlu0 %v1075, 28
    %v1095 = vpop.permute.xlu0 %1094
    %1096 = vrot.lane.b32.xlu0 %v1076, 28
    %v1097 = vpop.permute.xlu0 %1096
    %1098 = vrot.lane.b32.xlu0 %v1077, 28
    %v1099 = vpop.permute.xlu0 %1098
    %1100 = vrot.lane.b32.xlu0 %v1078, 28
    %v1101 = vpop.permute.xlu0 %1100
    %1102 = vrot.lane.b32.xlu0 %v1079, 28
    %v1103 = vpop.permute.xlu0 %1102
    %vm1104 = vcmask 228352
    %v1105 = vsel %vm1104, %v1089, %v1091
    %v1106 = vsel %vm1104, %v1091, %v1093
    %v1107 = vsel %vm1104, %v1093, %v1095
    %v1108 = vsel %vm1104, %v1095, %v1097
    %v1109 = vsel %vm1104, %v1097, %v1099
    %v1110 = vsel %vm1104, %v1099, %v1101
    %v1111 = vsel %vm1104, %v1101, %v1103
    %v1119 = vadd.f32 %v1063, %v1105
    %v1120 = vadd.f32 %v1064, %v1106
    %v1121 = vadd.f32 %v1065, %v1107
    %v1122 = vadd.f32 %v1066, %v1108
    %v1123 = vadd.f32 %v1067, %v1109
    %v1124 = vadd.f32 %v1068, %v1110
    %v1125 = vadd.f32 %v1069, %v1111
    %s1126 = sld [smem:[#allocation2 + $0x14]]
    %v1127 = vstv %s1126
    %v1128 = vmul.f32 %v1127, %v280
    %v1129 = vmul.f32 %v1127, %v281
    %v1130 = vmul.f32 %v1127, %v282
    %v1131 = vmul.f32 %v1127, %v283
    %v1132 = vmul.f32 %v1127, %v284
    %v1133 = vmul.f32 %v1127, %v285
    %v1134 = vmul.f32 %v1127, %v286
    %v1135 = vadd.f32 %v1119, %v1128
    %v1136 = vadd.f32 %v1120, %v1129
    %v1137 = vadd.f32 %v1121, %v1130
    %v1138 = vadd.f32 %v1122, %v1131
    %v1139 = vadd.f32 %v1123, %v1132
    %v1140 = vadd.f32 %v1124, %v1133
    %v1141 = vadd.f32 %v1125, %v1134
    %s1142 = sld [smem:[#allocation2 + $0x15]]
    %v1143 = vstv %s1142
    %v1144 = vmul.f32 %v1143, %v280
    %v1145 = vmul.f32 %v1143, %v281
    %v1146 = vmul.f32 %v1143, %v282
    %v1147 = vmul.f32 %v1143, %v283
    %v1148 = vmul.f32 %v1143, %v284
    %v1149 = vmul.f32 %v1143, %v285
    %v1150 = vmul.f32 %v1143, %v286
    %1158 = vrot.lane.b32.xlu0 %v1144, 127
    %v1159 = vpop.permute.xlu0 %1158
    %1160 = vrot.lane.b32.xlu0 %v1145, 127
    %v1161 = vpop.permute.xlu0 %1160
    %1162 = vrot.lane.b32.xlu0 %v1146, 127
    %v1163 = vpop.permute.xlu0 %1162
    %1164 = vrot.lane.b32.xlu0 %v1147, 127
    %v1165 = vpop.permute.xlu0 %1164
    %1166 = vrot.lane.b32.xlu0 %v1148, 127
    %v1167 = vpop.permute.xlu0 %1166
    %1168 = vrot.lane.b32.xlu0 %v1149, 127
    %v1169 = vpop.permute.xlu0 %1168
    %1170 = vrot.lane.b32.xlu0 %v1150, 127
    %v1171 = vpop.permute.xlu0 %1170
    %v1172 = vsel %vm104, %v1159, %v1161
    %v1173 = vsel %vm104, %v1161, %v1163
    %v1174 = vsel %vm104, %v1163, %v1165
    %v1175 = vsel %vm104, %v1165, %v1167
    %v1176 = vsel %vm104, %v1167, %v1169
    %v1177 = vsel %vm104, %v1169, %v1171
    %v1185 = vadd.f32 %v1135, %v1172
    %v1186 = vadd.f32 %v1136, %v1173
    %v1187 = vadd.f32 %v1137, %v1174
    %v1188 = vadd.f32 %v1138, %v1175
    %v1189 = vadd.f32 %v1139, %v1176
    %v1190 = vadd.f32 %v1140, %v1177
    %v1191 = vadd.f32 %v1141, %v1171
    %s1192 = sld [smem:[#allocation2 + $0x16]]
    %v1193 = vstv %s1192
    %v1194 = vmul.f32 %v1193, %v280
    %v1195 = vmul.f32 %v1193, %v281
    %v1196 = vmul.f32 %v1193, %v282
    %v1197 = vmul.f32 %v1193, %v283
    %v1198 = vmul.f32 %v1193, %v284
    %v1199 = vmul.f32 %v1193, %v285
    %v1200 = vmul.f32 %v1193, %v286
    %1208 = vrot.lane.b32.xlu0 %v1194, 126
    %v1209 = vpop.permute.xlu0 %1208
    %1210 = vrot.lane.b32.xlu0 %v1195, 126
    %v1211 = vpop.permute.xlu0 %1210
    %1212 = vrot.lane.b32.xlu0 %v1196, 126
    %v1213 = vpop.permute.xlu0 %1212
    %1214 = vrot.lane.b32.xlu0 %v1197, 126
    %v1215 = vpop.permute.xlu0 %1214
    %1216 = vrot.lane.b32.xlu0 %v1198, 126
    %v1217 = vpop.permute.xlu0 %1216
    %1218 = vrot.lane.b32.xlu0 %v1199, 126
    %v1219 = vpop.permute.xlu0 %1218
    %1220 = vrot.lane.b32.xlu0 %v1200, 126
    %v1221 = vpop.permute.xlu0 %1220
    %v1222 = vsel %vm155, %v1209, %v1211
    %v1223 = vsel %vm155, %v1211, %v1213
    %v1224 = vsel %vm155, %v1213, %v1215
    %v1225 = vsel %vm155, %v1215, %v1217
    %v1226 = vsel %vm155, %v1217, %v1219
    %v1227 = vsel %vm155, %v1219, %v1221
    %v1235 = vadd.f32 %v1185, %v1222
    %v1236 = vadd.f32 %v1186, %v1223
    %v1237 = vadd.f32 %v1187, %v1224
    %v1238 = vadd.f32 %v1188, %v1225
    %v1239 = vadd.f32 %v1189, %v1226
    %v1240 = vadd.f32 %v1190, %v1227
    %v1241 = vadd.f32 %v1191, %v1221
    %s1242 = sld [smem:[#allocation2 + $0x17]]
    %v1243 = vstv %s1242
    %v1244 = vmul.f32 %v1243, %v280
    %v1245 = vmul.f32 %v1243, %v281
    %v1246 = vmul.f32 %v1243, %v282
    %v1247 = vmul.f32 %v1243, %v283
    %v1248 = vmul.f32 %v1243, %v284
    %v1249 = vmul.f32 %v1243, %v285
    %v1250 = vmul.f32 %v1243, %v286
    %1258 = vrot.lane.b32.xlu0 %v1244, 125
    %v1259 = vpop.permute.xlu0 %1258
    %1260 = vrot.lane.b32.xlu0 %v1245, 125
    %v1261 = vpop.permute.xlu0 %1260
    %1262 = vrot.lane.b32.xlu0 %v1246, 125
    %v1263 = vpop.permute.xlu0 %1262
    %1264 = vrot.lane.b32.xlu0 %v1247, 125
    %v1265 = vpop.permute.xlu0 %1264
    %1266 = vrot.lane.b32.xlu0 %v1248, 125
    %v1267 = vpop.permute.xlu0 %1266
    %1268 = vrot.lane.b32.xlu0 %v1249, 125
    %v1269 = vpop.permute.xlu0 %1268
    %1270 = vrot.lane.b32.xlu0 %v1250, 125
    %v1271 = vpop.permute.xlu0 %1270
    %v1272 = vsel %vm206, %v1259, %v1261
    %v1273 = vsel %vm206, %v1261, %v1263
    %v1274 = vsel %vm206, %v1263, %v1265
    %v1275 = vsel %vm206, %v1265, %v1267
    %v1276 = vsel %vm206, %v1267, %v1269
    %v1277 = vsel %vm206, %v1269, %v1271
    %v1285 = vadd.f32 %v1235, %v1272
    %v1286 = vadd.f32 %v1236, %v1273
    %v1287 = vadd.f32 %v1237, %v1274
    %v1288 = vadd.f32 %v1238, %v1275
    %v1289 = vadd.f32 %v1239, %v1276
    %v1290 = vadd.f32 %v1240, %v1277
    %v1291 = vadd.f32 %v1241, %v1271
    %s1292 = sld [smem:[#allocation2 + $0x18]]
    %v1293 = vstv %s1292
    %v1294 = vmul.f32 %v1293, %v280
    %v1295 = vmul.f32 %v1293, %v281
    %v1296 = vmul.f32 %v1293, %v282
    %v1297 = vmul.f32 %v1293, %v283
    %v1298 = vmul.f32 %v1293, %v284
    %v1299 = vmul.f32 %v1293, %v285
    %v1300 = vmul.f32 %v1293, %v286
    %1308 = vrot.lane.b32.xlu0 %v1294, 124
    %v1309 = vpop.permute.xlu0 %1308
    %1310 = vrot.lane.b32.xlu0 %v1295, 124
    %v1311 = vpop.permute.xlu0 %1310
    %1312 = vrot.lane.b32.xlu0 %v1296, 124
    %v1313 = vpop.permute.xlu0 %1312
    %1314 = vrot.lane.b32.xlu0 %v1297, 124
    %v1315 = vpop.permute.xlu0 %1314
    %1316 = vrot.lane.b32.xlu0 %v1298, 124
    %v1317 = vpop.permute.xlu0 %1316
    %1318 = vrot.lane.b32.xlu0 %v1299, 124
    %v1319 = vpop.permute.xlu0 %1318
    %1320 = vrot.lane.b32.xlu0 %v1300, 124
    %v1321 = vpop.permute.xlu0 %1320
    %v1322 = vsel %vm257, %v1309, %v1311
    %v1323 = vsel %vm257, %v1311, %v1313
    %v1324 = vsel %vm257, %v1313, %v1315
    %v1325 = vsel %vm257, %v1315, %v1317
    %v1326 = vsel %vm257, %v1317, %v1319
    %v1327 = vsel %vm257, %v1319, %v1321
    %v1335 = vadd.f32 %v1285, %v1322
    %v1336 = vadd.f32 %v1286, %v1323
    %v1337 = vadd.f32 %v1287, %v1324
    %v1338 = vadd.f32 %v1288, %v1325
    %v1339 = vadd.f32 %v1289, %v1326
    %v1340 = vadd.f32 %v1290, %v1327
    %v1341 = vadd.f32 %v1291, %v1321
    %1349 = vrot.lane.b32.xlu0 %v1335, 127
    %v1350 = vpop.permute.xlu0 %1349
    %1351 = vrot.lane.b32.xlu0 %v1336, 127
    %v1352 = vpop.permute.xlu0 %1351
    %1353 = vrot.lane.b32.xlu0 %v1337, 127
    %v1354 = vpop.permute.xlu0 %1353
    %1355 = vrot.lane.b32.xlu0 %v1338, 127
    %v1356 = vpop.permute.xlu0 %1355
    %1357 = vrot.lane.b32.xlu0 %v1339, 127
    %v1358 = vpop.permute.xlu0 %1357
    %1359 = vrot.lane.b32.xlu0 %v1340, 127
    %v1360 = vpop.permute.xlu0 %1359
    %1361 = vrot.lane.b32.xlu0 %v1341, 127
    %v1362 = vpop.permute.xlu0 %1361
    %v1363 = vsel %vm104, %v1350, %v1352
    %v1364 = vsel %vm104, %v1352, %v1354
    %v1365 = vsel %vm104, %v1354, %v1356
    %v1366 = vsel %vm104, %v1356, %v1358
    %v1367 = vsel %vm104, %v1358, %v1360
    %v1368 = vsel %vm104, %v1360, %v1362
    %v1376 = vmax.f32 %v1335, %v1363
    %v1377 = vmax.f32 %v1336, %v1364
    %v1378 = vmax.f32 %v1337, %v1365
    %v1379 = vmax.f32 %v1338, %v1366
    %v1380 = vmax.f32 %v1339, %v1367
    %v1381 = vmax.f32 %v1340, %v1368
    %v1382 = vmax.f32 %v1341, %v1362
    %1390 = vrot.lane.b32.xlu0 %v1376, 96
    %v1391 = vpop.permute.xlu0 %1390
    %1392 = vrot.lane.b32.xlu0 %v1377, 96
    %v1393 = vpop.permute.xlu0 %1392
    %1394 = vrot.lane.b32.xlu0 %v1378, 96
    %v1395 = vpop.permute.xlu0 %1394
    %1396 = vrot.lane.b32.xlu0 %v1379, 96
    %v1397 = vpop.permute.xlu0 %1396
    %1398 = vrot.lane.b32.xlu0 %v1380, 96
    %v1399 = vpop.permute.xlu0 %1398
    %1400 = vrot.lane.b32.xlu0 %v1381, 96
    %v1401 = vpop.permute.xlu0 %1400
    %1402 = vrot.lane.b32.xlu0 %v1382, 96
    %v1403 = vpop.permute.xlu0 %1402
    %v1404 = vsel %vm320, %v1391, %v1393
    %v1405 = vsel %vm320, %v1393, %v1395
    %v1406 = vsel %vm320, %v1395, %v1397
    %v1407 = vsel %vm320, %v1397, %v1399
    %v1408 = vsel %vm320, %v1399, %v1401
    %v1409 = vsel %vm320, %v1401, %v1403
    %v1417 = vmax.f32 %v1376, %v1404
    %v1418 = vmax.f32 %v1377, %v1405
    %v1419 = vmax.f32 %v1378, %v1406
    %v1420 = vmax.f32 %v1379, %v1407
    %v1421 = vmax.f32 %v1380, %v1408
    %v1422 = vmax.f32 %v1381, %v1409
    %v1423 = vmax.f32 %v1382, %v1403
    %s1424 = sld [smem:[#allocation4]]
    %v1425 = vstv %s1424
    %v1426 = vadd.f32 %v1417, %v1425
    %v1427 = vadd.f32 %v1418, %v1425
    %v1428 = vadd.f32 %v1419, %v1425
    %v1429 = vadd.f32 %v1420, %v1425
    %v1430 = vadd.f32 %v1421, %v1425
    %v1431 = vadd.f32 %v1422, %v1425
    %v1432 = vadd.f32 %v1423, %v1425
    %v1433 = vmax.f32 %v1426, 0.0
    %v1434 = vmax.f32 %v1427, 0.0
    %v1435 = vmax.f32 %v1428, 0.0
    %v1436 = vmax.f32 %v1429, 0.0
    %v1437 = vmax.f32 %v1430, 0.0
    %v1438 = vmax.f32 %v1431, 0.0
    %v1439 = vmax.f32 %v1432, 0.0
    %v1440 = vld [vmem:[%s3] sm:$0xff]
    %v1441 = vld [vmem:[%s3 + $0x8] sm:$0xff]
    %v1442 = vld [vmem:[%s3 + $0x10] sm:$0xff]
    %v1443 = vld [vmem:[%s3 + $0x18] sm:$0xff]
    %v1444 = vld [vmem:[%s3 + $0x20] sm:$0xff]
    %v1445 = vld [vmem:[%s3 + $0x28] sm:$0xff]
    %v1446 = vld [vmem:[%s3 + $0x30] sm:$0xff]
    %v1447 = vld [vmem:[%s3 + $0x38] sm:$0xff]
    %v1448 = vld [vmem:[%s3 + $0x40] sm:$0xff]
    %v1449 = vld [vmem:[%s3 + $0x48] sm:$0xff]
    %v1450 = vld [vmem:[%s3 + $0x50] sm:$0xff]
    %v1451 = vld [vmem:[%s3 + $0x58] sm:$0xff]
    %v1452 = vld [vmem:[%s3 + $0x60] sm:$0xff]
    %v1453 = vld [vmem:[%s3 + $0x68] sm:$0xff]
    %v1454 = vld [vmem:[%s3 + $0x70] sm:$0xff]
    %v1455 = vld [vmem:[%s3 + $0x78] sm:$0xff]
    %v1456 = vld [vmem:[%s3 + $0x80] sm:$0xff]
    %v1457 = vld [vmem:[%s3 + $0x88] sm:$0xff]
    %v1458 = vld [vmem:[%s3 + $0x90] sm:$0xff]
    %v1459 = vld [vmem:[%s3 + $0x98] sm:$0xff]
    %v1460 = vld [vmem:[%s3 + $0xa0] sm:$0xff]
    %v1461 = vld [vmem:[%s3 + $0xa8] sm:$0xff]
    %v1462 = vld [vmem:[%s3 + $0xb0] sm:$0xff]
    %v1463 = vld [vmem:[%s3 + $0xb8] sm:$0xff]
    %v1464 = vld [vmem:[%s3 + $0xc0] sm:$0xff]
    %v1465 = vld [vmem:[%s3 + $0xc8] sm:$0xff]
    %v1466 = vld [vmem:[%s3 + $0xd0] sm:$0xff]
    %v1467 = vld [vmem:[%s3 + $0xd8] sm:$0xff]
    %v1468 = vld [vmem:[%s3 + $0xe0] sm:$0xff]
    %v1469 = vld [vmem:[%s3 + $0xe8] sm:$0xff]
    %v1470 = vld [vmem:[%s3 + $0xf0] sm:$0xff]
    %v1471 = vld [vmem:[%s3 + $0xf8] sm:$0xff]
    %v1472 = vld [vmem:[%s3 + $0x100] sm:$0xff]
    %v1473 = vld [vmem:[%s3 + $0x108] sm:$0xff]
    %v1474 = vld [vmem:[%s3 + $0x110] sm:$0xff]
    %v1475 = vld [vmem:[%s3 + $0x118] sm:$0xff]
    %v1476 = vld [vmem:[%s3 + $0x120] sm:$0xff]
    %v1477 = vld [vmem:[%s3 + $0x128] sm:$0xff]
    %v1478 = vld [vmem:[%s3 + $0x130] sm:$0xff]
    %v1479 = vld [vmem:[%s3 + $0x138] sm:$0xff]
    %v1480 = vld [vmem:[%s3 + $0x140] sm:$0xff]
    %v1481 = vld [vmem:[%s3 + $0x148] sm:$0xff]
    %v1482 = vld [vmem:[%s3 + $0x150] sm:$0xff]
    %v1483 = vld [vmem:[%s3 + $0x158] sm:$0xff]
    %v1484 = vld [vmem:[%s3 + $0x160] sm:$0xff]
    %v1485 = vld [vmem:[%s3 + $0x168] sm:$0xff]
    %v1486 = vld [vmem:[%s3 + $0x170] sm:$0xff]
    %v1487 = vld [vmem:[%s3 + $0x178] sm:$0xff]
    %v1488 = vld [vmem:[%s3 + $0x180] sm:$0xff]
    %v1489 = vld [vmem:[%s3 + $0x188] sm:$0xff]
    %v1490 = vld [vmem:[%s3 + $0x190] sm:$0xff]
    %v1491 = vld [vmem:[%s3 + $0x198] sm:$0xff]
    %v1492 = vld [vmem:[%s3 + $0x1a0] sm:$0xff]
    %v1493 = vld [vmem:[%s3 + $0x1a8] sm:$0xff]
    %v1494 = vld [vmem:[%s3 + $0x1b0] sm:$0xff]
    %v1495 = vld [vmem:[%s3 + $0x1b8] sm:$0xff]
    %v1496 = vld [vmem:[%s3 + $0x1c0] sm:$0xff]
    %v1497 = vld [vmem:[%s3 + $0x1c8] sm:$0xff]
    %v1498 = vld [vmem:[%s3 + $0x1d0] sm:$0xff]
    %v1499 = vld [vmem:[%s3 + $0x1d8] sm:$0xff]
    %v1500 = vld [vmem:[%s3 + $0x1e0] sm:$0xff]
    %v1501 = vld [vmem:[%s3 + $0x1e8] sm:$0xff]
    %v1502 = vld [vmem:[%s3 + $0x1f0] sm:$0xff]
    %v1503 = vld [vmem:[%s3 + $0x1f8] sm:$0xff]
    %v1504 = vld [vmem:[%s3 + $0x200] sm:$0xff]
    %v1505 = vld [vmem:[%s3 + $0x208] sm:$0xff]
    %v1506 = vld [vmem:[%s3 + $0x210] sm:$0xff]
    %v1507 = vld [vmem:[%s3 + $0x218] sm:$0xff]
    %v1508 = vld [vmem:[%s3 + $0x220] sm:$0xff]
    %v1509 = vld [vmem:[%s3 + $0x228] sm:$0xff]
    %v1510 = vld [vmem:[%s3 + $0x230] sm:$0xff]
    %v1511 = vld [vmem:[%s3 + $0x238] sm:$0xff]
    %v1512 = vld [vmem:[%s3 + $0x240] sm:$0xff]
    %v1513 = vld [vmem:[%s3 + $0x248] sm:$0xff]
    %v1514 = vld [vmem:[%s3 + $0x250] sm:$0xff]
    %v1515 = vld [vmem:[%s3 + $0x258] sm:$0xff]
    %v1516 = vld [vmem:[%s3 + $0x260] sm:$0xff]
    %v1517 = vld [vmem:[%s3 + $0x268] sm:$0xff]
    %v1518 = vld [vmem:[%s3 + $0x270] sm:$0xff]
    %v1519 = vld [vmem:[%s3 + $0x278] sm:$0xff]
    %v1520 = vld [vmem:[%s3 + $0x280] sm:$0xff]
    %v1521 = vld [vmem:[%s3 + $0x288] sm:$0xff]
    %v1522 = vld [vmem:[%s3 + $0x290] sm:$0xff]
    %v1523 = vld [vmem:[%s3 + $0x298] sm:$0xff]
    %v1524 = vld [vmem:[%s3 + $0x2a0] sm:$0xff]
    %v1525 = vld [vmem:[%s3 + $0x2a8] sm:$0xff]
    %v1526 = vld [vmem:[%s3 + $0x2b0] sm:$0xff]
    %v1527 = vld [vmem:[%s3 + $0x2b8] sm:$0xff]
    %v1528 = vld [vmem:[%s3 + $0x2c0] sm:$0xff]
    %v1529 = vld [vmem:[%s3 + $0x2c8] sm:$0xff]
    %v1530 = vld [vmem:[%s3 + $0x2d0] sm:$0xff]
    %v1531 = vld [vmem:[%s3 + $0x2d8] sm:$0xff]
    %v1532 = vld [vmem:[%s3 + $0x2e0] sm:$0xff]
    %v1533 = vld [vmem:[%s3 + $0x2e8] sm:$0xff]
    %v1534 = vld [vmem:[%s3 + $0x2f0] sm:$0xff]
    %v1535 = vld [vmem:[%s3 + $0x2f8] sm:$0xff]
    %v1536 = vld [vmem:[%s3 + $0x300] sm:$0xff]
    %v1537 = vld [vmem:[%s3 + $0x308] sm:$0xff]
    %v1538 = vld [vmem:[%s3 + $0x310] sm:$0xff]
    %v1539 = vld [vmem:[%s3 + $0x318] sm:$0xff]
    %v1540 = vld [vmem:[%s3 + $0x320] sm:$0xff]
    %v1541 = vld [vmem:[%s3 + $0x328] sm:$0xff]
    %v1542 = vld [vmem:[%s3 + $0x330] sm:$0xff]
    %v1543 = vld [vmem:[%s3 + $0x338] sm:$0xff]
    %v1544 = vld [vmem:[%s3 + $0x340] sm:$0xff]
    %v1545 = vld [vmem:[%s3 + $0x348] sm:$0xff]
    %v1546 = vld [vmem:[%s3 + $0x350] sm:$0xff]
    %v1547 = vld [vmem:[%s3 + $0x358] sm:$0x7]
    %s1548 = sld [smem:[#allocation2 + $0x19]]
    %v1549 = vstv %s1548
    %v1550 = vmul.f32 %v1549, %v52
    %v1551 = vmul.f32 %v1549, %v53
    %v1552 = vmul.f32 %v1549, %v54
    %v1553 = vmul.f32 %v1549, %v55
    %v1554 = vmul.f32 %v1549, %v56
    %v1555 = vmul.f32 %v1549, %v57
    %v1556 = vmul.f32 %v1549, %v58
    %v1557 = vadd.f32 %v1550, 0.0
    %v1558 = vadd.f32 %v1551, 0.0
    %v1559 = vadd.f32 %v1552, 0.0
    %v1560 = vadd.f32 %v1553, 0.0
    %v1561 = vadd.f32 %v1554, 0.0
    %v1562 = vadd.f32 %v1555, 0.0
    %v1563 = vadd.f32 %v1556, 0.0
    %s1564 = sld [smem:[#allocation2 + $0x1a]]
    %v1565 = vstv %s1564
    %v1566 = vmul.f32 %v1565, %v52
    %v1567 = vmul.f32 %v1565, %v53
    %v1568 = vmul.f32 %v1565, %v54
    %v1569 = vmul.f32 %v1565, %v55
    %v1570 = vmul.f32 %v1565, %v56
    %v1571 = vmul.f32 %v1565, %v57
    %v1572 = vmul.f32 %v1565, %v58
    %1580 = vrot.lane.b32.xlu0 %v1566, 127
    %v1581 = vpop.permute.xlu0 %1580
    %1582 = vrot.lane.b32.xlu0 %v1567, 127
    %v1583 = vpop.permute.xlu0 %1582
    %1584 = vrot.lane.b32.xlu0 %v1568, 127
    %v1585 = vpop.permute.xlu0 %1584
    %1586 = vrot.lane.b32.xlu0 %v1569, 127
    %v1587 = vpop.permute.xlu0 %1586
    %1588 = vrot.lane.b32.xlu0 %v1570, 127
    %v1589 = vpop.permute.xlu0 %1588
    %1590 = vrot.lane.b32.xlu0 %v1571, 127
    %v1591 = vpop.permute.xlu0 %1590
    %1592 = vrot.lane.b32.xlu0 %v1572, 127
    %v1593 = vpop.permute.xlu0 %1592
    %v1594 = vsel %vm104, %v1581, %v1583
    %v1595 = vsel %vm104, %v1583, %v1585
    %v1596 = vsel %vm104, %v1585, %v1587
    %v1597 = vsel %vm104, %v1587, %v1589
    %v1598 = vsel %vm104, %v1589, %v1591
    %v1599 = vsel %vm104, %v1591, %v1593
    %v1607 = vadd.f32 %v1557, %v1594
    %v1608 = vadd.f32 %v1558, %v1595
    %v1609 = vadd.f32 %v1559, %v1596
    %v1610 = vadd.f32 %v1560, %v1597
    %v1611 = vadd.f32 %v1561, %v1598
    %v1612 = vadd.f32 %v1562, %v1599
    %v1613 = vadd.f32 %v1563, %v1593
    %s1614 = sld [smem:[#allocation2 + $0x1b]]
    %v1615 = vstv %s1614
    %v1616 = vmul.f32 %v1615, %v52
    %v1617 = vmul.f32 %v1615, %v53
    %v1618 = vmul.f32 %v1615, %v54
    %v1619 = vmul.f32 %v1615, %v55
    %v1620 = vmul.f32 %v1615, %v56
    %v1621 = vmul.f32 %v1615, %v57
    %v1622 = vmul.f32 %v1615, %v58
    %1630 = vrot.lane.b32.xlu0 %v1616, 126
    %v1631 = vpop.permute.xlu0 %1630
    %1632 = vrot.lane.b32.xlu0 %v1617, 126
    %v1633 = vpop.permute.xlu0 %1632
    %1634 = vrot.lane.b32.xlu0 %v1618, 126
    %v1635 = vpop.permute.xlu0 %1634
    %1636 = vrot.lane.b32.xlu0 %v1619, 126
    %v1637 = vpop.permute.xlu0 %1636
    %1638 = vrot.lane.b32.xlu0 %v1620, 126
    %v1639 = vpop.permute.xlu0 %1638
    %1640 = vrot.lane.b32.xlu0 %v1621, 126
    %v1641 = vpop.permute.xlu0 %1640
    %1642 = vrot.lane.b32.xlu0 %v1622, 126
    %v1643 = vpop.permute.xlu0 %1642
    %v1644 = vsel %vm155, %v1631, %v1633
    %v1645 = vsel %vm155, %v1633, %v1635
    %v1646 = vsel %vm155, %v1635, %v1637
    %v1647 = vsel %vm155, %v1637, %v1639
    %v1648 = vsel %vm155, %v1639, %v1641
    %v1649 = vsel %vm155, %v1641, %v1643
    %v1657 = vadd.f32 %v1607, %v1644
    %v1658 = vadd.f32 %v1608, %v1645
    %v1659 = vadd.f32 %v1609, %v1646
    %v1660 = vadd.f32 %v1610, %v1647
    %v1661 = vadd.f32 %v1611, %v1648
    %v1662 = vadd.f32 %v1612, %v1649
    %v1663 = vadd.f32 %v1613, %v1643
    %s1664 = sld [smem:[#allocation2 + $0x1c]]
    %v1665 = vstv %s1664
    %v1666 = vmul.f32 %v1665, %v52
    %v1667 = vmul.f32 %v1665, %v53
    %v1668 = vmul.f32 %v1665, %v54
    %v1669 = vmul.f32 %v1665, %v55
    %v1670 = vmul.f32 %v1665, %v56
    %v1671 = vmul.f32 %v1665, %v57
    %v1672 = vmul.f32 %v1665, %v58
    %1680 = vrot.lane.b32.xlu0 %v1666, 125
    %v1681 = vpop.permute.xlu0 %1680
    %1682 = vrot.lane.b32.xlu0 %v1667, 125
    %v1683 = vpop.permute.xlu0 %1682
    %1684 = vrot.lane.b32.xlu0 %v1668, 125
    %v1685 = vpop.permute.xlu0 %1684
    %1686 = vrot.lane.b32.xlu0 %v1669, 125
    %v1687 = vpop.permute.xlu0 %1686
    %1688 = vrot.lane.b32.xlu0 %v1670, 125
    %v1689 = vpop.permute.xlu0 %1688
    %1690 = vrot.lane.b32.xlu0 %v1671, 125
    %v1691 = vpop.permute.xlu0 %1690
    %1692 = vrot.lane.b32.xlu0 %v1672, 125
    %v1693 = vpop.permute.xlu0 %1692
    %v1694 = vsel %vm206, %v1681, %v1683
    %v1695 = vsel %vm206, %v1683, %v1685
    %v1696 = vsel %vm206, %v1685, %v1687
    %v1697 = vsel %vm206, %v1687, %v1689
    %v1698 = vsel %vm206, %v1689, %v1691
    %v1699 = vsel %vm206, %v1691, %v1693
    %v1707 = vadd.f32 %v1657, %v1694
    %v1708 = vadd.f32 %v1658, %v1695
    %v1709 = vadd.f32 %v1659, %v1696
    %v1710 = vadd.f32 %v1660, %v1697
    %v1711 = vadd.f32 %v1661, %v1698
    %v1712 = vadd.f32 %v1662, %v1699
    %v1713 = vadd.f32 %v1663, %v1693
    %s1714 = sld [smem:[#allocation2 + $0x1d]]
    %v1715 = vstv %s1714
    %v1716 = vmul.f32 %v1715, %v52
    %v1717 = vmul.f32 %v1715, %v53
    %v1718 = vmul.f32 %v1715, %v54
    %v1719 = vmul.f32 %v1715, %v55
    %v1720 = vmul.f32 %v1715, %v56
    %v1721 = vmul.f32 %v1715, %v57
    %v1722 = vmul.f32 %v1715, %v58
    %1730 = vrot.lane.b32.xlu0 %v1716, 124
    %v1731 = vpop.permute.xlu0 %1730
    %1732 = vrot.lane.b32.xlu0 %v1717, 124
    %v1733 = vpop.permute.xlu0 %1732
    %1734 = vrot.lane.b32.xlu0 %v1718, 124
    %v1735 = vpop.permute.xlu0 %1734
    %1736 = vrot.lane.b32.xlu0 %v1719, 124
    %v1737 = vpop.permute.xlu0 %1736
    %1738 = vrot.lane.b32.xlu0 %v1720, 124
    %v1739 = vpop.permute.xlu0 %1738
    %1740 = vrot.lane.b32.xlu0 %v1721, 124
    %v1741 = vpop.permute.xlu0 %1740
    %1742 = vrot.lane.b32.xlu0 %v1722, 124
    %v1743 = vpop.permute.xlu0 %1742
    %v1744 = vsel %vm257, %v1731, %v1733
    %v1745 = vsel %vm257, %v1733, %v1735
    %v1746 = vsel %vm257, %v1735, %v1737
    %v1747 = vsel %vm257, %v1737, %v1739
    %v1748 = vsel %vm257, %v1739, %v1741
    %v1749 = vsel %vm257, %v1741, %v1743
    %v1757 = vadd.f32 %v1707, %v1744
    %v1758 = vadd.f32 %v1708, %v1745
    %v1759 = vadd.f32 %v1709, %v1746
    %v1760 = vadd.f32 %v1710, %v1747
    %v1761 = vadd.f32 %v1711, %v1748
    %v1762 = vadd.f32 %v1712, %v1749
    %v1763 = vadd.f32 %v1713, %v1743
    %s1764 = sld [smem:[#allocation2 + $0x1e]]
    %v1765 = vstv %s1764
    %v1766 = vmul.f32 %v1765, %v279
    %v1767 = vmul.f32 %v1765, %v280
    %v1768 = vmul.f32 %v1765, %v281
    %v1769 = vmul.f32 %v1765, %v282
    %v1770 = vmul.f32 %v1765, %v283
    %v1771 = vmul.f32 %v1765, %v284
    %v1772 = vmul.f32 %v1765, %v285
    %v1773 = vmul.f32 %v1765, %v286
    %1782 = vrot.lane.b32.xlu0 %v1766, 96
    %v1783 = vpop.permute.xlu0 %1782
    %1784 = vrot.lane.b32.xlu0 %v1767, 96
    %v1785 = vpop.permute.xlu0 %1784
    %1786 = vrot.lane.b32.xlu0 %v1768, 96
    %v1787 = vpop.permute.xlu0 %1786
    %1788 = vrot.lane.b32.xlu0 %v1769, 96
    %v1789 = vpop.permute.xlu0 %1788
    %1790 = vrot.lane.b32.xlu0 %v1770, 96
    %v1791 = vpop.permute.xlu0 %1790
    %1792 = vrot.lane.b32.xlu0 %v1771, 96
    %v1793 = vpop.permute.xlu0 %1792
    %1794 = vrot.lane.b32.xlu0 %v1772, 96
    %v1795 = vpop.permute.xlu0 %1794
    %1796 = vrot.lane.b32.xlu0 %v1773, 96
    %v1797 = vpop.permute.xlu0 %1796
    %v1798 = vsel %vm320, %v1783, %v1785
    %v1799 = vsel %vm320, %v1785, %v1787
    %v1800 = vsel %vm320, %v1787, %v1789
    %v1801 = vsel %vm320, %v1789, %v1791
    %v1802 = vsel %vm320, %v1791, %v1793
    %v1803 = vsel %vm320, %v1793, %v1795
    %v1804 = vsel %vm320, %v1795, %v1797
    %v1812 = vadd.f32 %v1757, %v1798
    %v1813 = vadd.f32 %v1758, %v1799
    %v1814 = vadd.f32 %v1759, %v1800
    %v1815 = vadd.f32 %v1760, %v1801
    %v1816 = vadd.f32 %v1761, %v1802
    %v1817 = vadd.f32 %v1762, %v1803
    %v1818 = vadd.f32 %v1763, %v1804
    %s1819 = sld [smem:[#allocation2 + $0x1f]]
    %v1820 = vstv %s1819
    %v1821 = vmul.f32 %v1820, %v279
    %v1822 = vmul.f32 %v1820, %v280
    %v1823 = vmul.f32 %v1820, %v281
    %v1824 = vmul.f32 %v1820, %v282
    %v1825 = vmul.f32 %v1820, %v283
    %v1826 = vmul.f32 %v1820, %v284
    %v1827 = vmul.f32 %v1820, %v285
    %v1828 = vmul.f32 %v1820, %v286
    %1837 = vrot.lane.b32.xlu0 %v1821, 95
    %v1838 = vpop.permute.xlu0 %1837
    %1839 = vrot.lane.b32.xlu0 %v1822, 95
    %v1840 = vpop.permute.xlu0 %1839
    %1841 = vrot.lane.b32.xlu0 %v1823, 95
    %v1842 = vpop.permute.xlu0 %1841
    %1843 = vrot.lane.b32.xlu0 %v1824, 95
    %v1844 = vpop.permute.xlu0 %1843
    %1845 = vrot.lane.b32.xlu0 %v1825, 95
    %v1846 = vpop.permute.xlu0 %1845
    %1847 = vrot.lane.b32.xlu0 %v1826, 95
    %v1848 = vpop.permute.xlu0 %1847
    %1849 = vrot.lane.b32.xlu0 %v1827, 95
    %v1850 = vpop.permute.xlu0 %1849
    %1851 = vrot.lane.b32.xlu0 %v1828, 95
    %v1852 = vpop.permute.xlu0 %1851
    %v1853 = vsel %vm376, %v1838, %v1840
    %v1854 = vsel %vm376, %v1840, %v1842
    %v1855 = vsel %vm376, %v1842, %v1844
    %v1856 = vsel %vm376, %v1844, %v1846
    %v1857 = vsel %vm376, %v1846, %v1848
    %v1858 = vsel %vm376, %v1848, %v1850
    %v1859 = vsel %vm376, %v1850, %v1852
    %v1867 = vadd.f32 %v1812, %v1853
    %v1868 = vadd.f32 %v1813, %v1854
    %v1869 = vadd.f32 %v1814, %v1855
    %v1870 = vadd.f32 %v1815, %v1856
    %v1871 = vadd.f32 %v1816, %v1857
    %v1872 = vadd.f32 %v1817, %v1858
    %v1873 = vadd.f32 %v1818, %v1859
    %s1874 = sld [smem:[#allocation2 + $0x20]]
    %v1875 = vstv %s1874
    %v1876 = vmul.f32 %v1875, %v279
    %v1877 = vmul.f32 %v1875, %v280
    %v1878 = vmul.f32 %v1875, %v281
    %v1879 = vmul.f32 %v1875, %v282
    %v1880 = vmul.f32 %v1875, %v283
    %v1881 = vmul.f32 %v1875, %v284
    %v1882 = vmul.f32 %v1875, %v285
    %v1883 = vmul.f32 %v1875, %v286
    %1892 = vrot.lane.b32.xlu0 %v1876, 94
    %v1893 = vpop.permute.xlu0 %1892
    %1894 = vrot.lane.b32.xlu0 %v1877, 94
    %v1895 = vpop.permute.xlu0 %1894
    %1896 = vrot.lane.b32.xlu0 %v1878, 94
    %v1897 = vpop.permute.xlu0 %1896
    %1898 = vrot.lane.b32.xlu0 %v1879, 94
    %v1899 = vpop.permute.xlu0 %1898
    %1900 = vrot.lane.b32.xlu0 %v1880, 94
    %v1901 = vpop.permute.xlu0 %1900
    %1902 = vrot.lane.b32.xlu0 %v1881, 94
    %v1903 = vpop.permute.xlu0 %1902
    %1904 = vrot.lane.b32.xlu0 %v1882, 94
    %v1905 = vpop.permute.xlu0 %1904
    %1906 = vrot.lane.b32.xlu0 %v1883, 94
    %v1907 = vpop.permute.xlu0 %1906
    %v1908 = vsel %vm432, %v1893, %v1895
    %v1909 = vsel %vm432, %v1895, %v1897
    %v1910 = vsel %vm432, %v1897, %v1899
    %v1911 = vsel %vm432, %v1899, %v1901
    %v1912 = vsel %vm432, %v1901, %v1903
    %v1913 = vsel %vm432, %v1903, %v1905
    %v1914 = vsel %vm432, %v1905, %v1907
    %v1922 = vadd.f32 %v1867, %v1908
    %v1923 = vadd.f32 %v1868, %v1909
    %v1924 = vadd.f32 %v1869, %v1910
    %v1925 = vadd.f32 %v1870, %v1911
    %v1926 = vadd.f32 %v1871, %v1912
    %v1927 = vadd.f32 %v1872, %v1913
    %v1928 = vadd.f32 %v1873, %v1914
    %s1929 = sld [smem:[#allocation2 + $0x21]]
    %v1930 = vstv %s1929
    %v1931 = vmul.f32 %v1930, %v279
    %v1932 = vmul.f32 %v1930, %v280
    %v1933 = vmul.f32 %v1930, %v281
    %v1934 = vmul.f32 %v1930, %v282
    %v1935 = vmul.f32 %v1930, %v283
    %v1936 = vmul.f32 %v1930, %v284
    %v1937 = vmul.f32 %v1930, %v285
    %v1938 = vmul.f32 %v1930, %v286
    %1947 = vrot.lane.b32.xlu0 %v1931, 93
    %v1948 = vpop.permute.xlu0 %1947
    %1949 = vrot.lane.b32.xlu0 %v1932, 93
    %v1950 = vpop.permute.xlu0 %1949
    %1951 = vrot.lane.b32.xlu0 %v1933, 93
    %v1952 = vpop.permute.xlu0 %1951
    %1953 = vrot.lane.b32.xlu0 %v1934, 93
    %v1954 = vpop.permute.xlu0 %1953
    %1955 = vrot.lane.b32.xlu0 %v1935, 93
    %v1956 = vpop.permute.xlu0 %1955
    %1957 = vrot.lane.b32.xlu0 %v1936, 93
    %v1958 = vpop.permute.xlu0 %1957
    %1959 = vrot.lane.b32.xlu0 %v1937, 93
    %v1960 = vpop.permute.xlu0 %1959
    %1961 = vrot.lane.b32.xlu0 %v1938, 93
    %v1962 = vpop.permute.xlu0 %1961
    %v1963 = vsel %vm488, %v1948, %v1950
    %v1964 = vsel %vm488, %v1950, %v1952
    %v1965 = vsel %vm488, %v1952, %v1954
    %v1966 = vsel %vm488, %v1954, %v1956
    %v1967 = vsel %vm488, %v1956, %v1958
    %v1968 = vsel %vm488, %v1958, %v1960
    %v1969 = vsel %vm488, %v1960, %v1962
    %v1977 = vadd.f32 %v1922, %v1963
    %v1978 = vadd.f32 %v1923, %v1964
    %v1979 = vadd.f32 %v1924, %v1965
    %v1980 = vadd.f32 %v1925, %v1966
    %v1981 = vadd.f32 %v1926, %v1967
    %v1982 = vadd.f32 %v1927, %v1968
    %v1983 = vadd.f32 %v1928, %v1969
    %s1984 = sld [smem:[#allocation2 + $0x22]]
    %v1985 = vstv %s1984
    %v1986 = vmul.f32 %v1985, %v279
    %v1987 = vmul.f32 %v1985, %v280
    %v1988 = vmul.f32 %v1985, %v281
    %v1989 = vmul.f32 %v1985, %v282
    %v1990 = vmul.f32 %v1985, %v283
    %v1991 = vmul.f32 %v1985, %v284
    %v1992 = vmul.f32 %v1985, %v285
    %v1993 = vmul.f32 %v1985, %v286
    %2002 = vrot.lane.b32.xlu0 %v1986, 92
    %v2003 = vpop.permute.xlu0 %2002
    %2004 = vrot.lane.b32.xlu0 %v1987, 92
    %v2005 = vpop.permute.xlu0 %2004
    %2006 = vrot.lane.b32.xlu0 %v1988, 92
    %v2007 = vpop.permute.xlu0 %2006
    %2008 = vrot.lane.b32.xlu0 %v1989, 92
    %v2009 = vpop.permute.xlu0 %2008
    %2010 = vrot.lane.b32.xlu0 %v1990, 92
    %v2011 = vpop.permute.xlu0 %2010
    %2012 = vrot.lane.b32.xlu0 %v1991, 92
    %v2013 = vpop.permute.xlu0 %2012
    %2014 = vrot.lane.b32.xlu0 %v1992, 92
    %v2015 = vpop.permute.xlu0 %2014
    %2016 = vrot.lane.b32.xlu0 %v1993, 92
    %v2017 = vpop.permute.xlu0 %2016
    %v2018 = vsel %vm544, %v2003, %v2005
    %v2019 = vsel %vm544, %v2005, %v2007
    %v2020 = vsel %vm544, %v2007, %v2009
    %v2021 = vsel %vm544, %v2009, %v2011
    %v2022 = vsel %vm544, %v2011, %v2013
    %v2023 = vsel %vm544, %v2013, %v2015
    %v2024 = vsel %vm544, %v2015, %v2017
    %v2032 = vadd.f32 %v1977, %v2018
    %v2033 = vadd.f32 %v1978, %v2019
    %v2034 = vadd.f32 %v1979, %v2020
    %v2035 = vadd.f32 %v1980, %v2021
    %v2036 = vadd.f32 %v1981, %v2022
    %v2037 = vadd.f32 %v1982, %v2023
    %v2038 = vadd.f32 %v1983, %v2024
    %s2039 = sld [smem:[#allocation2 + $0x23]]
    %v2040 = vstv %s2039
    %v2041 = vmul.f32 %v2040, %v279
    %v2042 = vmul.f32 %v2040, %v280
    %v2043 = vmul.f32 %v2040, %v281
    %v2044 = vmul.f32 %v2040, %v282
    %v2045 = vmul.f32 %v2040, %v283
    %v2046 = vmul.f32 %v2040, %v284
    %v2047 = vmul.f32 %v2040, %v285
    %v2048 = vmul.f32 %v2040, %v286
    %2057 = vrot.lane.b32.xlu0 %v2041, 64
    %v2058 = vpop.permute.xlu0 %2057
    %2059 = vrot.lane.b32.xlu0 %v2042, 64
    %v2060 = vpop.permute.xlu0 %2059
    %2061 = vrot.lane.b32.xlu0 %v2043, 64
    %v2062 = vpop.permute.xlu0 %2061
    %2063 = vrot.lane.b32.xlu0 %v2044, 64
    %v2064 = vpop.permute.xlu0 %2063
    %2065 = vrot.lane.b32.xlu0 %v2045, 64
    %v2066 = vpop.permute.xlu0 %2065
    %2067 = vrot.lane.b32.xlu0 %v2046, 64
    %v2068 = vpop.permute.xlu0 %2067
    %2069 = vrot.lane.b32.xlu0 %v2047, 64
    %v2070 = vpop.permute.xlu0 %2069
    %2071 = vrot.lane.b32.xlu0 %v2048, 64
    %v2072 = vpop.permute.xlu0 %2071
    %v2073 = vsel %vm600, %v2058, %v2060
    %v2074 = vsel %vm600, %v2060, %v2062
    %v2075 = vsel %vm600, %v2062, %v2064
    %v2076 = vsel %vm600, %v2064, %v2066
    %v2077 = vsel %vm600, %v2066, %v2068
    %v2078 = vsel %vm600, %v2068, %v2070
    %v2079 = vsel %vm600, %v2070, %v2072
    %v2087 = vadd.f32 %v2032, %v2073
    %v2088 = vadd.f32 %v2033, %v2074
    %v2089 = vadd.f32 %v2034, %v2075
    %v2090 = vadd.f32 %v2035, %v2076
    %v2091 = vadd.f32 %v2036, %v2077
    %v2092 = vadd.f32 %v2037, %v2078
    %v2093 = vadd.f32 %v2038, %v2079
    %s2094 = sld [smem:[#allocation2 + $0x24]]
    %v2095 = vstv %s2094
    %v2096 = vmul.f32 %v2095, %v279
    %v2097 = vmul.f32 %v2095, %v280
    %v2098 = vmul.f32 %v2095, %v281
    %v2099 = vmul.f32 %v2095, %v282
    %v2100 = vmul.f32 %v2095, %v283
    %v2101 = vmul.f32 %v2095, %v284
    %v2102 = vmul.f32 %v2095, %v285
    %v2103 = vmul.f32 %v2095, %v286
    %2112 = vrot.lane.b32.xlu0 %v2096, 63
    %v2113 = vpop.permute.xlu0 %2112
    %2114 = vrot.lane.b32.xlu0 %v2097, 63
    %v2115 = vpop.permute.xlu0 %2114
    %2116 = vrot.lane.b32.xlu0 %v2098, 63
    %v2117 = vpop.permute.xlu0 %2116
    %2118 = vrot.lane.b32.xlu0 %v2099, 63
    %v2119 = vpop.permute.xlu0 %2118
    %2120 = vrot.lane.b32.xlu0 %v2100, 63
    %v2121 = vpop.permute.xlu0 %2120
    %2122 = vrot.lane.b32.xlu0 %v2101, 63
    %v2123 = vpop.permute.xlu0 %2122
    %2124 = vrot.lane.b32.xlu0 %v2102, 63
    %v2125 = vpop.permute.xlu0 %2124
    %2126 = vrot.lane.b32.xlu0 %v2103, 63
    %v2127 = vpop.permute.xlu0 %2126
    %v2128 = vsel %vm656, %v2113, %v2115
    %v2129 = vsel %vm656, %v2115, %v2117
    %v2130 = vsel %vm656, %v2117, %v2119
    %v2131 = vsel %vm656, %v2119, %v2121
    %v2132 = vsel %vm656, %v2121, %v2123
    %v2133 = vsel %vm656, %v2123, %v2125
    %v2134 = vsel %vm656, %v2125, %v2127
    %v2142 = vadd.f32 %v2087, %v2128
    %v2143 = vadd.f32 %v2088, %v2129
    %v2144 = vadd.f32 %v2089, %v2130
    %v2145 = vadd.f32 %v2090, %v2131
    %v2146 = vadd.f32 %v2091, %v2132
    %v2147 = vadd.f32 %v2092, %v2133
    %v2148 = vadd.f32 %v2093, %v2134
    %s2149 = sld [smem:[#allocation2 + $0x25]]
    %v2150 = vstv %s2149
    %v2151 = vmul.f32 %v2150, %v279
    %v2152 = vmul.f32 %v2150, %v280
    %v2153 = vmul.f32 %v2150, %v281
    %v2154 = vmul.f32 %v2150, %v282
    %v2155 = vmul.f32 %v2150, %v283
    %v2156 = vmul.f32 %v2150, %v284
    %v2157 = vmul.f32 %v2150, %v285
    %v2158 = vmul.f32 %v2150, %v286
    %2167 = vrot.lane.b32.xlu0 %v2151, 62
    %v2168 = vpop.permute.xlu0 %2167
    %2169 = vrot.lane.b32.xlu0 %v2152, 62
    %v2170 = vpop.permute.xlu0 %2169
    %2171 = vrot.lane.b32.xlu0 %v2153, 62
    %v2172 = vpop.permute.xlu0 %2171
    %2173 = vrot.lane.b32.xlu0 %v2154, 62
    %v2174 = vpop.permute.xlu0 %2173
    %2175 = vrot.lane.b32.xlu0 %v2155, 62
    %v2176 = vpop.permute.xlu0 %2175
    %2177 = vrot.lane.b32.xlu0 %v2156, 62
    %v2178 = vpop.permute.xlu0 %2177
    %2179 = vrot.lane.b32.xlu0 %v2157, 62
    %v2180 = vpop.permute.xlu0 %2179
    %2181 = vrot.lane.b32.xlu0 %v2158, 62
    %v2182 = vpop.permute.xlu0 %2181
    %v2183 = vsel %vm712, %v2168, %v2170
    %v2184 = vsel %vm712, %v2170, %v2172
    %v2185 = vsel %vm712, %v2172, %v2174
    %v2186 = vsel %vm712, %v2174, %v2176
    %v2187 = vsel %vm712, %v2176, %v2178
    %v2188 = vsel %vm712, %v2178, %v2180
    %v2189 = vsel %vm712, %v2180, %v2182
    %v2197 = vadd.f32 %v2142, %v2183
    %v2198 = vadd.f32 %v2143, %v2184
    %v2199 = vadd.f32 %v2144, %v2185
    %v2200 = vadd.f32 %v2145, %v2186
    %v2201 = vadd.f32 %v2146, %v2187
    %v2202 = vadd.f32 %v2147, %v2188
    %v2203 = vadd.f32 %v2148, %v2189
    %s2204 = sld [smem:[#allocation2 + $0x26]]
    %v2205 = vstv %s2204
    %v2206 = vmul.f32 %v2205, %v279
    %v2207 = vmul.f32 %v2205, %v280
    %v2208 = vmul.f32 %v2205, %v281
    %v2209 = vmul.f32 %v2205, %v282
    %v2210 = vmul.f32 %v2205, %v283
    %v2211 = vmul.f32 %v2205, %v284
    %v2212 = vmul.f32 %v2205, %v285
    %v2213 = vmul.f32 %v2205, %v286
    %2222 = vrot.lane.b32.xlu0 %v2206, 61
    %v2223 = vpop.permute.xlu0 %2222
    %2224 = vrot.lane.b32.xlu0 %v2207, 61
    %v2225 = vpop.permute.xlu0 %2224
    %2226 = vrot.lane.b32.xlu0 %v2208, 61
    %v2227 = vpop.permute.xlu0 %2226
    %2228 = vrot.lane.b32.xlu0 %v2209, 61
    %v2229 = vpop.permute.xlu0 %2228
    %2230 = vrot.lane.b32.xlu0 %v2210, 61
    %v2231 = vpop.permute.xlu0 %2230
    %2232 = vrot.lane.b32.xlu0 %v2211, 61
    %v2233 = vpop.permute.xlu0 %2232
    %2234 = vrot.lane.b32.xlu0 %v2212, 61
    %v2235 = vpop.permute.xlu0 %2234
    %2236 = vrot.lane.b32.xlu0 %v2213, 61
    %v2237 = vpop.permute.xlu0 %2236
    %v2238 = vsel %vm768, %v2223, %v2225
    %v2239 = vsel %vm768, %v2225, %v2227
    %v2240 = vsel %vm768, %v2227, %v2229
    %v2241 = vsel %vm768, %v2229, %v2231
    %v2242 = vsel %vm768, %v2231, %v2233
    %v2243 = vsel %vm768, %v2233, %v2235
    %v2244 = vsel %vm768, %v2235, %v2237
    %v2252 = vadd.f32 %v2197, %v2238
    %v2253 = vadd.f32 %v2198, %v2239
    %v2254 = vadd.f32 %v2199, %v2240
    %v2255 = vadd.f32 %v2200, %v2241
    %v2256 = vadd.f32 %v2201, %v2242
    %v2257 = vadd.f32 %v2202, %v2243
    %v2258 = vadd.f32 %v2203, %v2244
    %s2259 = sld [smem:[#allocation2 + $0x27]]
    %v2260 = vstv %s2259
    %v2261 = vmul.f32 %v2260, %v279
    %v2262 = vmul.f32 %v2260, %v280
    %v2263 = vmul.f32 %v2260, %v281
    %v2264 = vmul.f32 %v2260, %v282
    %v2265 = vmul.f32 %v2260, %v283
    %v2266 = vmul.f32 %v2260, %v284
    %v2267 = vmul.f32 %v2260, %v285
    %v2268 = vmul.f32 %v2260, %v286
    %2277 = vrot.lane.b32.xlu0 %v2261, 60
    %v2278 = vpop.permute.xlu0 %2277
    %2279 = vrot.lane.b32.xlu0 %v2262, 60
    %v2280 = vpop.permute.xlu0 %2279
    %2281 = vrot.lane.b32.xlu0 %v2263, 60
    %v2282 = vpop.permute.xlu0 %2281
    %2283 = vrot.lane.b32.xlu0 %v2264, 60
    %v2284 = vpop.permute.xlu0 %2283
    %2285 = vrot.lane.b32.xlu0 %v2265, 60
    %v2286 = vpop.permute.xlu0 %2285
    %2287 = vrot.lane.b32.xlu0 %v2266, 60
    %v2288 = vpop.permute.xlu0 %2287
    %2289 = vrot.lane.b32.xlu0 %v2267, 60
    %v2290 = vpop.permute.xlu0 %2289
    %2291 = vrot.lane.b32.xlu0 %v2268, 60
    %v2292 = vpop.permute.xlu0 %2291
    %v2293 = vsel %vm824, %v2278, %v2280
    %v2294 = vsel %vm824, %v2280, %v2282
    %v2295 = vsel %vm824, %v2282, %v2284
    %v2296 = vsel %vm824, %v2284, %v2286
    %v2297 = vsel %vm824, %v2286, %v2288
    %v2298 = vsel %vm824, %v2288, %v2290
    %v2299 = vsel %vm824, %v2290, %v2292
    %v2307 = vadd.f32 %v2252, %v2293
    %v2308 = vadd.f32 %v2253, %v2294
    %v2309 = vadd.f32 %v2254, %v2295
    %v2310 = vadd.f32 %v2255, %v2296
    %v2311 = vadd.f32 %v2256, %v2297
    %v2312 = vadd.f32 %v2257, %v2298
    %v2313 = vadd.f32 %v2258, %v2299
    %s2314 = sld [smem:[#allocation2 + $0x28]]
    %v2315 = vstv %s2314
    %v2316 = vmul.f32 %v2315, %v279
    %v2317 = vmul.f32 %v2315, %v280
    %v2318 = vmul.f32 %v2315, %v281
    %v2319 = vmul.f32 %v2315, %v282
    %v2320 = vmul.f32 %v2315, %v283
    %v2321 = vmul.f32 %v2315, %v284
    %v2322 = vmul.f32 %v2315, %v285
    %v2323 = vmul.f32 %v2315, %v286
    %2332 = vrot.lane.b32.xlu0 %v2316, 32
    %v2333 = vpop.permute.xlu0 %2332
    %2334 = vrot.lane.b32.xlu0 %v2317, 32
    %v2335 = vpop.permute.xlu0 %2334
    %2336 = vrot.lane.b32.xlu0 %v2318, 32
    %v2337 = vpop.permute.xlu0 %2336
    %2338 = vrot.lane.b32.xlu0 %v2319, 32
    %v2339 = vpop.permute.xlu0 %2338
    %2340 = vrot.lane.b32.xlu0 %v2320, 32
    %v2341 = vpop.permute.xlu0 %2340
    %2342 = vrot.lane.b32.xlu0 %v2321, 32
    %v2343 = vpop.permute.xlu0 %2342
    %2344 = vrot.lane.b32.xlu0 %v2322, 32
    %v2345 = vpop.permute.xlu0 %2344
    %2346 = vrot.lane.b32.xlu0 %v2323, 32
    %v2347 = vpop.permute.xlu0 %2346
    %v2348 = vsel %vm880, %v2333, %v2335
    %v2349 = vsel %vm880, %v2335, %v2337
    %v2350 = vsel %vm880, %v2337, %v2339
    %v2351 = vsel %vm880, %v2339, %v2341
    %v2352 = vsel %vm880, %v2341, %v2343
    %v2353 = vsel %vm880, %v2343, %v2345
    %v2354 = vsel %vm880, %v2345, %v2347
    %v2362 = vadd.f32 %v2307, %v2348
    %v2363 = vadd.f32 %v2308, %v2349
    %v2364 = vadd.f32 %v2309, %v2350
    %v2365 = vadd.f32 %v2310, %v2351
    %v2366 = vadd.f32 %v2311, %v2352
    %v2367 = vadd.f32 %v2312, %v2353
    %v2368 = vadd.f32 %v2313, %v2354
    %s2369 = sld [smem:[#allocation2 + $0x29]]
    %v2370 = vstv %s2369
    %v2371 = vmul.f32 %v2370, %v279
    %v2372 = vmul.f32 %v2370, %v280
    %v2373 = vmul.f32 %v2370, %v281
    %v2374 = vmul.f32 %v2370, %v282
    %v2375 = vmul.f32 %v2370, %v283
    %v2376 = vmul.f32 %v2370, %v284
    %v2377 = vmul.f32 %v2370, %v285
    %v2378 = vmul.f32 %v2370, %v286
    %2387 = vrot.lane.b32.xlu0 %v2371, 31
    %v2388 = vpop.permute.xlu0 %2387
    %2389 = vrot.lane.b32.xlu0 %v2372, 31
    %v2390 = vpop.permute.xlu0 %2389
    %2391 = vrot.lane.b32.xlu0 %v2373, 31
    %v2392 = vpop.permute.xlu0 %2391
    %2393 = vrot.lane.b32.xlu0 %v2374, 31
    %v2394 = vpop.permute.xlu0 %2393
    %2395 = vrot.lane.b32.xlu0 %v2375, 31
    %v2396 = vpop.permute.xlu0 %2395
    %2397 = vrot.lane.b32.xlu0 %v2376, 31
    %v2398 = vpop.permute.xlu0 %2397
    %2399 = vrot.lane.b32.xlu0 %v2377, 31
    %v2400 = vpop.permute.xlu0 %2399
    %2401 = vrot.lane.b32.xlu0 %v2378, 31
    %v2402 = vpop.permute.xlu0 %2401
    %v2403 = vsel %vm936, %v2388, %v2390
    %v2404 = vsel %vm936, %v2390, %v2392
    %v2405 = vsel %vm936, %v2392, %v2394
    %v2406 = vsel %vm936, %v2394, %v2396
    %v2407 = vsel %vm936, %v2396, %v2398
    %v2408 = vsel %vm936, %v2398, %v2400
    %v2409 = vsel %vm936, %v2400, %v2402
    %v2417 = vadd.f32 %v2362, %v2403
    %v2418 = vadd.f32 %v2363, %v2404
    %v2419 = vadd.f32 %v2364, %v2405
    %v2420 = vadd.f32 %v2365, %v2406
    %v2421 = vadd.f32 %v2366, %v2407
    %v2422 = vadd.f32 %v2367, %v2408
    %v2423 = vadd.f32 %v2368, %v2409
    %s2424 = sld [smem:[#allocation2 + $0x2a]]
    %v2425 = vstv %s2424
    %v2426 = vmul.f32 %v2425, %v279
    %v2427 = vmul.f32 %v2425, %v280
    %v2428 = vmul.f32 %v2425, %v281
    %v2429 = vmul.f32 %v2425, %v282
    %v2430 = vmul.f32 %v2425, %v283
    %v2431 = vmul.f32 %v2425, %v284
    %v2432 = vmul.f32 %v2425, %v285
    %v2433 = vmul.f32 %v2425, %v286
    %2442 = vrot.lane.b32.xlu0 %v2426, 30
    %v2443 = vpop.permute.xlu0 %2442
    %2444 = vrot.lane.b32.xlu0 %v2427, 30
    %v2445 = vpop.permute.xlu0 %2444
    %2446 = vrot.lane.b32.xlu0 %v2428, 30
    %v2447 = vpop.permute.xlu0 %2446
    %2448 = vrot.lane.b32.xlu0 %v2429, 30
    %v2449 = vpop.permute.xlu0 %2448
    %2450 = vrot.lane.b32.xlu0 %v2430, 30
    %v2451 = vpop.permute.xlu0 %2450
    %2452 = vrot.lane.b32.xlu0 %v2431, 30
    %v2453 = vpop.permute.xlu0 %2452
    %2454 = vrot.lane.b32.xlu0 %v2432, 30
    %v2455 = vpop.permute.xlu0 %2454
    %2456 = vrot.lane.b32.xlu0 %v2433, 30
    %v2457 = vpop.permute.xlu0 %2456
    %v2458 = vsel %vm992, %v2443, %v2445
    %v2459 = vsel %vm992, %v2445, %v2447
    %v2460 = vsel %vm992, %v2447, %v2449
    %v2461 = vsel %vm992, %v2449, %v2451
    %v2462 = vsel %vm992, %v2451, %v2453
    %v2463 = vsel %vm992, %v2453, %v2455
    %v2464 = vsel %vm992, %v2455, %v2457
    %v2472 = vadd.f32 %v2417, %v2458
    %v2473 = vadd.f32 %v2418, %v2459
    %v2474 = vadd.f32 %v2419, %v2460
    %v2475 = vadd.f32 %v2420, %v2461
    %v2476 = vadd.f32 %v2421, %v2462
    %v2477 = vadd.f32 %v2422, %v2463
    %v2478 = vadd.f32 %v2423, %v2464
    %s2479 = sld [smem:[#allocation2 + $0x2b]]
    %v2480 = vstv %s2479
    %v2481 = vmul.f32 %v2480, %v279
    %v2482 = vmul.f32 %v2480, %v280
    %v2483 = vmul.f32 %v2480, %v281
    %v2484 = vmul.f32 %v2480, %v282
    %v2485 = vmul.f32 %v2480, %v283
    %v2486 = vmul.f32 %v2480, %v284
    %v2487 = vmul.f32 %v2480, %v285
    %v2488 = vmul.f32 %v2480, %v286
    %2497 = vrot.lane.b32.xlu0 %v2481, 29
    %v2498 = vpop.permute.xlu0 %2497
    %2499 = vrot.lane.b32.xlu0 %v2482, 29
    %v2500 = vpop.permute.xlu0 %2499
    %2501 = vrot.lane.b32.xlu0 %v2483, 29
    %v2502 = vpop.permute.xlu0 %2501
    %2503 = vrot.lane.b32.xlu0 %v2484, 29
    %v2504 = vpop.permute.xlu0 %2503
    %2505 = vrot.lane.b32.xlu0 %v2485, 29
    %v2506 = vpop.permute.xlu0 %2505
    %2507 = vrot.lane.b32.xlu0 %v2486, 29
    %v2508 = vpop.permute.xlu0 %2507
    %2509 = vrot.lane.b32.xlu0 %v2487, 29
    %v2510 = vpop.permute.xlu0 %2509
    %2511 = vrot.lane.b32.xlu0 %v2488, 29
    %v2512 = vpop.permute.xlu0 %2511
    %v2513 = vsel %vm1048, %v2498, %v2500
    %v2514 = vsel %vm1048, %v2500, %v2502
    %v2515 = vsel %vm1048, %v2502, %v2504
    %v2516 = vsel %vm1048, %v2504, %v2506
    %v2517 = vsel %vm1048, %v2506, %v2508
    %v2518 = vsel %vm1048, %v2508, %v2510
    %v2519 = vsel %vm1048, %v2510, %v2512
    %v2527 = vadd.f32 %v2472, %v2513
    %v2528 = vadd.f32 %v2473, %v2514
    %v2529 = vadd.f32 %v2474, %v2515
    %v2530 = vadd.f32 %v2475, %v2516
    %v2531 = vadd.f32 %v2476, %v2517
    %v2532 = vadd.f32 %v2477, %v2518
    %v2533 = vadd.f32 %v2478, %v2519
    %s2534 = sld [smem:[#allocation2 + $0x2c]]
    %v2535 = vstv %s2534
    %v2536 = vmul.f32 %v2535, %v279
    %v2537 = vmul.f32 %v2535, %v280
    %v2538 = vmul.f32 %v2535, %v281
    %v2539 = vmul.f32 %v2535, %v282
    %v2540 = vmul.f32 %v2535, %v283
    %v2541 = vmul.f32 %v2535, %v284
    %v2542 = vmul.f32 %v2535, %v285
    %v2543 = vmul.f32 %v2535, %v286
    %2552 = vrot.lane.b32.xlu0 %v2536, 28
    %v2553 = vpop.permute.xlu0 %2552
    %2554 = vrot.lane.b32.xlu0 %v2537, 28
    %v2555 = vpop.permute.xlu0 %2554
    %2556 = vrot.lane.b32.xlu0 %v2538, 28
    %v2557 = vpop.permute.xlu0 %2556
    %2558 = vrot.lane.b32.xlu0 %v2539, 28
    %v2559 = vpop.permute.xlu0 %2558
    %2560 = vrot.lane.b32.xlu0 %v2540, 28
    %v2561 = vpop.permute.xlu0 %2560
    %2562 = vrot.lane.b32.xlu0 %v2541, 28
    %v2563 = vpop.permute.xlu0 %2562
    %2564 = vrot.lane.b32.xlu0 %v2542, 28
    %v2565 = vpop.permute.xlu0 %2564
    %2566 = vrot.lane.b32.xlu0 %v2543, 28
    %v2567 = vpop.permute.xlu0 %2566
    %v2568 = vsel %vm1104, %v2553, %v2555
    %v2569 = vsel %vm1104, %v2555, %v2557
    %v2570 = vsel %vm1104, %v2557, %v2559
    %v2571 = vsel %vm1104, %v2559, %v2561
    %v2572 = vsel %vm1104, %v2561, %v2563
    %v2573 = vsel %vm1104, %v2563, %v2565
    %v2574 = vsel %vm1104, %v2565, %v2567
    %v2582 = vadd.f32 %v2527, %v2568
    %v2583 = vadd.f32 %v2528, %v2569
    %v2584 = vadd.f32 %v2529, %v2570
    %v2585 = vadd.f32 %v2530, %v2571
    %v2586 = vadd.f32 %v2531, %v2572
    %v2587 = vadd.f32 %v2532, %v2573
    %v2588 = vadd.f32 %v2533, %v2574
    %s2589 = sld [smem:[#allocation2 + $0x2d]]
    %v2590 = vstv %s2589
    %v2591 = vmul.f32 %v2590, %v280
    %v2592 = vmul.f32 %v2590, %v281
    %v2593 = vmul.f32 %v2590, %v282
    %v2594 = vmul.f32 %v2590, %v283
    %v2595 = vmul.f32 %v2590, %v284
    %v2596 = vmul.f32 %v2590, %v285
    %v2597 = vmul.f32 %v2590, %v286
    %v2598 = vadd.f32 %v2582, %v2591
    %v2599 = vadd.f32 %v2583, %v2592
    %v2600 = vadd.f32 %v2584, %v2593
    %v2601 = vadd.f32 %v2585, %v2594
    %v2602 = vadd.f32 %v2586, %v2595
    %v2603 = vadd.f32 %v2587, %v2596
    %v2604 = vadd.f32 %v2588, %v2597
    %s2605 = sld [smem:[#allocation2 + $0x2e]]
    %v2606 = vstv %s2605
    %v2607 = vmul.f32 %v2606, %v280
    %v2608 = vmul.f32 %v2606, %v281
    %v2609 = vmul.f32 %v2606, %v282
    %v2610 = vmul.f32 %v2606, %v283
    %v2611 = vmul.f32 %v2606, %v284
    %v2612 = vmul.f32 %v2606, %v285
    %v2613 = vmul.f32 %v2606, %v286
    %2621 = vrot.lane.b32.xlu0 %v2607, 127
    %v2622 = vpop.permute.xlu0 %2621
    %2623 = vrot.lane.b32.xlu0 %v2608, 127
    %v2624 = vpop.permute.xlu0 %2623
    %2625 = vrot.lane.b32.xlu0 %v2609, 127
    %v2626 = vpop.permute.xlu0 %2625
    %2627 = vrot.lane.b32.xlu0 %v2610, 127
    %v2628 = vpop.permute.xlu0 %2627
    %2629 = vrot.lane.b32.xlu0 %v2611, 127
    %v2630 = vpop.permute.xlu0 %2629
    %2631 = vrot.lane.b32.xlu0 %v2612, 127
    %v2632 = vpop.permute.xlu0 %2631
    %2633 = vrot.lane.b32.xlu0 %v2613, 127
    %v2634 = vpop.permute.xlu0 %2633
    %v2635 = vsel %vm104, %v2622, %v2624
    %v2636 = vsel %vm104, %v2624, %v2626
    %v2637 = vsel %vm104, %v2626, %v2628
    %v2638 = vsel %vm104, %v2628, %v2630
    %v2639 = vsel %vm104, %v2630, %v2632
    %v2640 = vsel %vm104, %v2632, %v2634
    %v2648 = vadd.f32 %v2598, %v2635
    %v2649 = vadd.f32 %v2599, %v2636
    %v2650 = vadd.f32 %v2600, %v2637
    %v2651 = vadd.f32 %v2601, %v2638
    %v2652 = vadd.f32 %v2602, %v2639
    %v2653 = vadd.f32 %v2603, %v2640
    %v2654 = vadd.f32 %v2604, %v2634
    %s2655 = sld [smem:[#allocation2 + $0x2f]]
    %v2656 = vstv %s2655
    %v2657 = vmul.f32 %v2656, %v280
    %v2658 = vmul.f32 %v2656, %v281
    %v2659 = vmul.f32 %v2656, %v282
    %v2660 = vmul.f32 %v2656, %v283
    %v2661 = vmul.f32 %v2656, %v284
    %v2662 = vmul.f32 %v2656, %v285
    %v2663 = vmul.f32 %v2656, %v286
    %2671 = vrot.lane.b32.xlu0 %v2657, 126
    %v2672 = vpop.permute.xlu0 %2671
    %2673 = vrot.lane.b32.xlu0 %v2658, 126
    %v2674 = vpop.permute.xlu0 %2673
    %2675 = vrot.lane.b32.xlu0 %v2659, 126
    %v2676 = vpop.permute.xlu0 %2675
    %2677 = vrot.lane.b32.xlu0 %v2660, 126
    %v2678 = vpop.permute.xlu0 %2677
    %2679 = vrot.lane.b32.xlu0 %v2661, 126
    %v2680 = vpop.permute.xlu0 %2679
    %2681 = vrot.lane.b32.xlu0 %v2662, 126
    %v2682 = vpop.permute.xlu0 %2681
    %2683 = vrot.lane.b32.xlu0 %v2663, 126
    %v2684 = vpop.permute.xlu0 %2683
    %v2685 = vsel %vm155, %v2672, %v2674
    %v2686 = vsel %vm155, %v2674, %v2676
    %v2687 = vsel %vm155, %v2676, %v2678
    %v2688 = vsel %vm155, %v2678, %v2680
    %v2689 = vsel %vm155, %v2680, %v2682
    %v2690 = vsel %vm155, %v2682, %v2684
    %v2698 = vadd.f32 %v2648, %v2685
    %v2699 = vadd.f32 %v2649, %v2686
    %v2700 = vadd.f32 %v2650, %v2687
    %v2701 = vadd.f32 %v2651, %v2688
    %v2702 = vadd.f32 %v2652, %v2689
    %v2703 = vadd.f32 %v2653, %v2690
    %v2704 = vadd.f32 %v2654, %v2684
    %s2705 = sld [smem:[#allocation2 + $0x30]]
    %v2706 = vstv %s2705
    %v2707 = vmul.f32 %v2706, %v280
    %v2708 = vmul.f32 %v2706, %v281
    %v2709 = vmul.f32 %v2706, %v282
    %v2710 = vmul.f32 %v2706, %v283
    %v2711 = vmul.f32 %v2706, %v284
    %v2712 = vmul.f32 %v2706, %v285
    %v2713 = vmul.f32 %v2706, %v286
    %2721 = vrot.lane.b32.xlu0 %v2707, 125
    %v2722 = vpop.permute.xlu0 %2721
    %2723 = vrot.lane.b32.xlu0 %v2708, 125
    %v2724 = vpop.permute.xlu0 %2723
    %2725 = vrot.lane.b32.xlu0 %v2709, 125
    %v2726 = vpop.permute.xlu0 %2725
    %2727 = vrot.lane.b32.xlu0 %v2710, 125
    %v2728 = vpop.permute.xlu0 %2727
    %2729 = vrot.lane.b32.xlu0 %v2711, 125
    %v2730 = vpop.permute.xlu0 %2729
    %2731 = vrot.lane.b32.xlu0 %v2712, 125
    %v2732 = vpop.permute.xlu0 %2731
    %2733 = vrot.lane.b32.xlu0 %v2713, 125
    %v2734 = vpop.permute.xlu0 %2733
    %v2735 = vsel %vm206, %v2722, %v2724
    %v2736 = vsel %vm206, %v2724, %v2726
    %v2737 = vsel %vm206, %v2726, %v2728
    %v2738 = vsel %vm206, %v2728, %v2730
    %v2739 = vsel %vm206, %v2730, %v2732
    %v2740 = vsel %vm206, %v2732, %v2734
    %v2748 = vadd.f32 %v2698, %v2735
    %v2749 = vadd.f32 %v2699, %v2736
    %v2750 = vadd.f32 %v2700, %v2737
    %v2751 = vadd.f32 %v2701, %v2738
    %v2752 = vadd.f32 %v2702, %v2739
    %v2753 = vadd.f32 %v2703, %v2740
    %v2754 = vadd.f32 %v2704, %v2734
    %s2755 = sld [smem:[#allocation2 + $0x31]]
    %v2756 = vstv %s2755
    %v2757 = vmul.f32 %v2756, %v280
    %v2758 = vmul.f32 %v2756, %v281
    %v2759 = vmul.f32 %v2756, %v282
    %v2760 = vmul.f32 %v2756, %v283
    %v2761 = vmul.f32 %v2756, %v284
    %v2762 = vmul.f32 %v2756, %v285
    %v2763 = vmul.f32 %v2756, %v286
    %2771 = vrot.lane.b32.xlu0 %v2757, 124
    %v2772 = vpop.permute.xlu0 %2771
    %2773 = vrot.lane.b32.xlu0 %v2758, 124
    %v2774 = vpop.permute.xlu0 %2773
    %2775 = vrot.lane.b32.xlu0 %v2759, 124
    %v2776 = vpop.permute.xlu0 %2775
    %2777 = vrot.lane.b32.xlu0 %v2760, 124
    %v2778 = vpop.permute.xlu0 %2777
    %2779 = vrot.lane.b32.xlu0 %v2761, 124
    %v2780 = vpop.permute.xlu0 %2779
    %2781 = vrot.lane.b32.xlu0 %v2762, 124
    %v2782 = vpop.permute.xlu0 %2781
    %2783 = vrot.lane.b32.xlu0 %v2763, 124
    %v2784 = vpop.permute.xlu0 %2783
    %v2785 = vsel %vm257, %v2772, %v2774
    %v2786 = vsel %vm257, %v2774, %v2776
    %v2787 = vsel %vm257, %v2776, %v2778
    %v2788 = vsel %vm257, %v2778, %v2780
    %v2789 = vsel %vm257, %v2780, %v2782
    %v2790 = vsel %vm257, %v2782, %v2784
    %v2798 = vadd.f32 %v2748, %v2785
    %v2799 = vadd.f32 %v2749, %v2786
    %v2800 = vadd.f32 %v2750, %v2787
    %v2801 = vadd.f32 %v2751, %v2788
    %v2802 = vadd.f32 %v2752, %v2789
    %v2803 = vadd.f32 %v2753, %v2790
    %v2804 = vadd.f32 %v2754, %v2784
    %2812 = vrot.lane.b32.xlu0 %v2798, 127
    %v2813 = vpop.permute.xlu0 %2812
    %2814 = vrot.lane.b32.xlu0 %v2799, 127
    %v2815 = vpop.permute.xlu0 %2814
    %2816 = vrot.lane.b32.xlu0 %v2800, 127
    %v2817 = vpop.permute.xlu0 %2816
    %2818 = vrot.lane.b32.xlu0 %v2801, 127
    %v2819 = vpop.permute.xlu0 %2818
    %2820 = vrot.lane.b32.xlu0 %v2802, 127
    %v2821 = vpop.permute.xlu0 %2820
    %2822 = vrot.lane.b32.xlu0 %v2803, 127
    %v2823 = vpop.permute.xlu0 %2822
    %2824 = vrot.lane.b32.xlu0 %v2804, 127
    %v2825 = vpop.permute.xlu0 %2824
    %v2826 = vsel %vm104, %v2813, %v2815
    %v2827 = vsel %vm104, %v2815, %v2817
    %v2828 = vsel %vm104, %v2817, %v2819
    %v2829 = vsel %vm104, %v2819, %v2821
    %v2830 = vsel %vm104, %v2821, %v2823
    %v2831 = vsel %vm104, %v2823, %v2825
    %v2839 = vmax.f32 %v2798, %v2826
    %v2840 = vmax.f32 %v2799, %v2827
    %v2841 = vmax.f32 %v2800, %v2828
    %v2842 = vmax.f32 %v2801, %v2829
    %v2843 = vmax.f32 %v2802, %v2830
    %v2844 = vmax.f32 %v2803, %v2831
    %v2845 = vmax.f32 %v2804, %v2825
    %2853 = vrot.lane.b32.xlu0 %v2839, 96
    %v2854 = vpop.permute.xlu0 %2853
    %2855 = vrot.lane.b32.xlu0 %v2840, 96
    %v2856 = vpop.permute.xlu0 %2855
    %2857 = vrot.lane.b32.xlu0 %v2841, 96
    %v2858 = vpop.permute.xlu0 %2857
    %2859 = vrot.lane.b32.xlu0 %v2842, 96
    %v2860 = vpop.permute.xlu0 %2859
    %2861 = vrot.lane.b32.xlu0 %v2843, 96
    %v2862 = vpop.permute.xlu0 %2861
    %2863 = vrot.lane.b32.xlu0 %v2844, 96
    %v2864 = vpop.permute.xlu0 %2863
    %2865 = vrot.lane.b32.xlu0 %v2845, 96
    %v2866 = vpop.permute.xlu0 %2865
    %v2867 = vsel %vm320, %v2854, %v2856
    %v2868 = vsel %vm320, %v2856, %v2858
    %v2869 = vsel %vm320, %v2858, %v2860
    %v2870 = vsel %vm320, %v2860, %v2862
    %v2871 = vsel %vm320, %v2862, %v2864
    %v2872 = vsel %vm320, %v2864, %v2866
    %v2880 = vmax.f32 %v2839, %v2867
    %v2881 = vmax.f32 %v2840, %v2868
    %v2882 = vmax.f32 %v2841, %v2869
    %v2883 = vmax.f32 %v2842, %v2870
    %v2884 = vmax.f32 %v2843, %v2871
    %v2885 = vmax.f32 %v2844, %v2872
    %v2886 = vmax.f32 %v2845, %v2866
    %s2887 = sld [smem:[#allocation4 + $0x1]]
    %v2888 = vstv %s2887
    %v2889 = vadd.f32 %v2880, %v2888
    %v2890 = vadd.f32 %v2881, %v2888
    %v2891 = vadd.f32 %v2882, %v2888
    %v2892 = vadd.f32 %v2883, %v2888
    %v2893 = vadd.f32 %v2884, %v2888
    %v2894 = vadd.f32 %v2885, %v2888
    %v2895 = vadd.f32 %v2886, %v2888
    %v2896 = vmax.f32 %v2889, 0.0
    %v2897 = vmax.f32 %v2890, 0.0
    %v2898 = vmax.f32 %v2891, 0.0
    %v2899 = vmax.f32 %v2892, 0.0
    %v2900 = vmax.f32 %v2893, 0.0
    %v2901 = vmax.f32 %v2894, 0.0
    %v2902 = vmax.f32 %v2895, 0.0
    %s2903 = scalar_lea.vmem %s3, 864
    %v2904 = vld [vmem:[%s2903] sm:$0xff]
    %v2905 = vld [vmem:[%s2903 + $0x8] sm:$0xff]
    %v2906 = vld [vmem:[%s2903 + $0x10] sm:$0xff]
    %v2907 = vld [vmem:[%s2903 + $0x18] sm:$0xff]
    %v2908 = vld [vmem:[%s2903 + $0x20] sm:$0xff]
    %v2909 = vld [vmem:[%s2903 + $0x28] sm:$0xff]
    %v2910 = vld [vmem:[%s2903 + $0x30] sm:$0xff]
    %v2911 = vld [vmem:[%s2903 + $0x38] sm:$0xff]
    %v2912 = vld [vmem:[%s2903 + $0x40] sm:$0xff]
    %v2913 = vld [vmem:[%s2903 + $0x48] sm:$0xff]
    %v2914 = vld [vmem:[%s2903 + $0x50] sm:$0xff]
    %v2915 = vld [vmem:[%s2903 + $0x58] sm:$0xff]
    %v2916 = vld [vmem:[%s2903 + $0x60] sm:$0xff]
    %v2917 = vld [vmem:[%s2903 + $0x68] sm:$0xff]
    %v2918 = vld [vmem:[%s2903 + $0x70] sm:$0xff]
    %v2919 = vld [vmem:[%s2903 + $0x78] sm:$0xff]
    %v2920 = vld [vmem:[%s2903 + $0x80] sm:$0xff]
    %v2921 = vld [vmem:[%s2903 + $0x88] sm:$0xff]
    %v2922 = vld [vmem:[%s2903 + $0x90] sm:$0xff]
    %v2923 = vld [vmem:[%s2903 + $0x98] sm:$0xff]
    %v2924 = vld [vmem:[%s2903 + $0xa0] sm:$0xff]
    %v2925 = vld [vmem:[%s2903 + $0xa8] sm:$0xff]
    %v2926 = vld [vmem:[%s2903 + $0xb0] sm:$0xff]
    %v2927 = vld [vmem:[%s2903 + $0xb8] sm:$0xff]
    %v2928 = vld [vmem:[%s2903 + $0xc0] sm:$0xff]
    %v2929 = vld [vmem:[%s2903 + $0xc8] sm:$0xff]
    %v2930 = vld [vmem:[%s2903 + $0xd0] sm:$0xff]
    %v2931 = vld [vmem:[%s2903 + $0xd8] sm:$0xff]
    %v2932 = vld [vmem:[%s2903 + $0xe0] sm:$0xff]
    %v2933 = vld [vmem:[%s2903 + $0xe8] sm:$0xff]
    %v2934 = vld [vmem:[%s2903 + $0xf0] sm:$0xff]
    %v2935 = vld [vmem:[%s2903 + $0xf8] sm:$0xff]
    %v2936 = vld [vmem:[%s2903 + $0x100] sm:$0xff]
    %v2937 = vld [vmem:[%s2903 + $0x108] sm:$0xff]
    %v2938 = vld [vmem:[%s2903 + $0x110] sm:$0xff]
    %v2939 = vld [vmem:[%s2903 + $0x118] sm:$0xff]
    %v2940 = vld [vmem:[%s2903 + $0x120] sm:$0xff]
    %v2941 = vld [vmem:[%s2903 + $0x128] sm:$0xff]
    %v2942 = vld [vmem:[%s2903 + $0x130] sm:$0xff]
    %v2943 = vld [vmem:[%s2903 + $0x138] sm:$0xff]
    %v2944 = vld [vmem:[%s2903 + $0x140] sm:$0xff]
    %v2945 = vld [vmem:[%s2903 + $0x148] sm:$0xff]
    %v2946 = vld [vmem:[%s2903 + $0x150] sm:$0xff]
    %v2947 = vld [vmem:[%s2903 + $0x158] sm:$0xff]
    %v2948 = vld [vmem:[%s2903 + $0x160] sm:$0xff]
    %v2949 = vld [vmem:[%s2903 + $0x168] sm:$0xff]
    %v2950 = vld [vmem:[%s2903 + $0x170] sm:$0xff]
    %v2951 = vld [vmem:[%s2903 + $0x178] sm:$0xff]
    %v2952 = vld [vmem:[%s2903 + $0x180] sm:$0xff]
    %v2953 = vld [vmem:[%s2903 + $0x188] sm:$0xff]
    %v2954 = vld [vmem:[%s2903 + $0x190] sm:$0xff]
    %v2955 = vld [vmem:[%s2903 + $0x198] sm:$0xff]
    %v2956 = vld [vmem:[%s2903 + $0x1a0] sm:$0xff]
    %v2957 = vld [vmem:[%s2903 + $0x1a8] sm:$0xff]
    %v2958 = vld [vmem:[%s2903 + $0x1b0] sm:$0xff]
    %v2959 = vld [vmem:[%s2903 + $0x1b8] sm:$0xff]
    %v2960 = vld [vmem:[%s2903 + $0x1c0] sm:$0xff]
    %v2961 = vld [vmem:[%s2903 + $0x1c8] sm:$0xff]
    %v2962 = vld [vmem:[%s2903 + $0x1d0] sm:$0xff]
    %v2963 = vld [vmem:[%s2903 + $0x1d8] sm:$0xff]
    %v2964 = vld [vmem:[%s2903 + $0x1e0] sm:$0xff]
    %v2965 = vld [vmem:[%s2903 + $0x1e8] sm:$0xff]
    %v2966 = vld [vmem:[%s2903 + $0x1f0] sm:$0xff]
    %v2967 = vld [vmem:[%s2903 + $0x1f8] sm:$0xff]
    %v2968 = vld [vmem:[%s2903 + $0x200] sm:$0xff]
    %v2969 = vld [vmem:[%s2903 + $0x208] sm:$0xff]
    %v2970 = vld [vmem:[%s2903 + $0x210] sm:$0xff]
    %v2971 = vld [vmem:[%s2903 + $0x218] sm:$0xff]
    %v2972 = vld [vmem:[%s2903 + $0x220] sm:$0xff]
    %v2973 = vld [vmem:[%s2903 + $0x228] sm:$0xff]
    %v2974 = vld [vmem:[%s2903 + $0x230] sm:$0xff]
    %v2975 = vld [vmem:[%s2903 + $0x238] sm:$0xff]
    %v2976 = vld [vmem:[%s2903 + $0x240] sm:$0xff]
    %v2977 = vld [vmem:[%s2903 + $0x248] sm:$0xff]
    %v2978 = vld [vmem:[%s2903 + $0x250] sm:$0xff]
    %v2979 = vld [vmem:[%s2903 + $0x258] sm:$0xff]
    %v2980 = vld [vmem:[%s2903 + $0x260] sm:$0xff]
    %v2981 = vld [vmem:[%s2903 + $0x268] sm:$0xff]
    %v2982 = vld [vmem:[%s2903 + $0x270] sm:$0xff]
    %v2983 = vld [vmem:[%s2903 + $0x278] sm:$0xff]
    %v2984 = vld [vmem:[%s2903 + $0x280] sm:$0xff]
    %v2985 = vld [vmem:[%s2903 + $0x288] sm:$0xff]
    %v2986 = vld [vmem:[%s2903 + $0x290] sm:$0xff]
    %v2987 = vld [vmem:[%s2903 + $0x298] sm:$0xff]
    %v2988 = vld [vmem:[%s2903 + $0x2a0] sm:$0xff]
    %v2989 = vld [vmem:[%s2903 + $0x2a8] sm:$0xff]
    %v2990 = vld [vmem:[%s2903 + $0x2b0] sm:$0xff]
    %v2991 = vld [vmem:[%s2903 + $0x2b8] sm:$0xff]
    %v2992 = vld [vmem:[%s2903 + $0x2c0] sm:$0xff]
    %v2993 = vld [vmem:[%s2903 + $0x2c8] sm:$0xff]
    %v2994 = vld [vmem:[%s2903 + $0x2d0] sm:$0xff]
    %v2995 = vld [vmem:[%s2903 + $0x2d8] sm:$0xff]
    %v2996 = vld [vmem:[%s2903 + $0x2e0] sm:$0xff]
    %v2997 = vld [vmem:[%s2903 + $0x2e8] sm:$0xff]
    %v2998 = vld [vmem:[%s2903 + $0x2f0] sm:$0xff]
    %v2999 = vld [vmem:[%s2903 + $0x2f8] sm:$0xff]
    %v3000 = vld [vmem:[%s2903 + $0x300] sm:$0xff]
    %v3001 = vld [vmem:[%s2903 + $0x308] sm:$0xff]
    %v3002 = vld [vmem:[%s2903 + $0x310] sm:$0xff]
    %v3003 = vld [vmem:[%s2903 + $0x318] sm:$0xff]
    %v3004 = vld [vmem:[%s2903 + $0x320] sm:$0xff]
    %v3005 = vld [vmem:[%s2903 + $0x328] sm:$0xff]
    %v3006 = vld [vmem:[%s2903 + $0x330] sm:$0xff]
    %v3007 = vld [vmem:[%s2903 + $0x338] sm:$0xff]
    %v3008 = vld [vmem:[%s2903 + $0x340] sm:$0xff]
    %v3009 = vld [vmem:[%s2903 + $0x348] sm:$0xff]
    %v3010 = vld [vmem:[%s2903 + $0x350] sm:$0xff]
    %v3011 = vld [vmem:[%s2903 + $0x358] sm:$0x7]
    %vm3012 = vcmask 744448
    %v3014 = vsel %vm3012, %v2902, 0
    %vm3016 = vcmask 1042432
    %v3018 = vsel %vm3016, %v3011, 0
    %3020 = vmatprep.subr.mxu0 0.0
    %3021 = vmatpush1.msra.mxu0 %v2919
    %3022 = vmatprep.subr.mxu0 0.0
    %3023 = vmatpush1.msra.mxu0 %v2918
    %3024 = vmatprep.subr.mxu0 0.0
    %3025 = vmatpush1.msra.mxu0 %v2917
    %3026 = vmatprep.subr.mxu0 0.0
    %3027 = vmatpush1.msra.mxu0 %v2916
    %3028 = vmatprep.subr.mxu0 0.0
    %3029 = vmatpush1.msra.mxu0 %v2915
    %3030 = vmatprep.subr.mxu0 0.0
    %3031 = vmatpush1.msra.mxu0 %v2914
    %3032 = vmatprep.subr.mxu0 0.0
    %3033 = vmatpush1.msra.mxu0 %v2913
    %3034 = vmatprep.subr.mxu0 0.0
    %3035 = vmatpush1.msra.mxu0 %v2912
    %3036 = vmatprep.subr.mxu0 0.0
    %3037 = vmatpush1.msra.mxu0 %v2911
    %3038 = vmatprep.subr.mxu0 0.0
    %3039 = vmatpush1.msra.mxu0 %v2910
    %3040 = vmatprep.subr.mxu0 0.0
    %3041 = vmatpush1.msra.mxu0 %v2909
    %3042 = vmatprep.subr.mxu0 0.0
    %3043 = vmatpush1.msra.mxu0 %v2908
    %3044 = vmatprep.subr.mxu0 0.0
    %3045 = vmatpush1.msra.mxu0 %v2907
    %3046 = vmatprep.subr.mxu0 0.0
    %3047 = vmatpush1.msra.mxu0 %v2906
    %3048 = vmatprep.subr.mxu0 0.0
    %3049 = vmatpush1.msra.mxu0 %v2905
    %3050 = vmatprep.subr.mxu0 0.0
    %3051 = vmatpush1.msra.mxu0 %v2904
    %3052 = vmatprep.subr.mxu0 0.0
    %3053 = vmatpush2.msra.mxu0 %v2935
    %3054 = vmatprep.subr.mxu0 0.0
    %3055 = vmatpush2.msra.mxu0 %v2934
    %3056 = vmatprep.subr.mxu0 0.0
    %3057 = vmatpush2.msra.mxu0 %v2933
    %3058 = vmatprep.subr.mxu0 0.0
    %3059 = vmatpush2.msra.mxu0 %v2932
    %3060 = vmatprep.subr.mxu0 0.0
    %3061 = vmatpush2.msra.mxu0 %v2931
    %3062 = vmatprep.subr.mxu0 0.0
    %3063 = vmatpush2.msra.mxu0 %v2930
    %3064 = vmatprep.subr.mxu0 0.0
    %3065 = vmatpush2.msra.mxu0 %v2929
    %3066 = vmatprep.subr.mxu0 0.0
    %3067 = vmatpush2.msra.mxu0 %v2928
    %3068 = vmatprep.subr.mxu0 0.0
    %3069 = vmatpush2.msra.mxu0 %v2927
    %3070 = vmatprep.subr.mxu0 0.0
    %3071 = vmatpush2.msra.mxu0 %v2926
    %3072 = vmatprep.subr.mxu0 0.0
    %3073 = vmatpush2.msra.mxu0 %v2925
    %3074 = vmatprep.subr.mxu0 0.0
    %3075 = vmatpush2.msra.mxu0 %v2924
    %3076 = vmatprep.subr.mxu0 0.0
    %3077 = vmatpush2.msra.mxu0 %v2923
    %3078 = vmatprep.subr.mxu0 0.0
    %3079 = vmatpush2.msra.mxu0 %v2922
    %3080 = vmatprep.subr.mxu0 0.0
    %3081 = vmatpush2.msra.mxu0 %v2921
    %3082 = vmatprep.subr.mxu0 0.0
    %3083 = vmatpush2.msra.mxu0 %v2920
    %3084 = vmatprep.mubr.f32.mxu0 %v2897
    %3085 = vmatmul.mubr.f32.gmra.mxu0 %v2896
    %v3086 = vpop.f32.mrf.mxu0
    %v3087 = vadd.f32 0.0, %v3086
    %v3088 = vpop.f32.mrf.mxu0
    %3089 = vdwg.mxu0
    %3090 = vmatprep.subr.mxu0 0.0
    %3091 = vmatpush1.msra.mxu0 %v2951
    %3092 = vmatprep.subr.mxu0 0.0
    %3093 = vmatpush1.msra.mxu0 %v2950
    %3094 = vmatprep.subr.mxu0 0.0
    %3095 = vmatpush1.msra.mxu0 %v2949
    %3096 = vmatprep.subr.mxu0 0.0
    %3097 = vmatpush1.msra.mxu0 %v2948
    %3098 = vmatprep.subr.mxu0 0.0
    %3099 = vmatpush1.msra.mxu0 %v2947
    %3100 = vmatprep.subr.mxu0 0.0
    %3101 = vmatpush1.msra.mxu0 %v2946
    %3102 = vmatprep.subr.mxu0 0.0
    %3103 = vmatpush1.msra.mxu0 %v2945
    %3104 = vmatprep.subr.mxu0 0.0
    %3105 = vmatpush1.msra.mxu0 %v2944
    %3106 = vmatprep.subr.mxu0 0.0
    %3107 = vmatpush1.msra.mxu0 %v2943
    %3108 = vmatprep.subr.mxu0 0.0
    %3109 = vmatpush1.msra.mxu0 %v2942
    %3110 = vmatprep.subr.mxu0 0.0
    %3111 = vmatpush1.msra.mxu0 %v2941
    %3112 = vmatprep.subr.mxu0 0.0
    %3113 = vmatpush1.msra.mxu0 %v2940
    %3114 = vmatprep.subr.mxu0 0.0
    %3115 = vmatpush1.msra.mxu0 %v2939
    %3116 = vmatprep.subr.mxu0 0.0
    %3117 = vmatpush1.msra.mxu0 %v2938
    %3118 = vmatprep.subr.mxu0 0.0
    %3119 = vmatpush1.msra.mxu0 %v2937
    %3120 = vmatprep.subr.mxu0 0.0
    %3121 = vmatpush1.msra.mxu0 %v2936
    %3122 = vmatprep.subr.mxu0 0.0
    %3123 = vmatpush2.msra.mxu0 %v2967
    %3124 = vmatprep.subr.mxu0 0.0
    %3125 = vmatpush2.msra.mxu0 %v2966
    %3126 = vmatprep.subr.mxu0 0.0
    %3127 = vmatpush2.msra.mxu0 %v2965
    %3128 = vmatprep.subr.mxu0 0.0
    %3129 = vmatpush2.msra.mxu0 %v2964
    %3130 = vmatprep.subr.mxu0 0.0
    %3131 = vmatpush2.msra.mxu0 %v2963
    %3132 = vmatprep.subr.mxu0 0.0
    %3133 = vmatpush2.msra.mxu0 %v2962
    %3134 = vmatprep.subr.mxu0 0.0
    %3135 = vmatpush2.msra.mxu0 %v2961
    %3136 = vmatprep.subr.mxu0 0.0
    %3137 = vmatpush2.msra.mxu0 %v2960
    %3138 = vmatprep.subr.mxu0 0.0
    %3139 = vmatpush2.msra.mxu0 %v2959
    %3140 = vmatprep.subr.mxu0 0.0
    %3141 = vmatpush2.msra.mxu0 %v2958
    %3142 = vmatprep.subr.mxu0 0.0
    %3143 = vmatpush2.msra.mxu0 %v2957
    %3144 = vmatprep.subr.mxu0 0.0
    %3145 = vmatpush2.msra.mxu0 %v2956
    %3146 = vmatprep.subr.mxu0 0.0
    %3147 = vmatpush2.msra.mxu0 %v2955
    %3148 = vmatprep.subr.mxu0 0.0
    %3149 = vmatpush2.msra.mxu0 %v2954
    %3150 = vmatprep.subr.mxu0 0.0
    %3151 = vmatpush2.msra.mxu0 %v2953
    %3152 = vmatprep.subr.mxu0 0.0
    %3153 = vmatpush2.msra.mxu0 %v2952
    %3154 = vmatprep.mubr.f32.mxu0 %v2899
    %3155 = vmatmul.mubr.f32.gmra.mxu0 %v2898
    %v3156 = vpop.f32.mrf.mxu0
    %v3157 = vadd.f32 %v3087, %v3156
    %v3158 = vpop.f32.mrf.mxu0
    %3159 = vdwg.mxu0
    %3160 = vmatprep.subr.mxu0 0.0
    %3161 = vmatpush1.msra.mxu0 %v2983
    %3162 = vmatprep.subr.mxu0 0.0
    %3163 = vmatpush1.msra.mxu0 %v2982
    %3164 = vmatprep.subr.mxu0 0.0
    %3165 = vmatpush1.msra.mxu0 %v2981
    %3166 = vmatprep.subr.mxu0 0.0
    %3167 = vmatpush1.msra.mxu0 %v2980
    %3168 = vmatprep.subr.mxu0 0.0
    %3169 = vmatpush1.msra.mxu0 %v2979
    %3170 = vmatprep.subr.mxu0 0.0
    %3171 = vmatpush1.msra.mxu0 %v2978
    %3172 = vmatprep.subr.mxu0 0.0
    %3173 = vmatpush1.msra.mxu0 %v2977
    %3174 = vmatprep.subr.mxu0 0.0
    %3175 = vmatpush1.msra.mxu0 %v2976
    %3176 = vmatprep.subr.mxu0 0.0
    %3177 = vmatpush1.msra.mxu0 %v2975
    %3178 = vmatprep.subr.mxu0 0.0
    %3179 = vmatpush1.msra.mxu0 %v2974
    %3180 = vmatprep.subr.mxu0 0.0
    %3181 = vmatpush1.msra.mxu0 %v2973
    %3182 = vmatprep.subr.mxu0 0.0
    %3183 = vmatpush1.msra.mxu0 %v2972
    %3184 = vmatprep.subr.mxu0 0.0
    %3185 = vmatpush1.msra.mxu0 %v2971
    %3186 = vmatprep.subr.mxu0 0.0
    %3187 = vmatpush1.msra.mxu0 %v2970
    %3188 = vmatprep.subr.mxu0 0.0
    %3189 = vmatpush1.msra.mxu0 %v2969
    %3190 = vmatprep.subr.mxu0 0.0
    %3191 = vmatpush1.msra.mxu0 %v2968
    %3192 = vmatprep.subr.mxu0 0.0
    %3193 = vmatpush2.msra.mxu0 %v2999
    %3194 = vmatprep.subr.mxu0 0.0
    %3195 = vmatpush2.msra.mxu0 %v2998
    %3196 = vmatprep.subr.mxu0 0.0
    %3197 = vmatpush2.msra.mxu0 %v2997
    %3198 = vmatprep.subr.mxu0 0.0
    %3199 = vmatpush2.msra.mxu0 %v2996
    %3200 = vmatprep.subr.mxu0 0.0
    %3201 = vmatpush2.msra.mxu0 %v2995
    %3202 = vmatprep.subr.mxu0 0.0
    %3203 = vmatpush2.msra.mxu0 %v2994
    %3204 = vmatprep.subr.mxu0 0.0
    %3205 = vmatpush2.msra.mxu0 %v2993
    %3206 = vmatprep.subr.mxu0 0.0
    %3207 = vmatpush2.msra.mxu0 %v2992
    %3208 = vmatprep.subr.mxu0 0.0
    %3209 = vmatpush2.msra.mxu0 %v2991
    %3210 = vmatprep.subr.mxu0 0.0
    %3211 = vmatpush2.msra.mxu0 %v2990
    %3212 = vmatprep.subr.mxu0 0.0
    %3213 = vmatpush2.msra.mxu0 %v2989
    %3214 = vmatprep.subr.mxu0 0.0
    %3215 = vmatpush2.msra.mxu0 %v2988
    %3216 = vmatprep.subr.mxu0 0.0
    %3217 = vmatpush2.msra.mxu0 %v2987
    %3218 = vmatprep.subr.mxu0 0.0
    %3219 = vmatpush2.msra.mxu0 %v2986
    %3220 = vmatprep.subr.mxu0 0.0
    %3221 = vmatpush2.msra.mxu0 %v2985
    %3222 = vmatprep.subr.mxu0 0.0
    %3223 = vmatpush2.msra.mxu0 %v2984
    %3224 = vmatprep.mubr.f32.mxu0 %v2901
    %3225 = vmatmul.mubr.f32.gmra.mxu0 %v2900
    %v3226 = vpop.f32.mrf.mxu0
    %v3227 = vadd.f32 %v3157, %v3226
    %v3228 = vpop.f32.mrf.mxu0
    %3229 = vdwg.mxu0
    %3230 = vmatprep.subr.mxu0 0.0
    %3231 = vmatpush1.msra.mxu0 0.0
    %3232 = vmatprep.subr.mxu0 0.0
    %3233 = vmatpush1.msra.mxu0 0.0
    %3234 = vmatprep.subr.mxu0 0.0
    %3235 = vmatpush1.msra.mxu0 0.0
    %3236 = vmatprep.subr.mxu0 0.0
    %3237 = vmatpush1.msra.mxu0 0.0
    %3238 = vmatprep.subr.mxu0 0.0
    %3239 = vmatpush1.msra.mxu0 %v3018
    %3240 = vmatprep.subr.mxu0 0.0
    %3241 = vmatpush1.msra.mxu0 %v3010
    %3242 = vmatprep.subr.mxu0 0.0
    %3243 = vmatpush1.msra.mxu0 %v3009
    %3244 = vmatprep.subr.mxu0 0.0
    %3245 = vmatpush1.msra.mxu0 %v3008
    %3246 = vmatprep.subr.mxu0 0.0
    %3247 = vmatpush1.msra.mxu0 %v3007
    %3248 = vmatprep.subr.mxu0 0.0
    %3249 = vmatpush1.msra.mxu0 %v3006
    %3250 = vmatprep.subr.mxu0 0.0
    %3251 = vmatpush1.msra.mxu0 %v3005
    %3252 = vmatprep.subr.mxu0 0.0
    %3253 = vmatpush1.msra.mxu0 %v3004
    %3254 = vmatprep.subr.mxu0 0.0
    %3255 = vmatpush1.msra.mxu0 %v3003
    %3256 = vmatprep.subr.mxu0 0.0
    %3257 = vmatpush1.msra.mxu0 %v3002
    %3258 = vmatprep.subr.mxu0 0.0
    %3259 = vmatpush1.msra.mxu0 %v3001
    %3260 = vmatprep.subr.mxu0 0.0
    %3261 = vmatpush1.msra.mxu0 %v3000
    %3262 = vmatprep.subr.mxu0 0.0
    %3263 = vmatpush2.msra.mxu0 0.0
    %3264 = vmatprep.subr.mxu0 0.0
    %3265 = vmatpush2.msra.mxu0 0.0
    %3266 = vmatprep.subr.mxu0 0.0
    %3267 = vmatpush2.msra.mxu0 0.0
    %3268 = vmatprep.subr.mxu0 0.0
    %3269 = vmatpush2.msra.mxu0 0.0
    %3270 = vmatprep.subr.mxu0 0.0
    %3271 = vmatpush2.msra.mxu0 0.0
    %3272 = vmatprep.subr.mxu0 0.0
    %3273 = vmatpush2.msra.mxu0 0.0
    %3274 = vmatprep.subr.mxu0 0.0
    %3275 = vmatpush2.msra.mxu0 0.0
    %3276 = vmatprep.subr.mxu0 0.0
    %3277 = vmatpush2.msra.mxu0 0.0
    %3278 = vmatprep.subr.mxu0 0.0
    %3279 = vmatpush2.msra.mxu0 0.0
    %3280 = vmatprep.subr.mxu0 0.0
    %3281 = vmatpush2.msra.mxu0 0.0
    %3282 = vmatprep.subr.mxu0 0.0
    %3283 = vmatpush2.msra.mxu0 0.0
    %3284 = vmatprep.subr.mxu0 0.0
    %3285 = vmatpush2.msra.mxu0 0.0
    %3286 = vmatprep.subr.mxu0 0.0
    %3287 = vmatpush2.msra.mxu0 0.0
    %3288 = vmatprep.subr.mxu0 0.0
    %3289 = vmatpush2.msra.mxu0 0.0
    %3290 = vmatprep.subr.mxu0 0.0
    %3291 = vmatpush2.msra.mxu0 0.0
    %3292 = vmatprep.subr.mxu0 0.0
    %3293 = vmatpush2.msra.mxu0 0.0
    %3294 = vmatprep.mubr.f32.mxu0 0.0
    %3295 = vmatmul.mubr.f32.gmra.mxu0 %v3014
    %v3296 = vpop.f32.mrf.mxu0
    %v3297 = vadd.f32 %v3227, %v3296
    %v3298 = vpop.f32.mrf.mxu0
    %3299 = vdwg.mxu0
    %v3301 = vsel %vm3012, %v1439, 0
    %v3304 = vsel %vm3016, %v1547, 0
    %3306 = vmatprep.subr.mxu0 0.0
    %3307 = vmatpush1.msra.mxu0 %v1455
    %3308 = vmatprep.subr.mxu0 0.0
    %3309 = vmatpush1.msra.mxu0 %v1454
    %3310 = vmatprep.subr.mxu0 0.0
    %3311 = vmatpush1.msra.mxu0 %v1453
    %3312 = vmatprep.subr.mxu0 0.0
    %3313 = vmatpush1.msra.mxu0 %v1452
    %3314 = vmatprep.subr.mxu0 0.0
    %3315 = vmatpush1.msra.mxu0 %v1451
    %3316 = vmatprep.subr.mxu0 0.0
    %3317 = vmatpush1.msra.mxu0 %v1450
    %3318 = vmatprep.subr.mxu0 0.0
    %3319 = vmatpush1.msra.mxu0 %v1449
    %3320 = vmatprep.subr.mxu0 0.0
    %3321 = vmatpush1.msra.mxu0 %v1448
    %3322 = vmatprep.subr.mxu0 0.0
    %3323 = vmatpush1.msra.mxu0 %v1447
    %3324 = vmatprep.subr.mxu0 0.0
    %3325 = vmatpush1.msra.mxu0 %v1446
    %3326 = vmatprep.subr.mxu0 0.0
    %3327 = vmatpush1.msra.mxu0 %v1445
    %3328 = vmatprep.subr.mxu0 0.0
    %3329 = vmatpush1.msra.mxu0 %v1444
    %3330 = vmatprep.subr.mxu0 0.0
    %3331 = vmatpush1.msra.mxu0 %v1443
    %3332 = vmatprep.subr.mxu0 0.0
    %3333 = vmatpush1.msra.mxu0 %v1442
    %3334 = vmatprep.subr.mxu0 0.0
    %3335 = vmatpush1.msra.mxu0 %v1441
    %3336 = vmatprep.subr.mxu0 0.0
    %3337 = vmatpush1.msra.mxu0 %v1440
    %3338 = vmatprep.subr.mxu0 0.0
    %3339 = vmatpush2.msra.mxu0 %v1471
    %3340 = vmatprep.subr.mxu0 0.0
    %3341 = vmatpush2.msra.mxu0 %v1470
    %3342 = vmatprep.subr.mxu0 0.0
    %3343 = vmatpush2.msra.mxu0 %v1469
    %3344 = vmatprep.subr.mxu0 0.0
    %3345 = vmatpush2.msra.mxu0 %v1468
    %3346 = vmatprep.subr.mxu0 0.0
    %3347 = vmatpush2.msra.mxu0 %v1467
    %3348 = vmatprep.subr.mxu0 0.0
    %3349 = vmatpush2.msra.mxu0 %v1466
    %3350 = vmatprep.subr.mxu0 0.0
    %3351 = vmatpush2.msra.mxu0 %v1465
    %3352 = vmatprep.subr.mxu0 0.0
    %3353 = vmatpush2.msra.mxu0 %v1464
    %3354 = vmatprep.subr.mxu0 0.0
    %3355 = vmatpush2.msra.mxu0 %v1463
    %3356 = vmatprep.subr.mxu0 0.0
    %3357 = vmatpush2.msra.mxu0 %v1462
    %3358 = vmatprep.subr.mxu0 0.0
    %3359 = vmatpush2.msra.mxu0 %v1461
    %3360 = vmatprep.subr.mxu0 0.0
    %3361 = vmatpush2.msra.mxu0 %v1460
    %3362 = vmatprep.subr.mxu0 0.0
    %3363 = vmatpush2.msra.mxu0 %v1459
    %3364 = vmatprep.subr.mxu0 0.0
    %3365 = vmatpush2.msra.mxu0 %v1458
    %3366 = vmatprep.subr.mxu0 0.0
    %3367 = vmatpush2.msra.mxu0 %v1457
    %3368 = vmatprep.subr.mxu0 0.0
    %3369 = vmatpush2.msra.mxu0 %v1456
    %3370 = vmatprep.mubr.f32.mxu0 %v1434
    %3371 = vmatmul.mubr.f32.gmra.mxu0 %v1433
    %v3372 = vpop.f32.mrf.mxu0
    %v3373 = vadd.f32 %v3297, %v3372
    %v3374 = vpop.f32.mrf.mxu0
    %3375 = vdwg.mxu0
    %3376 = vmatprep.subr.mxu0 0.0
    %3377 = vmatpush1.msra.mxu0 %v1487
    %3378 = vmatprep.subr.mxu0 0.0
    %3379 = vmatpush1.msra.mxu0 %v1486
    %3380 = vmatprep.subr.mxu0 0.0
    %3381 = vmatpush1.msra.mxu0 %v1485
    %3382 = vmatprep.subr.mxu0 0.0
    %3383 = vmatpush1.msra.mxu0 %v1484
    %3384 = vmatprep.subr.mxu0 0.0
    %3385 = vmatpush1.msra.mxu0 %v1483
    %3386 = vmatprep.subr.mxu0 0.0
    %3387 = vmatpush1.msra.mxu0 %v1482
    %3388 = vmatprep.subr.mxu0 0.0
    %3389 = vmatpush1.msra.mxu0 %v1481
    %3390 = vmatprep.subr.mxu0 0.0
    %3391 = vmatpush1.msra.mxu0 %v1480
    %3392 = vmatprep.subr.mxu0 0.0
    %3393 = vmatpush1.msra.mxu0 %v1479
    %3394 = vmatprep.subr.mxu0 0.0
    %3395 = vmatpush1.msra.mxu0 %v1478
    %3396 = vmatprep.subr.mxu0 0.0
    %3397 = vmatpush1.msra.mxu0 %v1477
    %3398 = vmatprep.subr.mxu0 0.0
    %3399 = vmatpush1.msra.mxu0 %v1476
    %3400 = vmatprep.subr.mxu0 0.0
    %3401 = vmatpush1.msra.mxu0 %v1475
    %3402 = vmatprep.subr.mxu0 0.0
    %3403 = vmatpush1.msra.mxu0 %v1474
    %3404 = vmatprep.subr.mxu0 0.0
    %3405 = vmatpush1.msra.mxu0 %v1473
    %3406 = vmatprep.subr.mxu0 0.0
    %3407 = vmatpush1.msra.mxu0 %v1472
    %3408 = vmatprep.subr.mxu0 0.0
    %3409 = vmatpush2.msra.mxu0 %v1503
    %3410 = vmatprep.subr.mxu0 0.0
    %3411 = vmatpush2.msra.mxu0 %v1502
    %3412 = vmatprep.subr.mxu0 0.0
    %3413 = vmatpush2.msra.mxu0 %v1501
    %3414 = vmatprep.subr.mxu0 0.0
    %3415 = vmatpush2.msra.mxu0 %v1500
    %3416 = vmatprep.subr.mxu0 0.0
    %3417 = vmatpush2.msra.mxu0 %v1499
    %3418 = vmatprep.subr.mxu0 0.0
    %3419 = vmatpush2.msra.mxu0 %v1498
    %3420 = vmatprep.subr.mxu0 0.0
    %3421 = vmatpush2.msra.mxu0 %v1497
    %3422 = vmatprep.subr.mxu0 0.0
    %3423 = vmatpush2.msra.mxu0 %v1496
    %3424 = vmatprep.subr.mxu0 0.0
    %3425 = vmatpush2.msra.mxu0 %v1495
    %3426 = vmatprep.subr.mxu0 0.0
    %3427 = vmatpush2.msra.mxu0 %v1494
    %3428 = vmatprep.subr.mxu0 0.0
    %3429 = vmatpush2.msra.mxu0 %v1493
    %3430 = vmatprep.subr.mxu0 0.0
    %3431 = vmatpush2.msra.mxu0 %v1492
    %3432 = vmatprep.subr.mxu0 0.0
    %3433 = vmatpush2.msra.mxu0 %v1491
    %3434 = vmatprep.subr.mxu0 0.0
    %3435 = vmatpush2.msra.mxu0 %v1490
    %3436 = vmatprep.subr.mxu0 0.0
    %3437 = vmatpush2.msra.mxu0 %v1489
    %3438 = vmatprep.subr.mxu0 0.0
    %3439 = vmatpush2.msra.mxu0 %v1488
    %3440 = vmatprep.mubr.f32.mxu0 %v1436
    %3441 = vmatmul.mubr.f32.gmra.mxu0 %v1435
    %v3442 = vpop.f32.mrf.mxu0
    %v3443 = vadd.f32 %v3373, %v3442
    %v3444 = vpop.f32.mrf.mxu0
    %3445 = vdwg.mxu0
    %3446 = vmatprep.subr.mxu0 0.0
    %3447 = vmatpush1.msra.mxu0 %v1519
    %3448 = vmatprep.subr.mxu0 0.0
    %3449 = vmatpush1.msra.mxu0 %v1518
    %3450 = vmatprep.subr.mxu0 0.0
    %3451 = vmatpush1.msra.mxu0 %v1517
    %3452 = vmatprep.subr.mxu0 0.0
    %3453 = vmatpush1.msra.mxu0 %v1516
    %3454 = vmatprep.subr.mxu0 0.0
    %3455 = vmatpush1.msra.mxu0 %v1515
    %3456 = vmatprep.subr.mxu0 0.0
    %3457 = vmatpush1.msra.mxu0 %v1514
    %3458 = vmatprep.subr.mxu0 0.0
    %3459 = vmatpush1.msra.mxu0 %v1513
    %3460 = vmatprep.subr.mxu0 0.0
    %3461 = vmatpush1.msra.mxu0 %v1512
    %3462 = vmatprep.subr.mxu0 0.0
    %3463 = vmatpush1.msra.mxu0 %v1511
    %3464 = vmatprep.subr.mxu0 0.0
    %3465 = vmatpush1.msra.mxu0 %v1510
    %3466 = vmatprep.subr.mxu0 0.0
    %3467 = vmatpush1.msra.mxu0 %v1509
    %3468 = vmatprep.subr.mxu0 0.0
    %3469 = vmatpush1.msra.mxu0 %v1508
    %3470 = vmatprep.subr.mxu0 0.0
    %3471 = vmatpush1.msra.mxu0 %v1507
    %3472 = vmatprep.subr.mxu0 0.0
    %3473 = vmatpush1.msra.mxu0 %v1506
    %3474 = vmatprep.subr.mxu0 0.0
    %3475 = vmatpush1.msra.mxu0 %v1505
    %3476 = vmatprep.subr.mxu0 0.0
    %3477 = vmatpush1.msra.mxu0 %v1504
    %3478 = vmatprep.subr.mxu0 0.0
    %3479 = vmatpush2.msra.mxu0 %v1535
    %3480 = vmatprep.subr.mxu0 0.0
    %3481 = vmatpush2.msra.mxu0 %v1534
    %3482 = vmatprep.subr.mxu0 0.0
    %3483 = vmatpush2.msra.mxu0 %v1533
    %3484 = vmatprep.subr.mxu0 0.0
    %3485 = vmatpush2.msra.mxu0 %v1532
    %3486 = vmatprep.subr.mxu0 0.0
    %3487 = vmatpush2.msra.mxu0 %v1531
    %3488 = vmatprep.subr.mxu0 0.0
    %3489 = vmatpush2.msra.mxu0 %v1530
    %3490 = vmatprep.subr.mxu0 0.0
    %3491 = vmatpush2.msra.mxu0 %v1529
    %3492 = vmatprep.subr.mxu0 0.0
    %3493 = vmatpush2.msra.mxu0 %v1528
    %3494 = vmatprep.subr.mxu0 0.0
    %3495 = vmatpush2.msra.mxu0 %v1527
    %3496 = vmatprep.subr.mxu0 0.0
    %3497 = vmatpush2.msra.mxu0 %v1526
    %3498 = vmatprep.subr.mxu0 0.0
    %3499 = vmatpush2.msra.mxu0 %v1525
    %3500 = vmatprep.subr.mxu0 0.0
    %3501 = vmatpush2.msra.mxu0 %v1524
    %3502 = vmatprep.subr.mxu0 0.0
    %3503 = vmatpush2.msra.mxu0 %v1523
    %3504 = vmatprep.subr.mxu0 0.0
    %3505 = vmatpush2.msra.mxu0 %v1522
    %3506 = vmatprep.subr.mxu0 0.0
    %3507 = vmatpush2.msra.mxu0 %v1521
    %3508 = vmatprep.subr.mxu0 0.0
    %3509 = vmatpush2.msra.mxu0 %v1520
    %3510 = vmatprep.mubr.f32.mxu0 %v1438
    %3511 = vmatmul.mubr.f32.gmra.mxu0 %v1437
    %v3512 = vpop.f32.mrf.mxu0
    %v3513 = vadd.f32 %v3443, %v3512
    %v3514 = vpop.f32.mrf.mxu0
    %3515 = vdwg.mxu0
    %3516 = vmatprep.subr.mxu0 0.0
    %3517 = vmatpush1.msra.mxu0 0.0
    %3518 = vmatprep.subr.mxu0 0.0
    %3519 = vmatpush1.msra.mxu0 0.0
    %3520 = vmatprep.subr.mxu0 0.0
    %3521 = vmatpush1.msra.mxu0 0.0
    %3522 = vmatprep.subr.mxu0 0.0
    %3523 = vmatpush1.msra.mxu0 0.0
    %3524 = vmatprep.subr.mxu0 0.0
    %3525 = vmatpush1.msra.mxu0 %v3304
    %3526 = vmatprep.subr.mxu0 0.0
    %3527 = vmatpush1.msra.mxu0 %v1546
    %3528 = vmatprep.subr.mxu0 0.0
    %3529 = vmatpush1.msra.mxu0 %v1545
    %3530 = vmatprep.subr.mxu0 0.0
    %3531 = vmatpush1.msra.mxu0 %v1544
    %3532 = vmatprep.subr.mxu0 0.0
    %3533 = vmatpush1.msra.mxu0 %v1543
    %3534 = vmatprep.subr.mxu0 0.0
    %3535 = vmatpush1.msra.mxu0 %v1542
    %3536 = vmatprep.subr.mxu0 0.0
    %3537 = vmatpush1.msra.mxu0 %v1541
    %3538 = vmatprep.subr.mxu0 0.0
    %3539 = vmatpush1.msra.mxu0 %v1540
    %3540 = vmatprep.subr.mxu0 0.0
    %3541 = vmatpush1.msra.mxu0 %v1539
    %3542 = vmatprep.subr.mxu0 0.0
    %3543 = vmatpush1.msra.mxu0 %v1538
    %3544 = vmatprep.subr.mxu0 0.0
    %3545 = vmatpush1.msra.mxu0 %v1537
    %3546 = vmatprep.subr.mxu0 0.0
    %3547 = vmatpush1.msra.mxu0 %v1536
    %3548 = vmatprep.subr.mxu0 0.0
    %3549 = vmatpush2.msra.mxu0 0.0
    %3550 = vmatprep.subr.mxu0 0.0
    %3551 = vmatpush2.msra.mxu0 0.0
    %3552 = vmatprep.subr.mxu0 0.0
    %3553 = vmatpush2.msra.mxu0 0.0
    %3554 = vmatprep.subr.mxu0 0.0
    %3555 = vmatpush2.msra.mxu0 0.0
    %3556 = vmatprep.subr.mxu0 0.0
    %3557 = vmatpush2.msra.mxu0 0.0
    %3558 = vmatprep.subr.mxu0 0.0
    %3559 = vmatpush2.msra.mxu0 0.0
    %3560 = vmatprep.subr.mxu0 0.0
    %3561 = vmatpush2.msra.mxu0 0.0
    %3562 = vmatprep.subr.mxu0 0.0
    %3563 = vmatpush2.msra.mxu0 0.0
    %3564 = vmatprep.subr.mxu0 0.0
    %3565 = vmatpush2.msra.mxu0 0.0
    %3566 = vmatprep.subr.mxu0 0.0
    %3567 = vmatpush2.msra.mxu0 0.0
    %3568 = vmatprep.subr.mxu0 0.0
    %3569 = vmatpush2.msra.mxu0 0.0
    %3570 = vmatprep.subr.mxu0 0.0
    %3571 = vmatpush2.msra.mxu0 0.0
    %3572 = vmatprep.subr.mxu0 0.0
    %3573 = vmatpush2.msra.mxu0 0.0
    %3574 = vmatprep.subr.mxu0 0.0
    %3575 = vmatpush2.msra.mxu0 0.0
    %3576 = vmatprep.subr.mxu0 0.0
    %3577 = vmatpush2.msra.mxu0 0.0
    %3578 = vmatprep.subr.mxu0 0.0
    %3579 = vmatpush2.msra.mxu0 0.0
    %3580 = vmatprep.mubr.f32.mxu0 0.0
    %3581 = vmatmul.mubr.f32.gmra.mxu0 %v3301
    %v3582 = vpop.f32.mrf.mxu0
    %v3583 = vadd.f32 %v3513, %v3582
    %v3584 = vpop.f32.mrf.mxu0
    %3585 = vdwg.mxu0
    %s3586 = sld [smem:[#allocation2 + $0x32]]
    %v3587 = vstv %s3586
    %v3588 = vmul.f32 %v3587, %v52
    %v3589 = vmul.f32 %v3587, %v53
    %v3590 = vmul.f32 %v3587, %v54
    %v3591 = vmul.f32 %v3587, %v55
    %v3592 = vmul.f32 %v3587, %v56
    %v3593 = vmul.f32 %v3587, %v57
    %v3594 = vmul.f32 %v3587, %v58
    %v3595 = vadd.f32 %v3588, 0.0
    %v3596 = vadd.f32 %v3589, 0.0
    %v3597 = vadd.f32 %v3590, 0.0
    %v3598 = vadd.f32 %v3591, 0.0
    %v3599 = vadd.f32 %v3592, 0.0
    %v3600 = vadd.f32 %v3593, 0.0
    %v3601 = vadd.f32 %v3594, 0.0
    %s3602 = sld [smem:[#allocation2 + $0x33]]
    %v3603 = vstv %s3602
    %v3604 = vmul.f32 %v3603, %v52
    %v3605 = vmul.f32 %v3603, %v53
    %v3606 = vmul.f32 %v3603, %v54
    %v3607 = vmul.f32 %v3603, %v55
    %v3608 = vmul.f32 %v3603, %v56
    %v3609 = vmul.f32 %v3603, %v57
    %v3610 = vmul.f32 %v3603, %v58
    %3618 = vrot.lane.b32.xlu0 %v3604, 127
    %v3619 = vpop.permute.xlu0 %3618
    %3620 = vrot.lane.b32.xlu0 %v3605, 127
    %v3621 = vpop.permute.xlu0 %3620
    %3622 = vrot.lane.b32.xlu0 %v3606, 127
    %v3623 = vpop.permute.xlu0 %3622
    %3624 = vrot.lane.b32.xlu0 %v3607, 127
    %v3625 = vpop.permute.xlu0 %3624
    %3626 = vrot.lane.b32.xlu0 %v3608, 127
    %v3627 = vpop.permute.xlu0 %3626
    %3628 = vrot.lane.b32.xlu0 %v3609, 127
    %v3629 = vpop.permute.xlu0 %3628
    %3630 = vrot.lane.b32.xlu0 %v3610, 127
    %v3631 = vpop.permute.xlu0 %3630
    %v3632 = vsel %vm104, %v3619, %v3621
    %v3633 = vsel %vm104, %v3621, %v3623
    %v3634 = vsel %vm104, %v3623, %v3625
    %v3635 = vsel %vm104, %v3625, %v3627
    %v3636 = vsel %vm104, %v3627, %v3629
    %v3637 = vsel %vm104, %v3629, %v3631
    %v3645 = vadd.f32 %v3595, %v3632
    %v3646 = vadd.f32 %v3596, %v3633
    %v3647 = vadd.f32 %v3597, %v3634
    %v3648 = vadd.f32 %v3598, %v3635
    %v3649 = vadd.f32 %v3599, %v3636
    %v3650 = vadd.f32 %v3600, %v3637
    %v3651 = vadd.f32 %v3601, %v3631
    %s3652 = sld [smem:[#allocation2 + $0x34]]
    %v3653 = vstv %s3652
    %v3654 = vmul.f32 %v3653, %v52
    %v3655 = vmul.f32 %v3653, %v53
    %v3656 = vmul.f32 %v3653, %v54
    %v3657 = vmul.f32 %v3653, %v55
    %v3658 = vmul.f32 %v3653, %v56
    %v3659 = vmul.f32 %v3653, %v57
    %v3660 = vmul.f32 %v3653, %v58
    %3668 = vrot.lane.b32.xlu0 %v3654, 126
    %v3669 = vpop.permute.xlu0 %3668
    %3670 = vrot.lane.b32.xlu0 %v3655, 126
    %v3671 = vpop.permute.xlu0 %3670
    %3672 = vrot.lane.b32.xlu0 %v3656, 126
    %v3673 = vpop.permute.xlu0 %3672
    %3674 = vrot.lane.b32.xlu0 %v3657, 126
    %v3675 = vpop.permute.xlu0 %3674
    %3676 = vrot.lane.b32.xlu0 %v3658, 126
    %v3677 = vpop.permute.xlu0 %3676
    %3678 = vrot.lane.b32.xlu0 %v3659, 126
    %v3679 = vpop.permute.xlu0 %3678
    %3680 = vrot.lane.b32.xlu0 %v3660, 126
    %v3681 = vpop.permute.xlu0 %3680
    %v3682 = vsel %vm155, %v3669, %v3671
    %v3683 = vsel %vm155, %v3671, %v3673
    %v3684 = vsel %vm155, %v3673, %v3675
    %v3685 = vsel %vm155, %v3675, %v3677
    %v3686 = vsel %vm155, %v3677, %v3679
    %v3687 = vsel %vm155, %v3679, %v3681
    %v3695 = vadd.f32 %v3645, %v3682
    %v3696 = vadd.f32 %v3646, %v3683
    %v3697 = vadd.f32 %v3647, %v3684
    %v3698 = vadd.f32 %v3648, %v3685
    %v3699 = vadd.f32 %v3649, %v3686
    %v3700 = vadd.f32 %v3650, %v3687
    %v3701 = vadd.f32 %v3651, %v3681
    %s3702 = sld [smem:[#allocation2 + $0x35]]
    %v3703 = vstv %s3702
    %v3704 = vmul.f32 %v3703, %v52
    %v3705 = vmul.f32 %v3703, %v53
    %v3706 = vmul.f32 %v3703, %v54
    %v3707 = vmul.f32 %v3703, %v55
    %v3708 = vmul.f32 %v3703, %v56
    %v3709 = vmul.f32 %v3703, %v57
    %v3710 = vmul.f32 %v3703, %v58
    %3718 = vrot.lane.b32.xlu0 %v3704, 125
    %v3719 = vpop.permute.xlu0 %3718
    %3720 = vrot.lane.b32.xlu0 %v3705, 125
    %v3721 = vpop.permute.xlu0 %3720
    %3722 = vrot.lane.b32.xlu0 %v3706, 125
    %v3723 = vpop.permute.xlu0 %3722
    %3724 = vrot.lane.b32.xlu0 %v3707, 125
    %v3725 = vpop.permute.xlu0 %3724
    %3726 = vrot.lane.b32.xlu0 %v3708, 125
    %v3727 = vpop.permute.xlu0 %3726
    %3728 = vrot.lane.b32.xlu0 %v3709, 125
    %v3729 = vpop.permute.xlu0 %3728
    %3730 = vrot.lane.b32.xlu0 %v3710, 125
    %v3731 = vpop.permute.xlu0 %3730
    %v3732 = vsel %vm206, %v3719, %v3721
    %v3733 = vsel %vm206, %v3721, %v3723
    %v3734 = vsel %vm206, %v3723, %v3725
    %v3735 = vsel %vm206, %v3725, %v3727
    %v3736 = vsel %vm206, %v3727, %v3729
    %v3737 = vsel %vm206, %v3729, %v3731
    %v3745 = vadd.f32 %v3695, %v3732
    %v3746 = vadd.f32 %v3696, %v3733
    %v3747 = vadd.f32 %v3697, %v3734
    %v3748 = vadd.f32 %v3698, %v3735
    %v3749 = vadd.f32 %v3699, %v3736
    %v3750 = vadd.f32 %v3700, %v3737
    %v3751 = vadd.f32 %v3701, %v3731
    %s3752 = sld [smem:[#allocation2 + $0x36]]
    %v3753 = vstv %s3752
    %v3754 = vmul.f32 %v3753, %v52
    %v3755 = vmul.f32 %v3753, %v53
    %v3756 = vmul.f32 %v3753, %v54
    %v3757 = vmul.f32 %v3753, %v55
    %v3758 = vmul.f32 %v3753, %v56
    %v3759 = vmul.f32 %v3753, %v57
    %v3760 = vmul.f32 %v3753, %v58
    %3768 = vrot.lane.b32.xlu0 %v3754, 124
    %v3769 = vpop.permute.xlu0 %3768
    %3770 = vrot.lane.b32.xlu0 %v3755, 124
    %v3771 = vpop.permute.xlu0 %3770
    %3772 = vrot.lane.b32.xlu0 %v3756, 124
    %v3773 = vpop.permute.xlu0 %3772
    %3774 = vrot.lane.b32.xlu0 %v3757, 124
    %v3775 = vpop.permute.xlu0 %3774
    %3776 = vrot.lane.b32.xlu0 %v3758, 124
    %v3777 = vpop.permute.xlu0 %3776
    %3778 = vrot.lane.b32.xlu0 %v3759, 124
    %v3779 = vpop.permute.xlu0 %3778
    %3780 = vrot.lane.b32.xlu0 %v3760, 124
    %v3781 = vpop.permute.xlu0 %3780
    %v3782 = vsel %vm257, %v3769, %v3771
    %v3783 = vsel %vm257, %v3771, %v3773
    %v3784 = vsel %vm257, %v3773, %v3775
    %v3785 = vsel %vm257, %v3775, %v3777
    %v3786 = vsel %vm257, %v3777, %v3779
    %v3787 = vsel %vm257, %v3779, %v3781
    %v3795 = vadd.f32 %v3745, %v3782
    %v3796 = vadd.f32 %v3746, %v3783
    %v3797 = vadd.f32 %v3747, %v3784
    %v3798 = vadd.f32 %v3748, %v3785
    %v3799 = vadd.f32 %v3749, %v3786
    %v3800 = vadd.f32 %v3750, %v3787
    %v3801 = vadd.f32 %v3751, %v3781
    %s3802 = sld [smem:[#allocation2 + $0x37]]
    %v3803 = vstv %s3802
    %v3804 = vmul.f32 %v3803, %v279
    %v3805 = vmul.f32 %v3803, %v280
    %v3806 = vmul.f32 %v3803, %v281
    %v3807 = vmul.f32 %v3803, %v282
    %v3808 = vmul.f32 %v3803, %v283
    %v3809 = vmul.f32 %v3803, %v284
    %v3810 = vmul.f32 %v3803, %v285
    %v3811 = vmul.f32 %v3803, %v286
    %3820 = vrot.lane.b32.xlu0 %v3804, 96
    %v3821 = vpop.permute.xlu0 %3820
    %3822 = vrot.lane.b32.xlu0 %v3805, 96
    %v3823 = vpop.permute.xlu0 %3822
    %3824 = vrot.lane.b32.xlu0 %v3806, 96
    %v3825 = vpop.permute.xlu0 %3824
    %3826 = vrot.lane.b32.xlu0 %v3807, 96
    %v3827 = vpop.permute.xlu0 %3826
    %3828 = vrot.lane.b32.xlu0 %v3808, 96
    %v3829 = vpop.permute.xlu0 %3828
    %3830 = vrot.lane.b32.xlu0 %v3809, 96
    %v3831 = vpop.permute.xlu0 %3830
    %3832 = vrot.lane.b32.xlu0 %v3810, 96
    %v3833 = vpop.permute.xlu0 %3832
    %3834 = vrot.lane.b32.xlu0 %v3811, 96
    %v3835 = vpop.permute.xlu0 %3834
    %v3836 = vsel %vm320, %v3821, %v3823
    %v3837 = vsel %vm320, %v3823, %v3825
    %v3838 = vsel %vm320, %v3825, %v3827
    %v3839 = vsel %vm320, %v3827, %v3829
    %v3840 = vsel %vm320, %v3829, %v3831
    %v3841 = vsel %vm320, %v3831, %v3833
    %v3842 = vsel %vm320, %v3833, %v3835
    %v3850 = vadd.f32 %v3795, %v3836
    %v3851 = vadd.f32 %v3796, %v3837
    %v3852 = vadd.f32 %v3797, %v3838
    %v3853 = vadd.f32 %v3798, %v3839
    %v3854 = vadd.f32 %v3799, %v3840
    %v3855 = vadd.f32 %v3800, %v3841
    %v3856 = vadd.f32 %v3801, %v3842
    %s3857 = sld [smem:[#allocation2 + $0x38]]
    %v3858 = vstv %s3857
    %v3859 = vmul.f32 %v3858, %v279
    %v3860 = vmul.f32 %v3858, %v280
    %v3861 = vmul.f32 %v3858, %v281
    %v3862 = vmul.f32 %v3858, %v282
    %v3863 = vmul.f32 %v3858, %v283
    %v3864 = vmul.f32 %v3858, %v284
    %v3865 = vmul.f32 %v3858, %v285
    %v3866 = vmul.f32 %v3858, %v286
    %3875 = vrot.lane.b32.xlu0 %v3859, 95
    %v3876 = vpop.permute.xlu0 %3875
    %3877 = vrot.lane.b32.xlu0 %v3860, 95
    %v3878 = vpop.permute.xlu0 %3877
    %3879 = vrot.lane.b32.xlu0 %v3861, 95
    %v3880 = vpop.permute.xlu0 %3879
    %3881 = vrot.lane.b32.xlu0 %v3862, 95
    %v3882 = vpop.permute.xlu0 %3881
    %3883 = vrot.lane.b32.xlu0 %v3863, 95
    %v3884 = vpop.permute.xlu0 %3883
    %3885 = vrot.lane.b32.xlu0 %v3864, 95
    %v3886 = vpop.permute.xlu0 %3885
    %3887 = vrot.lane.b32.xlu0 %v3865, 95
    %v3888 = vpop.permute.xlu0 %3887
    %3889 = vrot.lane.b32.xlu0 %v3866, 95
    %v3890 = vpop.permute.xlu0 %3889
    %v3891 = vsel %vm376, %v3876, %v3878
    %v3892 = vsel %vm376, %v3878, %v3880
    %v3893 = vsel %vm376, %v3880, %v3882
    %v3894 = vsel %vm376, %v3882, %v3884
    %v3895 = vsel %vm376, %v3884, %v3886
    %v3896 = vsel %vm376, %v3886, %v3888
    %v3897 = vsel %vm376, %v3888, %v3890
    %v3905 = vadd.f32 %v3850, %v3891
    %v3906 = vadd.f32 %v3851, %v3892
    %v3907 = vadd.f32 %v3852, %v3893
    %v3908 = vadd.f32 %v3853, %v3894
    %v3909 = vadd.f32 %v3854, %v3895
    %v3910 = vadd.f32 %v3855, %v3896
    %v3911 = vadd.f32 %v3856, %v3897
    %s3912 = sld [smem:[#allocation2 + $0x39]]
    %v3913 = vstv %s3912
    %v3914 = vmul.f32 %v3913, %v279
    %v3915 = vmul.f32 %v3913, %v280
    %v3916 = vmul.f32 %v3913, %v281
    %v3917 = vmul.f32 %v3913, %v282
    %v3918 = vmul.f32 %v3913, %v283
    %v3919 = vmul.f32 %v3913, %v284
    %v3920 = vmul.f32 %v3913, %v285
    %v3921 = vmul.f32 %v3913, %v286
    %3930 = vrot.lane.b32.xlu0 %v3914, 94
    %v3931 = vpop.permute.xlu0 %3930
    %3932 = vrot.lane.b32.xlu0 %v3915, 94
    %v3933 = vpop.permute.xlu0 %3932
    %3934 = vrot.lane.b32.xlu0 %v3916, 94
    %v3935 = vpop.permute.xlu0 %3934
    %3936 = vrot.lane.b32.xlu0 %v3917, 94
    %v3937 = vpop.permute.xlu0 %3936
    %3938 = vrot.lane.b32.xlu0 %v3918, 94
    %v3939 = vpop.permute.xlu0 %3938
    %3940 = vrot.lane.b32.xlu0 %v3919, 94
    %v3941 = vpop.permute.xlu0 %3940
    %3942 = vrot.lane.b32.xlu0 %v3920, 94
    %v3943 = vpop.permute.xlu0 %3942
    %3944 = vrot.lane.b32.xlu0 %v3921, 94
    %v3945 = vpop.permute.xlu0 %3944
    %v3946 = vsel %vm432, %v3931, %v3933
    %v3947 = vsel %vm432, %v3933, %v3935
    %v3948 = vsel %vm432, %v3935, %v3937
    %v3949 = vsel %vm432, %v3937, %v3939
    %v3950 = vsel %vm432, %v3939, %v3941
    %v3951 = vsel %vm432, %v3941, %v3943
    %v3952 = vsel %vm432, %v3943, %v3945
    %v3960 = vadd.f32 %v3905, %v3946
    %v3961 = vadd.f32 %v3906, %v3947
    %v3962 = vadd.f32 %v3907, %v3948
    %v3963 = vadd.f32 %v3908, %v3949
    %v3964 = vadd.f32 %v3909, %v3950
    %v3965 = vadd.f32 %v3910, %v3951
    %v3966 = vadd.f32 %v3911, %v3952
    %s3967 = sld [smem:[#allocation2 + $0x3a]]
    %v3968 = vstv %s3967
    %v3969 = vmul.f32 %v3968, %v279
    %v3970 = vmul.f32 %v3968, %v280
    %v3971 = vmul.f32 %v3968, %v281
    %v3972 = vmul.f32 %v3968, %v282
    %v3973 = vmul.f32 %v3968, %v283
    %v3974 = vmul.f32 %v3968, %v284
    %v3975 = vmul.f32 %v3968, %v285
    %v3976 = vmul.f32 %v3968, %v286
    %3985 = vrot.lane.b32.xlu0 %v3969, 93
    %v3986 = vpop.permute.xlu0 %3985
    %3987 = vrot.lane.b32.xlu0 %v3970, 93
    %v3988 = vpop.permute.xlu0 %3987
    %3989 = vrot.lane.b32.xlu0 %v3971, 93
    %v3990 = vpop.permute.xlu0 %3989
    %3991 = vrot.lane.b32.xlu0 %v3972, 93
    %v3992 = vpop.permute.xlu0 %3991
    %3993 = vrot.lane.b32.xlu0 %v3973, 93
    %v3994 = vpop.permute.xlu0 %3993
    %3995 = vrot.lane.b32.xlu0 %v3974, 93
    %v3996 = vpop.permute.xlu0 %3995
    %3997 = vrot.lane.b32.xlu0 %v3975, 93
    %v3998 = vpop.permute.xlu0 %3997
    %3999 = vrot.lane.b32.xlu0 %v3976, 93
    %v4000 = vpop.permute.xlu0 %3999
    %v4001 = vsel %vm488, %v3986, %v3988
    %v4002 = vsel %vm488, %v3988, %v3990
    %v4003 = vsel %vm488, %v3990, %v3992
    %v4004 = vsel %vm488, %v3992, %v3994
    %v4005 = vsel %vm488, %v3994, %v3996
    %v4006 = vsel %vm488, %v3996, %v3998
    %v4007 = vsel %vm488, %v3998, %v4000
    %v4015 = vadd.f32 %v3960, %v4001
    %v4016 = vadd.f32 %v3961, %v4002
    %v4017 = vadd.f32 %v3962, %v4003
    %v4018 = vadd.f32 %v3963, %v4004
    %v4019 = vadd.f32 %v3964, %v4005
    %v4020 = vadd.f32 %v3965, %v4006
    %v4021 = vadd.f32 %v3966, %v4007
    %s4022 = sld [smem:[#allocation2 + $0x3b]]
    %v4023 = vstv %s4022
    %v4024 = vmul.f32 %v4023, %v279
    %v4025 = vmul.f32 %v4023, %v280
    %v4026 = vmul.f32 %v4023, %v281
    %v4027 = vmul.f32 %v4023, %v282
    %v4028 = vmul.f32 %v4023, %v283
    %v4029 = vmul.f32 %v4023, %v284
    %v4030 = vmul.f32 %v4023, %v285
    %v4031 = vmul.f32 %v4023, %v286
    %4040 = vrot.lane.b32.xlu0 %v4024, 92
    %v4041 = vpop.permute.xlu0 %4040
    %4042 = vrot.lane.b32.xlu0 %v4025, 92
    %v4043 = vpop.permute.xlu0 %4042
    %4044 = vrot.lane.b32.xlu0 %v4026, 92
    %v4045 = vpop.permute.xlu0 %4044
    %4046 = vrot.lane.b32.xlu0 %v4027, 92
    %v4047 = vpop.permute.xlu0 %4046
    %4048 = vrot.lane.b32.xlu0 %v4028, 92
    %v4049 = vpop.permute.xlu0 %4048
    %4050 = vrot.lane.b32.xlu0 %v4029, 92
    %v4051 = vpop.permute.xlu0 %4050
    %4052 = vrot.lane.b32.xlu0 %v4030, 92
    %v4053 = vpop.permute.xlu0 %4052
    %4054 = vrot.lane.b32.xlu0 %v4031, 92
    %v4055 = vpop.permute.xlu0 %4054
    %v4056 = vsel %vm544, %v4041, %v4043
    %v4057 = vsel %vm544, %v4043, %v4045
    %v4058 = vsel %vm544, %v4045, %v4047
    %v4059 = vsel %vm544, %v4047, %v4049
    %v4060 = vsel %vm544, %v4049, %v4051
    %v4061 = vsel %vm544, %v4051, %v4053
    %v4062 = vsel %vm544, %v4053, %v4055
    %v4070 = vadd.f32 %v4015, %v4056
    %v4071 = vadd.f32 %v4016, %v4057
    %v4072 = vadd.f32 %v4017, %v4058
    %v4073 = vadd.f32 %v4018, %v4059
    %v4074 = vadd.f32 %v4019, %v4060
    %v4075 = vadd.f32 %v4020, %v4061
    %v4076 = vadd.f32 %v4021, %v4062
    %s4077 = sld [smem:[#allocation2 + $0x3c]]
    %v4078 = vstv %s4077
    %v4079 = vmul.f32 %v4078, %v279
    %v4080 = vmul.f32 %v4078, %v280
    %v4081 = vmul.f32 %v4078, %v281
    %v4082 = vmul.f32 %v4078, %v282
    %v4083 = vmul.f32 %v4078, %v283
    %v4084 = vmul.f32 %v4078, %v284
    %v4085 = vmul.f32 %v4078, %v285
    %v4086 = vmul.f32 %v4078, %v286
    %4095 = vrot.lane.b32.xlu0 %v4079, 64
    %v4096 = vpop.permute.xlu0 %4095
    %4097 = vrot.lane.b32.xlu0 %v4080, 64
    %v4098 = vpop.permute.xlu0 %4097
    %4099 = vrot.lane.b32.xlu0 %v4081, 64
    %v4100 = vpop.permute.xlu0 %4099
    %4101 = vrot.lane.b32.xlu0 %v4082, 64
    %v4102 = vpop.permute.xlu0 %4101
    %4103 = vrot.lane.b32.xlu0 %v4083, 64
    %v4104 = vpop.permute.xlu0 %4103
    %4105 = vrot.lane.b32.xlu0 %v4084, 64
    %v4106 = vpop.permute.xlu0 %4105
    %4107 = vrot.lane.b32.xlu0 %v4085, 64
    %v4108 = vpop.permute.xlu0 %4107
    %4109 = vrot.lane.b32.xlu0 %v4086, 64
    %v4110 = vpop.permute.xlu0 %4109
    %v4111 = vsel %vm600, %v4096, %v4098
    %v4112 = vsel %vm600, %v4098, %v4100
    %v4113 = vsel %vm600, %v4100, %v4102
    %v4114 = vsel %vm600, %v4102, %v4104
    %v4115 = vsel %vm600, %v4104, %v4106
    %v4116 = vsel %vm600, %v4106, %v4108
    %v4117 = vsel %vm600, %v4108, %v4110
    %v4125 = vadd.f32 %v4070, %v4111
    %v4126 = vadd.f32 %v4071, %v4112
    %v4127 = vadd.f32 %v4072, %v4113
    %v4128 = vadd.f32 %v4073, %v4114
    %v4129 = vadd.f32 %v4074, %v4115
    %v4130 = vadd.f32 %v4075, %v4116
    %v4131 = vadd.f32 %v4076, %v4117
    %s4132 = sld [smem:[#allocation2 + $0x3d]]
    %v4133 = vstv %s4132
    %v4134 = vmul.f32 %v4133, %v279
    %v4135 = vmul.f32 %v4133, %v280
    %v4136 = vmul.f32 %v4133, %v281
    %v4137 = vmul.f32 %v4133, %v282
    %v4138 = vmul.f32 %v4133, %v283
    %v4139 = vmul.f32 %v4133, %v284
    %v4140 = vmul.f32 %v4133, %v285
    %v4141 = vmul.f32 %v4133, %v286
    %4150 = vrot.lane.b32.xlu0 %v4134, 63
    %v4151 = vpop.permute.xlu0 %4150
    %4152 = vrot.lane.b32.xlu0 %v4135, 63
    %v4153 = vpop.permute.xlu0 %4152
    %4154 = vrot.lane.b32.xlu0 %v4136, 63
    %v4155 = vpop.permute.xlu0 %4154
    %4156 = vrot.lane.b32.xlu0 %v4137, 63
    %v4157 = vpop.permute.xlu0 %4156
    %4158 = vrot.lane.b32.xlu0 %v4138, 63
    %v4159 = vpop.permute.xlu0 %4158
    %4160 = vrot.lane.b32.xlu0 %v4139, 63
    %v4161 = vpop.permute.xlu0 %4160
    %4162 = vrot.lane.b32.xlu0 %v4140, 63
    %v4163 = vpop.permute.xlu0 %4162
    %4164 = vrot.lane.b32.xlu0 %v4141, 63
    %v4165 = vpop.permute.xlu0 %4164
    %v4166 = vsel %vm656, %v4151, %v4153
    %v4167 = vsel %vm656, %v4153, %v4155
    %v4168 = vsel %vm656, %v4155, %v4157
    %v4169 = vsel %vm656, %v4157, %v4159
    %v4170 = vsel %vm656, %v4159, %v4161
    %v4171 = vsel %vm656, %v4161, %v4163
    %v4172 = vsel %vm656, %v4163, %v4165
    %v4180 = vadd.f32 %v4125, %v4166
    %v4181 = vadd.f32 %v4126, %v4167
    %v4182 = vadd.f32 %v4127, %v4168
    %v4183 = vadd.f32 %v4128, %v4169
    %v4184 = vadd.f32 %v4129, %v4170
    %v4185 = vadd.f32 %v4130, %v4171
    %v4186 = vadd.f32 %v4131, %v4172
    %s4187 = sld [smem:[#allocation2 + $0x3e]]
    %v4188 = vstv %s4187
    %v4189 = vmul.f32 %v4188, %v279
    %v4190 = vmul.f32 %v4188, %v280
    %v4191 = vmul.f32 %v4188, %v281
    %v4192 = vmul.f32 %v4188, %v282
    %v4193 = vmul.f32 %v4188, %v283
    %v4194 = vmul.f32 %v4188, %v284
    %v4195 = vmul.f32 %v4188, %v285
    %v4196 = vmul.f32 %v4188, %v286
    %4205 = vrot.lane.b32.xlu0 %v4189, 62
    %v4206 = vpop.permute.xlu0 %4205
    %4207 = vrot.lane.b32.xlu0 %v4190, 62
    %v4208 = vpop.permute.xlu0 %4207
    %4209 = vrot.lane.b32.xlu0 %v4191, 62
    %v4210 = vpop.permute.xlu0 %4209
    %4211 = vrot.lane.b32.xlu0 %v4192, 62
    %v4212 = vpop.permute.xlu0 %4211
    %4213 = vrot.lane.b32.xlu0 %v4193, 62
    %v4214 = vpop.permute.xlu0 %4213
    %4215 = vrot.lane.b32.xlu0 %v4194, 62
    %v4216 = vpop.permute.xlu0 %4215
    %4217 = vrot.lane.b32.xlu0 %v4195, 62
    %v4218 = vpop.permute.xlu0 %4217
    %4219 = vrot.lane.b32.xlu0 %v4196, 62
    %v4220 = vpop.permute.xlu0 %4219
    %v4221 = vsel %vm712, %v4206, %v4208
    %v4222 = vsel %vm712, %v4208, %v4210
    %v4223 = vsel %vm712, %v4210, %v4212
    %v4224 = vsel %vm712, %v4212, %v4214
    %v4225 = vsel %vm712, %v4214, %v4216
    %v4226 = vsel %vm712, %v4216, %v4218
    %v4227 = vsel %vm712, %v4218, %v4220
    %v4235 = vadd.f32 %v4180, %v4221
    %v4236 = vadd.f32 %v4181, %v4222
    %v4237 = vadd.f32 %v4182, %v4223
    %v4238 = vadd.f32 %v4183, %v4224
    %v4239 = vadd.f32 %v4184, %v4225
    %v4240 = vadd.f32 %v4185, %v4226
    %v4241 = vadd.f32 %v4186, %v4227
    %s4242 = sld [smem:[#allocation2 + $0x3f]]
    %v4243 = vstv %s4242
    %v4244 = vmul.f32 %v4243, %v279
    %v4245 = vmul.f32 %v4243, %v280
    %v4246 = vmul.f32 %v4243, %v281
    %v4247 = vmul.f32 %v4243, %v282
    %v4248 = vmul.f32 %v4243, %v283
    %v4249 = vmul.f32 %v4243, %v284
    %v4250 = vmul.f32 %v4243, %v285
    %v4251 = vmul.f32 %v4243, %v286
    %4260 = vrot.lane.b32.xlu0 %v4244, 61
    %v4261 = vpop.permute.xlu0 %4260
    %4262 = vrot.lane.b32.xlu0 %v4245, 61
    %v4263 = vpop.permute.xlu0 %4262
    %4264 = vrot.lane.b32.xlu0 %v4246, 61
    %v4265 = vpop.permute.xlu0 %4264
    %4266 = vrot.lane.b32.xlu0 %v4247, 61
    %v4267 = vpop.permute.xlu0 %4266
    %4268 = vrot.lane.b32.xlu0 %v4248, 61
    %v4269 = vpop.permute.xlu0 %4268
    %4270 = vrot.lane.b32.xlu0 %v4249, 61
    %v4271 = vpop.permute.xlu0 %4270
    %4272 = vrot.lane.b32.xlu0 %v4250, 61
    %v4273 = vpop.permute.xlu0 %4272
    %4274 = vrot.lane.b32.xlu0 %v4251, 61
    %v4275 = vpop.permute.xlu0 %4274
    %v4276 = vsel %vm768, %v4261, %v4263
    %v4277 = vsel %vm768, %v4263, %v4265
    %v4278 = vsel %vm768, %v4265, %v4267
    %v4279 = vsel %vm768, %v4267, %v4269
    %v4280 = vsel %vm768, %v4269, %v4271
    %v4281 = vsel %vm768, %v4271, %v4273
    %v4282 = vsel %vm768, %v4273, %v4275
    %v4290 = vadd.f32 %v4235, %v4276
    %v4291 = vadd.f32 %v4236, %v4277
    %v4292 = vadd.f32 %v4237, %v4278
    %v4293 = vadd.f32 %v4238, %v4279
    %v4294 = vadd.f32 %v4239, %v4280
    %v4295 = vadd.f32 %v4240, %v4281
    %v4296 = vadd.f32 %v4241, %v4282
    %s4297 = sld [smem:[#allocation2 + $0x40]]
    %v4298 = vstv %s4297
    %v4299 = vmul.f32 %v4298, %v279
    %v4300 = vmul.f32 %v4298, %v280
    %v4301 = vmul.f32 %v4298, %v281
    %v4302 = vmul.f32 %v4298, %v282
    %v4303 = vmul.f32 %v4298, %v283
    %v4304 = vmul.f32 %v4298, %v284
    %v4305 = vmul.f32 %v4298, %v285
    %v4306 = vmul.f32 %v4298, %v286
    %4315 = vrot.lane.b32.xlu0 %v4299, 60
    %v4316 = vpop.permute.xlu0 %4315
    %4317 = vrot.lane.b32.xlu0 %v4300, 60
    %v4318 = vpop.permute.xlu0 %4317
    %4319 = vrot.lane.b32.xlu0 %v4301, 60
    %v4320 = vpop.permute.xlu0 %4319
    %4321 = vrot.lane.b32.xlu0 %v4302, 60
    %v4322 = vpop.permute.xlu0 %4321
    %4323 = vrot.lane.b32.xlu0 %v4303, 60
    %v4324 = vpop.permute.xlu0 %4323
    %4325 = vrot.lane.b32.xlu0 %v4304, 60
    %v4326 = vpop.permute.xlu0 %4325
    %4327 = vrot.lane.b32.xlu0 %v4305, 60
    %v4328 = vpop.permute.xlu0 %4327
    %4329 = vrot.lane.b32.xlu0 %v4306, 60
    %v4330 = vpop.permute.xlu0 %4329
    %v4331 = vsel %vm824, %v4316, %v4318
    %v4332 = vsel %vm824, %v4318, %v4320
    %v4333 = vsel %vm824, %v4320, %v4322
    %v4334 = vsel %vm824, %v4322, %v4324
    %v4335 = vsel %vm824, %v4324, %v4326
    %v4336 = vsel %vm824, %v4326, %v4328
    %v4337 = vsel %vm824, %v4328, %v4330
    %v4345 = vadd.f32 %v4290, %v4331
    %v4346 = vadd.f32 %v4291, %v4332
    %v4347 = vadd.f32 %v4292, %v4333
    %v4348 = vadd.f32 %v4293, %v4334
    %v4349 = vadd.f32 %v4294, %v4335
    %v4350 = vadd.f32 %v4295, %v4336
    %v4351 = vadd.f32 %v4296, %v4337
    %s4352 = sld [smem:[#allocation2 + $0x41]]
    %v4353 = vstv %s4352
    %v4354 = vmul.f32 %v4353, %v279
    %v4355 = vmul.f32 %v4353, %v280
    %v4356 = vmul.f32 %v4353, %v281
    %v4357 = vmul.f32 %v4353, %v282
    %v4358 = vmul.f32 %v4353, %v283
    %v4359 = vmul.f32 %v4353, %v284
    %v4360 = vmul.f32 %v4353, %v285
    %v4361 = vmul.f32 %v4353, %v286
    %4370 = vrot.lane.b32.xlu0 %v4354, 32
    %v4371 = vpop.permute.xlu0 %4370
    %4372 = vrot.lane.b32.xlu0 %v4355, 32
    %v4373 = vpop.permute.xlu0 %4372
    %4374 = vrot.lane.b32.xlu0 %v4356, 32
    %v4375 = vpop.permute.xlu0 %4374
    %4376 = vrot.lane.b32.xlu0 %v4357, 32
    %v4377 = vpop.permute.xlu0 %4376
    %4378 = vrot.lane.b32.xlu0 %v4358, 32
    %v4379 = vpop.permute.xlu0 %4378
    %4380 = vrot.lane.b32.xlu0 %v4359, 32
    %v4381 = vpop.permute.xlu0 %4380
    %4382 = vrot.lane.b32.xlu0 %v4360, 32
    %v4383 = vpop.permute.xlu0 %4382
    %4384 = vrot.lane.b32.xlu0 %v4361, 32
    %v4385 = vpop.permute.xlu0 %4384
    %v4386 = vsel %vm880, %v4371, %v4373
    %v4387 = vsel %vm880, %v4373, %v4375
    %v4388 = vsel %vm880, %v4375, %v4377
    %v4389 = vsel %vm880, %v4377, %v4379
    %v4390 = vsel %vm880, %v4379, %v4381
    %v4391 = vsel %vm880, %v4381, %v4383
    %v4392 = vsel %vm880, %v4383, %v4385
    %v4400 = vadd.f32 %v4345, %v4386
    %v4401 = vadd.f32 %v4346, %v4387
    %v4402 = vadd.f32 %v4347, %v4388
    %v4403 = vadd.f32 %v4348, %v4389
    %v4404 = vadd.f32 %v4349, %v4390
    %v4405 = vadd.f32 %v4350, %v4391
    %v4406 = vadd.f32 %v4351, %v4392
    %s4407 = sld [smem:[#allocation2 + $0x42]]
    %v4408 = vstv %s4407
    %v4409 = vmul.f32 %v4408, %v279
    %v4410 = vmul.f32 %v4408, %v280
    %v4411 = vmul.f32 %v4408, %v281
    %v4412 = vmul.f32 %v4408, %v282
    %v4413 = vmul.f32 %v4408, %v283
    %v4414 = vmul.f32 %v4408, %v284
    %v4415 = vmul.f32 %v4408, %v285
    %v4416 = vmul.f32 %v4408, %v286
    %4425 = vrot.lane.b32.xlu0 %v4409, 31
    %v4426 = vpop.permute.xlu0 %4425
    %4427 = vrot.lane.b32.xlu0 %v4410, 31
    %v4428 = vpop.permute.xlu0 %4427
    %4429 = vrot.lane.b32.xlu0 %v4411, 31
    %v4430 = vpop.permute.xlu0 %4429
    %4431 = vrot.lane.b32.xlu0 %v4412, 31
    %v4432 = vpop.permute.xlu0 %4431
    %4433 = vrot.lane.b32.xlu0 %v4413, 31
    %v4434 = vpop.permute.xlu0 %4433
    %4435 = vrot.lane.b32.xlu0 %v4414, 31
    %v4436 = vpop.permute.xlu0 %4435
    %4437 = vrot.lane.b32.xlu0 %v4415, 31
    %v4438 = vpop.permute.xlu0 %4437
    %4439 = vrot.lane.b32.xlu0 %v4416, 31
    %v4440 = vpop.permute.xlu0 %4439
    %v4441 = vsel %vm936, %v4426, %v4428
    %v4442 = vsel %vm936, %v4428, %v4430
    %v4443 = vsel %vm936, %v4430, %v4432
    %v4444 = vsel %vm936, %v4432, %v4434
    %v4445 = vsel %vm936, %v4434, %v4436
    %v4446 = vsel %vm936, %v4436, %v4438
    %v4447 = vsel %vm936, %v4438, %v4440
    %v4455 = vadd.f32 %v4400, %v4441
    %v4456 = vadd.f32 %v4401, %v4442
    %v4457 = vadd.f32 %v4402, %v4443
    %v4458 = vadd.f32 %v4403, %v4444
    %v4459 = vadd.f32 %v4404, %v4445
    %v4460 = vadd.f32 %v4405, %v4446
    %v4461 = vadd.f32 %v4406, %v4447
    %s4462 = sld [smem:[#allocation2 + $0x43]]
    %v4463 = vstv %s4462
    %v4464 = vmul.f32 %v4463, %v279
    %v4465 = vmul.f32 %v4463, %v280
    %v4466 = vmul.f32 %v4463, %v281
    %v4467 = vmul.f32 %v4463, %v282
    %v4468 = vmul.f32 %v4463, %v283
    %v4469 = vmul.f32 %v4463, %v284
    %v4470 = vmul.f32 %v4463, %v285
    %v4471 = vmul.f32 %v4463, %v286
    %4480 = vrot.lane.b32.xlu0 %v4464, 30
    %v4481 = vpop.permute.xlu0 %4480
    %4482 = vrot.lane.b32.xlu0 %v4465, 30
    %v4483 = vpop.permute.xlu0 %4482
    %4484 = vrot.lane.b32.xlu0 %v4466, 30
    %v4485 = vpop.permute.xlu0 %4484
    %4486 = vrot.lane.b32.xlu0 %v4467, 30
    %v4487 = vpop.permute.xlu0 %4486
    %4488 = vrot.lane.b32.xlu0 %v4468, 30
    %v4489 = vpop.permute.xlu0 %4488
    %4490 = vrot.lane.b32.xlu0 %v4469, 30
    %v4491 = vpop.permute.xlu0 %4490
    %4492 = vrot.lane.b32.xlu0 %v4470, 30
    %v4493 = vpop.permute.xlu0 %4492
    %4494 = vrot.lane.b32.xlu0 %v4471, 30
    %v4495 = vpop.permute.xlu0 %4494
    %v4496 = vsel %vm992, %v4481, %v4483
    %v4497 = vsel %vm992, %v4483, %v4485
    %v4498 = vsel %vm992, %v4485, %v4487
    %v4499 = vsel %vm992, %v4487, %v4489
    %v4500 = vsel %vm992, %v4489, %v4491
    %v4501 = vsel %vm992, %v4491, %v4493
    %v4502 = vsel %vm992, %v4493, %v4495
    %v4510 = vadd.f32 %v4455, %v4496
    %v4511 = vadd.f32 %v4456, %v4497
    %v4512 = vadd.f32 %v4457, %v4498
    %v4513 = vadd.f32 %v4458, %v4499
    %v4514 = vadd.f32 %v4459, %v4500
    %v4515 = vadd.f32 %v4460, %v4501
    %v4516 = vadd.f32 %v4461, %v4502
    %s4517 = sld [smem:[#allocation2 + $0x44]]
    %v4518 = vstv %s4517
    %v4519 = vmul.f32 %v4518, %v279
    %v4520 = vmul.f32 %v4518, %v280
    %v4521 = vmul.f32 %v4518, %v281
    %v4522 = vmul.f32 %v4518, %v282
    %v4523 = vmul.f32 %v4518, %v283
    %v4524 = vmul.f32 %v4518, %v284
    %v4525 = vmul.f32 %v4518, %v285
    %v4526 = vmul.f32 %v4518, %v286
    %4535 = vrot.lane.b32.xlu0 %v4519, 29
    %v4536 = vpop.permute.xlu0 %4535
    %4537 = vrot.lane.b32.xlu0 %v4520, 29
    %v4538 = vpop.permute.xlu0 %4537
    %4539 = vrot.lane.b32.xlu0 %v4521, 29
    %v4540 = vpop.permute.xlu0 %4539
    %4541 = vrot.lane.b32.xlu0 %v4522, 29
    %v4542 = vpop.permute.xlu0 %4541
    %4543 = vrot.lane.b32.xlu0 %v4523, 29
    %v4544 = vpop.permute.xlu0 %4543
    %4545 = vrot.lane.b32.xlu0 %v4524, 29
    %v4546 = vpop.permute.xlu0 %4545
    %4547 = vrot.lane.b32.xlu0 %v4525, 29
    %v4548 = vpop.permute.xlu0 %4547
    %4549 = vrot.lane.b32.xlu0 %v4526, 29
    %v4550 = vpop.permute.xlu0 %4549
    %v4551 = vsel %vm1048, %v4536, %v4538
    %v4552 = vsel %vm1048, %v4538, %v4540
    %v4553 = vsel %vm1048, %v4540, %v4542
    %v4554 = vsel %vm1048, %v4542, %v4544
    %v4555 = vsel %vm1048, %v4544, %v4546
    %v4556 = vsel %vm1048, %v4546, %v4548
    %v4557 = vsel %vm1048, %v4548, %v4550
    %v4565 = vadd.f32 %v4510, %v4551
    %v4566 = vadd.f32 %v4511, %v4552
    %v4567 = vadd.f32 %v4512, %v4553
    %v4568 = vadd.f32 %v4513, %v4554
    %v4569 = vadd.f32 %v4514, %v4555
    %v4570 = vadd.f32 %v4515, %v4556
    %v4571 = vadd.f32 %v4516, %v4557
    %s4572 = sld [smem:[#allocation2 + $0x45]]
    %v4573 = vstv %s4572
    %v4574 = vmul.f32 %v4573, %v279
    %v4575 = vmul.f32 %v4573, %v280
    %v4576 = vmul.f32 %v4573, %v281
    %v4577 = vmul.f32 %v4573, %v282
    %v4578 = vmul.f32 %v4573, %v283
    %v4579 = vmul.f32 %v4573, %v284
    %v4580 = vmul.f32 %v4573, %v285
    %v4581 = vmul.f32 %v4573, %v286
    %4590 = vrot.lane.b32.xlu0 %v4574, 28
    %v4591 = vpop.permute.xlu0 %4590
    %4592 = vrot.lane.b32.xlu0 %v4575, 28
    %v4593 = vpop.permute.xlu0 %4592
    %4594 = vrot.lane.b32.xlu0 %v4576, 28
    %v4595 = vpop.permute.xlu0 %4594
    %4596 = vrot.lane.b32.xlu0 %v4577, 28
    %v4597 = vpop.permute.xlu0 %4596
    %4598 = vrot.lane.b32.xlu0 %v4578, 28
    %v4599 = vpop.permute.xlu0 %4598
    %4600 = vrot.lane.b32.xlu0 %v4579, 28
    %v4601 = vpop.permute.xlu0 %4600
    %4602 = vrot.lane.b32.xlu0 %v4580, 28
    %v4603 = vpop.permute.xlu0 %4602
    %4604 = vrot.lane.b32.xlu0 %v4581, 28
    %v4605 = vpop.permute.xlu0 %4604
    %v4606 = vsel %vm1104, %v4591, %v4593
    %v4607 = vsel %vm1104, %v4593, %v4595
    %v4608 = vsel %vm1104, %v4595, %v4597
    %v4609 = vsel %vm1104, %v4597, %v4599
    %v4610 = vsel %vm1104, %v4599, %v4601
    %v4611 = vsel %vm1104, %v4601, %v4603
    %v4612 = vsel %vm1104, %v4603, %v4605
    %v4620 = vadd.f32 %v4565, %v4606
    %v4621 = vadd.f32 %v4566, %v4607
    %v4622 = vadd.f32 %v4567, %v4608
    %v4623 = vadd.f32 %v4568, %v4609
    %v4624 = vadd.f32 %v4569, %v4610
    %v4625 = vadd.f32 %v4570, %v4611
    %v4626 = vadd.f32 %v4571, %v4612
    %s4627 = sld [smem:[#allocation2 + $0x46]]
    %v4628 = vstv %s4627
    %v4629 = vmul.f32 %v4628, %v280
    %v4630 = vmul.f32 %v4628, %v281
    %v4631 = vmul.f32 %v4628, %v282
    %v4632 = vmul.f32 %v4628, %v283
    %v4633 = vmul.f32 %v4628, %v284
    %v4634 = vmul.f32 %v4628, %v285
    %v4635 = vmul.f32 %v4628, %v286
    %v4636 = vadd.f32 %v4620, %v4629
    %v4637 = vadd.f32 %v4621, %v4630
    %v4638 = vadd.f32 %v4622, %v4631
    %v4639 = vadd.f32 %v4623, %v4632
    %v4640 = vadd.f32 %v4624, %v4633
    %v4641 = vadd.f32 %v4625, %v4634
    %v4642 = vadd.f32 %v4626, %v4635
    %s4643 = sld [smem:[#allocation2 + $0x47]]
    %v4644 = vstv %s4643
    %v4645 = vmul.f32 %v4644, %v280
    %v4646 = vmul.f32 %v4644, %v281
    %v4647 = vmul.f32 %v4644, %v282
    %v4648 = vmul.f32 %v4644, %v283
    %v4649 = vmul.f32 %v4644, %v284
    %v4650 = vmul.f32 %v4644, %v285
    %v4651 = vmul.f32 %v4644, %v286
    %4659 = vrot.lane.b32.xlu0 %v4645, 127
    %v4660 = vpop.permute.xlu0 %4659
    %4661 = vrot.lane.b32.xlu0 %v4646, 127
    %v4662 = vpop.permute.xlu0 %4661
    %4663 = vrot.lane.b32.xlu0 %v4647, 127
    %v4664 = vpop.permute.xlu0 %4663
    %4665 = vrot.lane.b32.xlu0 %v4648, 127
    %v4666 = vpop.permute.xlu0 %4665
    %4667 = vrot.lane.b32.xlu0 %v4649, 127
    %v4668 = vpop.permute.xlu0 %4667
    %4669 = vrot.lane.b32.xlu0 %v4650, 127
    %v4670 = vpop.permute.xlu0 %4669
    %4671 = vrot.lane.b32.xlu0 %v4651, 127
    %v4672 = vpop.permute.xlu0 %4671
    %v4673 = vsel %vm104, %v4660, %v4662
    %v4674 = vsel %vm104, %v4662, %v4664
    %v4675 = vsel %vm104, %v4664, %v4666
    %v4676 = vsel %vm104, %v4666, %v4668
    %v4677 = vsel %vm104, %v4668, %v4670
    %v4678 = vsel %vm104, %v4670, %v4672
    %v4686 = vadd.f32 %v4636, %v4673
    %v4687 = vadd.f32 %v4637, %v4674
    %v4688 = vadd.f32 %v4638, %v4675
    %v4689 = vadd.f32 %v4639, %v4676
    %v4690 = vadd.f32 %v4640, %v4677
    %v4691 = vadd.f32 %v4641, %v4678
    %v4692 = vadd.f32 %v4642, %v4672
    %s4693 = sld [smem:[#allocation2 + $0x48]]
    %v4694 = vstv %s4693
    %v4695 = vmul.f32 %v4694, %v280
    %v4696 = vmul.f32 %v4694, %v281
    %v4697 = vmul.f32 %v4694, %v282
    %v4698 = vmul.f32 %v4694, %v283
    %v4699 = vmul.f32 %v4694, %v284
    %v4700 = vmul.f32 %v4694, %v285
    %v4701 = vmul.f32 %v4694, %v286
    %4709 = vrot.lane.b32.xlu0 %v4695, 126
    %v4710 = vpop.permute.xlu0 %4709
    %4711 = vrot.lane.b32.xlu0 %v4696, 126
    %v4712 = vpop.permute.xlu0 %4711
    %4713 = vrot.lane.b32.xlu0 %v4697, 126
    %v4714 = vpop.permute.xlu0 %4713
    %4715 = vrot.lane.b32.xlu0 %v4698, 126
    %v4716 = vpop.permute.xlu0 %4715
    %4717 = vrot.lane.b32.xlu0 %v4699, 126
    %v4718 = vpop.permute.xlu0 %4717
    %4719 = vrot.lane.b32.xlu0 %v4700, 126
    %v4720 = vpop.permute.xlu0 %4719
    %4721 = vrot.lane.b32.xlu0 %v4701, 126
    %v4722 = vpop.permute.xlu0 %4721
    %v4723 = vsel %vm155, %v4710, %v4712
    %v4724 = vsel %vm155, %v4712, %v4714
    %v4725 = vsel %vm155, %v4714, %v4716
    %v4726 = vsel %vm155, %v4716, %v4718
    %v4727 = vsel %vm155, %v4718, %v4720
    %v4728 = vsel %vm155, %v4720, %v4722
    %v4736 = vadd.f32 %v4686, %v4723
    %v4737 = vadd.f32 %v4687, %v4724
    %v4738 = vadd.f32 %v4688, %v4725
    %v4739 = vadd.f32 %v4689, %v4726
    %v4740 = vadd.f32 %v4690, %v4727
    %v4741 = vadd.f32 %v4691, %v4728
    %v4742 = vadd.f32 %v4692, %v4722
    %s4743 = sld [smem:[#allocation2 + $0x49]]
    %v4744 = vstv %s4743
    %v4745 = vmul.f32 %v4744, %v280
    %v4746 = vmul.f32 %v4744, %v281
    %v4747 = vmul.f32 %v4744, %v282
    %v4748 = vmul.f32 %v4744, %v283
    %v4749 = vmul.f32 %v4744, %v284
    %v4750 = vmul.f32 %v4744, %v285
    %v4751 = vmul.f32 %v4744, %v286
    %4759 = vrot.lane.b32.xlu0 %v4745, 125
    %v4760 = vpop.permute.xlu0 %4759
    %4761 = vrot.lane.b32.xlu0 %v4746, 125
    %v4762 = vpop.permute.xlu0 %4761
    %4763 = vrot.lane.b32.xlu0 %v4747, 125
    %v4764 = vpop.permute.xlu0 %4763
    %4765 = vrot.lane.b32.xlu0 %v4748, 125
    %v4766 = vpop.permute.xlu0 %4765
    %4767 = vrot.lane.b32.xlu0 %v4749, 125
    %v4768 = vpop.permute.xlu0 %4767
    %4769 = vrot.lane.b32.xlu0 %v4750, 125
    %v4770 = vpop.permute.xlu0 %4769
    %4771 = vrot.lane.b32.xlu0 %v4751, 125
    %v4772 = vpop.permute.xlu0 %4771
    %v4773 = vsel %vm206, %v4760, %v4762
    %v4774 = vsel %vm206, %v4762, %v4764
    %v4775 = vsel %vm206, %v4764, %v4766
    %v4776 = vsel %vm206, %v4766, %v4768
    %v4777 = vsel %vm206, %v4768, %v4770
    %v4778 = vsel %vm206, %v4770, %v4772
    %v4786 = vadd.f32 %v4736, %v4773
    %v4787 = vadd.f32 %v4737, %v4774
    %v4788 = vadd.f32 %v4738, %v4775
    %v4789 = vadd.f32 %v4739, %v4776
    %v4790 = vadd.f32 %v4740, %v4777
    %v4791 = vadd.f32 %v4741, %v4778
    %v4792 = vadd.f32 %v4742, %v4772
    %s4793 = sld [smem:[#allocation2 + $0x4a]]
    %v4794 = vstv %s4793
    %v4795 = vmul.f32 %v4794, %v280
    %v4796 = vmul.f32 %v4794, %v281
    %v4797 = vmul.f32 %v4794, %v282
    %v4798 = vmul.f32 %v4794, %v283
    %v4799 = vmul.f32 %v4794, %v284
    %v4800 = vmul.f32 %v4794, %v285
    %v4801 = vmul.f32 %v4794, %v286
    %4809 = vrot.lane.b32.xlu0 %v4795, 124
    %v4810 = vpop.permute.xlu0 %4809
    %4811 = vrot.lane.b32.xlu0 %v4796, 124
    %v4812 = vpop.permute.xlu0 %4811
    %4813 = vrot.lane.b32.xlu0 %v4797, 124
    %v4814 = vpop.permute.xlu0 %4813
    %4815 = vrot.lane.b32.xlu0 %v4798, 124
    %v4816 = vpop.permute.xlu0 %4815
    %4817 = vrot.lane.b32.xlu0 %v4799, 124
    %v4818 = vpop.permute.xlu0 %4817
    %4819 = vrot.lane.b32.xlu0 %v4800, 124
    %v4820 = vpop.permute.xlu0 %4819
    %4821 = vrot.lane.b32.xlu0 %v4801, 124
    %v4822 = vpop.permute.xlu0 %4821
    %v4823 = vsel %vm257, %v4810, %v4812
    %v4824 = vsel %vm257, %v4812, %v4814
    %v4825 = vsel %vm257, %v4814, %v4816
    %v4826 = vsel %vm257, %v4816, %v4818
    %v4827 = vsel %vm257, %v4818, %v4820
    %v4828 = vsel %vm257, %v4820, %v4822
    %v4836 = vadd.f32 %v4786, %v4823
    %v4837 = vadd.f32 %v4787, %v4824
    %v4838 = vadd.f32 %v4788, %v4825
    %v4839 = vadd.f32 %v4789, %v4826
    %v4840 = vadd.f32 %v4790, %v4827
    %v4841 = vadd.f32 %v4791, %v4828
    %v4842 = vadd.f32 %v4792, %v4822
    %4850 = vrot.lane.b32.xlu0 %v4836, 127
    %v4851 = vpop.permute.xlu0 %4850
    %4852 = vrot.lane.b32.xlu0 %v4837, 127
    %v4853 = vpop.permute.xlu0 %4852
    %4854 = vrot.lane.b32.xlu0 %v4838, 127
    %v4855 = vpop.permute.xlu0 %4854
    %4856 = vrot.lane.b32.xlu0 %v4839, 127
    %v4857 = vpop.permute.xlu0 %4856
    %4858 = vrot.lane.b32.xlu0 %v4840, 127
    %v4859 = vpop.permute.xlu0 %4858
    %4860 = vrot.lane.b32.xlu0 %v4841, 127
    %v4861 = vpop.permute.xlu0 %4860
    %4862 = vrot.lane.b32.xlu0 %v4842, 127
    %v4863 = vpop.permute.xlu0 %4862
    %v4864 = vsel %vm104, %v4851, %v4853
    %v4865 = vsel %vm104, %v4853, %v4855
    %v4866 = vsel %vm104, %v4855, %v4857
    %v4867 = vsel %vm104, %v4857, %v4859
    %v4868 = vsel %vm104, %v4859, %v4861
    %v4869 = vsel %vm104, %v4861, %v4863
    %v4877 = vmax.f32 %v4836, %v4864
    %v4878 = vmax.f32 %v4837, %v4865
    %v4879 = vmax.f32 %v4838, %v4866
    %v4880 = vmax.f32 %v4839, %v4867
    %v4881 = vmax.f32 %v4840, %v4868
    %v4882 = vmax.f32 %v4841, %v4869
    %v4883 = vmax.f32 %v4842, %v4863
    %4891 = vrot.lane.b32.xlu0 %v4877, 96
    %v4892 = vpop.permute.xlu0 %4891
    %4893 = vrot.lane.b32.xlu0 %v4878, 96
    %v4894 = vpop.permute.xlu0 %4893
    %4895 = vrot.lane.b32.xlu0 %v4879, 96
    %v4896 = vpop.permute.xlu0 %4895
    %4897 = vrot.lane.b32.xlu0 %v4880, 96
    %v4898 = vpop.permute.xlu0 %4897
    %4899 = vrot.lane.b32.xlu0 %v4881, 96
    %v4900 = vpop.permute.xlu0 %4899
    %4901 = vrot.lane.b32.xlu0 %v4882, 96
    %v4902 = vpop.permute.xlu0 %4901
    %4903 = vrot.lane.b32.xlu0 %v4883, 96
    %v4904 = vpop.permute.xlu0 %4903
    %v4905 = vsel %vm320, %v4892, %v4894
    %v4906 = vsel %vm320, %v4894, %v4896
    %v4907 = vsel %vm320, %v4896, %v4898
    %v4908 = vsel %vm320, %v4898, %v4900
    %v4909 = vsel %vm320, %v4900, %v4902
    %v4910 = vsel %vm320, %v4902, %v4904
    %v4918 = vmax.f32 %v4877, %v4905
    %v4919 = vmax.f32 %v4878, %v4906
    %v4920 = vmax.f32 %v4879, %v4907
    %v4921 = vmax.f32 %v4880, %v4908
    %v4922 = vmax.f32 %v4881, %v4909
    %v4923 = vmax.f32 %v4882, %v4910
    %v4924 = vmax.f32 %v4883, %v4904
    %s4925 = sld [smem:[#allocation4 + $0x2]]
    %v4926 = vstv %s4925
    %v4927 = vadd.f32 %v4918, %v4926
    %v4928 = vadd.f32 %v4919, %v4926
    %v4929 = vadd.f32 %v4920, %v4926
    %v4930 = vadd.f32 %v4921, %v4926
    %v4931 = vadd.f32 %v4922, %v4926
    %v4932 = vadd.f32 %v4923, %v4926
    %v4933 = vadd.f32 %v4924, %v4926
    %v4934 = vmax.f32 %v4927, 0.0
    %v4935 = vmax.f32 %v4928, 0.0
    %v4936 = vmax.f32 %v4929, 0.0
    %v4937 = vmax.f32 %v4930, 0.0
    %v4938 = vmax.f32 %v4931, 0.0
    %v4939 = vmax.f32 %v4932, 0.0
    %v4940 = vmax.f32 %v4933, 0.0
    %s4941 = scalar_lea.vmem %s3, 1728
    %v4942 = vld [vmem:[%s4941] sm:$0xff]
    %v4943 = vld [vmem:[%s4941 + $0x8] sm:$0xff]
    %v4944 = vld [vmem:[%s4941 + $0x10] sm:$0xff]
    %v4945 = vld [vmem:[%s4941 + $0x18] sm:$0xff]
    %v4946 = vld [vmem:[%s4941 + $0x20] sm:$0xff]
    %v4947 = vld [vmem:[%s4941 + $0x28] sm:$0xff]
    %v4948 = vld [vmem:[%s4941 + $0x30] sm:$0xff]
    %v4949 = vld [vmem:[%s4941 + $0x38] sm:$0xff]
    %v4950 = vld [vmem:[%s4941 + $0x40] sm:$0xff]
    %v4951 = vld [vmem:[%s4941 + $0x48] sm:$0xff]
    %v4952 = vld [vmem:[%s4941 + $0x50] sm:$0xff]
    %v4953 = vld [vmem:[%s4941 + $0x58] sm:$0xff]
    %v4954 = vld [vmem:[%s4941 + $0x60] sm:$0xff]
    %v4955 = vld [vmem:[%s4941 + $0x68] sm:$0xff]
    %v4956 = vld [vmem:[%s4941 + $0x70] sm:$0xff]
    %v4957 = vld [vmem:[%s4941 + $0x78] sm:$0xff]
    %v4958 = vld [vmem:[%s4941 + $0x80] sm:$0xff]
    %v4959 = vld [vmem:[%s4941 + $0x88] sm:$0xff]
    %v4960 = vld [vmem:[%s4941 + $0x90] sm:$0xff]
    %v4961 = vld [vmem:[%s4941 + $0x98] sm:$0xff]
    %v4962 = vld [vmem:[%s4941 + $0xa0] sm:$0xff]
    %v4963 = vld [vmem:[%s4941 + $0xa8] sm:$0xff]
    %v4964 = vld [vmem:[%s4941 + $0xb0] sm:$0xff]
    %v4965 = vld [vmem:[%s4941 + $0xb8] sm:$0xff]
    %v4966 = vld [vmem:[%s4941 + $0xc0] sm:$0xff]
    %v4967 = vld [vmem:[%s4941 + $0xc8] sm:$0xff]
    %v4968 = vld [vmem:[%s4941 + $0xd0] sm:$0xff]
    %v4969 = vld [vmem:[%s4941 + $0xd8] sm:$0xff]
    %v4970 = vld [vmem:[%s4941 + $0xe0] sm:$0xff]
    %v4971 = vld [vmem:[%s4941 + $0xe8] sm:$0xff]
    %v4972 = vld [vmem:[%s4941 + $0xf0] sm:$0xff]
    %v4973 = vld [vmem:[%s4941 + $0xf8] sm:$0xff]
    %v4974 = vld [vmem:[%s4941 + $0x100] sm:$0xff]
    %v4975 = vld [vmem:[%s4941 + $0x108] sm:$0xff]
    %v4976 = vld [vmem:[%s4941 + $0x110] sm:$0xff]
    %v4977 = vld [vmem:[%s4941 + $0x118] sm:$0xff]
    %v4978 = vld [vmem:[%s4941 + $0x120] sm:$0xff]
    %v4979 = vld [vmem:[%s4941 + $0x128] sm:$0xff]
    %v4980 = vld [vmem:[%s4941 + $0x130] sm:$0xff]
    %v4981 = vld [vmem:[%s4941 + $0x138] sm:$0xff]
    %v4982 = vld [vmem:[%s4941 + $0x140] sm:$0xff]
    %v4983 = vld [vmem:[%s4941 + $0x148] sm:$0xff]
    %v4984 = vld [vmem:[%s4941 + $0x150] sm:$0xff]
    %v4985 = vld [vmem:[%s4941 + $0x158] sm:$0xff]
    %v4986 = vld [vmem:[%s4941 + $0x160] sm:$0xff]
    %v4987 = vld [vmem:[%s4941 + $0x168] sm:$0xff]
    %v4988 = vld [vmem:[%s4941 + $0x170] sm:$0xff]
    %v4989 = vld [vmem:[%s4941 + $0x178] sm:$0xff]
    %v4990 = vld [vmem:[%s4941 + $0x180] sm:$0xff]
    %v4991 = vld [vmem:[%s4941 + $0x188] sm:$0xff]
    %v4992 = vld [vmem:[%s4941 + $0x190] sm:$0xff]
    %v4993 = vld [vmem:[%s4941 + $0x198] sm:$0xff]
    %v4994 = vld [vmem:[%s4941 + $0x1a0] sm:$0xff]
    %v4995 = vld [vmem:[%s4941 + $0x1a8] sm:$0xff]
    %v4996 = vld [vmem:[%s4941 + $0x1b0] sm:$0xff]
    %v4997 = vld [vmem:[%s4941 + $0x1b8] sm:$0xff]
    %v4998 = vld [vmem:[%s4941 + $0x1c0] sm:$0xff]
    %v4999 = vld [vmem:[%s4941 + $0x1c8] sm:$0xff]
    %v5000 = vld [vmem:[%s4941 + $0x1d0] sm:$0xff]
    %v5001 = vld [vmem:[%s4941 + $0x1d8] sm:$0xff]
    %v5002 = vld [vmem:[%s4941 + $0x1e0] sm:$0xff]
    %v5003 = vld [vmem:[%s4941 + $0x1e8] sm:$0xff]
    %v5004 = vld [vmem:[%s4941 + $0x1f0] sm:$0xff]
    %v5005 = vld [vmem:[%s4941 + $0x1f8] sm:$0xff]
    %v5006 = vld [vmem:[%s4941 + $0x200] sm:$0xff]
    %v5007 = vld [vmem:[%s4941 + $0x208] sm:$0xff]
    %v5008 = vld [vmem:[%s4941 + $0x210] sm:$0xff]
    %v5009 = vld [vmem:[%s4941 + $0x218] sm:$0xff]
    %v5010 = vld [vmem:[%s4941 + $0x220] sm:$0xff]
    %v5011 = vld [vmem:[%s4941 + $0x228] sm:$0xff]
    %v5012 = vld [vmem:[%s4941 + $0x230] sm:$0xff]
    %v5013 = vld [vmem:[%s4941 + $0x238] sm:$0xff]
    %v5014 = vld [vmem:[%s4941 + $0x240] sm:$0xff]
    %v5015 = vld [vmem:[%s4941 + $0x248] sm:$0xff]
    %v5016 = vld [vmem:[%s4941 + $0x250] sm:$0xff]
    %v5017 = vld [vmem:[%s4941 + $0x258] sm:$0xff]
    %v5018 = vld [vmem:[%s4941 + $0x260] sm:$0xff]
    %v5019 = vld [vmem:[%s4941 + $0x268] sm:$0xff]
    %v5020 = vld [vmem:[%s4941 + $0x270] sm:$0xff]
    %v5021 = vld [vmem:[%s4941 + $0x278] sm:$0xff]
    %v5022 = vld [vmem:[%s4941 + $0x280] sm:$0xff]
    %v5023 = vld [vmem:[%s4941 + $0x288] sm:$0xff]
    %v5024 = vld [vmem:[%s4941 + $0x290] sm:$0xff]
    %v5025 = vld [vmem:[%s4941 + $0x298] sm:$0xff]
    %v5026 = vld [vmem:[%s4941 + $0x2a0] sm:$0xff]
    %v5027 = vld [vmem:[%s4941 + $0x2a8] sm:$0xff]
    %v5028 = vld [vmem:[%s4941 + $0x2b0] sm:$0xff]
    %v5029 = vld [vmem:[%s4941 + $0x2b8] sm:$0xff]
    %v5030 = vld [vmem:[%s4941 + $0x2c0] sm:$0xff]
    %v5031 = vld [vmem:[%s4941 + $0x2c8] sm:$0xff]
    %v5032 = vld [vmem:[%s4941 + $0x2d0] sm:$0xff]
    %v5033 = vld [vmem:[%s4941 + $0x2d8] sm:$0xff]
    %v5034 = vld [vmem:[%s4941 + $0x2e0] sm:$0xff]
    %v5035 = vld [vmem:[%s4941 + $0x2e8] sm:$0xff]
    %v5036 = vld [vmem:[%s4941 + $0x2f0] sm:$0xff]
    %v5037 = vld [vmem:[%s4941 + $0x2f8] sm:$0xff]
    %v5038 = vld [vmem:[%s4941 + $0x300] sm:$0xff]
    %v5039 = vld [vmem:[%s4941 + $0x308] sm:$0xff]
    %v5040 = vld [vmem:[%s4941 + $0x310] sm:$0xff]
    %v5041 = vld [vmem:[%s4941 + $0x318] sm:$0xff]
    %v5042 = vld [vmem:[%s4941 + $0x320] sm:$0xff]
    %v5043 = vld [vmem:[%s4941 + $0x328] sm:$0xff]
    %v5044 = vld [vmem:[%s4941 + $0x330] sm:$0xff]
    %v5045 = vld [vmem:[%s4941 + $0x338] sm:$0xff]
    %v5046 = vld [vmem:[%s4941 + $0x340] sm:$0xff]
    %v5047 = vld [vmem:[%s4941 + $0x348] sm:$0xff]
    %v5048 = vld [vmem:[%s4941 + $0x350] sm:$0xff]
    %v5049 = vld [vmem:[%s4941 + $0x358] sm:$0x7]
    %v5051 = vsel %vm3012, %v4940, 0
    %v5054 = vsel %vm3016, %v5049, 0
    %5056 = vmatprep.subr.mxu0 0.0
    %5057 = vmatpush1.msra.mxu0 %v4957
    %5058 = vmatprep.subr.mxu0 0.0
    %5059 = vmatpush1.msra.mxu0 %v4956
    %5060 = vmatprep.subr.mxu0 0.0
    %5061 = vmatpush1.msra.mxu0 %v4955
    %5062 = vmatprep.subr.mxu0 0.0
    %5063 = vmatpush1.msra.mxu0 %v4954
    %5064 = vmatprep.subr.mxu0 0.0
    %5065 = vmatpush1.msra.mxu0 %v4953
    %5066 = vmatprep.subr.mxu0 0.0
    %5067 = vmatpush1.msra.mxu0 %v4952
    %5068 = vmatprep.subr.mxu0 0.0
    %5069 = vmatpush1.msra.mxu0 %v4951
    %5070 = vmatprep.subr.mxu0 0.0
    %5071 = vmatpush1.msra.mxu0 %v4950
    %5072 = vmatprep.subr.mxu0 0.0
    %5073 = vmatpush1.msra.mxu0 %v4949
    %5074 = vmatprep.subr.mxu0 0.0
    %5075 = vmatpush1.msra.mxu0 %v4948
    %5076 = vmatprep.subr.mxu0 0.0
    %5077 = vmatpush1.msra.mxu0 %v4947
    %5078 = vmatprep.subr.mxu0 0.0
    %5079 = vmatpush1.msra.mxu0 %v4946
    %5080 = vmatprep.subr.mxu0 0.0
    %5081 = vmatpush1.msra.mxu0 %v4945
    %5082 = vmatprep.subr.mxu0 0.0
    %5083 = vmatpush1.msra.mxu0 %v4944
    %5084 = vmatprep.subr.mxu0 0.0
    %5085 = vmatpush1.msra.mxu0 %v4943
    %5086 = vmatprep.subr.mxu0 0.0
    %5087 = vmatpush1.msra.mxu0 %v4942
    %5088 = vmatprep.subr.mxu0 0.0
    %5089 = vmatpush2.msra.mxu0 %v4973
    %5090 = vmatprep.subr.mxu0 0.0
    %5091 = vmatpush2.msra.mxu0 %v4972
    %5092 = vmatprep.subr.mxu0 0.0
    %5093 = vmatpush2.msra.mxu0 %v4971
    %5094 = vmatprep.subr.mxu0 0.0
    %5095 = vmatpush2.msra.mxu0 %v4970
    %5096 = vmatprep.subr.mxu0 0.0
    %5097 = vmatpush2.msra.mxu0 %v4969
    %5098 = vmatprep.subr.mxu0 0.0
    %5099 = vmatpush2.msra.mxu0 %v4968
    %5100 = vmatprep.subr.mxu0 0.0
    %5101 = vmatpush2.msra.mxu0 %v4967
    %5102 = vmatprep.subr.mxu0 0.0
    %5103 = vmatpush2.msra.mxu0 %v4966
    %5104 = vmatprep.subr.mxu0 0.0
    %5105 = vmatpush2.msra.mxu0 %v4965
    %5106 = vmatprep.subr.mxu0 0.0
    %5107 = vmatpush2.msra.mxu0 %v4964
    %5108 = vmatprep.subr.mxu0 0.0
    %5109 = vmatpush2.msra.mxu0 %v4963
    %5110 = vmatprep.subr.mxu0 0.0
    %5111 = vmatpush2.msra.mxu0 %v4962
    %5112 = vmatprep.subr.mxu0 0.0
    %5113 = vmatpush2.msra.mxu0 %v4961
    %5114 = vmatprep.subr.mxu0 0.0
    %5115 = vmatpush2.msra.mxu0 %v4960
    %5116 = vmatprep.subr.mxu0 0.0
    %5117 = vmatpush2.msra.mxu0 %v4959
    %5118 = vmatprep.subr.mxu0 0.0
    %5119 = vmatpush2.msra.mxu0 %v4958
    %5120 = vmatprep.mubr.f32.mxu0 %v4935
    %5121 = vmatmul.mubr.f32.gmra.mxu0 %v4934
    %v5122 = vpop.f32.mrf.mxu0
    %v5123 = vadd.f32 0.0, %v5122
    %v5124 = vpop.f32.mrf.mxu0
    %5125 = vdwg.mxu0
    %5126 = vmatprep.subr.mxu0 0.0
    %5127 = vmatpush1.msra.mxu0 %v4989
    %5128 = vmatprep.subr.mxu0 0.0
    %5129 = vmatpush1.msra.mxu0 %v4988
    %5130 = vmatprep.subr.mxu0 0.0
    %5131 = vmatpush1.msra.mxu0 %v4987
    %5132 = vmatprep.subr.mxu0 0.0
    %5133 = vmatpush1.msra.mxu0 %v4986
    %5134 = vmatprep.subr.mxu0 0.0
    %5135 = vmatpush1.msra.mxu0 %v4985
    %5136 = vmatprep.subr.mxu0 0.0
    %5137 = vmatpush1.msra.mxu0 %v4984
    %5138 = vmatprep.subr.mxu0 0.0
    %5139 = vmatpush1.msra.mxu0 %v4983
    %5140 = vmatprep.subr.mxu0 0.0
    %5141 = vmatpush1.msra.mxu0 %v4982
    %5142 = vmatprep.subr.mxu0 0.0
    %5143 = vmatpush1.msra.mxu0 %v4981
    %5144 = vmatprep.subr.mxu0 0.0
    %5145 = vmatpush1.msra.mxu0 %v4980
    %5146 = vmatprep.subr.mxu0 0.0
    %5147 = vmatpush1.msra.mxu0 %v4979
    %5148 = vmatprep.subr.mxu0 0.0
    %5149 = vmatpush1.msra.mxu0 %v4978
    %5150 = vmatprep.subr.mxu0 0.0
    %5151 = vmatpush1.msra.mxu0 %v4977
    %5152 = vmatprep.subr.mxu0 0.0
    %5153 = vmatpush1.msra.mxu0 %v4976
    %5154 = vmatprep.subr.mxu0 0.0
    %5155 = vmatpush1.msra.mxu0 %v4975
    %5156 = vmatprep.subr.mxu0 0.0
    %5157 = vmatpush1.msra.mxu0 %v4974
    %5158 = vmatprep.subr.mxu0 0.0
    %5159 = vmatpush2.msra.mxu0 %v5005
    %5160 = vmatprep.subr.mxu0 0.0
    %5161 = vmatpush2.msra.mxu0 %v5004
    %5162 = vmatprep.subr.mxu0 0.0
    %5163 = vmatpush2.msra.mxu0 %v5003
    %5164 = vmatprep.subr.mxu0 0.0
    %5165 = vmatpush2.msra.mxu0 %v5002
    %5166 = vmatprep.subr.mxu0 0.0
    %5167 = vmatpush2.msra.mxu0 %v5001
    %5168 = vmatprep.subr.mxu0 0.0
    %5169 = vmatpush2.msra.mxu0 %v5000
    %5170 = vmatprep.subr.mxu0 0.0
    %5171 = vmatpush2.msra.mxu0 %v4999
    %5172 = vmatprep.subr.mxu0 0.0
    %5173 = vmatpush2.msra.mxu0 %v4998
    %5174 = vmatprep.subr.mxu0 0.0
    %5175 = vmatpush2.msra.mxu0 %v4997
    %5176 = vmatprep.subr.mxu0 0.0
    %5177 = vmatpush2.msra.mxu0 %v4996
    %5178 = vmatprep.subr.mxu0 0.0
    %5179 = vmatpush2.msra.mxu0 %v4995
    %5180 = vmatprep.subr.mxu0 0.0
    %5181 = vmatpush2.msra.mxu0 %v4994
    %5182 = vmatprep.subr.mxu0 0.0
    %5183 = vmatpush2.msra.mxu0 %v4993
    %5184 = vmatprep.subr.mxu0 0.0
    %5185 = vmatpush2.msra.mxu0 %v4992
    %5186 = vmatprep.subr.mxu0 0.0
    %5187 = vmatpush2.msra.mxu0 %v4991
    %5188 = vmatprep.subr.mxu0 0.0
    %5189 = vmatpush2.msra.mxu0 %v4990
    %5190 = vmatprep.mubr.f32.mxu0 %v4937
    %5191 = vmatmul.mubr.f32.gmra.mxu0 %v4936
    %v5192 = vpop.f32.mrf.mxu0
    %v5193 = vadd.f32 %v5123, %v5192
    %v5194 = vpop.f32.mrf.mxu0
    %5195 = vdwg.mxu0
    %5196 = vmatprep.subr.mxu0 0.0
    %5197 = vmatpush1.msra.mxu0 %v5021
    %5198 = vmatprep.subr.mxu0 0.0
    %5199 = vmatpush1.msra.mxu0 %v5020
    %5200 = vmatprep.subr.mxu0 0.0
    %5201 = vmatpush1.msra.mxu0 %v5019
    %5202 = vmatprep.subr.mxu0 0.0
    %5203 = vmatpush1.msra.mxu0 %v5018
    %5204 = vmatprep.subr.mxu0 0.0
    %5205 = vmatpush1.msra.mxu0 %v5017
    %5206 = vmatprep.subr.mxu0 0.0
    %5207 = vmatpush1.msra.mxu0 %v5016
    %5208 = vmatprep.subr.mxu0 0.0
    %5209 = vmatpush1.msra.mxu0 %v5015
    %5210 = vmatprep.subr.mxu0 0.0
    %5211 = vmatpush1.msra.mxu0 %v5014
    %5212 = vmatprep.subr.mxu0 0.0
    %5213 = vmatpush1.msra.mxu0 %v5013
    %5214 = vmatprep.subr.mxu0 0.0
    %5215 = vmatpush1.msra.mxu0 %v5012
    %5216 = vmatprep.subr.mxu0 0.0
    %5217 = vmatpush1.msra.mxu0 %v5011
    %5218 = vmatprep.subr.mxu0 0.0
    %5219 = vmatpush1.msra.mxu0 %v5010
    %5220 = vmatprep.subr.mxu0 0.0
    %5221 = vmatpush1.msra.mxu0 %v5009
    %5222 = vmatprep.subr.mxu0 0.0
    %5223 = vmatpush1.msra.mxu0 %v5008
    %5224 = vmatprep.subr.mxu0 0.0
    %5225 = vmatpush1.msra.mxu0 %v5007
    %5226 = vmatprep.subr.mxu0 0.0
    %5227 = vmatpush1.msra.mxu0 %v5006
    %5228 = vmatprep.subr.mxu0 0.0
    %5229 = vmatpush2.msra.mxu0 %v5037
    %5230 = vmatprep.subr.mxu0 0.0
    %5231 = vmatpush2.msra.mxu0 %v5036
    %5232 = vmatprep.subr.mxu0 0.0
    %5233 = vmatpush2.msra.mxu0 %v5035
    %5234 = vmatprep.subr.mxu0 0.0
    %5235 = vmatpush2.msra.mxu0 %v5034
    %5236 = vmatprep.subr.mxu0 0.0
    %5237 = vmatpush2.msra.mxu0 %v5033
    %5238 = vmatprep.subr.mxu0 0.0
    %5239 = vmatpush2.msra.mxu0 %v5032
    %5240 = vmatprep.subr.mxu0 0.0
    %5241 = vmatpush2.msra.mxu0 %v5031
    %5242 = vmatprep.subr.mxu0 0.0
    %5243 = vmatpush2.msra.mxu0 %v5030
    %5244 = vmatprep.subr.mxu0 0.0
    %5245 = vmatpush2.msra.mxu0 %v5029
    %5246 = vmatprep.subr.mxu0 0.0
    %5247 = vmatpush2.msra.mxu0 %v5028
    %5248 = vmatprep.subr.mxu0 0.0
    %5249 = vmatpush2.msra.mxu0 %v5027
    %5250 = vmatprep.subr.mxu0 0.0
    %5251 = vmatpush2.msra.mxu0 %v5026
    %5252 = vmatprep.subr.mxu0 0.0
    %5253 = vmatpush2.msra.mxu0 %v5025
    %5254 = vmatprep.subr.mxu0 0.0
    %5255 = vmatpush2.msra.mxu0 %v5024
    %5256 = vmatprep.subr.mxu0 0.0
    %5257 = vmatpush2.msra.mxu0 %v5023
    %5258 = vmatprep.subr.mxu0 0.0
    %5259 = vmatpush2.msra.mxu0 %v5022
    %5260 = vmatprep.mubr.f32.mxu0 %v4939
    %5261 = vmatmul.mubr.f32.gmra.mxu0 %v4938
    %v5262 = vpop.f32.mrf.mxu0
    %v5263 = vadd.f32 %v5193, %v5262
    %v5264 = vpop.f32.mrf.mxu0
    %5265 = vdwg.mxu0
    %5266 = vmatprep.subr.mxu0 0.0
    %5267 = vmatpush1.msra.mxu0 0.0
    %5268 = vmatprep.subr.mxu0 0.0
    %5269 = vmatpush1.msra.mxu0 0.0
    %5270 = vmatprep.subr.mxu0 0.0
    %5271 = vmatpush1.msra.mxu0 0.0
    %5272 = vmatprep.subr.mxu0 0.0
    %5273 = vmatpush1.msra.mxu0 0.0
    %5274 = vmatprep.subr.mxu0 0.0
    %5275 = vmatpush1.msra.mxu0 %v5054
    %5276 = vmatprep.subr.mxu0 0.0
    %5277 = vmatpush1.msra.mxu0 %v5048
    %5278 = vmatprep.subr.mxu0 0.0
    %5279 = vmatpush1.msra.mxu0 %v5047
    %5280 = vmatprep.subr.mxu0 0.0
    %5281 = vmatpush1.msra.mxu0 %v5046
    %5282 = vmatprep.subr.mxu0 0.0
    %5283 = vmatpush1.msra.mxu0 %v5045
    %5284 = vmatprep.subr.mxu0 0.0
    %5285 = vmatpush1.msra.mxu0 %v5044
    %5286 = vmatprep.subr.mxu0 0.0
    %5287 = vmatpush1.msra.mxu0 %v5043
    %5288 = vmatprep.subr.mxu0 0.0
    %5289 = vmatpush1.msra.mxu0 %v5042
    %5290 = vmatprep.subr.mxu0 0.0
    %5291 = vmatpush1.msra.mxu0 %v5041
    %5292 = vmatprep.subr.mxu0 0.0
    %5293 = vmatpush1.msra.mxu0 %v5040
    %5294 = vmatprep.subr.mxu0 0.0
    %5295 = vmatpush1.msra.mxu0 %v5039
    %5296 = vmatprep.subr.mxu0 0.0
    %5297 = vmatpush1.msra.mxu0 %v5038
    %5298 = vmatprep.subr.mxu0 0.0
    %5299 = vmatpush2.msra.mxu0 0.0
    %5300 = vmatprep.subr.mxu0 0.0
    %5301 = vmatpush2.msra.mxu0 0.0
    %5302 = vmatprep.subr.mxu0 0.0
    %5303 = vmatpush2.msra.mxu0 0.0
    %5304 = vmatprep.subr.mxu0 0.0
    %5305 = vmatpush2.msra.mxu0 0.0
    %5306 = vmatprep.subr.mxu0 0.0
    %5307 = vmatpush2.msra.mxu0 0.0
    %5308 = vmatprep.subr.mxu0 0.0
    %5309 = vmatpush2.msra.mxu0 0.0
    %5310 = vmatprep.subr.mxu0 0.0
    %5311 = vmatpush2.msra.mxu0 0.0
    %5312 = vmatprep.subr.mxu0 0.0
    %5313 = vmatpush2.msra.mxu0 0.0
    %5314 = vmatprep.subr.mxu0 0.0
    %5315 = vmatpush2.msra.mxu0 0.0
    %5316 = vmatprep.subr.mxu0 0.0
    %5317 = vmatpush2.msra.mxu0 0.0
    %5318 = vmatprep.subr.mxu0 0.0
    %5319 = vmatpush2.msra.mxu0 0.0
    %5320 = vmatprep.subr.mxu0 0.0
    %5321 = vmatpush2.msra.mxu0 0.0
    %5322 = vmatprep.subr.mxu0 0.0
    %5323 = vmatpush2.msra.mxu0 0.0
    %5324 = vmatprep.subr.mxu0 0.0
    %5325 = vmatpush2.msra.mxu0 0.0
    %5326 = vmatprep.subr.mxu0 0.0
    %5327 = vmatpush2.msra.mxu0 0.0
    %5328 = vmatprep.subr.mxu0 0.0
    %5329 = vmatpush2.msra.mxu0 0.0
    %5330 = vmatprep.mubr.f32.mxu0 0.0
    %5331 = vmatmul.mubr.f32.gmra.mxu0 %v5051
    %v5332 = vpop.f32.mrf.mxu0
    %v5333 = vadd.f32 %v5263, %v5332
    %v5334 = vpop.f32.mrf.mxu0
    %5335 = vdwg.mxu0
    %v5336 = vadd.f32 %v3583, %v5333
    %s5337 = sld [smem:[#allocation2 + $0x4b]]
    %v5338 = vstv %s5337
    %v5339 = vmul.f32 %v5338, %v52
    %v5340 = vmul.f32 %v5338, %v53
    %v5341 = vmul.f32 %v5338, %v54
    %v5342 = vmul.f32 %v5338, %v55
    %v5343 = vmul.f32 %v5338, %v56
    %v5344 = vmul.f32 %v5338, %v57
    %v5345 = vmul.f32 %v5338, %v58
    %v5346 = vadd.f32 %v5339, 0.0
    %v5347 = vadd.f32 %v5340, 0.0
    %v5348 = vadd.f32 %v5341, 0.0
    %v5349 = vadd.f32 %v5342, 0.0
    %v5350 = vadd.f32 %v5343, 0.0
    %v5351 = vadd.f32 %v5344, 0.0
    %v5352 = vadd.f32 %v5345, 0.0
    %s5353 = sld [smem:[#allocation2 + $0x4c]]
    %v5354 = vstv %s5353
    %v5355 = vmul.f32 %v5354, %v52
    %v5356 = vmul.f32 %v5354, %v53
    %v5357 = vmul.f32 %v5354, %v54
    %v5358 = vmul.f32 %v5354, %v55
    %v5359 = vmul.f32 %v5354, %v56
    %v5360 = vmul.f32 %v5354, %v57
    %v5361 = vmul.f32 %v5354, %v58
    %5369 = vrot.lane.b32.xlu0 %v5355, 127
    %v5370 = vpop.permute.xlu0 %5369
    %5371 = vrot.lane.b32.xlu0 %v5356, 127
    %v5372 = vpop.permute.xlu0 %5371
    %5373 = vrot.lane.b32.xlu0 %v5357, 127
    %v5374 = vpop.permute.xlu0 %5373
    %5375 = vrot.lane.b32.xlu0 %v5358, 127
    %v5376 = vpop.permute.xlu0 %5375
    %5377 = vrot.lane.b32.xlu0 %v5359, 127
    %v5378 = vpop.permute.xlu0 %5377
    %5379 = vrot.lane.b32.xlu0 %v5360, 127
    %v5380 = vpop.permute.xlu0 %5379
    %5381 = vrot.lane.b32.xlu0 %v5361, 127
    %v5382 = vpop.permute.xlu0 %5381
    %v5383 = vsel %vm104, %v5370, %v5372
    %v5384 = vsel %vm104, %v5372, %v5374
    %v5385 = vsel %vm104, %v5374, %v5376
    %v5386 = vsel %vm104, %v5376, %v5378
    %v5387 = vsel %vm104, %v5378, %v5380
    %v5388 = vsel %vm104, %v5380, %v5382
    %v5396 = vadd.f32 %v5346, %v5383
    %v5397 = vadd.f32 %v5347, %v5384
    %v5398 = vadd.f32 %v5348, %v5385
    %v5399 = vadd.f32 %v5349, %v5386
    %v5400 = vadd.f32 %v5350, %v5387
    %v5401 = vadd.f32 %v5351, %v5388
    %v5402 = vadd.f32 %v5352, %v5382
    %s5403 = sld [smem:[#allocation2 + $0x4d]]
    %v5404 = vstv %s5403
    %v5405 = vmul.f32 %v5404, %v52
    %v5406 = vmul.f32 %v5404, %v53
    %v5407 = vmul.f32 %v5404, %v54
    %v5408 = vmul.f32 %v5404, %v55
    %v5409 = vmul.f32 %v5404, %v56
    %v5410 = vmul.f32 %v5404, %v57
    %v5411 = vmul.f32 %v5404, %v58
    %5419 = vrot.lane.b32.xlu0 %v5405, 126
    %v5420 = vpop.permute.xlu0 %5419
    %5421 = vrot.lane.b32.xlu0 %v5406, 126
    %v5422 = vpop.permute.xlu0 %5421
    %5423 = vrot.lane.b32.xlu0 %v5407, 126
    %v5424 = vpop.permute.xlu0 %5423
    %5425 = vrot.lane.b32.xlu0 %v5408, 126
    %v5426 = vpop.permute.xlu0 %5425
    %5427 = vrot.lane.b32.xlu0 %v5409, 126
    %v5428 = vpop.permute.xlu0 %5427
    %5429 = vrot.lane.b32.xlu0 %v5410, 126
    %v5430 = vpop.permute.xlu0 %5429
    %5431 = vrot.lane.b32.xlu0 %v5411, 126
    %v5432 = vpop.permute.xlu0 %5431
    %v5433 = vsel %vm155, %v5420, %v5422
    %v5434 = vsel %vm155, %v5422, %v5424
    %v5435 = vsel %vm155, %v5424, %v5426
    %v5436 = vsel %vm155, %v5426, %v5428
    %v5437 = vsel %vm155, %v5428, %v5430
    %v5438 = vsel %vm155, %v5430, %v5432
    %v5446 = vadd.f32 %v5396, %v5433
    %v5447 = vadd.f32 %v5397, %v5434
    %v5448 = vadd.f32 %v5398, %v5435
    %v5449 = vadd.f32 %v5399, %v5436
    %v5450 = vadd.f32 %v5400, %v5437
    %v5451 = vadd.f32 %v5401, %v5438
    %v5452 = vadd.f32 %v5402, %v5432
    %s5453 = sld [smem:[#allocation2 + $0x4e]]
    %v5454 = vstv %s5453
    %v5455 = vmul.f32 %v5454, %v52
    %v5456 = vmul.f32 %v5454, %v53
    %v5457 = vmul.f32 %v5454, %v54
    %v5458 = vmul.f32 %v5454, %v55
    %v5459 = vmul.f32 %v5454, %v56
    %v5460 = vmul.f32 %v5454, %v57
    %v5461 = vmul.f32 %v5454, %v58
    %5469 = vrot.lane.b32.xlu0 %v5455, 125
    %v5470 = vpop.permute.xlu0 %5469
    %5471 = vrot.lane.b32.xlu0 %v5456, 125
    %v5472 = vpop.permute.xlu0 %5471
    %5473 = vrot.lane.b32.xlu0 %v5457, 125
    %v5474 = vpop.permute.xlu0 %5473
    %5475 = vrot.lane.b32.xlu0 %v5458, 125
    %v5476 = vpop.permute.xlu0 %5475
    %5477 = vrot.lane.b32.xlu0 %v5459, 125
    %v5478 = vpop.permute.xlu0 %5477
    %5479 = vrot.lane.b32.xlu0 %v5460, 125
    %v5480 = vpop.permute.xlu0 %5479
    %5481 = vrot.lane.b32.xlu0 %v5461, 125
    %v5482 = vpop.permute.xlu0 %5481
    %v5483 = vsel %vm206, %v5470, %v5472
    %v5484 = vsel %vm206, %v5472, %v5474
    %v5485 = vsel %vm206, %v5474, %v5476
    %v5486 = vsel %vm206, %v5476, %v5478
    %v5487 = vsel %vm206, %v5478, %v5480
    %v5488 = vsel %vm206, %v5480, %v5482
    %v5496 = vadd.f32 %v5446, %v5483
    %v5497 = vadd.f32 %v5447, %v5484
    %v5498 = vadd.f32 %v5448, %v5485
    %v5499 = vadd.f32 %v5449, %v5486
    %v5500 = vadd.f32 %v5450, %v5487
    %v5501 = vadd.f32 %v5451, %v5488
    %v5502 = vadd.f32 %v5452, %v5482
    %s5503 = sld [smem:[#allocation2 + $0x4f]]
    %v5504 = vstv %s5503
    %v5505 = vmul.f32 %v5504, %v52
    %v5506 = vmul.f32 %v5504, %v53
    %v5507 = vmul.f32 %v5504, %v54
    %v5508 = vmul.f32 %v5504, %v55
    %v5509 = vmul.f32 %v5504, %v56
    %v5510 = vmul.f32 %v5504, %v57
    %v5511 = vmul.f32 %v5504, %v58
    %5519 = vrot.lane.b32.xlu0 %v5505, 124
    %v5520 = vpop.permute.xlu0 %5519
    %5521 = vrot.lane.b32.xlu0 %v5506, 124
    %v5522 = vpop.permute.xlu0 %5521
    %5523 = vrot.lane.b32.xlu0 %v5507, 124
    %v5524 = vpop.permute.xlu0 %5523
    %5525 = vrot.lane.b32.xlu0 %v5508, 124
    %v5526 = vpop.permute.xlu0 %5525
    %5527 = vrot.lane.b32.xlu0 %v5509, 124
    %v5528 = vpop.permute.xlu0 %5527
    %5529 = vrot.lane.b32.xlu0 %v5510, 124
    %v5530 = vpop.permute.xlu0 %5529
    %5531 = vrot.lane.b32.xlu0 %v5511, 124
    %v5532 = vpop.permute.xlu0 %5531
    %v5533 = vsel %vm257, %v5520, %v5522
    %v5534 = vsel %vm257, %v5522, %v5524
    %v5535 = vsel %vm257, %v5524, %v5526
    %v5536 = vsel %vm257, %v5526, %v5528
    %v5537 = vsel %vm257, %v5528, %v5530
    %v5538 = vsel %vm257, %v5530, %v5532
    %v5546 = vadd.f32 %v5496, %v5533
    %v5547 = vadd.f32 %v5497, %v5534
    %v5548 = vadd.f32 %v5498, %v5535
    %v5549 = vadd.f32 %v5499, %v5536
    %v5550 = vadd.f32 %v5500, %v5537
    %v5551 = vadd.f32 %v5501, %v5538
    %v5552 = vadd.f32 %v5502, %v5532
    %s5553 = sld [smem:[#allocation2 + $0x50]]
    %v5554 = vstv %s5553
    %v5555 = vmul.f32 %v5554, %v279
    %v5556 = vmul.f32 %v5554, %v280
    %v5557 = vmul.f32 %v5554, %v281
    %v5558 = vmul.f32 %v5554, %v282
    %v5559 = vmul.f32 %v5554, %v283
    %v5560 = vmul.f32 %v5554, %v284
    %v5561 = vmul.f32 %v5554, %v285
    %v5562 = vmul.f32 %v5554, %v286
    %5571 = vrot.lane.b32.xlu0 %v5555, 96
    %v5572 = vpop.permute.xlu0 %5571
    %5573 = vrot.lane.b32.xlu0 %v5556, 96
    %v5574 = vpop.permute.xlu0 %5573
    %5575 = vrot.lane.b32.xlu0 %v5557, 96
    %v5576 = vpop.permute.xlu0 %5575
    %5577 = vrot.lane.b32.xlu0 %v5558, 96
    %v5578 = vpop.permute.xlu0 %5577
    %5579 = vrot.lane.b32.xlu0 %v5559, 96
    %v5580 = vpop.permute.xlu0 %5579
    %5581 = vrot.lane.b32.xlu0 %v5560, 96
    %v5582 = vpop.permute.xlu0 %5581
    %5583 = vrot.lane.b32.xlu0 %v5561, 96
    %v5584 = vpop.permute.xlu0 %5583
    %5585 = vrot.lane.b32.xlu0 %v5562, 96
    %v5586 = vpop.permute.xlu0 %5585
    %v5587 = vsel %vm320, %v5572, %v5574
    %v5588 = vsel %vm320, %v5574, %v5576
    %v5589 = vsel %vm320, %v5576, %v5578
    %v5590 = vsel %vm320, %v5578, %v5580
    %v5591 = vsel %vm320, %v5580, %v5582
    %v5592 = vsel %vm320, %v5582, %v5584
    %v5593 = vsel %vm320, %v5584, %v5586
    %v5601 = vadd.f32 %v5546, %v5587
    %v5602 = vadd.f32 %v5547, %v5588
    %v5603 = vadd.f32 %v5548, %v5589
    %v5604 = vadd.f32 %v5549, %v5590
    %v5605 = vadd.f32 %v5550, %v5591
    %v5606 = vadd.f32 %v5551, %v5592
    %v5607 = vadd.f32 %v5552, %v5593
    %s5608 = sld [smem:[#allocation2 + $0x51]]
    %v5609 = vstv %s5608
    %v5610 = vmul.f32 %v5609, %v279
    %v5611 = vmul.f32 %v5609, %v280
    %v5612 = vmul.f32 %v5609, %v281
    %v5613 = vmul.f32 %v5609, %v282
    %v5614 = vmul.f32 %v5609, %v283
    %v5615 = vmul.f32 %v5609, %v284
    %v5616 = vmul.f32 %v5609, %v285
    %v5617 = vmul.f32 %v5609, %v286
    %5626 = vrot.lane.b32.xlu0 %v5610, 95
    %v5627 = vpop.permute.xlu0 %5626
    %5628 = vrot.lane.b32.xlu0 %v5611, 95
    %v5629 = vpop.permute.xlu0 %5628
    %5630 = vrot.lane.b32.xlu0 %v5612, 95
    %v5631 = vpop.permute.xlu0 %5630
    %5632 = vrot.lane.b32.xlu0 %v5613, 95
    %v5633 = vpop.permute.xlu0 %5632
    %5634 = vrot.lane.b32.xlu0 %v5614, 95
    %v5635 = vpop.permute.xlu0 %5634
    %5636 = vrot.lane.b32.xlu0 %v5615, 95
    %v5637 = vpop.permute.xlu0 %5636
    %5638 = vrot.lane.b32.xlu0 %v5616, 95
    %v5639 = vpop.permute.xlu0 %5638
    %5640 = vrot.lane.b32.xlu0 %v5617, 95
    %v5641 = vpop.permute.xlu0 %5640
    %v5642 = vsel %vm376, %v5627, %v5629
    %v5643 = vsel %vm376, %v5629, %v5631
    %v5644 = vsel %vm376, %v5631, %v5633
    %v5645 = vsel %vm376, %v5633, %v5635
    %v5646 = vsel %vm376, %v5635, %v5637
    %v5647 = vsel %vm376, %v5637, %v5639
    %v5648 = vsel %vm376, %v5639, %v5641
    %v5656 = vadd.f32 %v5601, %v5642
    %v5657 = vadd.f32 %v5602, %v5643
    %v5658 = vadd.f32 %v5603, %v5644
    %v5659 = vadd.f32 %v5604, %v5645
    %v5660 = vadd.f32 %v5605, %v5646
    %v5661 = vadd.f32 %v5606, %v5647
    %v5662 = vadd.f32 %v5607, %v5648
    %s5663 = sld [smem:[#allocation2 + $0x52]]
    %v5664 = vstv %s5663
    %v5665 = vmul.f32 %v5664, %v279
    %v5666 = vmul.f32 %v5664, %v280
    %v5667 = vmul.f32 %v5664, %v281
    %v5668 = vmul.f32 %v5664, %v282
    %v5669 = vmul.f32 %v5664, %v283
    %v5670 = vmul.f32 %v5664, %v284
    %v5671 = vmul.f32 %v5664, %v285
    %v5672 = vmul.f32 %v5664, %v286
    %5681 = vrot.lane.b32.xlu0 %v5665, 94
    %v5682 = vpop.permute.xlu0 %5681
    %5683 = vrot.lane.b32.xlu0 %v5666, 94
    %v5684 = vpop.permute.xlu0 %5683
    %5685 = vrot.lane.b32.xlu0 %v5667, 94
    %v5686 = vpop.permute.xlu0 %5685
    %5687 = vrot.lane.b32.xlu0 %v5668, 94
    %v5688 = vpop.permute.xlu0 %5687
    %5689 = vrot.lane.b32.xlu0 %v5669, 94
    %v5690 = vpop.permute.xlu0 %5689
    %5691 = vrot.lane.b32.xlu0 %v5670, 94
    %v5692 = vpop.permute.xlu0 %5691
    %5693 = vrot.lane.b32.xlu0 %v5671, 94
    %v5694 = vpop.permute.xlu0 %5693
    %5695 = vrot.lane.b32.xlu0 %v5672, 94
    %v5696 = vpop.permute.xlu0 %5695
    %v5697 = vsel %vm432, %v5682, %v5684
    %v5698 = vsel %vm432, %v5684, %v5686
    %v5699 = vsel %vm432, %v5686, %v5688
    %v5700 = vsel %vm432, %v5688, %v5690
    %v5701 = vsel %vm432, %v5690, %v5692
    %v5702 = vsel %vm432, %v5692, %v5694
    %v5703 = vsel %vm432, %v5694, %v5696
    %v5711 = vadd.f32 %v5656, %v5697
    %v5712 = vadd.f32 %v5657, %v5698
    %v5713 = vadd.f32 %v5658, %v5699
    %v5714 = vadd.f32 %v5659, %v5700
    %v5715 = vadd.f32 %v5660, %v5701
    %v5716 = vadd.f32 %v5661, %v5702
    %v5717 = vadd.f32 %v5662, %v5703
    %s5718 = sld [smem:[#allocation2 + $0x53]]
    %v5719 = vstv %s5718
    %v5720 = vmul.f32 %v5719, %v279
    %v5721 = vmul.f32 %v5719, %v280
    %v5722 = vmul.f32 %v5719, %v281
    %v5723 = vmul.f32 %v5719, %v282
    %v5724 = vmul.f32 %v5719, %v283
    %v5725 = vmul.f32 %v5719, %v284
    %v5726 = vmul.f32 %v5719, %v285
    %v5727 = vmul.f32 %v5719, %v286
    %5736 = vrot.lane.b32.xlu0 %v5720, 93
    %v5737 = vpop.permute.xlu0 %5736
    %5738 = vrot.lane.b32.xlu0 %v5721, 93
    %v5739 = vpop.permute.xlu0 %5738
    %5740 = vrot.lane.b32.xlu0 %v5722, 93
    %v5741 = vpop.permute.xlu0 %5740
    %5742 = vrot.lane.b32.xlu0 %v5723, 93
    %v5743 = vpop.permute.xlu0 %5742
    %5744 = vrot.lane.b32.xlu0 %v5724, 93
    %v5745 = vpop.permute.xlu0 %5744
    %5746 = vrot.lane.b32.xlu0 %v5725, 93
    %v5747 = vpop.permute.xlu0 %5746
    %5748 = vrot.lane.b32.xlu0 %v5726, 93
    %v5749 = vpop.permute.xlu0 %5748
    %5750 = vrot.lane.b32.xlu0 %v5727, 93
    %v5751 = vpop.permute.xlu0 %5750
    %v5752 = vsel %vm488, %v5737, %v5739
    %v5753 = vsel %vm488, %v5739, %v5741
    %v5754 = vsel %vm488, %v5741, %v5743
    %v5755 = vsel %vm488, %v5743, %v5745
    %v5756 = vsel %vm488, %v5745, %v5747
    %v5757 = vsel %vm488, %v5747, %v5749
    %v5758 = vsel %vm488, %v5749, %v5751
    %v5766 = vadd.f32 %v5711, %v5752
    %v5767 = vadd.f32 %v5712, %v5753
    %v5768 = vadd.f32 %v5713, %v5754
    %v5769 = vadd.f32 %v5714, %v5755
    %v5770 = vadd.f32 %v5715, %v5756
    %v5771 = vadd.f32 %v5716, %v5757
    %v5772 = vadd.f32 %v5717, %v5758
    %s5773 = sld [smem:[#allocation2 + $0x54]]
    %v5774 = vstv %s5773
    %v5775 = vmul.f32 %v5774, %v279
    %v5776 = vmul.f32 %v5774, %v280
    %v5777 = vmul.f32 %v5774, %v281
    %v5778 = vmul.f32 %v5774, %v282
    %v5779 = vmul.f32 %v5774, %v283
    %v5780 = vmul.f32 %v5774, %v284
    %v5781 = vmul.f32 %v5774, %v285
    %v5782 = vmul.f32 %v5774, %v286
    %5791 = vrot.lane.b32.xlu0 %v5775, 92
    %v5792 = vpop.permute.xlu0 %5791
    %5793 = vrot.lane.b32.xlu0 %v5776, 92
    %v5794 = vpop.permute.xlu0 %5793
    %5795 = vrot.lane.b32.xlu0 %v5777, 92
    %v5796 = vpop.permute.xlu0 %5795
    %5797 = vrot.lane.b32.xlu0 %v5778, 92
    %v5798 = vpop.permute.xlu0 %5797
    %5799 = vrot.lane.b32.xlu0 %v5779, 92
    %v5800 = vpop.permute.xlu0 %5799
    %5801 = vrot.lane.b32.xlu0 %v5780, 92
    %v5802 = vpop.permute.xlu0 %5801
    %5803 = vrot.lane.b32.xlu0 %v5781, 92
    %v5804 = vpop.permute.xlu0 %5803
    %5805 = vrot.lane.b32.xlu0 %v5782, 92
    %v5806 = vpop.permute.xlu0 %5805
    %v5807 = vsel %vm544, %v5792, %v5794
    %v5808 = vsel %vm544, %v5794, %v5796
    %v5809 = vsel %vm544, %v5796, %v5798
    %v5810 = vsel %vm544, %v5798, %v5800
    %v5811 = vsel %vm544, %v5800, %v5802
    %v5812 = vsel %vm544, %v5802, %v5804
    %v5813 = vsel %vm544, %v5804, %v5806
    %v5821 = vadd.f32 %v5766, %v5807
    %v5822 = vadd.f32 %v5767, %v5808
    %v5823 = vadd.f32 %v5768, %v5809
    %v5824 = vadd.f32 %v5769, %v5810
    %v5825 = vadd.f32 %v5770, %v5811
    %v5826 = vadd.f32 %v5771, %v5812
    %v5827 = vadd.f32 %v5772, %v5813
    %s5828 = sld [smem:[#allocation2 + $0x55]]
    %v5829 = vstv %s5828
    %v5830 = vmul.f32 %v5829, %v279
    %v5831 = vmul.f32 %v5829, %v280
    %v5832 = vmul.f32 %v5829, %v281
    %v5833 = vmul.f32 %v5829, %v282
    %v5834 = vmul.f32 %v5829, %v283
    %v5835 = vmul.f32 %v5829, %v284
    %v5836 = vmul.f32 %v5829, %v285
    %v5837 = vmul.f32 %v5829, %v286
    %5846 = vrot.lane.b32.xlu0 %v5830, 64
    %v5847 = vpop.permute.xlu0 %5846
    %5848 = vrot.lane.b32.xlu0 %v5831, 64
    %v5849 = vpop.permute.xlu0 %5848
    %5850 = vrot.lane.b32.xlu0 %v5832, 64
    %v5851 = vpop.permute.xlu0 %5850
    %5852 = vrot.lane.b32.xlu0 %v5833, 64
    %v5853 = vpop.permute.xlu0 %5852
    %5854 = vrot.lane.b32.xlu0 %v5834, 64
    %v5855 = vpop.permute.xlu0 %5854
    %5856 = vrot.lane.b32.xlu0 %v5835, 64
    %v5857 = vpop.permute.xlu0 %5856
    %5858 = vrot.lane.b32.xlu0 %v5836, 64
    %v5859 = vpop.permute.xlu0 %5858
    %5860 = vrot.lane.b32.xlu0 %v5837, 64
    %v5861 = vpop.permute.xlu0 %5860
    %v5862 = vsel %vm600, %v5847, %v5849
    %v5863 = vsel %vm600, %v5849, %v5851
    %v5864 = vsel %vm600, %v5851, %v5853
    %v5865 = vsel %vm600, %v5853, %v5855
    %v5866 = vsel %vm600, %v5855, %v5857
    %v5867 = vsel %vm600, %v5857, %v5859
    %v5868 = vsel %vm600, %v5859, %v5861
    %v5876 = vadd.f32 %v5821, %v5862
    %v5877 = vadd.f32 %v5822, %v5863
    %v5878 = vadd.f32 %v5823, %v5864
    %v5879 = vadd.f32 %v5824, %v5865
    %v5880 = vadd.f32 %v5825, %v5866
    %v5881 = vadd.f32 %v5826, %v5867
    %v5882 = vadd.f32 %v5827, %v5868
    %s5883 = sld [smem:[#allocation2 + $0x56]]
    %v5884 = vstv %s5883
    %v5885 = vmul.f32 %v5884, %v279
    %v5886 = vmul.f32 %v5884, %v280
    %v5887 = vmul.f32 %v5884, %v281
    %v5888 = vmul.f32 %v5884, %v282
    %v5889 = vmul.f32 %v5884, %v283
    %v5890 = vmul.f32 %v5884, %v284
    %v5891 = vmul.f32 %v5884, %v285
    %v5892 = vmul.f32 %v5884, %v286
    %5901 = vrot.lane.b32.xlu0 %v5885, 63
    %v5902 = vpop.permute.xlu0 %5901
    %5903 = vrot.lane.b32.xlu0 %v5886, 63
    %v5904 = vpop.permute.xlu0 %5903
    %5905 = vrot.lane.b32.xlu0 %v5887, 63
    %v5906 = vpop.permute.xlu0 %5905
    %5907 = vrot.lane.b32.xlu0 %v5888, 63
    %v5908 = vpop.permute.xlu0 %5907
    %5909 = vrot.lane.b32.xlu0 %v5889, 63
    %v5910 = vpop.permute.xlu0 %5909
    %5911 = vrot.lane.b32.xlu0 %v5890, 63
    %v5912 = vpop.permute.xlu0 %5911
    %5913 = vrot.lane.b32.xlu0 %v5891, 63
    %v5914 = vpop.permute.xlu0 %5913
    %5915 = vrot.lane.b32.xlu0 %v5892, 63
    %v5916 = vpop.permute.xlu0 %5915
    %v5917 = vsel %vm656, %v5902, %v5904
    %v5918 = vsel %vm656, %v5904, %v5906
    %v5919 = vsel %vm656, %v5906, %v5908
    %v5920 = vsel %vm656, %v5908, %v5910
    %v5921 = vsel %vm656, %v5910, %v5912
    %v5922 = vsel %vm656, %v5912, %v5914
    %v5923 = vsel %vm656, %v5914, %v5916
    %v5931 = vadd.f32 %v5876, %v5917
    %v5932 = vadd.f32 %v5877, %v5918
    %v5933 = vadd.f32 %v5878, %v5919
    %v5934 = vadd.f32 %v5879, %v5920
    %v5935 = vadd.f32 %v5880, %v5921
    %v5936 = vadd.f32 %v5881, %v5922
    %v5937 = vadd.f32 %v5882, %v5923
    %s5938 = sld [smem:[#allocation2 + $0x57]]
    %v5939 = vstv %s5938
    %v5940 = vmul.f32 %v5939, %v279
    %v5941 = vmul.f32 %v5939, %v280
    %v5942 = vmul.f32 %v5939, %v281
    %v5943 = vmul.f32 %v5939, %v282
    %v5944 = vmul.f32 %v5939, %v283
    %v5945 = vmul.f32 %v5939, %v284
    %v5946 = vmul.f32 %v5939, %v285
    %v5947 = vmul.f32 %v5939, %v286
    %5956 = vrot.lane.b32.xlu0 %v5940, 62
    %v5957 = vpop.permute.xlu0 %5956
    %5958 = vrot.lane.b32.xlu0 %v5941, 62
    %v5959 = vpop.permute.xlu0 %5958
    %5960 = vrot.lane.b32.xlu0 %v5942, 62
    %v5961 = vpop.permute.xlu0 %5960
    %5962 = vrot.lane.b32.xlu0 %v5943, 62
    %v5963 = vpop.permute.xlu0 %5962
    %5964 = vrot.lane.b32.xlu0 %v5944, 62
    %v5965 = vpop.permute.xlu0 %5964
    %5966 = vrot.lane.b32.xlu0 %v5945, 62
    %v5967 = vpop.permute.xlu0 %5966
    %5968 = vrot.lane.b32.xlu0 %v5946, 62
    %v5969 = vpop.permute.xlu0 %5968
    %5970 = vrot.lane.b32.xlu0 %v5947, 62
    %v5971 = vpop.permute.xlu0 %5970
    %v5972 = vsel %vm712, %v5957, %v5959
    %v5973 = vsel %vm712, %v5959, %v5961
    %v5974 = vsel %vm712, %v5961, %v5963
    %v5975 = vsel %vm712, %v5963, %v5965
    %v5976 = vsel %vm712, %v5965, %v5967
    %v5977 = vsel %vm712, %v5967, %v5969
    %v5978 = vsel %vm712, %v5969, %v5971
    %v5986 = vadd.f32 %v5931, %v5972
    %v5987 = vadd.f32 %v5932, %v5973
    %v5988 = vadd.f32 %v5933, %v5974
    %v5989 = vadd.f32 %v5934, %v5975
    %v5990 = vadd.f32 %v5935, %v5976
    %v5991 = vadd.f32 %v5936, %v5977
    %v5992 = vadd.f32 %v5937, %v5978
    %s5993 = sld [smem:[#allocation2 + $0x58]]
    %v5994 = vstv %s5993
    %v5995 = vmul.f32 %v5994, %v279
    %v5996 = vmul.f32 %v5994, %v280
    %v5997 = vmul.f32 %v5994, %v281
    %v5998 = vmul.f32 %v5994, %v282
    %v5999 = vmul.f32 %v5994, %v283
    %v6000 = vmul.f32 %v5994, %v284
    %v6001 = vmul.f32 %v5994, %v285
    %v6002 = vmul.f32 %v5994, %v286
    %6011 = vrot.lane.b32.xlu0 %v5995, 61
    %v6012 = vpop.permute.xlu0 %6011
    %6013 = vrot.lane.b32.xlu0 %v5996, 61
    %v6014 = vpop.permute.xlu0 %6013
    %6015 = vrot.lane.b32.xlu0 %v5997, 61
    %v6016 = vpop.permute.xlu0 %6015
    %6017 = vrot.lane.b32.xlu0 %v5998, 61
    %v6018 = vpop.permute.xlu0 %6017
    %6019 = vrot.lane.b32.xlu0 %v5999, 61
    %v6020 = vpop.permute.xlu0 %6019
    %6021 = vrot.lane.b32.xlu0 %v6000, 61
    %v6022 = vpop.permute.xlu0 %6021
    %6023 = vrot.lane.b32.xlu0 %v6001, 61
    %v6024 = vpop.permute.xlu0 %6023
    %6025 = vrot.lane.b32.xlu0 %v6002, 61
    %v6026 = vpop.permute.xlu0 %6025
    %v6027 = vsel %vm768, %v6012, %v6014
    %v6028 = vsel %vm768, %v6014, %v6016
    %v6029 = vsel %vm768, %v6016, %v6018
    %v6030 = vsel %vm768, %v6018, %v6020
    %v6031 = vsel %vm768, %v6020, %v6022
    %v6032 = vsel %vm768, %v6022, %v6024
    %v6033 = vsel %vm768, %v6024, %v6026
    %v6041 = vadd.f32 %v5986, %v6027
    %v6042 = vadd.f32 %v5987, %v6028
    %v6043 = vadd.f32 %v5988, %v6029
    %v6044 = vadd.f32 %v5989, %v6030
    %v6045 = vadd.f32 %v5990, %v6031
    %v6046 = vadd.f32 %v5991, %v6032
    %v6047 = vadd.f32 %v5992, %v6033
    %s6048 = sld [smem:[#allocation2 + $0x59]]
    %v6049 = vstv %s6048
    %v6050 = vmul.f32 %v6049, %v279
    %v6051 = vmul.f32 %v6049, %v280
    %v6052 = vmul.f32 %v6049, %v281
    %v6053 = vmul.f32 %v6049, %v282
    %v6054 = vmul.f32 %v6049, %v283
    %v6055 = vmul.f32 %v6049, %v284
    %v6056 = vmul.f32 %v6049, %v285
    %v6057 = vmul.f32 %v6049, %v286
    %6066 = vrot.lane.b32.xlu0 %v6050, 60
    %v6067 = vpop.permute.xlu0 %6066
    %6068 = vrot.lane.b32.xlu0 %v6051, 60
    %v6069 = vpop.permute.xlu0 %6068
    %6070 = vrot.lane.b32.xlu0 %v6052, 60
    %v6071 = vpop.permute.xlu0 %6070
    %6072 = vrot.lane.b32.xlu0 %v6053, 60
    %v6073 = vpop.permute.xlu0 %6072
    %6074 = vrot.lane.b32.xlu0 %v6054, 60
    %v6075 = vpop.permute.xlu0 %6074
    %6076 = vrot.lane.b32.xlu0 %v6055, 60
    %v6077 = vpop.permute.xlu0 %6076
    %6078 = vrot.lane.b32.xlu0 %v6056, 60
    %v6079 = vpop.permute.xlu0 %6078
    %6080 = vrot.lane.b32.xlu0 %v6057, 60
    %v6081 = vpop.permute.xlu0 %6080
    %v6082 = vsel %vm824, %v6067, %v6069
    %v6083 = vsel %vm824, %v6069, %v6071
    %v6084 = vsel %vm824, %v6071, %v6073
    %v6085 = vsel %vm824, %v6073, %v6075
    %v6086 = vsel %vm824, %v6075, %v6077
    %v6087 = vsel %vm824, %v6077, %v6079
    %v6088 = vsel %vm824, %v6079, %v6081
    %v6096 = vadd.f32 %v6041, %v6082
    %v6097 = vadd.f32 %v6042, %v6083
    %v6098 = vadd.f32 %v6043, %v6084
    %v6099 = vadd.f32 %v6044, %v6085
    %v6100 = vadd.f32 %v6045, %v6086
    %v6101 = vadd.f32 %v6046, %v6087
    %v6102 = vadd.f32 %v6047, %v6088
    %s6103 = sld [smem:[#allocation2 + $0x5a]]
    %v6104 = vstv %s6103
    %v6105 = vmul.f32 %v6104, %v279
    %v6106 = vmul.f32 %v6104, %v280
    %v6107 = vmul.f32 %v6104, %v281
    %v6108 = vmul.f32 %v6104, %v282
    %v6109 = vmul.f32 %v6104, %v283
    %v6110 = vmul.f32 %v6104, %v284
    %v6111 = vmul.f32 %v6104, %v285
    %v6112 = vmul.f32 %v6104, %v286
    %6121 = vrot.lane.b32.xlu0 %v6105, 32
    %v6122 = vpop.permute.xlu0 %6121
    %6123 = vrot.lane.b32.xlu0 %v6106, 32
    %v6124 = vpop.permute.xlu0 %6123
    %6125 = vrot.lane.b32.xlu0 %v6107, 32
    %v6126 = vpop.permute.xlu0 %6125
    %6127 = vrot.lane.b32.xlu0 %v6108, 32
    %v6128 = vpop.permute.xlu0 %6127
    %6129 = vrot.lane.b32.xlu0 %v6109, 32
    %v6130 = vpop.permute.xlu0 %6129
    %6131 = vrot.lane.b32.xlu0 %v6110, 32
    %v6132 = vpop.permute.xlu0 %6131
    %6133 = vrot.lane.b32.xlu0 %v6111, 32
    %v6134 = vpop.permute.xlu0 %6133
    %6135 = vrot.lane.b32.xlu0 %v6112, 32
    %v6136 = vpop.permute.xlu0 %6135
    %v6137 = vsel %vm880, %v6122, %v6124
    %v6138 = vsel %vm880, %v6124, %v6126
    %v6139 = vsel %vm880, %v6126, %v6128
    %v6140 = vsel %vm880, %v6128, %v6130
    %v6141 = vsel %vm880, %v6130, %v6132
    %v6142 = vsel %vm880, %v6132, %v6134
    %v6143 = vsel %vm880, %v6134, %v6136
    %v6151 = vadd.f32 %v6096, %v6137
    %v6152 = vadd.f32 %v6097, %v6138
    %v6153 = vadd.f32 %v6098, %v6139
    %v6154 = vadd.f32 %v6099, %v6140
    %v6155 = vadd.f32 %v6100, %v6141
    %v6156 = vadd.f32 %v6101, %v6142
    %v6157 = vadd.f32 %v6102, %v6143
    %s6158 = sld [smem:[#allocation2 + $0x5b]]
    %v6159 = vstv %s6158
    %v6160 = vmul.f32 %v6159, %v279
    %v6161 = vmul.f32 %v6159, %v280
    %v6162 = vmul.f32 %v6159, %v281
    %v6163 = vmul.f32 %v6159, %v282
    %v6164 = vmul.f32 %v6159, %v283
    %v6165 = vmul.f32 %v6159, %v284
    %v6166 = vmul.f32 %v6159, %v285
    %v6167 = vmul.f32 %v6159, %v286
    %6176 = vrot.lane.b32.xlu0 %v6160, 31
    %v6177 = vpop.permute.xlu0 %6176
    %6178 = vrot.lane.b32.xlu0 %v6161, 31
    %v6179 = vpop.permute.xlu0 %6178
    %6180 = vrot.lane.b32.xlu0 %v6162, 31
    %v6181 = vpop.permute.xlu0 %6180
    %6182 = vrot.lane.b32.xlu0 %v6163, 31
    %v6183 = vpop.permute.xlu0 %6182
    %6184 = vrot.lane.b32.xlu0 %v6164, 31
    %v6185 = vpop.permute.xlu0 %6184
    %6186 = vrot.lane.b32.xlu0 %v6165, 31
    %v6187 = vpop.permute.xlu0 %6186
    %6188 = vrot.lane.b32.xlu0 %v6166, 31
    %v6189 = vpop.permute.xlu0 %6188
    %6190 = vrot.lane.b32.xlu0 %v6167, 31
    %v6191 = vpop.permute.xlu0 %6190
    %v6192 = vsel %vm936, %v6177, %v6179
    %v6193 = vsel %vm936, %v6179, %v6181
    %v6194 = vsel %vm936, %v6181, %v6183
    %v6195 = vsel %vm936, %v6183, %v6185
    %v6196 = vsel %vm936, %v6185, %v6187
    %v6197 = vsel %vm936, %v6187, %v6189
    %v6198 = vsel %vm936, %v6189, %v6191
    %v6206 = vadd.f32 %v6151, %v6192
    %v6207 = vadd.f32 %v6152, %v6193
    %v6208 = vadd.f32 %v6153, %v6194
    %v6209 = vadd.f32 %v6154, %v6195
    %v6210 = vadd.f32 %v6155, %v6196
    %v6211 = vadd.f32 %v6156, %v6197
    %v6212 = vadd.f32 %v6157, %v6198
    %s6213 = sld [smem:[#allocation2 + $0x5c]]
    %v6214 = vstv %s6213
    %v6215 = vmul.f32 %v6214, %v279
    %v6216 = vmul.f32 %v6214, %v280
    %v6217 = vmul.f32 %v6214, %v281
    %v6218 = vmul.f32 %v6214, %v282
    %v6219 = vmul.f32 %v6214, %v283
    %v6220 = vmul.f32 %v6214, %v284
    %v6221 = vmul.f32 %v6214, %v285
    %v6222 = vmul.f32 %v6214, %v286
    %6231 = vrot.lane.b32.xlu0 %v6215, 30
    %v6232 = vpop.permute.xlu0 %6231
    %6233 = vrot.lane.b32.xlu0 %v6216, 30
    %v6234 = vpop.permute.xlu0 %6233
    %6235 = vrot.lane.b32.xlu0 %v6217, 30
    %v6236 = vpop.permute.xlu0 %6235
    %6237 = vrot.lane.b32.xlu0 %v6218, 30
    %v6238 = vpop.permute.xlu0 %6237
    %6239 = vrot.lane.b32.xlu0 %v6219, 30
    %v6240 = vpop.permute.xlu0 %6239
    %6241 = vrot.lane.b32.xlu0 %v6220, 30
    %v6242 = vpop.permute.xlu0 %6241
    %6243 = vrot.lane.b32.xlu0 %v6221, 30
    %v6244 = vpop.permute.xlu0 %6243
    %6245 = vrot.lane.b32.xlu0 %v6222, 30
    %v6246 = vpop.permute.xlu0 %6245
    %v6247 = vsel %vm992, %v6232, %v6234
    %v6248 = vsel %vm992, %v6234, %v6236
    %v6249 = vsel %vm992, %v6236, %v6238
    %v6250 = vsel %vm992, %v6238, %v6240
    %v6251 = vsel %vm992, %v6240, %v6242
    %v6252 = vsel %vm992, %v6242, %v6244
    %v6253 = vsel %vm992, %v6244, %v6246
    %v6261 = vadd.f32 %v6206, %v6247
    %v6262 = vadd.f32 %v6207, %v6248
    %v6263 = vadd.f32 %v6208, %v6249
    %v6264 = vadd.f32 %v6209, %v6250
    %v6265 = vadd.f32 %v6210, %v6251
    %v6266 = vadd.f32 %v6211, %v6252
    %v6267 = vadd.f32 %v6212, %v6253
    %s6268 = sld [smem:[#allocation2 + $0x5d]]
    %v6269 = vstv %s6268
    %v6270 = vmul.f32 %v6269, %v279
    %v6271 = vmul.f32 %v6269, %v280
    %v6272 = vmul.f32 %v6269, %v281
    %v6273 = vmul.f32 %v6269, %v282
    %v6274 = vmul.f32 %v6269, %v283
    %v6275 = vmul.f32 %v6269, %v284
    %v6276 = vmul.f32 %v6269, %v285
    %v6277 = vmul.f32 %v6269, %v286
    %6286 = vrot.lane.b32.xlu0 %v6270, 29
    %v6287 = vpop.permute.xlu0 %6286
    %6288 = vrot.lane.b32.xlu0 %v6271, 29
    %v6289 = vpop.permute.xlu0 %6288
    %6290 = vrot.lane.b32.xlu0 %v6272, 29
    %v6291 = vpop.permute.xlu0 %6290
    %6292 = vrot.lane.b32.xlu0 %v6273, 29
    %v6293 = vpop.permute.xlu0 %6292
    %6294 = vrot.lane.b32.xlu0 %v6274, 29
    %v6295 = vpop.permute.xlu0 %6294
    %6296 = vrot.lane.b32.xlu0 %v6275, 29
    %v6297 = vpop.permute.xlu0 %6296
    %6298 = vrot.lane.b32.xlu0 %v6276, 29
    %v6299 = vpop.permute.xlu0 %6298
    %6300 = vrot.lane.b32.xlu0 %v6277, 29
    %v6301 = vpop.permute.xlu0 %6300
    %v6302 = vsel %vm1048, %v6287, %v6289
    %v6303 = vsel %vm1048, %v6289, %v6291
    %v6304 = vsel %vm1048, %v6291, %v6293
    %v6305 = vsel %vm1048, %v6293, %v6295
    %v6306 = vsel %vm1048, %v6295, %v6297
    %v6307 = vsel %vm1048, %v6297, %v6299
    %v6308 = vsel %vm1048, %v6299, %v6301
    %v6316 = vadd.f32 %v6261, %v6302
    %v6317 = vadd.f32 %v6262, %v6303
    %v6318 = vadd.f32 %v6263, %v6304
    %v6319 = vadd.f32 %v6264, %v6305
    %v6320 = vadd.f32 %v6265, %v6306
    %v6321 = vadd.f32 %v6266, %v6307
    %v6322 = vadd.f32 %v6267, %v6308
    %s6323 = sld [smem:[#allocation2 + $0x5e]]
    %v6324 = vstv %s6323
    %v6325 = vmul.f32 %v6324, %v279
    %v6326 = vmul.f32 %v6324, %v280
    %v6327 = vmul.f32 %v6324, %v281
    %v6328 = vmul.f32 %v6324, %v282
    %v6329 = vmul.f32 %v6324, %v283
    %v6330 = vmul.f32 %v6324, %v284
    %v6331 = vmul.f32 %v6324, %v285
    %v6332 = vmul.f32 %v6324, %v286
    %6341 = vrot.lane.b32.xlu0 %v6325, 28
    %v6342 = vpop.permute.xlu0 %6341
    %6343 = vrot.lane.b32.xlu0 %v6326, 28
    %v6344 = vpop.permute.xlu0 %6343
    %6345 = vrot.lane.b32.xlu0 %v6327, 28
    %v6346 = vpop.permute.xlu0 %6345
    %6347 = vrot.lane.b32.xlu0 %v6328, 28
    %v6348 = vpop.permute.xlu0 %6347
    %6349 = vrot.lane.b32.xlu0 %v6329, 28
    %v6350 = vpop.permute.xlu0 %6349
    %6351 = vrot.lane.b32.xlu0 %v6330, 28
    %v6352 = vpop.permute.xlu0 %6351
    %6353 = vrot.lane.b32.xlu0 %v6331, 28
    %v6354 = vpop.permute.xlu0 %6353
    %6355 = vrot.lane.b32.xlu0 %v6332, 28
    %v6356 = vpop.permute.xlu0 %6355
    %v6357 = vsel %vm1104, %v6342, %v6344
    %v6358 = vsel %vm1104, %v6344, %v6346
    %v6359 = vsel %vm1104, %v6346, %v6348
    %v6360 = vsel %vm1104, %v6348, %v6350
    %v6361 = vsel %vm1104, %v6350, %v6352
    %v6362 = vsel %vm1104, %v6352, %v6354
    %v6363 = vsel %vm1104, %v6354, %v6356
    %v6371 = vadd.f32 %v6316, %v6357
    %v6372 = vadd.f32 %v6317, %v6358
    %v6373 = vadd.f32 %v6318, %v6359
    %v6374 = vadd.f32 %v6319, %v6360
    %v6375 = vadd.f32 %v6320, %v6361
    %v6376 = vadd.f32 %v6321, %v6362
    %v6377 = vadd.f32 %v6322, %v6363
    %s6378 = sld [smem:[#allocation2 + $0x5f]]
    %v6379 = vstv %s6378
    %v6380 = vmul.f32 %v6379, %v280
    %v6381 = vmul.f32 %v6379, %v281
    %v6382 = vmul.f32 %v6379, %v282
    %v6383 = vmul.f32 %v6379, %v283
    %v6384 = vmul.f32 %v6379, %v284
    %v6385 = vmul.f32 %v6379, %v285
    %v6386 = vmul.f32 %v6379, %v286
    %v6387 = vadd.f32 %v6371, %v6380
    %v6388 = vadd.f32 %v6372, %v6381
    %v6389 = vadd.f32 %v6373, %v6382
    %v6390 = vadd.f32 %v6374, %v6383
    %v6391 = vadd.f32 %v6375, %v6384
    %v6392 = vadd.f32 %v6376, %v6385
    %v6393 = vadd.f32 %v6377, %v6386
    %s6394 = sld [smem:[#allocation2 + $0x60]]
    %v6395 = vstv %s6394
    %v6396 = vmul.f32 %v6395, %v280
    %v6397 = vmul.f32 %v6395, %v281
    %v6398 = vmul.f32 %v6395, %v282
    %v6399 = vmul.f32 %v6395, %v283
    %v6400 = vmul.f32 %v6395, %v284
    %v6401 = vmul.f32 %v6395, %v285
    %v6402 = vmul.f32 %v6395, %v286
    %6410 = vrot.lane.b32.xlu0 %v6396, 127
    %v6411 = vpop.permute.xlu0 %6410
    %6412 = vrot.lane.b32.xlu0 %v6397, 127
    %v6413 = vpop.permute.xlu0 %6412
    %6414 = vrot.lane.b32.xlu0 %v6398, 127
    %v6415 = vpop.permute.xlu0 %6414
    %6416 = vrot.lane.b32.xlu0 %v6399, 127
    %v6417 = vpop.permute.xlu0 %6416
    %6418 = vrot.lane.b32.xlu0 %v6400, 127
    %v6419 = vpop.permute.xlu0 %6418
    %6420 = vrot.lane.b32.xlu0 %v6401, 127
    %v6421 = vpop.permute.xlu0 %6420
    %6422 = vrot.lane.b32.xlu0 %v6402, 127
    %v6423 = vpop.permute.xlu0 %6422
    %v6424 = vsel %vm104, %v6411, %v6413
    %v6425 = vsel %vm104, %v6413, %v6415
    %v6426 = vsel %vm104, %v6415, %v6417
    %v6427 = vsel %vm104, %v6417, %v6419
    %v6428 = vsel %vm104, %v6419, %v6421
    %v6429 = vsel %vm104, %v6421, %v6423
    %v6437 = vadd.f32 %v6387, %v6424
    %v6438 = vadd.f32 %v6388, %v6425
    %v6439 = vadd.f32 %v6389, %v6426
    %v6440 = vadd.f32 %v6390, %v6427
    %v6441 = vadd.f32 %v6391, %v6428
    %v6442 = vadd.f32 %v6392, %v6429
    %v6443 = vadd.f32 %v6393, %v6423
    %s6444 = sld [smem:[#allocation2 + $0x61]]
    %v6445 = vstv %s6444
    %v6446 = vmul.f32 %v6445, %v280
    %v6447 = vmul.f32 %v6445, %v281
    %v6448 = vmul.f32 %v6445, %v282
    %v6449 = vmul.f32 %v6445, %v283
    %v6450 = vmul.f32 %v6445, %v284
    %v6451 = vmul.f32 %v6445, %v285
    %v6452 = vmul.f32 %v6445, %v286
    %6460 = vrot.lane.b32.xlu0 %v6446, 126
    %v6461 = vpop.permute.xlu0 %6460
    %6462 = vrot.lane.b32.xlu0 %v6447, 126
    %v6463 = vpop.permute.xlu0 %6462
    %6464 = vrot.lane.b32.xlu0 %v6448, 126
    %v6465 = vpop.permute.xlu0 %6464
    %6466 = vrot.lane.b32.xlu0 %v6449, 126
    %v6467 = vpop.permute.xlu0 %6466
    %6468 = vrot.lane.b32.xlu0 %v6450, 126
    %v6469 = vpop.permute.xlu0 %6468
    %6470 = vrot.lane.b32.xlu0 %v6451, 126
    %v6471 = vpop.permute.xlu0 %6470
    %6472 = vrot.lane.b32.xlu0 %v6452, 126
    %v6473 = vpop.permute.xlu0 %6472
    %v6474 = vsel %vm155, %v6461, %v6463
    %v6475 = vsel %vm155, %v6463, %v6465
    %v6476 = vsel %vm155, %v6465, %v6467
    %v6477 = vsel %vm155, %v6467, %v6469
    %v6478 = vsel %vm155, %v6469, %v6471
    %v6479 = vsel %vm155, %v6471, %v6473
    %v6487 = vadd.f32 %v6437, %v6474
    %v6488 = vadd.f32 %v6438, %v6475
    %v6489 = vadd.f32 %v6439, %v6476
    %v6490 = vadd.f32 %v6440, %v6477
    %v6491 = vadd.f32 %v6441, %v6478
    %v6492 = vadd.f32 %v6442, %v6479
    %v6493 = vadd.f32 %v6443, %v6473
    %s6494 = sld [smem:[#allocation2 + $0x62]]
    %v6495 = vstv %s6494
    %v6496 = vmul.f32 %v6495, %v280
    %v6497 = vmul.f32 %v6495, %v281
    %v6498 = vmul.f32 %v6495, %v282
    %v6499 = vmul.f32 %v6495, %v283
    %v6500 = vmul.f32 %v6495, %v284
    %v6501 = vmul.f32 %v6495, %v285
    %v6502 = vmul.f32 %v6495, %v286
    %6510 = vrot.lane.b32.xlu0 %v6496, 125
    %v6511 = vpop.permute.xlu0 %6510
    %6512 = vrot.lane.b32.xlu0 %v6497, 125
    %v6513 = vpop.permute.xlu0 %6512
    %6514 = vrot.lane.b32.xlu0 %v6498, 125
    %v6515 = vpop.permute.xlu0 %6514
    %6516 = vrot.lane.b32.xlu0 %v6499, 125
    %v6517 = vpop.permute.xlu0 %6516
    %6518 = vrot.lane.b32.xlu0 %v6500, 125
    %v6519 = vpop.permute.xlu0 %6518
    %6520 = vrot.lane.b32.xlu0 %v6501, 125
    %v6521 = vpop.permute.xlu0 %6520
    %6522 = vrot.lane.b32.xlu0 %v6502, 125
    %v6523 = vpop.permute.xlu0 %6522
    %v6524 = vsel %vm206, %v6511, %v6513
    %v6525 = vsel %vm206, %v6513, %v6515
    %v6526 = vsel %vm206, %v6515, %v6517
    %v6527 = vsel %vm206, %v6517, %v6519
    %v6528 = vsel %vm206, %v6519, %v6521
    %v6529 = vsel %vm206, %v6521, %v6523
    %v6537 = vadd.f32 %v6487, %v6524
    %v6538 = vadd.f32 %v6488, %v6525
    %v6539 = vadd.f32 %v6489, %v6526
    %v6540 = vadd.f32 %v6490, %v6527
    %v6541 = vadd.f32 %v6491, %v6528
    %v6542 = vadd.f32 %v6492, %v6529
    %v6543 = vadd.f32 %v6493, %v6523
    %s6544 = sld [smem:[#allocation2 + $0x63]]
    %v6545 = vstv %s6544
    %v6546 = vmul.f32 %v6545, %v280
    %v6547 = vmul.f32 %v6545, %v281
    %v6548 = vmul.f32 %v6545, %v282
    %v6549 = vmul.f32 %v6545, %v283
    %v6550 = vmul.f32 %v6545, %v284
    %v6551 = vmul.f32 %v6545, %v285
    %v6552 = vmul.f32 %v6545, %v286
    %6560 = vrot.lane.b32.xlu0 %v6546, 124
    %v6561 = vpop.permute.xlu0 %6560
    %6562 = vrot.lane.b32.xlu0 %v6547, 124
    %v6563 = vpop.permute.xlu0 %6562
    %6564 = vrot.lane.b32.xlu0 %v6548, 124
    %v6565 = vpop.permute.xlu0 %6564
    %6566 = vrot.lane.b32.xlu0 %v6549, 124
    %v6567 = vpop.permute.xlu0 %6566
    %6568 = vrot.lane.b32.xlu0 %v6550, 124
    %v6569 = vpop.permute.xlu0 %6568
    %6570 = vrot.lane.b32.xlu0 %v6551, 124
    %v6571 = vpop.permute.xlu0 %6570
    %6572 = vrot.lane.b32.xlu0 %v6552, 124
    %v6573 = vpop.permute.xlu0 %6572
    %v6574 = vsel %vm257, %v6561, %v6563
    %v6575 = vsel %vm257, %v6563, %v6565
    %v6576 = vsel %vm257, %v6565, %v6567
    %v6577 = vsel %vm257, %v6567, %v6569
    %v6578 = vsel %vm257, %v6569, %v6571
    %v6579 = vsel %vm257, %v6571, %v6573
    %v6587 = vadd.f32 %v6537, %v6574
    %v6588 = vadd.f32 %v6538, %v6575
    %v6589 = vadd.f32 %v6539, %v6576
    %v6590 = vadd.f32 %v6540, %v6577
    %v6591 = vadd.f32 %v6541, %v6578
    %v6592 = vadd.f32 %v6542, %v6579
    %v6593 = vadd.f32 %v6543, %v6573
    %6601 = vrot.lane.b32.xlu0 %v6587, 127
    %v6602 = vpop.permute.xlu0 %6601
    %6603 = vrot.lane.b32.xlu0 %v6588, 127
    %v6604 = vpop.permute.xlu0 %6603
    %6605 = vrot.lane.b32.xlu0 %v6589, 127
    %v6606 = vpop.permute.xlu0 %6605
    %6607 = vrot.lane.b32.xlu0 %v6590, 127
    %v6608 = vpop.permute.xlu0 %6607
    %6609 = vrot.lane.b32.xlu0 %v6591, 127
    %v6610 = vpop.permute.xlu0 %6609
    %6611 = vrot.lane.b32.xlu0 %v6592, 127
    %v6612 = vpop.permute.xlu0 %6611
    %6613 = vrot.lane.b32.xlu0 %v6593, 127
    %v6614 = vpop.permute.xlu0 %6613
    %v6615 = vsel %vm104, %v6602, %v6604
    %v6616 = vsel %vm104, %v6604, %v6606
    %v6617 = vsel %vm104, %v6606, %v6608
    %v6618 = vsel %vm104, %v6608, %v6610
    %v6619 = vsel %vm104, %v6610, %v6612
    %v6620 = vsel %vm104, %v6612, %v6614
    %v6628 = vmax.f32 %v6587, %v6615
    %v6629 = vmax.f32 %v6588, %v6616
    %v6630 = vmax.f32 %v6589, %v6617
    %v6631 = vmax.f32 %v6590, %v6618
    %v6632 = vmax.f32 %v6591, %v6619
    %v6633 = vmax.f32 %v6592, %v6620
    %v6634 = vmax.f32 %v6593, %v6614
    %6642 = vrot.lane.b32.xlu0 %v6628, 96
    %v6643 = vpop.permute.xlu0 %6642
    %6644 = vrot.lane.b32.xlu0 %v6629, 96
    %v6645 = vpop.permute.xlu0 %6644
    %6646 = vrot.lane.b32.xlu0 %v6630, 96
    %v6647 = vpop.permute.xlu0 %6646
    %6648 = vrot.lane.b32.xlu0 %v6631, 96
    %v6649 = vpop.permute.xlu0 %6648
    %6650 = vrot.lane.b32.xlu0 %v6632, 96
    %v6651 = vpop.permute.xlu0 %6650
    %6652 = vrot.lane.b32.xlu0 %v6633, 96
    %v6653 = vpop.permute.xlu0 %6652
    %6654 = vrot.lane.b32.xlu0 %v6634, 96
    %v6655 = vpop.permute.xlu0 %6654
    %v6656 = vsel %vm320, %v6643, %v6645
    %v6657 = vsel %vm320, %v6645, %v6647
    %v6658 = vsel %vm320, %v6647, %v6649
    %v6659 = vsel %vm320, %v6649, %v6651
    %v6660 = vsel %vm320, %v6651, %v6653
    %v6661 = vsel %vm320, %v6653, %v6655
    %v6669 = vmax.f32 %v6628, %v6656
    %v6670 = vmax.f32 %v6629, %v6657
    %v6671 = vmax.f32 %v6630, %v6658
    %v6672 = vmax.f32 %v6631, %v6659
    %v6673 = vmax.f32 %v6632, %v6660
    %v6674 = vmax.f32 %v6633, %v6661
    %v6675 = vmax.f32 %v6634, %v6655
    %s6676 = sld [smem:[#allocation4 + $0x3]]
    %v6677 = vstv %s6676
    %v6678 = vadd.f32 %v6669, %v6677
    %v6679 = vadd.f32 %v6670, %v6677
    %v6680 = vadd.f32 %v6671, %v6677
    %v6681 = vadd.f32 %v6672, %v6677
    %v6682 = vadd.f32 %v6673, %v6677
    %v6683 = vadd.f32 %v6674, %v6677
    %v6684 = vadd.f32 %v6675, %v6677
    %v6685 = vmax.f32 %v6678, 0.0
    %v6686 = vmax.f32 %v6679, 0.0
    %v6687 = vmax.f32 %v6680, 0.0
    %v6688 = vmax.f32 %v6681, 0.0
    %v6689 = vmax.f32 %v6682, 0.0
    %v6690 = vmax.f32 %v6683, 0.0
    %v6691 = vmax.f32 %v6684, 0.0
    %s6692 = scalar_lea.vmem %s3, 2592
    %v6693 = vld [vmem:[%s6692] sm:$0xff]
    %v6694 = vld [vmem:[%s6692 + $0x8] sm:$0xff]
    %v6695 = vld [vmem:[%s6692 + $0x10] sm:$0xff]
    %v6696 = vld [vmem:[%s6692 + $0x18] sm:$0xff]
    %v6697 = vld [vmem:[%s6692 + $0x20] sm:$0xff]
    %v6698 = vld [vmem:[%s6692 + $0x28] sm:$0xff]
    %v6699 = vld [vmem:[%s6692 + $0x30] sm:$0xff]
    %v6700 = vld [vmem:[%s6692 + $0x38] sm:$0xff]
    %v6701 = vld [vmem:[%s6692 + $0x40] sm:$0xff]
    %v6702 = vld [vmem:[%s6692 + $0x48] sm:$0xff]
    %v6703 = vld [vmem:[%s6692 + $0x50] sm:$0xff]
    %v6704 = vld [vmem:[%s6692 + $0x58] sm:$0xff]
    %v6705 = vld [vmem:[%s6692 + $0x60] sm:$0xff]
    %v6706 = vld [vmem:[%s6692 + $0x68] sm:$0xff]
    %v6707 = vld [vmem:[%s6692 + $0x70] sm:$0xff]
    %v6708 = vld [vmem:[%s6692 + $0x78] sm:$0xff]
    %v6709 = vld [vmem:[%s6692 + $0x80] sm:$0xff]
    %v6710 = vld [vmem:[%s6692 + $0x88] sm:$0xff]
    %v6711 = vld [vmem:[%s6692 + $0x90] sm:$0xff]
    %v6712 = vld [vmem:[%s6692 + $0x98] sm:$0xff]
    %v6713 = vld [vmem:[%s6692 + $0xa0] sm:$0xff]
    %v6714 = vld [vmem:[%s6692 + $0xa8] sm:$0xff]
    %v6715 = vld [vmem:[%s6692 + $0xb0] sm:$0xff]
    %v6716 = vld [vmem:[%s6692 + $0xb8] sm:$0xff]
    %v6717 = vld [vmem:[%s6692 + $0xc0] sm:$0xff]
    %v6718 = vld [vmem:[%s6692 + $0xc8] sm:$0xff]
    %v6719 = vld [vmem:[%s6692 + $0xd0] sm:$0xff]
    %v6720 = vld [vmem:[%s6692 + $0xd8] sm:$0xff]
    %v6721 = vld [vmem:[%s6692 + $0xe0] sm:$0xff]
    %v6722 = vld [vmem:[%s6692 + $0xe8] sm:$0xff]
    %v6723 = vld [vmem:[%s6692 + $0xf0] sm:$0xff]
    %v6724 = vld [vmem:[%s6692 + $0xf8] sm:$0xff]
    %v6725 = vld [vmem:[%s6692 + $0x100] sm:$0xff]
    %v6726 = vld [vmem:[%s6692 + $0x108] sm:$0xff]
    %v6727 = vld [vmem:[%s6692 + $0x110] sm:$0xff]
    %v6728 = vld [vmem:[%s6692 + $0x118] sm:$0xff]
    %v6729 = vld [vmem:[%s6692 + $0x120] sm:$0xff]
    %v6730 = vld [vmem:[%s6692 + $0x128] sm:$0xff]
    %v6731 = vld [vmem:[%s6692 + $0x130] sm:$0xff]
    %v6732 = vld [vmem:[%s6692 + $0x138] sm:$0xff]
    %v6733 = vld [vmem:[%s6692 + $0x140] sm:$0xff]
    %v6734 = vld [vmem:[%s6692 + $0x148] sm:$0xff]
    %v6735 = vld [vmem:[%s6692 + $0x150] sm:$0xff]
    %v6736 = vld [vmem:[%s6692 + $0x158] sm:$0xff]
    %v6737 = vld [vmem:[%s6692 + $0x160] sm:$0xff]
    %v6738 = vld [vmem:[%s6692 + $0x168] sm:$0xff]
    %v6739 = vld [vmem:[%s6692 + $0x170] sm:$0xff]
    %v6740 = vld [vmem:[%s6692 + $0x178] sm:$0xff]
    %v6741 = vld [vmem:[%s6692 + $0x180] sm:$0xff]
    %v6742 = vld [vmem:[%s6692 + $0x188] sm:$0xff]
    %v6743 = vld [vmem:[%s6692 + $0x190] sm:$0xff]
    %v6744 = vld [vmem:[%s6692 + $0x198] sm:$0xff]
    %v6745 = vld [vmem:[%s6692 + $0x1a0] sm:$0xff]
    %v6746 = vld [vmem:[%s6692 + $0x1a8] sm:$0xff]
    %v6747 = vld [vmem:[%s6692 + $0x1b0] sm:$0xff]
    %v6748 = vld [vmem:[%s6692 + $0x1b8] sm:$0xff]
    %v6749 = vld [vmem:[%s6692 + $0x1c0] sm:$0xff]
    %v6750 = vld [vmem:[%s6692 + $0x1c8] sm:$0xff]
    %v6751 = vld [vmem:[%s6692 + $0x1d0] sm:$0xff]
    %v6752 = vld [vmem:[%s6692 + $0x1d8] sm:$0xff]
    %v6753 = vld [vmem:[%s6692 + $0x1e0] sm:$0xff]
    %v6754 = vld [vmem:[%s6692 + $0x1e8] sm:$0xff]
    %v6755 = vld [vmem:[%s6692 + $0x1f0] sm:$0xff]
    %v6756 = vld [vmem:[%s6692 + $0x1f8] sm:$0xff]
    %v6757 = vld [vmem:[%s6692 + $0x200] sm:$0xff]
    %v6758 = vld [vmem:[%s6692 + $0x208] sm:$0xff]
    %v6759 = vld [vmem:[%s6692 + $0x210] sm:$0xff]
    %v6760 = vld [vmem:[%s6692 + $0x218] sm:$0xff]
    %v6761 = vld [vmem:[%s6692 + $0x220] sm:$0xff]
    %v6762 = vld [vmem:[%s6692 + $0x228] sm:$0xff]
    %v6763 = vld [vmem:[%s6692 + $0x230] sm:$0xff]
    %v6764 = vld [vmem:[%s6692 + $0x238] sm:$0xff]
    %v6765 = vld [vmem:[%s6692 + $0x240] sm:$0xff]
    %v6766 = vld [vmem:[%s6692 + $0x248] sm:$0xff]
    %v6767 = vld [vmem:[%s6692 + $0x250] sm:$0xff]
    %v6768 = vld [vmem:[%s6692 + $0x258] sm:$0xff]
    %v6769 = vld [vmem:[%s6692 + $0x260] sm:$0xff]
    %v6770 = vld [vmem:[%s6692 + $0x268] sm:$0xff]
    %v6771 = vld [vmem:[%s6692 + $0x270] sm:$0xff]
    %v6772 = vld [vmem:[%s6692 + $0x278] sm:$0xff]
    %v6773 = vld [vmem:[%s6692 + $0x280] sm:$0xff]
    %v6774 = vld [vmem:[%s6692 + $0x288] sm:$0xff]
    %v6775 = vld [vmem:[%s6692 + $0x290] sm:$0xff]
    %v6776 = vld [vmem:[%s6692 + $0x298] sm:$0xff]
    %v6777 = vld [vmem:[%s6692 + $0x2a0] sm:$0xff]
    %v6778 = vld [vmem:[%s6692 + $0x2a8] sm:$0xff]
    %v6779 = vld [vmem:[%s6692 + $0x2b0] sm:$0xff]
    %v6780 = vld [vmem:[%s6692 + $0x2b8] sm:$0xff]
    %v6781 = vld [vmem:[%s6692 + $0x2c0] sm:$0xff]
    %v6782 = vld [vmem:[%s6692 + $0x2c8] sm:$0xff]
    %v6783 = vld [vmem:[%s6692 + $0x2d0] sm:$0xff]
    %v6784 = vld [vmem:[%s6692 + $0x2d8] sm:$0xff]
    %v6785 = vld [vmem:[%s6692 + $0x2e0] sm:$0xff]
    %v6786 = vld [vmem:[%s6692 + $0x2e8] sm:$0xff]
    %v6787 = vld [vmem:[%s6692 + $0x2f0] sm:$0xff]
    %v6788 = vld [vmem:[%s6692 + $0x2f8] sm:$0xff]
    %v6789 = vld [vmem:[%s6692 + $0x300] sm:$0xff]
    %v6790 = vld [vmem:[%s6692 + $0x308] sm:$0xff]
    %v6791 = vld [vmem:[%s6692 + $0x310] sm:$0xff]
    %v6792 = vld [vmem:[%s6692 + $0x318] sm:$0xff]
    %v6793 = vld [vmem:[%s6692 + $0x320] sm:$0xff]
    %v6794 = vld [vmem:[%s6692 + $0x328] sm:$0xff]
    %v6795 = vld [vmem:[%s6692 + $0x330] sm:$0xff]
    %v6796 = vld [vmem:[%s6692 + $0x338] sm:$0xff]
    %v6797 = vld [vmem:[%s6692 + $0x340] sm:$0xff]
    %v6798 = vld [vmem:[%s6692 + $0x348] sm:$0xff]
    %v6799 = vld [vmem:[%s6692 + $0x350] sm:$0xff]
    %v6800 = vld [vmem:[%s6692 + $0x358] sm:$0x7]
    %v6802 = vsel %vm3012, %v6691, 0
    %v6805 = vsel %vm3016, %v6800, 0
    %6807 = vmatprep.subr.mxu0 0.0
    %6808 = vmatpush1.msra.mxu0 %v6708
    %6809 = vmatprep.subr.mxu0 0.0
    %6810 = vmatpush1.msra.mxu0 %v6707
    %6811 = vmatprep.subr.mxu0 0.0
    %6812 = vmatpush1.msra.mxu0 %v6706
    %6813 = vmatprep.subr.mxu0 0.0
    %6814 = vmatpush1.msra.mxu0 %v6705
    %6815 = vmatprep.subr.mxu0 0.0
    %6816 = vmatpush1.msra.mxu0 %v6704
    %6817 = vmatprep.subr.mxu0 0.0
    %6818 = vmatpush1.msra.mxu0 %v6703
    %6819 = vmatprep.subr.mxu0 0.0
    %6820 = vmatpush1.msra.mxu0 %v6702
    %6821 = vmatprep.subr.mxu0 0.0
    %6822 = vmatpush1.msra.mxu0 %v6701
    %6823 = vmatprep.subr.mxu0 0.0
    %6824 = vmatpush1.msra.mxu0 %v6700
    %6825 = vmatprep.subr.mxu0 0.0
    %6826 = vmatpush1.msra.mxu0 %v6699
    %6827 = vmatprep.subr.mxu0 0.0
    %6828 = vmatpush1.msra.mxu0 %v6698
    %6829 = vmatprep.subr.mxu0 0.0
    %6830 = vmatpush1.msra.mxu0 %v6697
    %6831 = vmatprep.subr.mxu0 0.0
    %6832 = vmatpush1.msra.mxu0 %v6696
    %6833 = vmatprep.subr.mxu0 0.0
    %6834 = vmatpush1.msra.mxu0 %v6695
    %6835 = vmatprep.subr.mxu0 0.0
    %6836 = vmatpush1.msra.mxu0 %v6694
    %6837 = vmatprep.subr.mxu0 0.0
    %6838 = vmatpush1.msra.mxu0 %v6693
    %6839 = vmatprep.subr.mxu0 0.0
    %6840 = vmatpush2.msra.mxu0 %v6724
    %6841 = vmatprep.subr.mxu0 0.0
    %6842 = vmatpush2.msra.mxu0 %v6723
    %6843 = vmatprep.subr.mxu0 0.0
    %6844 = vmatpush2.msra.mxu0 %v6722
    %6845 = vmatprep.subr.mxu0 0.0
    %6846 = vmatpush2.msra.mxu0 %v6721
    %6847 = vmatprep.subr.mxu0 0.0
    %6848 = vmatpush2.msra.mxu0 %v6720
    %6849 = vmatprep.subr.mxu0 0.0
    %6850 = vmatpush2.msra.mxu0 %v6719
    %6851 = vmatprep.subr.mxu0 0.0
    %6852 = vmatpush2.msra.mxu0 %v6718
    %6853 = vmatprep.subr.mxu0 0.0
    %6854 = vmatpush2.msra.mxu0 %v6717
    %6855 = vmatprep.subr.mxu0 0.0
    %6856 = vmatpush2.msra.mxu0 %v6716
    %6857 = vmatprep.subr.mxu0 0.0
    %6858 = vmatpush2.msra.mxu0 %v6715
    %6859 = vmatprep.subr.mxu0 0.0
    %6860 = vmatpush2.msra.mxu0 %v6714
    %6861 = vmatprep.subr.mxu0 0.0
    %6862 = vmatpush2.msra.mxu0 %v6713
    %6863 = vmatprep.subr.mxu0 0.0
    %6864 = vmatpush2.msra.mxu0 %v6712
    %6865 = vmatprep.subr.mxu0 0.0
    %6866 = vmatpush2.msra.mxu0 %v6711
    %6867 = vmatprep.subr.mxu0 0.0
    %6868 = vmatpush2.msra.mxu0 %v6710
    %6869 = vmatprep.subr.mxu0 0.0
    %6870 = vmatpush2.msra.mxu0 %v6709
    %6871 = vmatprep.mubr.f32.mxu0 %v6686
    %6872 = vmatmul.mubr.f32.gmra.mxu0 %v6685
    %v6873 = vpop.f32.mrf.mxu0
    %v6874 = vadd.f32 0.0, %v6873
    %v6875 = vpop.f32.mrf.mxu0
    %6876 = vdwg.mxu0
    %6877 = vmatprep.subr.mxu0 0.0
    %6878 = vmatpush1.msra.mxu0 %v6740
    %6879 = vmatprep.subr.mxu0 0.0
    %6880 = vmatpush1.msra.mxu0 %v6739
    %6881 = vmatprep.subr.mxu0 0.0
    %6882 = vmatpush1.msra.mxu0 %v6738
    %6883 = vmatprep.subr.mxu0 0.0
    %6884 = vmatpush1.msra.mxu0 %v6737
    %6885 = vmatprep.subr.mxu0 0.0
    %6886 = vmatpush1.msra.mxu0 %v6736
    %6887 = vmatprep.subr.mxu0 0.0
    %6888 = vmatpush1.msra.mxu0 %v6735
    %6889 = vmatprep.subr.mxu0 0.0
    %6890 = vmatpush1.msra.mxu0 %v6734
    %6891 = vmatprep.subr.mxu0 0.0
    %6892 = vmatpush1.msra.mxu0 %v6733
    %6893 = vmatprep.subr.mxu0 0.0
    %6894 = vmatpush1.msra.mxu0 %v6732
    %6895 = vmatprep.subr.mxu0 0.0
    %6896 = vmatpush1.msra.mxu0 %v6731
    %6897 = vmatprep.subr.mxu0 0.0
    %6898 = vmatpush1.msra.mxu0 %v6730
    %6899 = vmatprep.subr.mxu0 0.0
    %6900 = vmatpush1.msra.mxu0 %v6729
    %6901 = vmatprep.subr.mxu0 0.0
    %6902 = vmatpush1.msra.mxu0 %v6728
    %6903 = vmatprep.subr.mxu0 0.0
    %6904 = vmatpush1.msra.mxu0 %v6727
    %6905 = vmatprep.subr.mxu0 0.0
    %6906 = vmatpush1.msra.mxu0 %v6726
    %6907 = vmatprep.subr.mxu0 0.0
    %6908 = vmatpush1.msra.mxu0 %v6725
    %6909 = vmatprep.subr.mxu0 0.0
    %6910 = vmatpush2.msra.mxu0 %v6756
    %6911 = vmatprep.subr.mxu0 0.0
    %6912 = vmatpush2.msra.mxu0 %v6755
    %6913 = vmatprep.subr.mxu0 0.0
    %6914 = vmatpush2.msra.mxu0 %v6754
    %6915 = vmatprep.subr.mxu0 0.0
    %6916 = vmatpush2.msra.mxu0 %v6753
    %6917 = vmatprep.subr.mxu0 0.0
    %6918 = vmatpush2.msra.mxu0 %v6752
    %6919 = vmatprep.subr.mxu0 0.0
    %6920 = vmatpush2.msra.mxu0 %v6751
    %6921 = vmatprep.subr.mxu0 0.0
    %6922 = vmatpush2.msra.mxu0 %v6750
    %6923 = vmatprep.subr.mxu0 0.0
    %6924 = vmatpush2.msra.mxu0 %v6749
    %6925 = vmatprep.subr.mxu0 0.0
    %6926 = vmatpush2.msra.mxu0 %v6748
    %6927 = vmatprep.subr.mxu0 0.0
    %6928 = vmatpush2.msra.mxu0 %v6747
    %6929 = vmatprep.subr.mxu0 0.0
    %6930 = vmatpush2.msra.mxu0 %v6746
    %6931 = vmatprep.subr.mxu0 0.0
    %6932 = vmatpush2.msra.mxu0 %v6745
    %6933 = vmatprep.subr.mxu0 0.0
    %6934 = vmatpush2.msra.mxu0 %v6744
    %6935 = vmatprep.subr.mxu0 0.0
    %6936 = vmatpush2.msra.mxu0 %v6743
    %6937 = vmatprep.subr.mxu0 0.0
    %6938 = vmatpush2.msra.mxu0 %v6742
    %6939 = vmatprep.subr.mxu0 0.0
    %6940 = vmatpush2.msra.mxu0 %v6741
    %6941 = vmatprep.mubr.f32.mxu0 %v6688
    %6942 = vmatmul.mubr.f32.gmra.mxu0 %v6687
    %v6943 = vpop.f32.mrf.mxu0
    %v6944 = vadd.f32 %v6874, %v6943
    %v6945 = vpop.f32.mrf.mxu0
    %6946 = vdwg.mxu0
    %6947 = vmatprep.subr.mxu0 0.0
    %6948 = vmatpush1.msra.mxu0 %v6772
    %6949 = vmatprep.subr.mxu0 0.0
    %6950 = vmatpush1.msra.mxu0 %v6771
    %6951 = vmatprep.subr.mxu0 0.0
    %6952 = vmatpush1.msra.mxu0 %v6770
    %6953 = vmatprep.subr.mxu0 0.0
    %6954 = vmatpush1.msra.mxu0 %v6769
    %6955 = vmatprep.subr.mxu0 0.0
    %6956 = vmatpush1.msra.mxu0 %v6768
    %6957 = vmatprep.subr.mxu0 0.0
    %6958 = vmatpush1.msra.mxu0 %v6767
    %6959 = vmatprep.subr.mxu0 0.0
    %6960 = vmatpush1.msra.mxu0 %v6766
    %6961 = vmatprep.subr.mxu0 0.0
    %6962 = vmatpush1.msra.mxu0 %v6765
    %6963 = vmatprep.subr.mxu0 0.0
    %6964 = vmatpush1.msra.mxu0 %v6764
    %6965 = vmatprep.subr.mxu0 0.0
    %6966 = vmatpush1.msra.mxu0 %v6763
    %6967 = vmatprep.subr.mxu0 0.0
    %6968 = vmatpush1.msra.mxu0 %v6762
    %6969 = vmatprep.subr.mxu0 0.0
    %6970 = vmatpush1.msra.mxu0 %v6761
    %6971 = vmatprep.subr.mxu0 0.0
    %6972 = vmatpush1.msra.mxu0 %v6760
    %6973 = vmatprep.subr.mxu0 0.0
    %6974 = vmatpush1.msra.mxu0 %v6759
    %6975 = vmatprep.subr.mxu0 0.0
    %6976 = vmatpush1.msra.mxu0 %v6758
    %6977 = vmatprep.subr.mxu0 0.0
    %6978 = vmatpush1.msra.mxu0 %v6757
    %6979 = vmatprep.subr.mxu0 0.0
    %6980 = vmatpush2.msra.mxu0 %v6788
    %6981 = vmatprep.subr.mxu0 0.0
    %6982 = vmatpush2.msra.mxu0 %v6787
    %6983 = vmatprep.subr.mxu0 0.0
    %6984 = vmatpush2.msra.mxu0 %v6786
    %6985 = vmatprep.subr.mxu0 0.0
    %6986 = vmatpush2.msra.mxu0 %v6785
    %6987 = vmatprep.subr.mxu0 0.0
    %6988 = vmatpush2.msra.mxu0 %v6784
    %6989 = vmatprep.subr.mxu0 0.0
    %6990 = vmatpush2.msra.mxu0 %v6783
    %6991 = vmatprep.subr.mxu0 0.0
    %6992 = vmatpush2.msra.mxu0 %v6782
    %6993 = vmatprep.subr.mxu0 0.0
    %6994 = vmatpush2.msra.mxu0 %v6781
    %6995 = vmatprep.subr.mxu0 0.0
    %6996 = vmatpush2.msra.mxu0 %v6780
    %6997 = vmatprep.subr.mxu0 0.0
    %6998 = vmatpush2.msra.mxu0 %v6779
    %6999 = vmatprep.subr.mxu0 0.0
    %7000 = vmatpush2.msra.mxu0 %v6778
    %7001 = vmatprep.subr.mxu0 0.0
    %7002 = vmatpush2.msra.mxu0 %v6777
    %7003 = vmatprep.subr.mxu0 0.0
    %7004 = vmatpush2.msra.mxu0 %v6776
    %7005 = vmatprep.subr.mxu0 0.0
    %7006 = vmatpush2.msra.mxu0 %v6775
    %7007 = vmatprep.subr.mxu0 0.0
    %7008 = vmatpush2.msra.mxu0 %v6774
    %7009 = vmatprep.subr.mxu0 0.0
    %7010 = vmatpush2.msra.mxu0 %v6773
    %7011 = vmatprep.mubr.f32.mxu0 %v6690
    %7012 = vmatmul.mubr.f32.gmra.mxu0 %v6689
    %v7013 = vpop.f32.mrf.mxu0
    %v7014 = vadd.f32 %v6944, %v7013
    %v7015 = vpop.f32.mrf.mxu0
    %7016 = vdwg.mxu0
    %7017 = vmatprep.subr.mxu0 0.0
    %7018 = vmatpush1.msra.mxu0 0.0
    %7019 = vmatprep.subr.mxu0 0.0
    %7020 = vmatpush1.msra.mxu0 0.0
    %7021 = vmatprep.subr.mxu0 0.0
    %7022 = vmatpush1.msra.mxu0 0.0
    %7023 = vmatprep.subr.mxu0 0.0
    %7024 = vmatpush1.msra.mxu0 0.0
    %7025 = vmatprep.subr.mxu0 0.0
    %7026 = vmatpush1.msra.mxu0 %v6805
    %7027 = vmatprep.subr.mxu0 0.0
    %7028 = vmatpush1.msra.mxu0 %v6799
    %7029 = vmatprep.subr.mxu0 0.0
    %7030 = vmatpush1.msra.mxu0 %v6798
    %7031 = vmatprep.subr.mxu0 0.0
    %7032 = vmatpush1.msra.mxu0 %v6797
    %7033 = vmatprep.subr.mxu0 0.0
    %7034 = vmatpush1.msra.mxu0 %v6796
    %7035 = vmatprep.subr.mxu0 0.0
    %7036 = vmatpush1.msra.mxu0 %v6795
    %7037 = vmatprep.subr.mxu0 0.0
    %7038 = vmatpush1.msra.mxu0 %v6794
    %7039 = vmatprep.subr.mxu0 0.0
    %7040 = vmatpush1.msra.mxu0 %v6793
    %7041 = vmatprep.subr.mxu0 0.0
    %7042 = vmatpush1.msra.mxu0 %v6792
    %7043 = vmatprep.subr.mxu0 0.0
    %7044 = vmatpush1.msra.mxu0 %v6791
    %7045 = vmatprep.subr.mxu0 0.0
    %7046 = vmatpush1.msra.mxu0 %v6790
    %7047 = vmatprep.subr.mxu0 0.0
    %7048 = vmatpush1.msra.mxu0 %v6789
    %7049 = vmatprep.subr.mxu0 0.0
    %7050 = vmatpush2.msra.mxu0 0.0
    %7051 = vmatprep.subr.mxu0 0.0
    %7052 = vmatpush2.msra.mxu0 0.0
    %7053 = vmatprep.subr.mxu0 0.0
    %7054 = vmatpush2.msra.mxu0 0.0
    %7055 = vmatprep.subr.mxu0 0.0
    %7056 = vmatpush2.msra.mxu0 0.0
    %7057 = vmatprep.subr.mxu0 0.0
    %7058 = vmatpush2.msra.mxu0 0.0
    %7059 = vmatprep.subr.mxu0 0.0
    %7060 = vmatpush2.msra.mxu0 0.0
    %7061 = vmatprep.subr.mxu0 0.0
    %7062 = vmatpush2.msra.mxu0 0.0
    %7063 = vmatprep.subr.mxu0 0.0
    %7064 = vmatpush2.msra.mxu0 0.0
    %7065 = vmatprep.subr.mxu0 0.0
    %7066 = vmatpush2.msra.mxu0 0.0
    %7067 = vmatprep.subr.mxu0 0.0
    %7068 = vmatpush2.msra.mxu0 0.0
    %7069 = vmatprep.subr.mxu0 0.0
    %7070 = vmatpush2.msra.mxu0 0.0
    %7071 = vmatprep.subr.mxu0 0.0
    %7072 = vmatpush2.msra.mxu0 0.0
    %7073 = vmatprep.subr.mxu0 0.0
    %7074 = vmatpush2.msra.mxu0 0.0
    %7075 = vmatprep.subr.mxu0 0.0
    %7076 = vmatpush2.msra.mxu0 0.0
    %7077 = vmatprep.subr.mxu0 0.0
    %7078 = vmatpush2.msra.mxu0 0.0
    %7079 = vmatprep.subr.mxu0 0.0
    %7080 = vmatpush2.msra.mxu0 0.0
    %7081 = vmatprep.mubr.f32.mxu0 0.0
    %7082 = vmatmul.mubr.f32.gmra.mxu0 %v6802
    %v7083 = vpop.f32.mrf.mxu0
    %v7084 = vadd.f32 %v7014, %v7083
    %v7085 = vpop.f32.mrf.mxu0
    %7086 = vdwg.mxu0
    %v7087 = vadd.f32 %v5336, %v7084
    %s7088 = sld [smem:[#allocation2 + $0x64]]
    %v7089 = vstv %s7088
    %v7090 = vmul.f32 %v7089, %v52
    %v7091 = vmul.f32 %v7089, %v53
    %v7092 = vmul.f32 %v7089, %v54
    %v7093 = vmul.f32 %v7089, %v55
    %v7094 = vmul.f32 %v7089, %v56
    %v7095 = vmul.f32 %v7089, %v57
    %v7096 = vmul.f32 %v7089, %v58
    %v7097 = vadd.f32 %v7090, 0.0
    %v7098 = vadd.f32 %v7091, 0.0
    %v7099 = vadd.f32 %v7092, 0.0
    %v7100 = vadd.f32 %v7093, 0.0
    %v7101 = vadd.f32 %v7094, 0.0
    %v7102 = vadd.f32 %v7095, 0.0
    %v7103 = vadd.f32 %v7096, 0.0
    %s7104 = sld [smem:[#allocation2 + $0x65]]
    %v7105 = vstv %s7104
    %v7106 = vmul.f32 %v7105, %v52
    %v7107 = vmul.f32 %v7105, %v53
    %v7108 = vmul.f32 %v7105, %v54
    %v7109 = vmul.f32 %v7105, %v55
    %v7110 = vmul.f32 %v7105, %v56
    %v7111 = vmul.f32 %v7105, %v57
    %v7112 = vmul.f32 %v7105, %v58
    %7120 = vrot.lane.b32.xlu0 %v7106, 127
    %v7121 = vpop.permute.xlu0 %7120
    %7122 = vrot.lane.b32.xlu0 %v7107, 127
    %v7123 = vpop.permute.xlu0 %7122
    %7124 = vrot.lane.b32.xlu0 %v7108, 127
    %v7125 = vpop.permute.xlu0 %7124
    %7126 = vrot.lane.b32.xlu0 %v7109, 127
    %v7127 = vpop.permute.xlu0 %7126
    %7128 = vrot.lane.b32.xlu0 %v7110, 127
    %v7129 = vpop.permute.xlu0 %7128
    %7130 = vrot.lane.b32.xlu0 %v7111, 127
    %v7131 = vpop.permute.xlu0 %7130
    %7132 = vrot.lane.b32.xlu0 %v7112, 127
    %v7133 = vpop.permute.xlu0 %7132
    %v7134 = vsel %vm104, %v7121, %v7123
    %v7135 = vsel %vm104, %v7123, %v7125
    %v7136 = vsel %vm104, %v7125, %v7127
    %v7137 = vsel %vm104, %v7127, %v7129
    %v7138 = vsel %vm104, %v7129, %v7131
    %v7139 = vsel %vm104, %v7131, %v7133
    %v7147 = vadd.f32 %v7097, %v7134
    %v7148 = vadd.f32 %v7098, %v7135
    %v7149 = vadd.f32 %v7099, %v7136
    %v7150 = vadd.f32 %v7100, %v7137
    %v7151 = vadd.f32 %v7101, %v7138
    %v7152 = vadd.f32 %v7102, %v7139
    %v7153 = vadd.f32 %v7103, %v7133
    %s7154 = sld [smem:[#allocation2 + $0x66]]
    %v7155 = vstv %s7154
    %v7156 = vmul.f32 %v7155, %v52
    %v7157 = vmul.f32 %v7155, %v53
    %v7158 = vmul.f32 %v7155, %v54
    %v7159 = vmul.f32 %v7155, %v55
    %v7160 = vmul.f32 %v7155, %v56
    %v7161 = vmul.f32 %v7155, %v57
    %v7162 = vmul.f32 %v7155, %v58
    %7170 = vrot.lane.b32.xlu0 %v7156, 126
    %v7171 = vpop.permute.xlu0 %7170
    %7172 = vrot.lane.b32.xlu0 %v7157, 126
    %v7173 = vpop.permute.xlu0 %7172
    %7174 = vrot.lane.b32.xlu0 %v7158, 126
    %v7175 = vpop.permute.xlu0 %7174
    %7176 = vrot.lane.b32.xlu0 %v7159, 126
    %v7177 = vpop.permute.xlu0 %7176
    %7178 = vrot.lane.b32.xlu0 %v7160, 126
    %v7179 = vpop.permute.xlu0 %7178
    %7180 = vrot.lane.b32.xlu0 %v7161, 126
    %v7181 = vpop.permute.xlu0 %7180
    %7182 = vrot.lane.b32.xlu0 %v7162, 126
    %v7183 = vpop.permute.xlu0 %7182
    %v7184 = vsel %vm155, %v7171, %v7173
    %v7185 = vsel %vm155, %v7173, %v7175
    %v7186 = vsel %vm155, %v7175, %v7177
    %v7187 = vsel %vm155, %v7177, %v7179
    %v7188 = vsel %vm155, %v7179, %v7181
    %v7189 = vsel %vm155, %v7181, %v7183
    %v7197 = vadd.f32 %v7147, %v7184
    %v7198 = vadd.f32 %v7148, %v7185
    %v7199 = vadd.f32 %v7149, %v7186
    %v7200 = vadd.f32 %v7150, %v7187
    %v7201 = vadd.f32 %v7151, %v7188
    %v7202 = vadd.f32 %v7152, %v7189
    %v7203 = vadd.f32 %v7153, %v7183
    %s7204 = sld [smem:[#allocation2 + $0x67]]
    %v7205 = vstv %s7204
    %v7206 = vmul.f32 %v7205, %v52
    %v7207 = vmul.f32 %v7205, %v53
    %v7208 = vmul.f32 %v7205, %v54
    %v7209 = vmul.f32 %v7205, %v55
    %v7210 = vmul.f32 %v7205, %v56
    %v7211 = vmul.f32 %v7205, %v57
    %v7212 = vmul.f32 %v7205, %v58
    %7220 = vrot.lane.b32.xlu0 %v7206, 125
    %v7221 = vpop.permute.xlu0 %7220
    %7222 = vrot.lane.b32.xlu0 %v7207, 125
    %v7223 = vpop.permute.xlu0 %7222
    %7224 = vrot.lane.b32.xlu0 %v7208, 125
    %v7225 = vpop.permute.xlu0 %7224
    %7226 = vrot.lane.b32.xlu0 %v7209, 125
    %v7227 = vpop.permute.xlu0 %7226
    %7228 = vrot.lane.b32.xlu0 %v7210, 125
    %v7229 = vpop.permute.xlu0 %7228
    %7230 = vrot.lane.b32.xlu0 %v7211, 125
    %v7231 = vpop.permute.xlu0 %7230
    %7232 = vrot.lane.b32.xlu0 %v7212, 125
    %v7233 = vpop.permute.xlu0 %7232
    %v7234 = vsel %vm206, %v7221, %v7223
    %v7235 = vsel %vm206, %v7223, %v7225
    %v7236 = vsel %vm206, %v7225, %v7227
    %v7237 = vsel %vm206, %v7227, %v7229
    %v7238 = vsel %vm206, %v7229, %v7231
    %v7239 = vsel %vm206, %v7231, %v7233
    %v7247 = vadd.f32 %v7197, %v7234
    %v7248 = vadd.f32 %v7198, %v7235
    %v7249 = vadd.f32 %v7199, %v7236
    %v7250 = vadd.f32 %v7200, %v7237
    %v7251 = vadd.f32 %v7201, %v7238
    %v7252 = vadd.f32 %v7202, %v7239
    %v7253 = vadd.f32 %v7203, %v7233
    %s7254 = sld [smem:[#allocation2 + $0x68]]
    %v7255 = vstv %s7254
    %v7256 = vmul.f32 %v7255, %v52
    %v7257 = vmul.f32 %v7255, %v53
    %v7258 = vmul.f32 %v7255, %v54
    %v7259 = vmul.f32 %v7255, %v55
    %v7260 = vmul.f32 %v7255, %v56
    %v7261 = vmul.f32 %v7255, %v57
    %v7262 = vmul.f32 %v7255, %v58
    %7270 = vrot.lane.b32.xlu0 %v7256, 124
    %v7271 = vpop.permute.xlu0 %7270
    %7272 = vrot.lane.b32.xlu0 %v7257, 124
    %v7273 = vpop.permute.xlu0 %7272
    %7274 = vrot.lane.b32.xlu0 %v7258, 124
    %v7275 = vpop.permute.xlu0 %7274
    %7276 = vrot.lane.b32.xlu0 %v7259, 124
    %v7277 = vpop.permute.xlu0 %7276
    %7278 = vrot.lane.b32.xlu0 %v7260, 124
    %v7279 = vpop.permute.xlu0 %7278
    %7280 = vrot.lane.b32.xlu0 %v7261, 124
    %v7281 = vpop.permute.xlu0 %7280
    %7282 = vrot.lane.b32.xlu0 %v7262, 124
    %v7283 = vpop.permute.xlu0 %7282
    %v7284 = vsel %vm257, %v7271, %v7273
    %v7285 = vsel %vm257, %v7273, %v7275
    %v7286 = vsel %vm257, %v7275, %v7277
    %v7287 = vsel %vm257, %v7277, %v7279
    %v7288 = vsel %vm257, %v7279, %v7281
    %v7289 = vsel %vm257, %v7281, %v7283
    %v7297 = vadd.f32 %v7247, %v7284
    %v7298 = vadd.f32 %v7248, %v7285
    %v7299 = vadd.f32 %v7249, %v7286
    %v7300 = vadd.f32 %v7250, %v7287
    %v7301 = vadd.f32 %v7251, %v7288
    %v7302 = vadd.f32 %v7252, %v7289
    %v7303 = vadd.f32 %v7253, %v7283
    %s7304 = sld [smem:[#allocation2 + $0x69]]
    %v7305 = vstv %s7304
    %v7306 = vmul.f32 %v7305, %v279
    %v7307 = vmul.f32 %v7305, %v280
    %v7308 = vmul.f32 %v7305, %v281
    %v7309 = vmul.f32 %v7305, %v282
    %v7310 = vmul.f32 %v7305, %v283
    %v7311 = vmul.f32 %v7305, %v284
    %v7312 = vmul.f32 %v7305, %v285
    %v7313 = vmul.f32 %v7305, %v286
    %7322 = vrot.lane.b32.xlu0 %v7306, 96
    %v7323 = vpop.permute.xlu0 %7322
    %7324 = vrot.lane.b32.xlu0 %v7307, 96
    %v7325 = vpop.permute.xlu0 %7324
    %7326 = vrot.lane.b32.xlu0 %v7308, 96
    %v7327 = vpop.permute.xlu0 %7326
    %7328 = vrot.lane.b32.xlu0 %v7309, 96
    %v7329 = vpop.permute.xlu0 %7328
    %7330 = vrot.lane.b32.xlu0 %v7310, 96
    %v7331 = vpop.permute.xlu0 %7330
    %7332 = vrot.lane.b32.xlu0 %v7311, 96
    %v7333 = vpop.permute.xlu0 %7332
    %7334 = vrot.lane.b32.xlu0 %v7312, 96
    %v7335 = vpop.permute.xlu0 %7334
    %7336 = vrot.lane.b32.xlu0 %v7313, 96
    %v7337 = vpop.permute.xlu0 %7336
    %v7338 = vsel %vm320, %v7323, %v7325
    %v7339 = vsel %vm320, %v7325, %v7327
    %v7340 = vsel %vm320, %v7327, %v7329
    %v7341 = vsel %vm320, %v7329, %v7331
    %v7342 = vsel %vm320, %v7331, %v7333
    %v7343 = vsel %vm320, %v7333, %v7335
    %v7344 = vsel %vm320, %v7335, %v7337
    %v7352 = vadd.f32 %v7297, %v7338
    %v7353 = vadd.f32 %v7298, %v7339
    %v7354 = vadd.f32 %v7299, %v7340
    %v7355 = vadd.f32 %v7300, %v7341
    %v7356 = vadd.f32 %v7301, %v7342
    %v7357 = vadd.f32 %v7302, %v7343
    %v7358 = vadd.f32 %v7303, %v7344
    %s7359 = sld [smem:[#allocation2 + $0x6a]]
    %v7360 = vstv %s7359
    %v7361 = vmul.f32 %v7360, %v279
    %v7362 = vmul.f32 %v7360, %v280
    %v7363 = vmul.f32 %v7360, %v281
    %v7364 = vmul.f32 %v7360, %v282
    %v7365 = vmul.f32 %v7360, %v283
    %v7366 = vmul.f32 %v7360, %v284
    %v7367 = vmul.f32 %v7360, %v285
    %v7368 = vmul.f32 %v7360, %v286
    %7377 = vrot.lane.b32.xlu0 %v7361, 95
    %v7378 = vpop.permute.xlu0 %7377
    %7379 = vrot.lane.b32.xlu0 %v7362, 95
    %v7380 = vpop.permute.xlu0 %7379
    %7381 = vrot.lane.b32.xlu0 %v7363, 95
    %v7382 = vpop.permute.xlu0 %7381
    %7383 = vrot.lane.b32.xlu0 %v7364, 95
    %v7384 = vpop.permute.xlu0 %7383
    %7385 = vrot.lane.b32.xlu0 %v7365, 95
    %v7386 = vpop.permute.xlu0 %7385
    %7387 = vrot.lane.b32.xlu0 %v7366, 95
    %v7388 = vpop.permute.xlu0 %7387
    %7389 = vrot.lane.b32.xlu0 %v7367, 95
    %v7390 = vpop.permute.xlu0 %7389
    %7391 = vrot.lane.b32.xlu0 %v7368, 95
    %v7392 = vpop.permute.xlu0 %7391
    %v7393 = vsel %vm376, %v7378, %v7380
    %v7394 = vsel %vm376, %v7380, %v7382
    %v7395 = vsel %vm376, %v7382, %v7384
    %v7396 = vsel %vm376, %v7384, %v7386
    %v7397 = vsel %vm376, %v7386, %v7388
    %v7398 = vsel %vm376, %v7388, %v7390
    %v7399 = vsel %vm376, %v7390, %v7392
    %v7407 = vadd.f32 %v7352, %v7393
    %v7408 = vadd.f32 %v7353, %v7394
    %v7409 = vadd.f32 %v7354, %v7395
    %v7410 = vadd.f32 %v7355, %v7396
    %v7411 = vadd.f32 %v7356, %v7397
    %v7412 = vadd.f32 %v7357, %v7398
    %v7413 = vadd.f32 %v7358, %v7399
    %s7414 = sld [smem:[#allocation2 + $0x6b]]
    %v7415 = vstv %s7414
    %v7416 = vmul.f32 %v7415, %v279
    %v7417 = vmul.f32 %v7415, %v280
    %v7418 = vmul.f32 %v7415, %v281
    %v7419 = vmul.f32 %v7415, %v282
    %v7420 = vmul.f32 %v7415, %v283
    %v7421 = vmul.f32 %v7415, %v284
    %v7422 = vmul.f32 %v7415, %v285
    %v7423 = vmul.f32 %v7415, %v286
    %7432 = vrot.lane.b32.xlu0 %v7416, 94
    %v7433 = vpop.permute.xlu0 %7432
    %7434 = vrot.lane.b32.xlu0 %v7417, 94
    %v7435 = vpop.permute.xlu0 %7434
    %7436 = vrot.lane.b32.xlu0 %v7418, 94
    %v7437 = vpop.permute.xlu0 %7436
    %7438 = vrot.lane.b32.xlu0 %v7419, 94
    %v7439 = vpop.permute.xlu0 %7438
    %7440 = vrot.lane.b32.xlu0 %v7420, 94
    %v7441 = vpop.permute.xlu0 %7440
    %7442 = vrot.lane.b32.xlu0 %v7421, 94
    %v7443 = vpop.permute.xlu0 %7442
    %7444 = vrot.lane.b32.xlu0 %v7422, 94
    %v7445 = vpop.permute.xlu0 %7444
    %7446 = vrot.lane.b32.xlu0 %v7423, 94
    %v7447 = vpop.permute.xlu0 %7446
    %v7448 = vsel %vm432, %v7433, %v7435
    %v7449 = vsel %vm432, %v7435, %v7437
    %v7450 = vsel %vm432, %v7437, %v7439
    %v7451 = vsel %vm432, %v7439, %v7441
    %v7452 = vsel %vm432, %v7441, %v7443
    %v7453 = vsel %vm432, %v7443, %v7445
    %v7454 = vsel %vm432, %v7445, %v7447
    %v7462 = vadd.f32 %v7407, %v7448
    %v7463 = vadd.f32 %v7408, %v7449
    %v7464 = vadd.f32 %v7409, %v7450
    %v7465 = vadd.f32 %v7410, %v7451
    %v7466 = vadd.f32 %v7411, %v7452
    %v7467 = vadd.f32 %v7412, %v7453
    %v7468 = vadd.f32 %v7413, %v7454
    %s7469 = sld [smem:[#allocation2 + $0x6c]]
    %v7470 = vstv %s7469
    %v7471 = vmul.f32 %v7470, %v279
    %v7472 = vmul.f32 %v7470, %v280
    %v7473 = vmul.f32 %v7470, %v281
    %v7474 = vmul.f32 %v7470, %v282
    %v7475 = vmul.f32 %v7470, %v283
    %v7476 = vmul.f32 %v7470, %v284
    %v7477 = vmul.f32 %v7470, %v285
    %v7478 = vmul.f32 %v7470, %v286
    %7487 = vrot.lane.b32.xlu0 %v7471, 93
    %v7488 = vpop.permute.xlu0 %7487
    %7489 = vrot.lane.b32.xlu0 %v7472, 93
    %v7490 = vpop.permute.xlu0 %7489
    %7491 = vrot.lane.b32.xlu0 %v7473, 93
    %v7492 = vpop.permute.xlu0 %7491
    %7493 = vrot.lane.b32.xlu0 %v7474, 93
    %v7494 = vpop.permute.xlu0 %7493
    %7495 = vrot.lane.b32.xlu0 %v7475, 93
    %v7496 = vpop.permute.xlu0 %7495
    %7497 = vrot.lane.b32.xlu0 %v7476, 93
    %v7498 = vpop.permute.xlu0 %7497
    %7499 = vrot.lane.b32.xlu0 %v7477, 93
    %v7500 = vpop.permute.xlu0 %7499
    %7501 = vrot.lane.b32.xlu0 %v7478, 93
    %v7502 = vpop.permute.xlu0 %7501
    %v7503 = vsel %vm488, %v7488, %v7490
    %v7504 = vsel %vm488, %v7490, %v7492
    %v7505 = vsel %vm488, %v7492, %v7494
    %v7506 = vsel %vm488, %v7494, %v7496
    %v7507 = vsel %vm488, %v7496, %v7498
    %v7508 = vsel %vm488, %v7498, %v7500
    %v7509 = vsel %vm488, %v7500, %v7502
    %v7517 = vadd.f32 %v7462, %v7503
    %v7518 = vadd.f32 %v7463, %v7504
    %v7519 = vadd.f32 %v7464, %v7505
    %v7520 = vadd.f32 %v7465, %v7506
    %v7521 = vadd.f32 %v7466, %v7507
    %v7522 = vadd.f32 %v7467, %v7508
    %v7523 = vadd.f32 %v7468, %v7509
    %s7524 = sld [smem:[#allocation2 + $0x6d]]
    %v7525 = vstv %s7524
    %v7526 = vmul.f32 %v7525, %v279
    %v7527 = vmul.f32 %v7525, %v280
    %v7528 = vmul.f32 %v7525, %v281
    %v7529 = vmul.f32 %v7525, %v282
    %v7530 = vmul.f32 %v7525, %v283
    %v7531 = vmul.f32 %v7525, %v284
    %v7532 = vmul.f32 %v7525, %v285
    %v7533 = vmul.f32 %v7525, %v286
    %7542 = vrot.lane.b32.xlu0 %v7526, 92
    %v7543 = vpop.permute.xlu0 %7542
    %7544 = vrot.lane.b32.xlu0 %v7527, 92
    %v7545 = vpop.permute.xlu0 %7544
    %7546 = vrot.lane.b32.xlu0 %v7528, 92
    %v7547 = vpop.permute.xlu0 %7546
    %7548 = vrot.lane.b32.xlu0 %v7529, 92
    %v7549 = vpop.permute.xlu0 %7548
    %7550 = vrot.lane.b32.xlu0 %v7530, 92
    %v7551 = vpop.permute.xlu0 %7550
    %7552 = vrot.lane.b32.xlu0 %v7531, 92
    %v7553 = vpop.permute.xlu0 %7552
    %7554 = vrot.lane.b32.xlu0 %v7532, 92
    %v7555 = vpop.permute.xlu0 %7554
    %7556 = vrot.lane.b32.xlu0 %v7533, 92
    %v7557 = vpop.permute.xlu0 %7556
    %v7558 = vsel %vm544, %v7543, %v7545
    %v7559 = vsel %vm544, %v7545, %v7547
    %v7560 = vsel %vm544, %v7547, %v7549
    %v7561 = vsel %vm544, %v7549, %v7551
    %v7562 = vsel %vm544, %v7551, %v7553
    %v7563 = vsel %vm544, %v7553, %v7555
    %v7564 = vsel %vm544, %v7555, %v7557
    %v7572 = vadd.f32 %v7517, %v7558
    %v7573 = vadd.f32 %v7518, %v7559
    %v7574 = vadd.f32 %v7519, %v7560
    %v7575 = vadd.f32 %v7520, %v7561
    %v7576 = vadd.f32 %v7521, %v7562
    %v7577 = vadd.f32 %v7522, %v7563
    %v7578 = vadd.f32 %v7523, %v7564
    %s7579 = sld [smem:[#allocation2 + $0x6e]]
    %v7580 = vstv %s7579
    %v7581 = vmul.f32 %v7580, %v279
    %v7582 = vmul.f32 %v7580, %v280
    %v7583 = vmul.f32 %v7580, %v281
    %v7584 = vmul.f32 %v7580, %v282
    %v7585 = vmul.f32 %v7580, %v283
    %v7586 = vmul.f32 %v7580, %v284
    %v7587 = vmul.f32 %v7580, %v285
    %v7588 = vmul.f32 %v7580, %v286
    %7597 = vrot.lane.b32.xlu0 %v7581, 64
    %v7598 = vpop.permute.xlu0 %7597
    %7599 = vrot.lane.b32.xlu0 %v7582, 64
    %v7600 = vpop.permute.xlu0 %7599
    %7601 = vrot.lane.b32.xlu0 %v7583, 64
    %v7602 = vpop.permute.xlu0 %7601
    %7603 = vrot.lane.b32.xlu0 %v7584, 64
    %v7604 = vpop.permute.xlu0 %7603
    %7605 = vrot.lane.b32.xlu0 %v7585, 64
    %v7606 = vpop.permute.xlu0 %7605
    %7607 = vrot.lane.b32.xlu0 %v7586, 64
    %v7608 = vpop.permute.xlu0 %7607
    %7609 = vrot.lane.b32.xlu0 %v7587, 64
    %v7610 = vpop.permute.xlu0 %7609
    %7611 = vrot.lane.b32.xlu0 %v7588, 64
    %v7612 = vpop.permute.xlu0 %7611
    %v7613 = vsel %vm600, %v7598, %v7600
    %v7614 = vsel %vm600, %v7600, %v7602
    %v7615 = vsel %vm600, %v7602, %v7604
    %v7616 = vsel %vm600, %v7604, %v7606
    %v7617 = vsel %vm600, %v7606, %v7608
    %v7618 = vsel %vm600, %v7608, %v7610
    %v7619 = vsel %vm600, %v7610, %v7612
    %v7627 = vadd.f32 %v7572, %v7613
    %v7628 = vadd.f32 %v7573, %v7614
    %v7629 = vadd.f32 %v7574, %v7615
    %v7630 = vadd.f32 %v7575, %v7616
    %v7631 = vadd.f32 %v7576, %v7617
    %v7632 = vadd.f32 %v7577, %v7618
    %v7633 = vadd.f32 %v7578, %v7619
    %s7634 = sld [smem:[#allocation2 + $0x6f]]
    %v7635 = vstv %s7634
    %v7636 = vmul.f32 %v7635, %v279
    %v7637 = vmul.f32 %v7635, %v280
    %v7638 = vmul.f32 %v7635, %v281
    %v7639 = vmul.f32 %v7635, %v282
    %v7640 = vmul.f32 %v7635, %v283
    %v7641 = vmul.f32 %v7635, %v284
    %v7642 = vmul.f32 %v7635, %v285
    %v7643 = vmul.f32 %v7635, %v286
    %7652 = vrot.lane.b32.xlu0 %v7636, 63
    %v7653 = vpop.permute.xlu0 %7652
    %7654 = vrot.lane.b32.xlu0 %v7637, 63
    %v7655 = vpop.permute.xlu0 %7654
    %7656 = vrot.lane.b32.xlu0 %v7638, 63
    %v7657 = vpop.permute.xlu0 %7656
    %7658 = vrot.lane.b32.xlu0 %v7639, 63
    %v7659 = vpop.permute.xlu0 %7658
    %7660 = vrot.lane.b32.xlu0 %v7640, 63
    %v7661 = vpop.permute.xlu0 %7660
    %7662 = vrot.lane.b32.xlu0 %v7641, 63
    %v7663 = vpop.permute.xlu0 %7662
    %7664 = vrot.lane.b32.xlu0 %v7642, 63
    %v7665 = vpop.permute.xlu0 %7664
    %7666 = vrot.lane.b32.xlu0 %v7643, 63
    %v7667 = vpop.permute.xlu0 %7666
    %v7668 = vsel %vm656, %v7653, %v7655
    %v7669 = vsel %vm656, %v7655, %v7657
    %v7670 = vsel %vm656, %v7657, %v7659
    %v7671 = vsel %vm656, %v7659, %v7661
    %v7672 = vsel %vm656, %v7661, %v7663
    %v7673 = vsel %vm656, %v7663, %v7665
    %v7674 = vsel %vm656, %v7665, %v7667
    %v7682 = vadd.f32 %v7627, %v7668
    %v7683 = vadd.f32 %v7628, %v7669
    %v7684 = vadd.f32 %v7629, %v7670
    %v7685 = vadd.f32 %v7630, %v7671
    %v7686 = vadd.f32 %v7631, %v7672
    %v7687 = vadd.f32 %v7632, %v7673
    %v7688 = vadd.f32 %v7633, %v7674
    %s7689 = sld [smem:[#allocation2 + $0x70]]
    %v7690 = vstv %s7689
    %v7691 = vmul.f32 %v7690, %v279
    %v7692 = vmul.f32 %v7690, %v280
    %v7693 = vmul.f32 %v7690, %v281
    %v7694 = vmul.f32 %v7690, %v282
    %v7695 = vmul.f32 %v7690, %v283
    %v7696 = vmul.f32 %v7690, %v284
    %v7697 = vmul.f32 %v7690, %v285
    %v7698 = vmul.f32 %v7690, %v286
    %7707 = vrot.lane.b32.xlu0 %v7691, 62
    %v7708 = vpop.permute.xlu0 %7707
    %7709 = vrot.lane.b32.xlu0 %v7692, 62
    %v7710 = vpop.permute.xlu0 %7709
    %7711 = vrot.lane.b32.xlu0 %v7693, 62
    %v7712 = vpop.permute.xlu0 %7711
    %7713 = vrot.lane.b32.xlu0 %v7694, 62
    %v7714 = vpop.permute.xlu0 %7713
    %7715 = vrot.lane.b32.xlu0 %v7695, 62
    %v7716 = vpop.permute.xlu0 %7715
    %7717 = vrot.lane.b32.xlu0 %v7696, 62
    %v7718 = vpop.permute.xlu0 %7717
    %7719 = vrot.lane.b32.xlu0 %v7697, 62
    %v7720 = vpop.permute.xlu0 %7719
    %7721 = vrot.lane.b32.xlu0 %v7698, 62
    %v7722 = vpop.permute.xlu0 %7721
    %v7723 = vsel %vm712, %v7708, %v7710
    %v7724 = vsel %vm712, %v7710, %v7712
    %v7725 = vsel %vm712, %v7712, %v7714
    %v7726 = vsel %vm712, %v7714, %v7716
    %v7727 = vsel %vm712, %v7716, %v7718
    %v7728 = vsel %vm712, %v7718, %v7720
    %v7729 = vsel %vm712, %v7720, %v7722
    %v7737 = vadd.f32 %v7682, %v7723
    %v7738 = vadd.f32 %v7683, %v7724
    %v7739 = vadd.f32 %v7684, %v7725
    %v7740 = vadd.f32 %v7685, %v7726
    %v7741 = vadd.f32 %v7686, %v7727
    %v7742 = vadd.f32 %v7687, %v7728
    %v7743 = vadd.f32 %v7688, %v7729
    %s7744 = sld [smem:[#allocation2 + $0x71]]
    %v7745 = vstv %s7744
    %v7746 = vmul.f32 %v7745, %v279
    %v7747 = vmul.f32 %v7745, %v280
    %v7748 = vmul.f32 %v7745, %v281
    %v7749 = vmul.f32 %v7745, %v282
    %v7750 = vmul.f32 %v7745, %v283
    %v7751 = vmul.f32 %v7745, %v284
    %v7752 = vmul.f32 %v7745, %v285
    %v7753 = vmul.f32 %v7745, %v286
    %7762 = vrot.lane.b32.xlu0 %v7746, 61
    %v7763 = vpop.permute.xlu0 %7762
    %7764 = vrot.lane.b32.xlu0 %v7747, 61
    %v7765 = vpop.permute.xlu0 %7764
    %7766 = vrot.lane.b32.xlu0 %v7748, 61
    %v7767 = vpop.permute.xlu0 %7766
    %7768 = vrot.lane.b32.xlu0 %v7749, 61
    %v7769 = vpop.permute.xlu0 %7768
    %7770 = vrot.lane.b32.xlu0 %v7750, 61
    %v7771 = vpop.permute.xlu0 %7770
    %7772 = vrot.lane.b32.xlu0 %v7751, 61
    %v7773 = vpop.permute.xlu0 %7772
    %7774 = vrot.lane.b32.xlu0 %v7752, 61
    %v7775 = vpop.permute.xlu0 %7774
    %7776 = vrot.lane.b32.xlu0 %v7753, 61
    %v7777 = vpop.permute.xlu0 %7776
    %v7778 = vsel %vm768, %v7763, %v7765
    %v7779 = vsel %vm768, %v7765, %v7767
    %v7780 = vsel %vm768, %v7767, %v7769
    %v7781 = vsel %vm768, %v7769, %v7771
    %v7782 = vsel %vm768, %v7771, %v7773
    %v7783 = vsel %vm768, %v7773, %v7775
    %v7784 = vsel %vm768, %v7775, %v7777
    %v7792 = vadd.f32 %v7737, %v7778
    %v7793 = vadd.f32 %v7738, %v7779
    %v7794 = vadd.f32 %v7739, %v7780
    %v7795 = vadd.f32 %v7740, %v7781
    %v7796 = vadd.f32 %v7741, %v7782
    %v7797 = vadd.f32 %v7742, %v7783
    %v7798 = vadd.f32 %v7743, %v7784
    %s7799 = sld [smem:[#allocation2 + $0x72]]
    %v7800 = vstv %s7799
    %v7801 = vmul.f32 %v7800, %v279
    %v7802 = vmul.f32 %v7800, %v280
    %v7803 = vmul.f32 %v7800, %v281
    %v7804 = vmul.f32 %v7800, %v282
    %v7805 = vmul.f32 %v7800, %v283
    %v7806 = vmul.f32 %v7800, %v284
    %v7807 = vmul.f32 %v7800, %v285
    %v7808 = vmul.f32 %v7800, %v286
    %7817 = vrot.lane.b32.xlu0 %v7801, 60
    %v7818 = vpop.permute.xlu0 %7817
    %7819 = vrot.lane.b32.xlu0 %v7802, 60
    %v7820 = vpop.permute.xlu0 %7819
    %7821 = vrot.lane.b32.xlu0 %v7803, 60
    %v7822 = vpop.permute.xlu0 %7821
    %7823 = vrot.lane.b32.xlu0 %v7804, 60
    %v7824 = vpop.permute.xlu0 %7823
    %7825 = vrot.lane.b32.xlu0 %v7805, 60
    %v7826 = vpop.permute.xlu0 %7825
    %7827 = vrot.lane.b32.xlu0 %v7806, 60
    %v7828 = vpop.permute.xlu0 %7827
    %7829 = vrot.lane.b32.xlu0 %v7807, 60
    %v7830 = vpop.permute.xlu0 %7829
    %7831 = vrot.lane.b32.xlu0 %v7808, 60
    %v7832 = vpop.permute.xlu0 %7831
    %v7833 = vsel %vm824, %v7818, %v7820
    %v7834 = vsel %vm824, %v7820, %v7822
    %v7835 = vsel %vm824, %v7822, %v7824
    %v7836 = vsel %vm824, %v7824, %v7826
    %v7837 = vsel %vm824, %v7826, %v7828
    %v7838 = vsel %vm824, %v7828, %v7830
    %v7839 = vsel %vm824, %v7830, %v7832
    %v7847 = vadd.f32 %v7792, %v7833
    %v7848 = vadd.f32 %v7793, %v7834
    %v7849 = vadd.f32 %v7794, %v7835
    %v7850 = vadd.f32 %v7795, %v7836
    %v7851 = vadd.f32 %v7796, %v7837
    %v7852 = vadd.f32 %v7797, %v7838
    %v7853 = vadd.f32 %v7798, %v7839
    %s7854 = sld [smem:[#allocation2 + $0x73]]
    %v7855 = vstv %s7854
    %v7856 = vmul.f32 %v7855, %v279
    %v7857 = vmul.f32 %v7855, %v280
    %v7858 = vmul.f32 %v7855, %v281
    %v7859 = vmul.f32 %v7855, %v282
    %v7860 = vmul.f32 %v7855, %v283
    %v7861 = vmul.f32 %v7855, %v284
    %v7862 = vmul.f32 %v7855, %v285
    %v7863 = vmul.f32 %v7855, %v286
    %7872 = vrot.lane.b32.xlu0 %v7856, 32
    %v7873 = vpop.permute.xlu0 %7872
    %7874 = vrot.lane.b32.xlu0 %v7857, 32
    %v7875 = vpop.permute.xlu0 %7874
    %7876 = vrot.lane.b32.xlu0 %v7858, 32
    %v7877 = vpop.permute.xlu0 %7876
    %7878 = vrot.lane.b32.xlu0 %v7859, 32
    %v7879 = vpop.permute.xlu0 %7878
    %7880 = vrot.lane.b32.xlu0 %v7860, 32
    %v7881 = vpop.permute.xlu0 %7880
    %7882 = vrot.lane.b32.xlu0 %v7861, 32
    %v7883 = vpop.permute.xlu0 %7882
    %7884 = vrot.lane.b32.xlu0 %v7862, 32
    %v7885 = vpop.permute.xlu0 %7884
    %7886 = vrot.lane.b32.xlu0 %v7863, 32
    %v7887 = vpop.permute.xlu0 %7886
    %v7888 = vsel %vm880, %v7873, %v7875
    %v7889 = vsel %vm880, %v7875, %v7877
    %v7890 = vsel %vm880, %v7877, %v7879
    %v7891 = vsel %vm880, %v7879, %v7881
    %v7892 = vsel %vm880, %v7881, %v7883
    %v7893 = vsel %vm880, %v7883, %v7885
    %v7894 = vsel %vm880, %v7885, %v7887
    %v7902 = vadd.f32 %v7847, %v7888
    %v7903 = vadd.f32 %v7848, %v7889
    %v7904 = vadd.f32 %v7849, %v7890
    %v7905 = vadd.f32 %v7850, %v7891
    %v7906 = vadd.f32 %v7851, %v7892
    %v7907 = vadd.f32 %v7852, %v7893
    %v7908 = vadd.f32 %v7853, %v7894
    %s7909 = sld [smem:[#allocation2 + $0x74]]
    %v7910 = vstv %s7909
    %v7911 = vmul.f32 %v7910, %v279
    %v7912 = vmul.f32 %v7910, %v280
    %v7913 = vmul.f32 %v7910, %v281
    %v7914 = vmul.f32 %v7910, %v282
    %v7915 = vmul.f32 %v7910, %v283
    %v7916 = vmul.f32 %v7910, %v284
    %v7917 = vmul.f32 %v7910, %v285
    %v7918 = vmul.f32 %v7910, %v286
    %7927 = vrot.lane.b32.xlu0 %v7911, 31
    %v7928 = vpop.permute.xlu0 %7927
    %7929 = vrot.lane.b32.xlu0 %v7912, 31
    %v7930 = vpop.permute.xlu0 %7929
    %7931 = vrot.lane.b32.xlu0 %v7913, 31
    %v7932 = vpop.permute.xlu0 %7931
    %7933 = vrot.lane.b32.xlu0 %v7914, 31
    %v7934 = vpop.permute.xlu0 %7933
    %7935 = vrot.lane.b32.xlu0 %v7915, 31
    %v7936 = vpop.permute.xlu0 %7935
    %7937 = vrot.lane.b32.xlu0 %v7916, 31
    %v7938 = vpop.permute.xlu0 %7937
    %7939 = vrot.lane.b32.xlu0 %v7917, 31
    %v7940 = vpop.permute.xlu0 %7939
    %7941 = vrot.lane.b32.xlu0 %v7918, 31
    %v7942 = vpop.permute.xlu0 %7941
    %v7943 = vsel %vm936, %v7928, %v7930
    %v7944 = vsel %vm936, %v7930, %v7932
    %v7945 = vsel %vm936, %v7932, %v7934
    %v7946 = vsel %vm936, %v7934, %v7936
    %v7947 = vsel %vm936, %v7936, %v7938
    %v7948 = vsel %vm936, %v7938, %v7940
    %v7949 = vsel %vm936, %v7940, %v7942
    %v7957 = vadd.f32 %v7902, %v7943
    %v7958 = vadd.f32 %v7903, %v7944
    %v7959 = vadd.f32 %v7904, %v7945
    %v7960 = vadd.f32 %v7905, %v7946
    %v7961 = vadd.f32 %v7906, %v7947
    %v7962 = vadd.f32 %v7907, %v7948
    %v7963 = vadd.f32 %v7908, %v7949
    %s7964 = sld [smem:[#allocation2 + $0x75]]
    %v7965 = vstv %s7964
    %v7966 = vmul.f32 %v7965, %v279
    %v7967 = vmul.f32 %v7965, %v280
    %v7968 = vmul.f32 %v7965, %v281
    %v7969 = vmul.f32 %v7965, %v282
    %v7970 = vmul.f32 %v7965, %v283
    %v7971 = vmul.f32 %v7965, %v284
    %v7972 = vmul.f32 %v7965, %v285
    %v7973 = vmul.f32 %v7965, %v286
    %7982 = vrot.lane.b32.xlu0 %v7966, 30
    %v7983 = vpop.permute.xlu0 %7982
    %7984 = vrot.lane.b32.xlu0 %v7967, 30
    %v7985 = vpop.permute.xlu0 %7984
    %7986 = vrot.lane.b32.xlu0 %v7968, 30
    %v7987 = vpop.permute.xlu0 %7986
    %7988 = vrot.lane.b32.xlu0 %v7969, 30
    %v7989 = vpop.permute.xlu0 %7988
    %7990 = vrot.lane.b32.xlu0 %v7970, 30
    %v7991 = vpop.permute.xlu0 %7990
    %7992 = vrot.lane.b32.xlu0 %v7971, 30
    %v7993 = vpop.permute.xlu0 %7992
    %7994 = vrot.lane.b32.xlu0 %v7972, 30
    %v7995 = vpop.permute.xlu0 %7994
    %7996 = vrot.lane.b32.xlu0 %v7973, 30
    %v7997 = vpop.permute.xlu0 %7996
    %v7998 = vsel %vm992, %v7983, %v7985
    %v7999 = vsel %vm992, %v7985, %v7987
    %v8000 = vsel %vm992, %v7987, %v7989
    %v8001 = vsel %vm992, %v7989, %v7991
    %v8002 = vsel %vm992, %v7991, %v7993
    %v8003 = vsel %vm992, %v7993, %v7995
    %v8004 = vsel %vm992, %v7995, %v7997
    %v8012 = vadd.f32 %v7957, %v7998
    %v8013 = vadd.f32 %v7958, %v7999
    %v8014 = vadd.f32 %v7959, %v8000
    %v8015 = vadd.f32 %v7960, %v8001
    %v8016 = vadd.f32 %v7961, %v8002
    %v8017 = vadd.f32 %v7962, %v8003
    %v8018 = vadd.f32 %v7963, %v8004
    %s8019 = sld [smem:[#allocation2 + $0x76]]
    %v8020 = vstv %s8019
    %v8021 = vmul.f32 %v8020, %v279
    %v8022 = vmul.f32 %v8020, %v280
    %v8023 = vmul.f32 %v8020, %v281
    %v8024 = vmul.f32 %v8020, %v282
    %v8025 = vmul.f32 %v8020, %v283
    %v8026 = vmul.f32 %v8020, %v284
    %v8027 = vmul.f32 %v8020, %v285
    %v8028 = vmul.f32 %v8020, %v286
    %8037 = vrot.lane.b32.xlu0 %v8021, 29
    %v8038 = vpop.permute.xlu0 %8037
    %8039 = vrot.lane.b32.xlu0 %v8022, 29
    %v8040 = vpop.permute.xlu0 %8039
    %8041 = vrot.lane.b32.xlu0 %v8023, 29
    %v8042 = vpop.permute.xlu0 %8041
    %8043 = vrot.lane.b32.xlu0 %v8024, 29
    %v8044 = vpop.permute.xlu0 %8043
    %8045 = vrot.lane.b32.xlu0 %v8025, 29
    %v8046 = vpop.permute.xlu0 %8045
    %8047 = vrot.lane.b32.xlu0 %v8026, 29
    %v8048 = vpop.permute.xlu0 %8047
    %8049 = vrot.lane.b32.xlu0 %v8027, 29
    %v8050 = vpop.permute.xlu0 %8049
    %8051 = vrot.lane.b32.xlu0 %v8028, 29
    %v8052 = vpop.permute.xlu0 %8051
    %v8053 = vsel %vm1048, %v8038, %v8040
    %v8054 = vsel %vm1048, %v8040, %v8042
    %v8055 = vsel %vm1048, %v8042, %v8044
    %v8056 = vsel %vm1048, %v8044, %v8046
    %v8057 = vsel %vm1048, %v8046, %v8048
    %v8058 = vsel %vm1048, %v8048, %v8050
    %v8059 = vsel %vm1048, %v8050, %v8052
    %v8067 = vadd.f32 %v8012, %v8053
    %v8068 = vadd.f32 %v8013, %v8054
    %v8069 = vadd.f32 %v8014, %v8055
    %v8070 = vadd.f32 %v8015, %v8056
    %v8071 = vadd.f32 %v8016, %v8057
    %v8072 = vadd.f32 %v8017, %v8058
    %v8073 = vadd.f32 %v8018, %v8059
    %s8074 = sld [smem:[#allocation2 + $0x77]]
    %v8075 = vstv %s8074
    %v8076 = vmul.f32 %v8075, %v279
    %v8077 = vmul.f32 %v8075, %v280
    %v8078 = vmul.f32 %v8075, %v281
    %v8079 = vmul.f32 %v8075, %v282
    %v8080 = vmul.f32 %v8075, %v283
    %v8081 = vmul.f32 %v8075, %v284
    %v8082 = vmul.f32 %v8075, %v285
    %v8083 = vmul.f32 %v8075, %v286
    %8092 = vrot.lane.b32.xlu0 %v8076, 28
    %v8093 = vpop.permute.xlu0 %8092
    %8094 = vrot.lane.b32.xlu0 %v8077, 28
    %v8095 = vpop.permute.xlu0 %8094
    %8096 = vrot.lane.b32.xlu0 %v8078, 28
    %v8097 = vpop.permute.xlu0 %8096
    %8098 = vrot.lane.b32.xlu0 %v8079, 28
    %v8099 = vpop.permute.xlu0 %8098
    %8100 = vrot.lane.b32.xlu0 %v8080, 28
    %v8101 = vpop.permute.xlu0 %8100
    %8102 = vrot.lane.b32.xlu0 %v8081, 28
    %v8103 = vpop.permute.xlu0 %8102
    %8104 = vrot.lane.b32.xlu0 %v8082, 28
    %v8105 = vpop.permute.xlu0 %8104
    %8106 = vrot.lane.b32.xlu0 %v8083, 28
    %v8107 = vpop.permute.xlu0 %8106
    %v8108 = vsel %vm1104, %v8093, %v8095
    %v8109 = vsel %vm1104, %v8095, %v8097
    %v8110 = vsel %vm1104, %v8097, %v8099
    %v8111 = vsel %vm1104, %v8099, %v8101
    %v8112 = vsel %vm1104, %v8101, %v8103
    %v8113 = vsel %vm1104, %v8103, %v8105
    %v8114 = vsel %vm1104, %v8105, %v8107
    %v8122 = vadd.f32 %v8067, %v8108
    %v8123 = vadd.f32 %v8068, %v8109
    %v8124 = vadd.f32 %v8069, %v8110
    %v8125 = vadd.f32 %v8070, %v8111
    %v8126 = vadd.f32 %v8071, %v8112
    %v8127 = vadd.f32 %v8072, %v8113
    %v8128 = vadd.f32 %v8073, %v8114
    %s8129 = sld [smem:[#allocation2 + $0x78]]
    %v8130 = vstv %s8129
    %v8131 = vmul.f32 %v8130, %v280
    %v8132 = vmul.f32 %v8130, %v281
    %v8133 = vmul.f32 %v8130, %v282
    %v8134 = vmul.f32 %v8130, %v283
    %v8135 = vmul.f32 %v8130, %v284
    %v8136 = vmul.f32 %v8130, %v285
    %v8137 = vmul.f32 %v8130, %v286
    %v8138 = vadd.f32 %v8122, %v8131
    %v8139 = vadd.f32 %v8123, %v8132
    %v8140 = vadd.f32 %v8124, %v8133
    %v8141 = vadd.f32 %v8125, %v8134
    %v8142 = vadd.f32 %v8126, %v8135
    %v8143 = vadd.f32 %v8127, %v8136
    %v8144 = vadd.f32 %v8128, %v8137
    %s8145 = sld [smem:[#allocation2 + $0x79]]
    %v8146 = vstv %s8145
    %v8147 = vmul.f32 %v8146, %v280
    %v8148 = vmul.f32 %v8146, %v281
    %v8149 = vmul.f32 %v8146, %v282
    %v8150 = vmul.f32 %v8146, %v283
    %v8151 = vmul.f32 %v8146, %v284
    %v8152 = vmul.f32 %v8146, %v285
    %v8153 = vmul.f32 %v8146, %v286
    %8161 = vrot.lane.b32.xlu0 %v8147, 127
    %v8162 = vpop.permute.xlu0 %8161
    %8163 = vrot.lane.b32.xlu0 %v8148, 127
    %v8164 = vpop.permute.xlu0 %8163
    %8165 = vrot.lane.b32.xlu0 %v8149, 127
    %v8166 = vpop.permute.xlu0 %8165
    %8167 = vrot.lane.b32.xlu0 %v8150, 127
    %v8168 = vpop.permute.xlu0 %8167
    %8169 = vrot.lane.b32.xlu0 %v8151, 127
    %v8170 = vpop.permute.xlu0 %8169
    %8171 = vrot.lane.b32.xlu0 %v8152, 127
    %v8172 = vpop.permute.xlu0 %8171
    %8173 = vrot.lane.b32.xlu0 %v8153, 127
    %v8174 = vpop.permute.xlu0 %8173
    %v8175 = vsel %vm104, %v8162, %v8164
    %v8176 = vsel %vm104, %v8164, %v8166
    %v8177 = vsel %vm104, %v8166, %v8168
    %v8178 = vsel %vm104, %v8168, %v8170
    %v8179 = vsel %vm104, %v8170, %v8172
    %v8180 = vsel %vm104, %v8172, %v8174
    %v8188 = vadd.f32 %v8138, %v8175
    %v8189 = vadd.f32 %v8139, %v8176
    %v8190 = vadd.f32 %v8140, %v8177
    %v8191 = vadd.f32 %v8141, %v8178
    %v8192 = vadd.f32 %v8142, %v8179
    %v8193 = vadd.f32 %v8143, %v8180
    %v8194 = vadd.f32 %v8144, %v8174
    %s8195 = sld [smem:[#allocation2 + $0x7a]]
    %v8196 = vstv %s8195
    %v8197 = vmul.f32 %v8196, %v280
    %v8198 = vmul.f32 %v8196, %v281
    %v8199 = vmul.f32 %v8196, %v282
    %v8200 = vmul.f32 %v8196, %v283
    %v8201 = vmul.f32 %v8196, %v284
    %v8202 = vmul.f32 %v8196, %v285
    %v8203 = vmul.f32 %v8196, %v286
    %8211 = vrot.lane.b32.xlu0 %v8197, 126
    %v8212 = vpop.permute.xlu0 %8211
    %8213 = vrot.lane.b32.xlu0 %v8198, 126
    %v8214 = vpop.permute.xlu0 %8213
    %8215 = vrot.lane.b32.xlu0 %v8199, 126
    %v8216 = vpop.permute.xlu0 %8215
    %8217 = vrot.lane.b32.xlu0 %v8200, 126
    %v8218 = vpop.permute.xlu0 %8217
    %8219 = vrot.lane.b32.xlu0 %v8201, 126
    %v8220 = vpop.permute.xlu0 %8219
    %8221 = vrot.lane.b32.xlu0 %v8202, 126
    %v8222 = vpop.permute.xlu0 %8221
    %8223 = vrot.lane.b32.xlu0 %v8203, 126
    %v8224 = vpop.permute.xlu0 %8223
    %v8225 = vsel %vm155, %v8212, %v8214
    %v8226 = vsel %vm155, %v8214, %v8216
    %v8227 = vsel %vm155, %v8216, %v8218
    %v8228 = vsel %vm155, %v8218, %v8220
    %v8229 = vsel %vm155, %v8220, %v8222
    %v8230 = vsel %vm155, %v8222, %v8224
    %v8238 = vadd.f32 %v8188, %v8225
    %v8239 = vadd.f32 %v8189, %v8226
    %v8240 = vadd.f32 %v8190, %v8227
    %v8241 = vadd.f32 %v8191, %v8228
    %v8242 = vadd.f32 %v8192, %v8229
    %v8243 = vadd.f32 %v8193, %v8230
    %v8244 = vadd.f32 %v8194, %v8224
    %s8245 = sld [smem:[#allocation2 + $0x7b]]
    %v8246 = vstv %s8245
    %v8247 = vmul.f32 %v8246, %v280
    %v8248 = vmul.f32 %v8246, %v281
    %v8249 = vmul.f32 %v8246, %v282
    %v8250 = vmul.f32 %v8246, %v283
    %v8251 = vmul.f32 %v8246, %v284
    %v8252 = vmul.f32 %v8246, %v285
    %v8253 = vmul.f32 %v8246, %v286
    %8261 = vrot.lane.b32.xlu0 %v8247, 125
    %v8262 = vpop.permute.xlu0 %8261
    %8263 = vrot.lane.b32.xlu0 %v8248, 125
    %v8264 = vpop.permute.xlu0 %8263
    %8265 = vrot.lane.b32.xlu0 %v8249, 125
    %v8266 = vpop.permute.xlu0 %8265
    %8267 = vrot.lane.b32.xlu0 %v8250, 125
    %v8268 = vpop.permute.xlu0 %8267
    %8269 = vrot.lane.b32.xlu0 %v8251, 125
    %v8270 = vpop.permute.xlu0 %8269
    %8271 = vrot.lane.b32.xlu0 %v8252, 125
    %v8272 = vpop.permute.xlu0 %8271
    %8273 = vrot.lane.b32.xlu0 %v8253, 125
    %v8274 = vpop.permute.xlu0 %8273
    %v8275 = vsel %vm206, %v8262, %v8264
    %v8276 = vsel %vm206, %v8264, %v8266
    %v8277 = vsel %vm206, %v8266, %v8268
    %v8278 = vsel %vm206, %v8268, %v8270
    %v8279 = vsel %vm206, %v8270, %v8272
    %v8280 = vsel %vm206, %v8272, %v8274
    %v8288 = vadd.f32 %v8238, %v8275
    %v8289 = vadd.f32 %v8239, %v8276
    %v8290 = vadd.f32 %v8240, %v8277
    %v8291 = vadd.f32 %v8241, %v8278
    %v8292 = vadd.f32 %v8242, %v8279
    %v8293 = vadd.f32 %v8243, %v8280
    %v8294 = vadd.f32 %v8244, %v8274
    %s8295 = sld [smem:[#allocation2 + $0x7c]]
    %v8296 = vstv %s8295
    %v8297 = vmul.f32 %v8296, %v280
    %v8298 = vmul.f32 %v8296, %v281
    %v8299 = vmul.f32 %v8296, %v282
    %v8300 = vmul.f32 %v8296, %v283
    %v8301 = vmul.f32 %v8296, %v284
    %v8302 = vmul.f32 %v8296, %v285
    %v8303 = vmul.f32 %v8296, %v286
    %8311 = vrot.lane.b32.xlu0 %v8297, 124
    %v8312 = vpop.permute.xlu0 %8311
    %8313 = vrot.lane.b32.xlu0 %v8298, 124
    %v8314 = vpop.permute.xlu0 %8313
    %8315 = vrot.lane.b32.xlu0 %v8299, 124
    %v8316 = vpop.permute.xlu0 %8315
    %8317 = vrot.lane.b32.xlu0 %v8300, 124
    %v8318 = vpop.permute.xlu0 %8317
    %8319 = vrot.lane.b32.xlu0 %v8301, 124
    %v8320 = vpop.permute.xlu0 %8319
    %8321 = vrot.lane.b32.xlu0 %v8302, 124
    %v8322 = vpop.permute.xlu0 %8321
    %8323 = vrot.lane.b32.xlu0 %v8303, 124
    %v8324 = vpop.permute.xlu0 %8323
    %v8325 = vsel %vm257, %v8312, %v8314
    %v8326 = vsel %vm257, %v8314, %v8316
    %v8327 = vsel %vm257, %v8316, %v8318
    %v8328 = vsel %vm257, %v8318, %v8320
    %v8329 = vsel %vm257, %v8320, %v8322
    %v8330 = vsel %vm257, %v8322, %v8324
    %v8338 = vadd.f32 %v8288, %v8325
    %v8339 = vadd.f32 %v8289, %v8326
    %v8340 = vadd.f32 %v8290, %v8327
    %v8341 = vadd.f32 %v8291, %v8328
    %v8342 = vadd.f32 %v8292, %v8329
    %v8343 = vadd.f32 %v8293, %v8330
    %v8344 = vadd.f32 %v8294, %v8324
    %8352 = vrot.lane.b32.xlu0 %v8338, 127
    %v8353 = vpop.permute.xlu0 %8352
    %8354 = vrot.lane.b32.xlu0 %v8339, 127
    %v8355 = vpop.permute.xlu0 %8354
    %8356 = vrot.lane.b32.xlu0 %v8340, 127
    %v8357 = vpop.permute.xlu0 %8356
    %8358 = vrot.lane.b32.xlu0 %v8341, 127
    %v8359 = vpop.permute.xlu0 %8358
    %8360 = vrot.lane.b32.xlu0 %v8342, 127
    %v8361 = vpop.permute.xlu0 %8360
    %8362 = vrot.lane.b32.xlu0 %v8343, 127
    %v8363 = vpop.permute.xlu0 %8362
    %8364 = vrot.lane.b32.xlu0 %v8344, 127
    %v8365 = vpop.permute.xlu0 %8364
    %v8366 = vsel %vm104, %v8353, %v8355
    %v8367 = vsel %vm104, %v8355, %v8357
    %v8368 = vsel %vm104, %v8357, %v8359
    %v8369 = vsel %vm104, %v8359, %v8361
    %v8370 = vsel %vm104, %v8361, %v8363
    %v8371 = vsel %vm104, %v8363, %v8365
    %v8379 = vmax.f32 %v8338, %v8366
    %v8380 = vmax.f32 %v8339, %v8367
    %v8381 = vmax.f32 %v8340, %v8368
    %v8382 = vmax.f32 %v8341, %v8369
    %v8383 = vmax.f32 %v8342, %v8370
    %v8384 = vmax.f32 %v8343, %v8371
    %v8385 = vmax.f32 %v8344, %v8365
    %8393 = vrot.lane.b32.xlu0 %v8379, 96
    %v8394 = vpop.permute.xlu0 %8393
    %8395 = vrot.lane.b32.xlu0 %v8380, 96
    %v8396 = vpop.permute.xlu0 %8395
    %8397 = vrot.lane.b32.xlu0 %v8381, 96
    %v8398 = vpop.permute.xlu0 %8397
    %8399 = vrot.lane.b32.xlu0 %v8382, 96
    %v8400 = vpop.permute.xlu0 %8399
    %8401 = vrot.lane.b32.xlu0 %v8383, 96
    %v8402 = vpop.permute.xlu0 %8401
    %8403 = vrot.lane.b32.xlu0 %v8384, 96
    %v8404 = vpop.permute.xlu0 %8403
    %8405 = vrot.lane.b32.xlu0 %v8385, 96
    %v8406 = vpop.permute.xlu0 %8405
    %v8407 = vsel %vm320, %v8394, %v8396
    %v8408 = vsel %vm320, %v8396, %v8398
    %v8409 = vsel %vm320, %v8398, %v8400
    %v8410 = vsel %vm320, %v8400, %v8402
    %v8411 = vsel %vm320, %v8402, %v8404
    %v8412 = vsel %vm320, %v8404, %v8406
    %v8420 = vmax.f32 %v8379, %v8407
    %v8421 = vmax.f32 %v8380, %v8408
    %v8422 = vmax.f32 %v8381, %v8409
    %v8423 = vmax.f32 %v8382, %v8410
    %v8424 = vmax.f32 %v8383, %v8411
    %v8425 = vmax.f32 %v8384, %v8412
    %v8426 = vmax.f32 %v8385, %v8406
    %s8427 = sld [smem:[#allocation4 + $0x4]]
    %v8428 = vstv %s8427
    %v8429 = vadd.f32 %v8420, %v8428
    %v8430 = vadd.f32 %v8421, %v8428
    %v8431 = vadd.f32 %v8422, %v8428
    %v8432 = vadd.f32 %v8423, %v8428
    %v8433 = vadd.f32 %v8424, %v8428
    %v8434 = vadd.f32 %v8425, %v8428
    %v8435 = vadd.f32 %v8426, %v8428
    %v8436 = vmax.f32 %v8429, 0.0
    %v8437 = vmax.f32 %v8430, 0.0
    %v8438 = vmax.f32 %v8431, 0.0
    %v8439 = vmax.f32 %v8432, 0.0
    %v8440 = vmax.f32 %v8433, 0.0
    %v8441 = vmax.f32 %v8434, 0.0
    %v8442 = vmax.f32 %v8435, 0.0
    %s8443 = scalar_lea.vmem %s3, 3456
    %v8444 = vld [vmem:[%s8443] sm:$0xff]
    %v8445 = vld [vmem:[%s8443 + $0x8] sm:$0xff]
    %v8446 = vld [vmem:[%s8443 + $0x10] sm:$0xff]
    %v8447 = vld [vmem:[%s8443 + $0x18] sm:$0xff]
    %v8448 = vld [vmem:[%s8443 + $0x20] sm:$0xff]
    %v8449 = vld [vmem:[%s8443 + $0x28] sm:$0xff]
    %v8450 = vld [vmem:[%s8443 + $0x30] sm:$0xff]
    %v8451 = vld [vmem:[%s8443 + $0x38] sm:$0xff]
    %v8452 = vld [vmem:[%s8443 + $0x40] sm:$0xff]
    %v8453 = vld [vmem:[%s8443 + $0x48] sm:$0xff]
    %v8454 = vld [vmem:[%s8443 + $0x50] sm:$0xff]
    %v8455 = vld [vmem:[%s8443 + $0x58] sm:$0xff]
    %v8456 = vld [vmem:[%s8443 + $0x60] sm:$0xff]
    %v8457 = vld [vmem:[%s8443 + $0x68] sm:$0xff]
    %v8458 = vld [vmem:[%s8443 + $0x70] sm:$0xff]
    %v8459 = vld [vmem:[%s8443 + $0x78] sm:$0xff]
    %v8460 = vld [vmem:[%s8443 + $0x80] sm:$0xff]
    %v8461 = vld [vmem:[%s8443 + $0x88] sm:$0xff]
    %v8462 = vld [vmem:[%s8443 + $0x90] sm:$0xff]
    %v8463 = vld [vmem:[%s8443 + $0x98] sm:$0xff]
    %v8464 = vld [vmem:[%s8443 + $0xa0] sm:$0xff]
    %v8465 = vld [vmem:[%s8443 + $0xa8] sm:$0xff]
    %v8466 = vld [vmem:[%s8443 + $0xb0] sm:$0xff]
    %v8467 = vld [vmem:[%s8443 + $0xb8] sm:$0xff]
    %v8468 = vld [vmem:[%s8443 + $0xc0] sm:$0xff]
    %v8469 = vld [vmem:[%s8443 + $0xc8] sm:$0xff]
    %v8470 = vld [vmem:[%s8443 + $0xd0] sm:$0xff]
    %v8471 = vld [vmem:[%s8443 + $0xd8] sm:$0xff]
    %v8472 = vld [vmem:[%s8443 + $0xe0] sm:$0xff]
    %v8473 = vld [vmem:[%s8443 + $0xe8] sm:$0xff]
    %v8474 = vld [vmem:[%s8443 + $0xf0] sm:$0xff]
    %v8475 = vld [vmem:[%s8443 + $0xf8] sm:$0xff]
    %v8476 = vld [vmem:[%s8443 + $0x100] sm:$0xff]
    %v8477 = vld [vmem:[%s8443 + $0x108] sm:$0xff]
    %v8478 = vld [vmem:[%s8443 + $0x110] sm:$0xff]
    %v8479 = vld [vmem:[%s8443 + $0x118] sm:$0xff]
    %v8480 = vld [vmem:[%s8443 + $0x120] sm:$0xff]
    %v8481 = vld [vmem:[%s8443 + $0x128] sm:$0xff]
    %v8482 = vld [vmem:[%s8443 + $0x130] sm:$0xff]
    %v8483 = vld [vmem:[%s8443 + $0x138] sm:$0xff]
    %v8484 = vld [vmem:[%s8443 + $0x140] sm:$0xff]
    %v8485 = vld [vmem:[%s8443 + $0x148] sm:$0xff]
    %v8486 = vld [vmem:[%s8443 + $0x150] sm:$0xff]
    %v8487 = vld [vmem:[%s8443 + $0x158] sm:$0xff]
    %v8488 = vld [vmem:[%s8443 + $0x160] sm:$0xff]
    %v8489 = vld [vmem:[%s8443 + $0x168] sm:$0xff]
    %v8490 = vld [vmem:[%s8443 + $0x170] sm:$0xff]
    %v8491 = vld [vmem:[%s8443 + $0x178] sm:$0xff]
    %v8492 = vld [vmem:[%s8443 + $0x180] sm:$0xff]
    %v8493 = vld [vmem:[%s8443 + $0x188] sm:$0xff]
    %v8494 = vld [vmem:[%s8443 + $0x190] sm:$0xff]
    %v8495 = vld [vmem:[%s8443 + $0x198] sm:$0xff]
    %v8496 = vld [vmem:[%s8443 + $0x1a0] sm:$0xff]
    %v8497 = vld [vmem:[%s8443 + $0x1a8] sm:$0xff]
    %v8498 = vld [vmem:[%s8443 + $0x1b0] sm:$0xff]
    %v8499 = vld [vmem:[%s8443 + $0x1b8] sm:$0xff]
    %v8500 = vld [vmem:[%s8443 + $0x1c0] sm:$0xff]
    %v8501 = vld [vmem:[%s8443 + $0x1c8] sm:$0xff]
    %v8502 = vld [vmem:[%s8443 + $0x1d0] sm:$0xff]
    %v8503 = vld [vmem:[%s8443 + $0x1d8] sm:$0xff]
    %v8504 = vld [vmem:[%s8443 + $0x1e0] sm:$0xff]
    %v8505 = vld [vmem:[%s8443 + $0x1e8] sm:$0xff]
    %v8506 = vld [vmem:[%s8443 + $0x1f0] sm:$0xff]
    %v8507 = vld [vmem:[%s8443 + $0x1f8] sm:$0xff]
    %v8508 = vld [vmem:[%s8443 + $0x200] sm:$0xff]
    %v8509 = vld [vmem:[%s8443 + $0x208] sm:$0xff]
    %v8510 = vld [vmem:[%s8443 + $0x210] sm:$0xff]
    %v8511 = vld [vmem:[%s8443 + $0x218] sm:$0xff]
    %v8512 = vld [vmem:[%s8443 + $0x220] sm:$0xff]
    %v8513 = vld [vmem:[%s8443 + $0x228] sm:$0xff]
    %v8514 = vld [vmem:[%s8443 + $0x230] sm:$0xff]
    %v8515 = vld [vmem:[%s8443 + $0x238] sm:$0xff]
    %v8516 = vld [vmem:[%s8443 + $0x240] sm:$0xff]
    %v8517 = vld [vmem:[%s8443 + $0x248] sm:$0xff]
    %v8518 = vld [vmem:[%s8443 + $0x250] sm:$0xff]
    %v8519 = vld [vmem:[%s8443 + $0x258] sm:$0xff]
    %v8520 = vld [vmem:[%s8443 + $0x260] sm:$0xff]
    %v8521 = vld [vmem:[%s8443 + $0x268] sm:$0xff]
    %v8522 = vld [vmem:[%s8443 + $0x270] sm:$0xff]
    %v8523 = vld [vmem:[%s8443 + $0x278] sm:$0xff]
    %v8524 = vld [vmem:[%s8443 + $0x280] sm:$0xff]
    %v8525 = vld [vmem:[%s8443 + $0x288] sm:$0xff]
    %v8526 = vld [vmem:[%s8443 + $0x290] sm:$0xff]
    %v8527 = vld [vmem:[%s8443 + $0x298] sm:$0xff]
    %v8528 = vld [vmem:[%s8443 + $0x2a0] sm:$0xff]
    %v8529 = vld [vmem:[%s8443 + $0x2a8] sm:$0xff]
    %v8530 = vld [vmem:[%s8443 + $0x2b0] sm:$0xff]
    %v8531 = vld [vmem:[%s8443 + $0x2b8] sm:$0xff]
    %v8532 = vld [vmem:[%s8443 + $0x2c0] sm:$0xff]
    %v8533 = vld [vmem:[%s8443 + $0x2c8] sm:$0xff]
    %v8534 = vld [vmem:[%s8443 + $0x2d0] sm:$0xff]
    %v8535 = vld [vmem:[%s8443 + $0x2d8] sm:$0xff]
    %v8536 = vld [vmem:[%s8443 + $0x2e0] sm:$0xff]
    %v8537 = vld [vmem:[%s8443 + $0x2e8] sm:$0xff]
    %v8538 = vld [vmem:[%s8443 + $0x2f0] sm:$0xff]
    %v8539 = vld [vmem:[%s8443 + $0x2f8] sm:$0xff]
    %v8540 = vld [vmem:[%s8443 + $0x300] sm:$0xff]
    %v8541 = vld [vmem:[%s8443 + $0x308] sm:$0xff]
    %v8542 = vld [vmem:[%s8443 + $0x310] sm:$0xff]
    %v8543 = vld [vmem:[%s8443 + $0x318] sm:$0xff]
    %v8544 = vld [vmem:[%s8443 + $0x320] sm:$0xff]
    %v8545 = vld [vmem:[%s8443 + $0x328] sm:$0xff]
    %v8546 = vld [vmem:[%s8443 + $0x330] sm:$0xff]
    %v8547 = vld [vmem:[%s8443 + $0x338] sm:$0xff]
    %v8548 = vld [vmem:[%s8443 + $0x340] sm:$0xff]
    %v8549 = vld [vmem:[%s8443 + $0x348] sm:$0xff]
    %v8550 = vld [vmem:[%s8443 + $0x350] sm:$0xff]
    %v8551 = vld [vmem:[%s8443 + $0x358] sm:$0x7]
    %v8553 = vsel %vm3012, %v8442, 0
    %v8556 = vsel %vm3016, %v8551, 0
    %8558 = vmatprep.subr.mxu0 0.0
    %8559 = vmatpush1.msra.mxu0 %v8459
    %8560 = vmatprep.subr.mxu0 0.0
    %8561 = vmatpush1.msra.mxu0 %v8458
    %8562 = vmatprep.subr.mxu0 0.0
    %8563 = vmatpush1.msra.mxu0 %v8457
    %8564 = vmatprep.subr.mxu0 0.0
    %8565 = vmatpush1.msra.mxu0 %v8456
    %8566 = vmatprep.subr.mxu0 0.0
    %8567 = vmatpush1.msra.mxu0 %v8455
    %8568 = vmatprep.subr.mxu0 0.0
    %8569 = vmatpush1.msra.mxu0 %v8454
    %8570 = vmatprep.subr.mxu0 0.0
    %8571 = vmatpush1.msra.mxu0 %v8453
    %8572 = vmatprep.subr.mxu0 0.0
    %8573 = vmatpush1.msra.mxu0 %v8452
    %8574 = vmatprep.subr.mxu0 0.0
    %8575 = vmatpush1.msra.mxu0 %v8451
    %8576 = vmatprep.subr.mxu0 0.0
    %8577 = vmatpush1.msra.mxu0 %v8450
    %8578 = vmatprep.subr.mxu0 0.0
    %8579 = vmatpush1.msra.mxu0 %v8449
    %8580 = vmatprep.subr.mxu0 0.0
    %8581 = vmatpush1.msra.mxu0 %v8448
    %8582 = vmatprep.subr.mxu0 0.0
    %8583 = vmatpush1.msra.mxu0 %v8447
    %8584 = vmatprep.subr.mxu0 0.0
    %8585 = vmatpush1.msra.mxu0 %v8446
    %8586 = vmatprep.subr.mxu0 0.0
    %8587 = vmatpush1.msra.mxu0 %v8445
    %8588 = vmatprep.subr.mxu0 0.0
    %8589 = vmatpush1.msra.mxu0 %v8444
    %8590 = vmatprep.subr.mxu0 0.0
    %8591 = vmatpush2.msra.mxu0 %v8475
    %8592 = vmatprep.subr.mxu0 0.0
    %8593 = vmatpush2.msra.mxu0 %v8474
    %8594 = vmatprep.subr.mxu0 0.0
    %8595 = vmatpush2.msra.mxu0 %v8473
    %8596 = vmatprep.subr.mxu0 0.0
    %8597 = vmatpush2.msra.mxu0 %v8472
    %8598 = vmatprep.subr.mxu0 0.0
    %8599 = vmatpush2.msra.mxu0 %v8471
    %8600 = vmatprep.subr.mxu0 0.0
    %8601 = vmatpush2.msra.mxu0 %v8470
    %8602 = vmatprep.subr.mxu0 0.0
    %8603 = vmatpush2.msra.mxu0 %v8469
    %8604 = vmatprep.subr.mxu0 0.0
    %8605 = vmatpush2.msra.mxu0 %v8468
    %8606 = vmatprep.subr.mxu0 0.0
    %8607 = vmatpush2.msra.mxu0 %v8467
    %8608 = vmatprep.subr.mxu0 0.0
    %8609 = vmatpush2.msra.mxu0 %v8466
    %8610 = vmatprep.subr.mxu0 0.0
    %8611 = vmatpush2.msra.mxu0 %v8465
    %8612 = vmatprep.subr.mxu0 0.0
    %8613 = vmatpush2.msra.mxu0 %v8464
    %8614 = vmatprep.subr.mxu0 0.0
    %8615 = vmatpush2.msra.mxu0 %v8463
    %8616 = vmatprep.subr.mxu0 0.0
    %8617 = vmatpush2.msra.mxu0 %v8462
    %8618 = vmatprep.subr.mxu0 0.0
    %8619 = vmatpush2.msra.mxu0 %v8461
    %8620 = vmatprep.subr.mxu0 0.0
    %8621 = vmatpush2.msra.mxu0 %v8460
    %8622 = vmatprep.mubr.f32.mxu0 %v8437
    %8623 = vmatmul.mubr.f32.gmra.mxu0 %v8436
    %v8624 = vpop.f32.mrf.mxu0
    %v8625 = vadd.f32 0.0, %v8624
    %v8626 = vpop.f32.mrf.mxu0
    %8627 = vdwg.mxu0
    %8628 = vmatprep.subr.mxu0 0.0
    %8629 = vmatpush1.msra.mxu0 %v8491
    %8630 = vmatprep.subr.mxu0 0.0
    %8631 = vmatpush1.msra.mxu0 %v8490
    %8632 = vmatprep.subr.mxu0 0.0
    %8633 = vmatpush1.msra.mxu0 %v8489
    %8634 = vmatprep.subr.mxu0 0.0
    %8635 = vmatpush1.msra.mxu0 %v8488
    %8636 = vmatprep.subr.mxu0 0.0
    %8637 = vmatpush1.msra.mxu0 %v8487
    %8638 = vmatprep.subr.mxu0 0.0
    %8639 = vmatpush1.msra.mxu0 %v8486
    %8640 = vmatprep.subr.mxu0 0.0
    %8641 = vmatpush1.msra.mxu0 %v8485
    %8642 = vmatprep.subr.mxu0 0.0
    %8643 = vmatpush1.msra.mxu0 %v8484
    %8644 = vmatprep.subr.mxu0 0.0
    %8645 = vmatpush1.msra.mxu0 %v8483
    %8646 = vmatprep.subr.mxu0 0.0
    %8647 = vmatpush1.msra.mxu0 %v8482
    %8648 = vmatprep.subr.mxu0 0.0
    %8649 = vmatpush1.msra.mxu0 %v8481
    %8650 = vmatprep.subr.mxu0 0.0
    %8651 = vmatpush1.msra.mxu0 %v8480
    %8652 = vmatprep.subr.mxu0 0.0
    %8653 = vmatpush1.msra.mxu0 %v8479
    %8654 = vmatprep.subr.mxu0 0.0
    %8655 = vmatpush1.msra.mxu0 %v8478
    %8656 = vmatprep.subr.mxu0 0.0
    %8657 = vmatpush1.msra.mxu0 %v8477
    %8658 = vmatprep.subr.mxu0 0.0
    %8659 = vmatpush1.msra.mxu0 %v8476
    %8660 = vmatprep.subr.mxu0 0.0
    %8661 = vmatpush2.msra.mxu0 %v8507
    %8662 = vmatprep.subr.mxu0 0.0
    %8663 = vmatpush2.msra.mxu0 %v8506
    %8664 = vmatprep.subr.mxu0 0.0
    %8665 = vmatpush2.msra.mxu0 %v8505
    %8666 = vmatprep.subr.mxu0 0.0
    %8667 = vmatpush2.msra.mxu0 %v8504
    %8668 = vmatprep.subr.mxu0 0.0
    %8669 = vmatpush2.msra.mxu0 %v8503
    %8670 = vmatprep.subr.mxu0 0.0
    %8671 = vmatpush2.msra.mxu0 %v8502
    %8672 = vmatprep.subr.mxu0 0.0
    %8673 = vmatpush2.msra.mxu0 %v8501
    %8674 = vmatprep.subr.mxu0 0.0
    %8675 = vmatpush2.msra.mxu0 %v8500
    %8676 = vmatprep.subr.mxu0 0.0
    %8677 = vmatpush2.msra.mxu0 %v8499
    %8678 = vmatprep.subr.mxu0 0.0
    %8679 = vmatpush2.msra.mxu0 %v8498
    %8680 = vmatprep.subr.mxu0 0.0
    %8681 = vmatpush2.msra.mxu0 %v8497
    %8682 = vmatprep.subr.mxu0 0.0
    %8683 = vmatpush2.msra.mxu0 %v8496
    %8684 = vmatprep.subr.mxu0 0.0
    %8685 = vmatpush2.msra.mxu0 %v8495
    %8686 = vmatprep.subr.mxu0 0.0
    %8687 = vmatpush2.msra.mxu0 %v8494
    %8688 = vmatprep.subr.mxu0 0.0
    %8689 = vmatpush2.msra.mxu0 %v8493
    %8690 = vmatprep.subr.mxu0 0.0
    %8691 = vmatpush2.msra.mxu0 %v8492
    %8692 = vmatprep.mubr.f32.mxu0 %v8439
    %8693 = vmatmul.mubr.f32.gmra.mxu0 %v8438
    %v8694 = vpop.f32.mrf.mxu0
    %v8695 = vadd.f32 %v8625, %v8694
    %v8696 = vpop.f32.mrf.mxu0
    %8697 = vdwg.mxu0
    %8698 = vmatprep.subr.mxu0 0.0
    %8699 = vmatpush1.msra.mxu0 %v8523
    %8700 = vmatprep.subr.mxu0 0.0
    %8701 = vmatpush1.msra.mxu0 %v8522
    %8702 = vmatprep.subr.mxu0 0.0
    %8703 = vmatpush1.msra.mxu0 %v8521
    %8704 = vmatprep.subr.mxu0 0.0
    %8705 = vmatpush1.msra.mxu0 %v8520
    %8706 = vmatprep.subr.mxu0 0.0
    %8707 = vmatpush1.msra.mxu0 %v8519
    %8708 = vmatprep.subr.mxu0 0.0
    %8709 = vmatpush1.msra.mxu0 %v8518
    %8710 = vmatprep.subr.mxu0 0.0
    %8711 = vmatpush1.msra.mxu0 %v8517
    %8712 = vmatprep.subr.mxu0 0.0
    %8713 = vmatpush1.msra.mxu0 %v8516
    %8714 = vmatprep.subr.mxu0 0.0
    %8715 = vmatpush1.msra.mxu0 %v8515
    %8716 = vmatprep.subr.mxu0 0.0
    %8717 = vmatpush1.msra.mxu0 %v8514
    %8718 = vmatprep.subr.mxu0 0.0
    %8719 = vmatpush1.msra.mxu0 %v8513
    %8720 = vmatprep.subr.mxu0 0.0
    %8721 = vmatpush1.msra.mxu0 %v8512
    %8722 = vmatprep.subr.mxu0 0.0
    %8723 = vmatpush1.msra.mxu0 %v8511
    %8724 = vmatprep.subr.mxu0 0.0
    %8725 = vmatpush1.msra.mxu0 %v8510
    %8726 = vmatprep.subr.mxu0 0.0
    %8727 = vmatpush1.msra.mxu0 %v8509
    %8728 = vmatprep.subr.mxu0 0.0
    %8729 = vmatpush1.msra.mxu0 %v8508
    %8730 = vmatprep.subr.mxu0 0.0
    %8731 = vmatpush2.msra.mxu0 %v8539
    %8732 = vmatprep.subr.mxu0 0.0
    %8733 = vmatpush2.msra.mxu0 %v8538
    %8734 = vmatprep.subr.mxu0 0.0
    %8735 = vmatpush2.msra.mxu0 %v8537
    %8736 = vmatprep.subr.mxu0 0.0
    %8737 = vmatpush2.msra.mxu0 %v8536
    %8738 = vmatprep.subr.mxu0 0.0
    %8739 = vmatpush2.msra.mxu0 %v8535
    %8740 = vmatprep.subr.mxu0 0.0
    %8741 = vmatpush2.msra.mxu0 %v8534
    %8742 = vmatprep.subr.mxu0 0.0
    %8743 = vmatpush2.msra.mxu0 %v8533
    %8744 = vmatprep.subr.mxu0 0.0
    %8745 = vmatpush2.msra.mxu0 %v8532
    %8746 = vmatprep.subr.mxu0 0.0
    %8747 = vmatpush2.msra.mxu0 %v8531
    %8748 = vmatprep.subr.mxu0 0.0
    %8749 = vmatpush2.msra.mxu0 %v8530
    %8750 = vmatprep.subr.mxu0 0.0
    %8751 = vmatpush2.msra.mxu0 %v8529
    %8752 = vmatprep.subr.mxu0 0.0
    %8753 = vmatpush2.msra.mxu0 %v8528
    %8754 = vmatprep.subr.mxu0 0.0
    %8755 = vmatpush2.msra.mxu0 %v8527
    %8756 = vmatprep.subr.mxu0 0.0
    %8757 = vmatpush2.msra.mxu0 %v8526
    %8758 = vmatprep.subr.mxu0 0.0
    %8759 = vmatpush2.msra.mxu0 %v8525
    %8760 = vmatprep.subr.mxu0 0.0
    %8761 = vmatpush2.msra.mxu0 %v8524
    %8762 = vmatprep.mubr.f32.mxu0 %v8441
    %8763 = vmatmul.mubr.f32.gmra.mxu0 %v8440
    %v8764 = vpop.f32.mrf.mxu0
    %v8765 = vadd.f32 %v8695, %v8764
    %v8766 = vpop.f32.mrf.mxu0
    %8767 = vdwg.mxu0
    %8768 = vmatprep.subr.mxu0 0.0
    %8769 = vmatpush1.msra.mxu0 0.0
    %8770 = vmatprep.subr.mxu0 0.0
    %8771 = vmatpush1.msra.mxu0 0.0
    %8772 = vmatprep.subr.mxu0 0.0
    %8773 = vmatpush1.msra.mxu0 0.0
    %8774 = vmatprep.subr.mxu0 0.0
    %8775 = vmatpush1.msra.mxu0 0.0
    %8776 = vmatprep.subr.mxu0 0.0
    %8777 = vmatpush1.msra.mxu0 %v8556
    %8778 = vmatprep.subr.mxu0 0.0
    %8779 = vmatpush1.msra.mxu0 %v8550
    %8780 = vmatprep.subr.mxu0 0.0
    %8781 = vmatpush1.msra.mxu0 %v8549
    %8782 = vmatprep.subr.mxu0 0.0
    %8783 = vmatpush1.msra.mxu0 %v8548
    %8784 = vmatprep.subr.mxu0 0.0
    %8785 = vmatpush1.msra.mxu0 %v8547
    %8786 = vmatprep.subr.mxu0 0.0
    %8787 = vmatpush1.msra.mxu0 %v8546
    %8788 = vmatprep.subr.mxu0 0.0
    %8789 = vmatpush1.msra.mxu0 %v8545
    %8790 = vmatprep.subr.mxu0 0.0
    %8791 = vmatpush1.msra.mxu0 %v8544
    %8792 = vmatprep.subr.mxu0 0.0
    %8793 = vmatpush1.msra.mxu0 %v8543
    %8794 = vmatprep.subr.mxu0 0.0
    %8795 = vmatpush1.msra.mxu0 %v8542
    %8796 = vmatprep.subr.mxu0 0.0
    %8797 = vmatpush1.msra.mxu0 %v8541
    %8798 = vmatprep.subr.mxu0 0.0
    %8799 = vmatpush1.msra.mxu0 %v8540
    %8800 = vmatprep.subr.mxu0 0.0
    %8801 = vmatpush2.msra.mxu0 0.0
    %8802 = vmatprep.subr.mxu0 0.0
    %8803 = vmatpush2.msra.mxu0 0.0
    %8804 = vmatprep.subr.mxu0 0.0
    %8805 = vmatpush2.msra.mxu0 0.0
    %8806 = vmatprep.subr.mxu0 0.0
    %8807 = vmatpush2.msra.mxu0 0.0
    %8808 = vmatprep.subr.mxu0 0.0
    %8809 = vmatpush2.msra.mxu0 0.0
    %8810 = vmatprep.subr.mxu0 0.0
    %8811 = vmatpush2.msra.mxu0 0.0
    %8812 = vmatprep.subr.mxu0 0.0
    %8813 = vmatpush2.msra.mxu0 0.0
    %8814 = vmatprep.subr.mxu0 0.0
    %8815 = vmatpush2.msra.mxu0 0.0
    %8816 = vmatprep.subr.mxu0 0.0
    %8817 = vmatpush2.msra.mxu0 0.0
    %8818 = vmatprep.subr.mxu0 0.0
    %8819 = vmatpush2.msra.mxu0 0.0
    %8820 = vmatprep.subr.mxu0 0.0
    %8821 = vmatpush2.msra.mxu0 0.0
    %8822 = vmatprep.subr.mxu0 0.0
    %8823 = vmatpush2.msra.mxu0 0.0
    %8824 = vmatprep.subr.mxu0 0.0
    %8825 = vmatpush2.msra.mxu0 0.0
    %8826 = vmatprep.subr.mxu0 0.0
    %8827 = vmatpush2.msra.mxu0 0.0
    %8828 = vmatprep.subr.mxu0 0.0
    %8829 = vmatpush2.msra.mxu0 0.0
    %8830 = vmatprep.subr.mxu0 0.0
    %8831 = vmatpush2.msra.mxu0 0.0
    %8832 = vmatprep.mubr.f32.mxu0 0.0
    %8833 = vmatmul.mubr.f32.gmra.mxu0 %v8553
    %v8834 = vpop.f32.mrf.mxu0
    %v8835 = vadd.f32 %v8765, %v8834
    %v8836 = vpop.f32.mrf.mxu0
    %8837 = vdwg.mxu0
    %v8838 = vadd.f32 %v7087, %v8835
    %v8839 = vld [vmem:[%s4] sm:$0x1]
    %v8841 = vlaneseq
    %v8842 = vshrl.u32 %v8841, 7
    %v8843 = vsub.s32 0, %v8842
    %v8844 = vrot.slane %v8839, %v8843
    %v8846 = vadd.f32 %v8838, %v8844
    %v8847 = vmax.f32 %v8846, 0.0
    %v8848 = vld [vmem:[%s5] sm:$0xff]
    %v8849 = vld [vmem:[%s5 + $0x8] sm:$0xff]
    %v8850 = vld [vmem:[%s5 + $0x10] sm:$0xff]
    %v8851 = vld [vmem:[%s5 + $0x18] sm:$0xff]
    %v8852 = vld [vmem:[%s5 + $0x20] sm:$0xff]
    %v8853 = vld [vmem:[%s5 + $0x28] sm:$0xff]
    %v8854 = vld [vmem:[%s5 + $0x30] sm:$0xff]
    %v8855 = vld [vmem:[%s5 + $0x38] sm:$0xff]
    %v8856 = vld [vmem:[%s5 + $0x40] sm:$0xff]
    %v8857 = vld [vmem:[%s5 + $0x48] sm:$0xff]
    %v8858 = vld [vmem:[%s5 + $0x50] sm:$0xff]
    %v8859 = vld [vmem:[%s5 + $0x58] sm:$0xff]
    %v8860 = vld [vmem:[%s5 + $0x60] sm:$0xff]
    %v8861 = vld [vmem:[%s5 + $0x68] sm:$0xff]
    %v8862 = vld [vmem:[%s5 + $0x70] sm:$0xff]
    %v8863 = vld [vmem:[%s5 + $0x78] sm:$0xff]
    %v8864 = vld [vmem:[%s6] sm:$0x1]
    %v8866 = vlaneseq
    %v8867 = vshrl.u32 %v8866, 7
    %v8868 = vsub.s32 0, %v8867
    %v8869 = vrot.slane %v8864, %v8868
    %8871 = vmatprep.subr.mxu0 0.0
    %8872 = vmatpush1.msra.mxu0 %v8863
    %8873 = vmatprep.subr.mxu0 0.0
    %8874 = vmatpush1.msra.mxu0 %v8862
    %8875 = vmatprep.subr.mxu0 0.0
    %8876 = vmatpush1.msra.mxu0 %v8861
    %8877 = vmatprep.subr.mxu0 0.0
    %8878 = vmatpush1.msra.mxu0 %v8860
    %8879 = vmatprep.subr.mxu0 0.0
    %8880 = vmatpush1.msra.mxu0 %v8859
    %8881 = vmatprep.subr.mxu0 0.0
    %8882 = vmatpush1.msra.mxu0 %v8858
    %8883 = vmatprep.subr.mxu0 0.0
    %8884 = vmatpush1.msra.mxu0 %v8857
    %8885 = vmatprep.subr.mxu0 0.0
    %8886 = vmatpush1.msra.mxu0 %v8856
    %8887 = vmatprep.subr.mxu0 0.0
    %8888 = vmatpush1.msra.mxu0 %v8855
    %8889 = vmatprep.subr.mxu0 0.0
    %8890 = vmatpush1.msra.mxu0 %v8854
    %8891 = vmatprep.subr.mxu0 0.0
    %8892 = vmatpush1.msra.mxu0 %v8853
    %8893 = vmatprep.subr.mxu0 0.0
    %8894 = vmatpush1.msra.mxu0 %v8852
    %8895 = vmatprep.subr.mxu0 0.0
    %8896 = vmatpush1.msra.mxu0 %v8851
    %8897 = vmatprep.subr.mxu0 0.0
    %8898 = vmatpush1.msra.mxu0 %v8850
    %8899 = vmatprep.subr.mxu0 0.0
    %8900 = vmatpush1.msra.mxu0 %v8849
    %8901 = vmatprep.subr.mxu0 0.0
    %8902 = vmatpush1.msra.mxu0 %v8848
    %8903 = vmatprep.subr.mxu0 0.0
    %8904 = vmatpush2.msra.mxu0 0.0
    %8905 = vmatprep.subr.mxu0 0.0
    %8906 = vmatpush2.msra.mxu0 0.0
    %8907 = vmatprep.subr.mxu0 0.0
    %8908 = vmatpush2.msra.mxu0 0.0
    %8909 = vmatprep.subr.mxu0 0.0
    %8910 = vmatpush2.msra.mxu0 0.0
    %8911 = vmatprep.subr.mxu0 0.0
    %8912 = vmatpush2.msra.mxu0 0.0
    %8913 = vmatprep.subr.mxu0 0.0
    %8914 = vmatpush2.msra.mxu0 0.0
    %8915 = vmatprep.subr.mxu0 0.0
    %8916 = vmatpush2.msra.mxu0 0.0
    %8917 = vmatprep.subr.mxu0 0.0
    %8918 = vmatpush2.msra.mxu0 0.0
    %8919 = vmatprep.subr.mxu0 0.0
    %8920 = vmatpush2.msra.mxu0 0.0
    %8921 = vmatprep.subr.mxu0 0.0
    %8922 = vmatpush2.msra.mxu0 0.0
    %8923 = vmatprep.subr.mxu0 0.0
    %8924 = vmatpush2.msra.mxu0 0.0
    %8925 = vmatprep.subr.mxu0 0.0
    %8926 = vmatpush2.msra.mxu0 0.0
    %8927 = vmatprep.subr.mxu0 0.0
    %8928 = vmatpush2.msra.mxu0 0.0
    %8929 = vmatprep.subr.mxu0 0.0
    %8930 = vmatpush2.msra.mxu0 0.0
    %8931 = vmatprep.subr.mxu0 0.0
    %8932 = vmatpush2.msra.mxu0 0.0
    %8933 = vmatprep.subr.mxu0 0.0
    %8934 = vmatpush2.msra.mxu0 0.0
    %8935 = vmatprep.mubr.f32.mxu0 0.0
    %8936 = vmatmul.mubr.f32.gmra.mxu0 %v8847
    %v8937 = vpop.f32.mrf.mxu0
    %v8938 = vadd.f32 %v8869, %v8937
    %v8939 = vpop.f32.mrf.mxu0
    %8940 = vdwg.mxu0
    %v8941 = vlaneseq
    %v8942 = vand.u32 %v8941, 127
    %vm8943 = vcmp.lt.s32.totalorder %v8942, 10
    %v8944 = vsel %vm8943, %v8938, -1e+30
    %8945 = vmax.xlane.f32.xlu0 %v8944
    %v8946 = vpop.xlane.xlu0 %8945
    %v8947 = vsub.f32 %v8944, %v8946
    %v8948 = vmul.f32 %v8947, 1.442695
    %v8949 = vpow.pop %v8948
    %8950 = vadd.xlane.f32.xlu0 %v8949
    %v8951 = vpop.xlane.xlu0 %8950
    %v8952 = vrcp.pop %v8951
    %v8953 = vmul.f32 1.0, %v8952
    %v8954 = vmul.f32 %v8949, %v8953
    %8955 = vst [vmem:[%s7] sm:$0xff] %v8954
    // Predicated region
    $region38: #{mnist_forward.1} parent=1 // pred_check
      _
    $region39: #{mnist_forward.1} parent=1 // pred_check_branch
      %8957 = sbr.rel (0) target = $region41
    $region40: #{mnist_forward.1} parent=1 // pred_region
      _
    $region41: #{mnist_forward.1} parent=1 // pred_fallthru
      _
    // Predicated region
    $region42: #{mnist_forward.1} parent=1 // pred_check
      _
    $region43: #{mnist_forward.1} parent=1 // pred_check_branch
      %8959 = sbr.rel (0) target = $region45
    $region44: #{mnist_forward.1} parent=1 // pred_region
      _
    $region45: #{mnist_forward.1} parent=1 // pred_fallthru
      _
    %8960 = vsyncpa [#allocation3], 1
    %8961 = vsyncpa [#allocation5], 1

</llo_original>
